<compile_context>
chip_gen: v5e
topology: v5e:2x2
jax: 0.10.0
libtpu: 0.0.40
codegen_flags: <defaults>
</compile_context>

<pallas_src>
import functools
import math

import jax
import jax.numpy as jnp
from jax.experimental import pallas as pl
from jax.experimental.pallas import tpu as pltpu


# ------------------------------ Pallas kernel -------------------------------

def _fused_mlpv3_kernel(x_ref, w_in_ref, b_stack_ref, w_mid_ref, w_fin_ref,
                        b_fin_ref, o_ref, *, input_size, num_mid_layers):
    """Whole MLPv3 forward for one (tm, input_size) row tile.

    Layer map (all weights pre-transposed to (fan_in, fan_out)):
      w_in / b_stack[0]       : fc_in                      (VPU broadcast FMAs, f32)
      w_mid[0 .. L-1]         : trunk fc blocks            (bf16 MXU, f32 acc)
      w_mid[L]                : fc_out1 || fc_out2 fused   (concat along fan_out)
      w_mid[L+1 .. L+Lh]      : fc_head1/fc_head2 fused    (block-diagonal)
      w_fin / b_fin           : out1/out2 fused            (block-diagonal)
    Dropout has p=0 (module default) -> identity.
    # TODO(synk): training-mode dropout (p>0) masks are not implemented.
    # TODO(synk): on v5e (128-wide MXU) interleaving the two half-width head
    # chains would beat the block-diagonal fusion used here (tuned for v6e/v7x).
    """
    tm = x_ref.shape[0]
    hidden = w_in_ref.shape[1]

    # ---- fc_in: (tm, K) @ (K, H) with K ~ 3 done as K VPU broadcast FMAs ----
    x = x_ref[...].astype(jnp.float32)
    h = jnp.zeros((tm, hidden), jnp.float32)
    for k in range(input_size):
        h = h + x[:, k:k + 1] * w_in_ref[k:k + 1, :]
    h = jnp.maximum(h + b_stack_ref[0:1, :], 0.0)

    # ---- trunk + fused fc_out + fused (block-diagonal) head layers ----------
    for li in range(num_mid_layers):
        acc = jnp.dot(h.astype(jnp.bfloat16), w_mid_ref[li],
                      preferred_element_type=jnp.float32)
        h = jnp.maximum(acc + b_stack_ref[li + 1:li + 2, :], 0.0)

    # ---- fused final layer (block-diagonal, no activation), single store ----
    y = jnp.dot(h.astype(jnp.bfloat16), w_fin_ref[...],
                preferred_element_type=jnp.float32) + b_fin_ref[...]
    o_ref[...] = y.astype(o_ref.dtype)


# ------------------------------- Parameters ---------------------------------

def init_mlpv3_params(key, *, input_size=3, hidden_size=256, output_size=2,
                      num_layers=5, num_layers_head=3):
    """nn.Linear-style init; weights stored transposed as (fan_in, fan_out).

    Returns both the per-layer (PyTorch-structured) weights for the reference
    and the packed / fused / bf16 parameters used by the kernel.
    Lane-dense layouts want hidden_size % 128 == 0 (not required for correctness).
    """
    assert hidden_size % 2 == 0
    half = hidden_size // 2
    out_half = output_size // 2
    assert out_half >= 1, "output_size//2 must be >= 1 for a non-empty output"

    def lin_init(k, fan_in, fan_out):
        kw, kb = jax.random.split(k)
        bound = 1.0 / math.sqrt(fan_in)   # nn.Linear default U(-1/sqrt(in), 1/sqrt(in))
        w = jax.random.uniform(kw, (fan_in, fan_out), jnp.float32, -bound, bound)
        b = jax.random.uniform(kb, (1, fan_out), jnp.float32, -bound, bound)
        return w, b

    n_linear = 1 + num_layers + 2 + 2 * num_layers_head + 2
    keys = iter(jax.random.split(key, n_linear))
    fc_in = lin_init(next(keys), input_size, hidden_size)
    trunk = [lin_init(next(keys), hidden_size, hidden_size) for _ in range(num_layers)]
    fc_out1 = lin_init(next(keys), hidden_size, half)
    fc_out2 = lin_init(next(keys), hidden_size, half)
    head1 = [lin_init(next(keys), half, half) for _ in range(num_layers_head)]
    head2 = [lin_init(next(keys), half, half) for _ in range(num_layers_head)]
    out1 = lin_init(next(keys), half, out_half)
    out2 = lin_init(next(keys), half, out_half)

    # ------------------------- packing for the kernel -----------------------
    mid_ws = [w for w, _ in trunk]
    mid_bs = [b for _, b in trunk]
    # fc_out1 / fc_out2 fused along fan_out -> one full-width (H, H) matmul
    mid_ws.append(jnp.concatenate([fc_out1[0], fc_out2[0]], axis=1))
    mid_bs.append(jnp.concatenate([fc_out1[1], fc_out2[1]], axis=1))
    # head layers: block-diagonal so both towers run as one (tm, H) activation
    for (w1, b1), (w2, b2) in zip(head1, head2):
        w = jnp.zeros((hidden_size, hidden_size), jnp.float32)
        w = w.at[:half, :half].set(w1).at[half:, half:].set(w2)
        mid_ws.append(w)
        mid_bs.append(jnp.concatenate([b1, b2], axis=1))
    # final layer: block-diagonal -> concatenated output in one matmul + store
    w_fin = jnp.zeros((hidden_size, 2 * out_half), jnp.float32)
    w_fin = w_fin.at[:half, :out_half].set(out1[0]).at[half:, out_half:].set(out2[0])
    b_fin = jnp.concatenate([out1[1], out2[1]], axis=1)

    packed = dict(
        w_in=fc_in[0],                                            # (K, H) f32 (VPU layer)
        b_stack=jnp.concatenate([fc_in[1]] + mid_bs, axis=0),     # (1+n_mid, H) f32
        w_mid=jnp.stack(mid_ws).astype(jnp.bfloat16),             # (n_mid, H, H) bf16
        w_fin=w_fin.astype(jnp.bfloat16),                         # (H, 2*out_half) bf16
        b_fin=b_fin,                                              # (1, 2*out_half) f32
    )
    ref = dict(fc_in=fc_in, trunk=trunk, fc_out1=fc_out1, fc_out2=fc_out2,
               head1=head1, head2=head2, out1=out1, out2=out2)
    return dict(packed=packed, ref=ref, input_size=input_size,
                hidden_size=hidden_size, output_size=output_size,
                num_layers=num_layers, num_layers_head=num_layers_head)


# -------------------------------- Forward -----------------------------------

def _choose_tm(n):
    # Adaptive row tile: big tiles for large N (hide MXU fill/drain of the
    # serial matmul chain, amortize ~0.35us/step), small tiles for small N so
    # a v7x megacore still gets >= 2 "parallel" grid steps.
    if n >= 8192:
        return 1024
    if n >= 2048:
        return 512
    if n >= 512:
        return 256
    return 128


def mlpv3_forward(params, x, *, tm=None):
    """Mirrors MLPv3.forward: x.view(-1, input_size) -> trunk -> 2 heads -> cat."""
    input_size = params["input_size"]
    x = x.reshape(-1, input_size).astype(jnp.float32)   # x.view(-1, input_size)
    n = x.shape[0]
    if tm is None:
        tm = _choose_tm(n)
    n_pad = pl.cdiv(n, tm) * tm
    if n_pad != n:
        x = jnp.pad(x, ((0, n_pad - n), (0, 0)))         # pad rows; sliced off below

    p = params["packed"]
    out_dim = 2 * (params["output_size"] // 2)
    num_mid_layers = p["w_mid"].shape[0]

    kernel = functools.partial(_fused_mlpv3_kernel,
                               input_size=input_size,
                               num_mid_layers=num_mid_layers)

    in_specs = [
        pl.BlockSpec((tm, input_size), lambda i: (i, 0)),     # x row tile
        pl.BlockSpec(p["w_in"].shape, lambda i: (0, 0)),      # resident params ...
        pl.BlockSpec(p["b_stack"].shape, lambda i: (0, 0)),
        pl.BlockSpec(p["w_mid"].shape, lambda i: (0, 0, 0)),
        pl.BlockSpec(p["w_fin"].shape, lambda i: (0, 0)),
        pl.BlockSpec(p["b_fin"].shape, lambda i: (0, 0)),
    ]

    out = pl.pallas_call(
        kernel,
        out_shape=jax.ShapeDtypeStruct((n_pad, out_dim), jnp.float32),
        grid_spec=pltpu.PrefetchScalarGridSpec(
            num_scalar_prefetch=0,
            grid=(n_pad // tm,),
            in_specs=in_specs,
            out_specs=pl.BlockSpec((tm, out_dim), lambda i: (i, 0)),
        ),
        compiler_params=pltpu.CompilerParams(
            dimension_semantics=("parallel",),    # megacore-shard row tiles
            # ~1.2 MiB bf16 weight stack (x2 buffers) + row tiles + unrolled
            # intermediates stays well under 32 MiB: safe on v5e/v6e (128 MiB
            # VMEM) and v7x (64 MiB VMEM).
            vmem_limit_bytes=32 * 1024 * 1024,
        ),
    )(x, p["w_in"], p["b_stack"], p["w_mid"], p["w_fin"], p["b_fin"])
    return out[:n]


# --------------------------- Pure-JAX reference -----------------------------

def mlpv3_reference(params, x):
    """Layer-by-layer reference mirroring MLPv3.forward (NO fusion), using the
    same numeric policy as the kernel: bf16 matmul operands, f32 accumulation,
    f32 bias add / ReLU (fc_in kept in f32)."""
    r = params["ref"]

    def lin(h, wb):
        w, b = wb
        return jnp.dot(h.astype(jnp.bfloat16), w.astype(jnp.bfloat16),
                       preferred_element_type=jnp.float32) + b

    relu = jax.nn.relu
    h = x.reshape(-1, params["input_size"]).astype(jnp.float32)
    h = relu(jnp.dot(h, r["fc_in"][0], preferred_element_type=jnp.float32)
             + r["fc_in"][1])
    for wb in r["trunk"]:
        h = relu(lin(h, wb))
    h1 = relu(lin(h, r["fc_out1"]))
    h2 = relu(lin(h, r["fc_out2"]))
    for wb in r["head1"]:
        h1 = relu(lin(h1, wb))
    for wb in r["head2"]:
        h2 = relu(lin(h2, wb))
    return jnp.concatenate([lin(h1, r["out1"]), lin(h2, r["out2"])], axis=1)


# ----------------------------------- Demo -----------------------------------

if __name__ == "__main__":
    key = jax.random.PRNGKey(0)
    k_params, k_x = jax.random.split(key)

    params = init_mlpv3_params(k_params, input_size=3, hidden_size=256,
                               output_size=2, num_layers=5, num_layers_head=3)

    # Small batch of "points"; forward flattens to (-1, 3) like x.view(-1, 3).
    # N = 1000 is deliberately NOT a multiple of tm to exercise the pad path.
    x = jax.random.normal(k_x, (4, 250, 3), jnp.float32)

    out = mlpv3_forward(params, x)
    jax.block_until_ready(out)

    assert out.shape == (1000, 2), out.shape
    assert bool(jnp.all(jnp.isfinite(out)))

    ref = mlpv3_reference(params, x)
    max_err = float(jnp.max(jnp.abs(out - ref)))
    assert bool(jnp.allclose(out, ref, atol=2e-3, rtol=2e-2)), max_err

    print("KERNEL_OK")
</pallas_src>

<mosaic_0001>
module attributes {stable_mosaic.version = 11 : i64} {
  func.func @_fused_mlpv3_kernel(%arg0: i32, %arg1: memref<256x3xf32, #tpu.memory_space<vmem>>, %arg2: memref<3x256xf32, #tpu.memory_space<vmem>>, %arg3: memref<10x256xf32, #tpu.memory_space<vmem>>, %arg4: memref<9x256x256xbf16, #tpu.memory_space<vmem>>, %arg5: memref<256x2xbf16, #tpu.memory_space<vmem>>, %arg6: memref<1x2xf32, #tpu.memory_space<vmem>>, %arg7: memref<256x2xf32, #tpu.memory_space<vmem>>) attributes {dimension_semantics = [#tpu.dimension_semantics<parallel>], iteration_bounds = array<i64: 4>, scalar_prefetch = 0 : i64, scratch_operands = 0 : i64, tpu.core_type = #tpu.core_type<tc>, window_params = [{transform_indices = @transform_0, window_bounds = array<i64: 256, 3>}, {pipeline_mode = #tpu.pipeline_mode<synchronous>, transform_indices = @transform_1, window_bounds = array<i64: 3, 256>}, {pipeline_mode = #tpu.pipeline_mode<synchronous>, transform_indices = @transform_2, window_bounds = array<i64: 10, 256>}, {pipeline_mode = #tpu.pipeline_mode<synchronous>, transform_indices = @transform_3, window_bounds = array<i64: 9, 256, 256>}, {pipeline_mode = #tpu.pipeline_mode<synchronous>, transform_indices = @transform_4, window_bounds = array<i64: 256, 2>}, {pipeline_mode = #tpu.pipeline_mode<synchronous>, transform_indices = @transform_5, window_bounds = array<i64: 1, 2>}, {transform_indices = @transform_6, window_bounds = array<i64: 256, 2>}]} {
    %c0 = arith.constant 0 : index
    %c0_0 = arith.constant 0 : index
    %0 = vector.load %arg1[%c0, %c0_0] : memref<256x3xf32, #tpu.memory_space<vmem>>, vector<256x3xf32>
    %cst = arith.constant 0.000000e+00 : f32
    %1 = vector.broadcast %cst : f32 to vector<256x256xf32>
    %2 = vector.extract_strided_slice %0 {offsets = [0, 0], sizes = [256, 1], strides = [1, 1]} : vector<256x3xf32> to vector<256x1xf32>
    %c0_1 = arith.constant 0 : index
    %c0_2 = arith.constant 0 : index
    %3 = vector.load %arg2[%c0_1, %c0_2] : memref<3x256xf32, #tpu.memory_space<vmem>>, vector<1x256xf32>
    %4 = vector.broadcast %2 : vector<256x1xf32> to vector<256x256xf32>
    %5 = vector.broadcast %3 : vector<1x256xf32> to vector<256x256xf32>
    %6 = arith.mulf %4, %5 : vector<256x256xf32>
    %7 = arith.addf %1, %6 : vector<256x256xf32>
    %8 = vector.extract_strided_slice %0 {offsets = [0, 1], sizes = [256, 1], strides = [1, 1]} : vector<256x3xf32> to vector<256x1xf32>
    %c1 = arith.constant 1 : index
    %c0_3 = arith.constant 0 : index
    %9 = vector.load %arg2[%c1, %c0_3] : memref<3x256xf32, #tpu.memory_space<vmem>>, vector<1x256xf32>
    %10 = vector.broadcast %8 : vector<256x1xf32> to vector<256x256xf32>
    %11 = vector.broadcast %9 : vector<1x256xf32> to vector<256x256xf32>
    %12 = arith.mulf %10, %11 : vector<256x256xf32>
    %13 = arith.addf %7, %12 : vector<256x256xf32>
    %14 = vector.extract_strided_slice %0 {offsets = [0, 2], sizes = [256, 1], strides = [1, 1]} : vector<256x3xf32> to vector<256x1xf32>
    %c2 = arith.constant 2 : index
    %c0_4 = arith.constant 0 : index
    %15 = vector.load %arg2[%c2, %c0_4] : memref<3x256xf32, #tpu.memory_space<vmem>>, vector<1x256xf32>
    %16 = vector.broadcast %14 : vector<256x1xf32> to vector<256x256xf32>
    %17 = vector.broadcast %15 : vector<1x256xf32> to vector<256x256xf32>
    %18 = arith.mulf %16, %17 : vector<256x256xf32>
    %19 = arith.addf %13, %18 : vector<256x256xf32>
    %c0_5 = arith.constant 0 : index
    %c0_6 = arith.constant 0 : index
    %20 = vector.load %arg3[%c0_5, %c0_6] : memref<10x256xf32, #tpu.memory_space<vmem>>, vector<1x256xf32>
    %21 = vector.broadcast %20 : vector<1x256xf32> to vector<256x256xf32>
    %22 = arith.addf %19, %21 : vector<256x256xf32>
    %cst_7 = arith.constant 0.000000e+00 : f32
    %23 = vector.broadcast %cst_7 : f32 to vector<256x256xf32>
    %24 = arith.maximumf %22, %23 : vector<256x256xf32>
    %25 = arith.truncf %24 : vector<256x256xf32> to vector<256x256xbf16>
    %c0_8 = arith.constant 0 : index
    %c0_9 = arith.constant 0 : index
    %c0_10 = arith.constant 0 : index
    %26 = vector.load %arg4[%c0_8, %c0_9, %c0_10] : memref<9x256x256xbf16, #tpu.memory_space<vmem>>, vector<1x256x256xbf16>
    %27 = vector.shape_cast %26 : vector<1x256x256xbf16> to vector<256x256xbf16>
    %cst_11 = arith.constant dense<0.000000e+00> : vector<256x256xf32>
    %28 = tpu.matmul %25, %27, %cst_11 {dimension_numbers = #tpu.dot_dimension_numbers<[1], [0], [0], [1], [0, 0, 1, 1], [], []>} : vector<256x256xbf16>, vector<256x256xbf16>, vector<256x256xf32> -> vector<256x256xf32>
    %c1_12 = arith.constant 1 : index
    %c0_13 = arith.constant 0 : index
    %29 = vector.load %arg3[%c1_12, %c0_13] : memref<10x256xf32, #tpu.memory_space<vmem>>, vector<1x256xf32>
    %30 = vector.broadcast %29 : vector<1x256xf32> to vector<256x256xf32>
    %31 = arith.addf %28, %30 : vector<256x256xf32>
    %cst_14 = arith.constant 0.000000e+00 : f32
    %32 = vector.broadcast %cst_14 : f32 to vector<256x256xf32>
    %33 = arith.maximumf %31, %32 : vector<256x256xf32>
    %34 = arith.truncf %33 : vector<256x256xf32> to vector<256x256xbf16>
    %c1_15 = arith.constant 1 : index
    %c0_16 = arith.constant 0 : index
    %c0_17 = arith.constant 0 : index
    %35 = vector.load %arg4[%c1_15, %c0_16, %c0_17] : memref<9x256x256xbf16, #tpu.memory_space<vmem>>, vector<1x256x256xbf16>
    %36 = vector.shape_cast %35 : vector<1x256x256xbf16> to vector<256x256xbf16>
    %cst_18 = arith.constant dense<0.000000e+00> : vector<256x256xf32>
    %37 = tpu.matmul %34, %36, %cst_18 {dimension_numbers = #tpu.dot_dimension_numbers<[1], [0], [0], [1], [0, 0, 1, 1], [], []>} : vector<256x256xbf16>, vector<256x256xbf16>, vector<256x256xf32> -> vector<256x256xf32>
    %c2_19 = arith.constant 2 : index
    %c0_20 = arith.constant 0 : index
    %38 = vector.load %arg3[%c2_19, %c0_20] : memref<10x256xf32, #tpu.memory_space<vmem>>, vector<1x256xf32>
    %39 = vector.broadcast %38 : vector<1x256xf32> to vector<256x256xf32>
    %40 = arith.addf %37, %39 : vector<256x256xf32>
    %cst_21 = arith.constant 0.000000e+00 : f32
    %41 = vector.broadcast %cst_21 : f32 to vector<256x256xf32>
    %42 = arith.maximumf %40, %41 : vector<256x256xf32>
    %43 = arith.truncf %42 : vector<256x256xf32> to vector<256x256xbf16>
    %c2_22 = arith.constant 2 : index
    %c0_23 = arith.constant 0 : index
    %c0_24 = arith.constant 0 : index
    %44 = vector.load %arg4[%c2_22, %c0_23, %c0_24] : memref<9x256x256xbf16, #tpu.memory_space<vmem>>, vector<1x256x256xbf16>
    %45 = vector.shape_cast %44 : vector<1x256x256xbf16> to vector<256x256xbf16>
    %cst_25 = arith.constant dense<0.000000e+00> : vector<256x256xf32>
    %46 = tpu.matmul %43, %45, %cst_25 {dimension_numbers = #tpu.dot_dimension_numbers<[1], [0], [0], [1], [0, 0, 1, 1], [], []>} : vector<256x256xbf16>, vector<256x256xbf16>, vector<256x256xf32> -> vector<256x256xf32>
    %c3 = arith.constant 3 : index
    %c0_26 = arith.constant 0 : index
    %47 = vector.load %arg3[%c3, %c0_26] : memref<10x256xf32, #tpu.memory_space<vmem>>, vector<1x256xf32>
    %48 = vector.broadcast %47 : vector<1x256xf32> to vector<256x256xf32>
    %49 = arith.addf %46, %48 : vector<256x256xf32>
    %cst_27 = arith.constant 0.000000e+00 : f32
    %50 = vector.broadcast %cst_27 : f32 to vector<256x256xf32>
    %51 = arith.maximumf %49, %50 : vector<256x256xf32>
    %52 = arith.truncf %51 : vector<256x256xf32> to vector<256x256xbf16>
    %c3_28 = arith.constant 3 : index
    %c0_29 = arith.constant 0 : index
    %c0_30 = arith.constant 0 : index
    %53 = vector.load %arg4[%c3_28, %c0_29, %c0_30] : memref<9x256x256xbf16, #tpu.memory_space<vmem>>, vector<1x256x256xbf16>
    %54 = vector.shape_cast %53 : vector<1x256x256xbf16> to vector<256x256xbf16>
    %cst_31 = arith.constant dense<0.000000e+00> : vector<256x256xf32>
    %55 = tpu.matmul %52, %54, %cst_31 {dimension_numbers = #tpu.dot_dimension_numbers<[1], [0], [0], [1], [0, 0, 1, 1], [], []>} : vector<256x256xbf16>, vector<256x256xbf16>, vector<256x256xf32> -> vector<256x256xf32>
    %c4 = arith.constant 4 : index
    %c0_32 = arith.constant 0 : index
    %56 = vector.load %arg3[%c4, %c0_32] : memref<10x256xf32, #tpu.memory_space<vmem>>, vector<1x256xf32>
    %57 = vector.broadcast %56 : vector<1x256xf32> to vector<256x256xf32>
    %58 = arith.addf %55, %57 : vector<256x256xf32>
    %cst_33 = arith.constant 0.000000e+00 : f32
    %59 = vector.broadcast %cst_33 : f32 to vector<256x256xf32>
    %60 = arith.maximumf %58, %59 : vector<256x256xf32>
    %61 = arith.truncf %60 : vector<256x256xf32> to vector<256x256xbf16>
    %c4_34 = arith.constant 4 : index
    %c0_35 = arith.constant 0 : index
    %c0_36 = arith.constant 0 : index
    %62 = vector.load %arg4[%c4_34, %c0_35, %c0_36] : memref<9x256x256xbf16, #tpu.memory_space<vmem>>, vector<1x256x256xbf16>
    %63 = vector.shape_cast %62 : vector<1x256x256xbf16> to vector<256x256xbf16>
    %cst_37 = arith.constant dense<0.000000e+00> : vector<256x256xf32>
    %64 = tpu.matmul %61, %63, %cst_37 {dimension_numbers = #tpu.dot_dimension_numbers<[1], [0], [0], [1], [0, 0, 1, 1], [], []>} : vector<256x256xbf16>, vector<256x256xbf16>, vector<256x256xf32> -> vector<256x256xf32>
    %c5 = arith.constant 5 : index
    %c0_38 = arith.constant 0 : index
    %65 = vector.load %arg3[%c5, %c0_38] : memref<10x256xf32, #tpu.memory_space<vmem>>, vector<1x256xf32>
    %66 = vector.broadcast %65 : vector<1x256xf32> to vector<256x256xf32>
    %67 = arith.addf %64, %66 : vector<256x256xf32>
    %cst_39 = arith.constant 0.000000e+00 : f32
    %68 = vector.broadcast %cst_39 : f32 to vector<256x256xf32>
    %69 = arith.maximumf %67, %68 : vector<256x256xf32>
    %70 = arith.truncf %69 : vector<256x256xf32> to vector<256x256xbf16>
    %c5_40 = arith.constant 5 : index
    %c0_41 = arith.constant 0 : index
    %c0_42 = arith.constant 0 : index
    %71 = vector.load %arg4[%c5_40, %c0_41, %c0_42] : memref<9x256x256xbf16, #tpu.memory_space<vmem>>, vector<1x256x256xbf16>
    %72 = vector.shape_cast %71 : vector<1x256x256xbf16> to vector<256x256xbf16>
    %cst_43 = arith.constant dense<0.000000e+00> : vector<256x256xf32>
    %73 = tpu.matmul %70, %72, %cst_43 {dimension_numbers = #tpu.dot_dimension_numbers<[1], [0], [0], [1], [0, 0, 1, 1], [], []>} : vector<256x256xbf16>, vector<256x256xbf16>, vector<256x256xf32> -> vector<256x256xf32>
    %c6 = arith.constant 6 : index
    %c0_44 = arith.constant 0 : index
    %74 = vector.load %arg3[%c6, %c0_44] : memref<10x256xf32, #tpu.memory_space<vmem>>, vector<1x256xf32>
    %75 = vector.broadcast %74 : vector<1x256xf32> to vector<256x256xf32>
    %76 = arith.addf %73, %75 : vector<256x256xf32>
    %cst_45 = arith.constant 0.000000e+00 : f32
    %77 = vector.broadcast %cst_45 : f32 to vector<256x256xf32>
    %78 = arith.maximumf %76, %77 : vector<256x256xf32>
    %79 = arith.truncf %78 : vector<256x256xf32> to vector<256x256xbf16>
    %c6_46 = arith.constant 6 : index
    %c0_47 = arith.constant 0 : index
    %c0_48 = arith.constant 0 : index
    %80 = vector.load %arg4[%c6_46, %c0_47, %c0_48] : memref<9x256x256xbf16, #tpu.memory_space<vmem>>, vector<1x256x256xbf16>
    %81 = vector.shape_cast %80 : vector<1x256x256xbf16> to vector<256x256xbf16>
    %cst_49 = arith.constant dense<0.000000e+00> : vector<256x256xf32>
    %82 = tpu.matmul %79, %81, %cst_49 {dimension_numbers = #tpu.dot_dimension_numbers<[1], [0], [0], [1], [0, 0, 1, 1], [], []>} : vector<256x256xbf16>, vector<256x256xbf16>, vector<256x256xf32> -> vector<256x256xf32>
    %c7 = arith.constant 7 : index
    %c0_50 = arith.constant 0 : index
    %83 = vector.load %arg3[%c7, %c0_50] : memref<10x256xf32, #tpu.memory_space<vmem>>, vector<1x256xf32>
    %84 = vector.broadcast %83 : vector<1x256xf32> to vector<256x256xf32>
    %85 = arith.addf %82, %84 : vector<256x256xf32>
    %cst_51 = arith.constant 0.000000e+00 : f32
    %86 = vector.broadcast %cst_51 : f32 to vector<256x256xf32>
    %87 = arith.maximumf %85, %86 : vector<256x256xf32>
    %88 = arith.truncf %87 : vector<256x256xf32> to vector<256x256xbf16>
    %c7_52 = arith.constant 7 : index
    %c0_53 = arith.constant 0 : index
    %c0_54 = arith.constant 0 : index
    %89 = vector.load %arg4[%c7_52, %c0_53, %c0_54] : memref<9x256x256xbf16, #tpu.memory_space<vmem>>, vector<1x256x256xbf16>
    %90 = vector.shape_cast %89 : vector<1x256x256xbf16> to vector<256x256xbf16>
    %cst_55 = arith.constant dense<0.000000e+00> : vector<256x256xf32>
    %91 = tpu.matmul %88, %90, %cst_55 {dimension_numbers = #tpu.dot_dimension_numbers<[1], [0], [0], [1], [0, 0, 1, 1], [], []>} : vector<256x256xbf16>, vector<256x256xbf16>, vector<256x256xf32> -> vector<256x256xf32>
    %c8 = arith.constant 8 : index
    %c0_56 = arith.constant 0 : index
    %92 = vector.load %arg3[%c8, %c0_56] : memref<10x256xf32, #tpu.memory_space<vmem>>, vector<1x256xf32>
    %93 = vector.broadcast %92 : vector<1x256xf32> to vector<256x256xf32>
    %94 = arith.addf %91, %93 : vector<256x256xf32>
    %cst_57 = arith.constant 0.000000e+00 : f32
    %95 = vector.broadcast %cst_57 : f32 to vector<256x256xf32>
    %96 = arith.maximumf %94, %95 : vector<256x256xf32>
    %97 = arith.truncf %96 : vector<256x256xf32> to vector<256x256xbf16>
    %c8_58 = arith.constant 8 : index
    %c0_59 = arith.constant 0 : index
    %c0_60 = arith.constant 0 : index
    %98 = vector.load %arg4[%c8_58, %c0_59, %c0_60] : memref<9x256x256xbf16, #tpu.memory_space<vmem>>, vector<1x256x256xbf16>
    %99 = vector.shape_cast %98 : vector<1x256x256xbf16> to vector<256x256xbf16>
    %cst_61 = arith.constant dense<0.000000e+00> : vector<256x256xf32>
    %100 = tpu.matmul %97, %99, %cst_61 {dimension_numbers = #tpu.dot_dimension_numbers<[1], [0], [0], [1], [0, 0, 1, 1], [], []>} : vector<256x256xbf16>, vector<256x256xbf16>, vector<256x256xf32> -> vector<256x256xf32>
    %c9 = arith.constant 9 : index
    %c0_62 = arith.constant 0 : index
    %101 = vector.load %arg3[%c9, %c0_62] : memref<10x256xf32, #tpu.memory_space<vmem>>, vector<1x256xf32>
    %102 = vector.broadcast %101 : vector<1x256xf32> to vector<256x256xf32>
    %103 = arith.addf %100, %102 : vector<256x256xf32>
    %cst_63 = arith.constant 0.000000e+00 : f32
    %104 = vector.broadcast %cst_63 : f32 to vector<256x256xf32>
    %105 = arith.maximumf %103, %104 : vector<256x256xf32>
    %106 = arith.truncf %105 : vector<256x256xf32> to vector<256x256xbf16>
    %c0_64 = arith.constant 0 : index
    %c0_65 = arith.constant 0 : index
    %107 = vector.load %arg5[%c0_64, %c0_65] : memref<256x2xbf16, #tpu.memory_space<vmem>>, vector<256x2xbf16>
    %cst_66 = arith.constant dense<0.000000e+00> : vector<256x2xf32>
    %108 = tpu.matmul %106, %107, %cst_66 {dimension_numbers = #tpu.dot_dimension_numbers<[1], [0], [0], [1], [0, 0, 1, 1], [], []>} : vector<256x256xbf16>, vector<256x2xbf16>, vector<256x2xf32> -> vector<256x2xf32>
    %c0_67 = arith.constant 0 : index
    %c0_68 = arith.constant 0 : index
    %109 = vector.load %arg6[%c0_67, %c0_68] : memref<1x2xf32, #tpu.memory_space<vmem>>, vector<1x2xf32>
    %110 = vector.broadcast %109 : vector<1x2xf32> to vector<256x2xf32>
    %111 = arith.addf %108, %110 : vector<256x2xf32>
    %c0_69 = arith.constant 0 : index
    %c0_70 = arith.constant 0 : index
    %112 = vector.load %arg7[%c0_69, %c0_70] : memref<256x2xf32, #tpu.memory_space<vmem>>, vector<256x2xf32>
    tpu.vector_store %arg7[%c0_69, %c0_70], %111 {strides = array<i32>} : memref<256x2xf32, #tpu.memory_space<vmem>>, vector<256x2xf32>,
    return
  }
  func.func @transform_0(%arg0: i32) -> (i32, i32) {
    %c0_i32 = arith.constant 0 : i32
    %c0_i32_0 = arith.constant 0 : i32
    return %arg0, %c0_i32 : i32, i32
  }
  func.func @transform_1(%arg0: i32) -> (i32, i32) {
    %c0_i32 = arith.constant 0 : i32
    %c0_i32_0 = arith.constant 0 : i32
    %c0_i32_1 = arith.constant 0 : i32
    return %c0_i32, %c0_i32_0 : i32, i32
  }
  func.func @transform_2(%arg0: i32) -> (i32, i32) {
    %c0_i32 = arith.constant 0 : i32
    %c0_i32_0 = arith.constant 0 : i32
    %c0_i32_1 = arith.constant 0 : i32
    return %c0_i32, %c0_i32_0 : i32, i32
  }
  func.func @transform_3(%arg0: i32) -> (i32, i32, i32) {
    %c0_i32 = arith.constant 0 : i32
    %c0_i32_0 = arith.constant 0 : i32
    %c0_i32_1 = arith.constant 0 : i32
    %c0_i32_2 = arith.constant 0 : i32
    return %c0_i32, %c0_i32_0, %c0_i32_1 : i32, i32, i32
  }
  func.func @transform_4(%arg0: i32) -> (i32, i32) {
    %c0_i32 = arith.constant 0 : i32
    %c0_i32_0 = arith.constant 0 : i32
    %c0_i32_1 = arith.constant 0 : i32
    return %c0_i32, %c0_i32_0 : i32, i32
  }
  func.func @transform_5(%arg0: i32) -> (i32, i32) {
    %c0_i32 = arith.constant 0 : i32
    %c0_i32_0 = arith.constant 0 : i32
    %c0_i32_1 = arith.constant 0 : i32
    return %c0_i32, %c0_i32_0 : i32, i32
  }
  func.func @transform_6(%arg0: i32) -> (i32, i32) {
    %c0_i32 = arith.constant 0 : i32
    %c0_i32_0 = arith.constant 0 : i32
    return %arg0, %c0_i32 : i32, i32
  }
}

</mosaic_0001>

<llo_original>
// kernel: tpu_custom_call.1
$region0: #{tpu_custom_call.1}
  #allocation0 [shape = 'u32[]', space=smem, size = 0x4, offset = 0x4, fixed_abs, tag = 'smem constant byte address 0x4 - core index']
  #allocation1 [shape = 'u32[72,128]{1,0:T(1,128)}', space=vmem, size = 0x9000, scoped, tag = 'internal scratch']
  %s0 = inlined_call_operand.vmem [shape: f32[1024,3], index: 0, kind: input, shape index: {}]
  %s1 = inlined_call_operand.hbm [shape: f32[3,256], index: 1, kind: input, shape index: {}]
  %s2 = inlined_call_operand.hbm [shape: f32[10,256], index: 2, kind: input, shape index: {}]
  %s3 = inlined_call_operand.hbm [shape: bf16[9,256,256], index: 3, kind: input, shape index: {}]
  %s4 = inlined_call_operand.vmem [shape: bf16[256,2], index: 4, kind: input, shape index: {}]
  %s5 = inlined_call_operand.hbm [shape: f32[1,2], index: 5, kind: input, shape index: {}]
  %s6 = inlined_call_operand.vmem [shape: f32[1024,2], index: 6, kind: output, shape index: {}]
  %s7 = sld [smem:[#allocation0]]
  $region73: #{tpu_custom_call.1} parent=0
    _
  %s9 = ssub.s32 1, %s7
  %s10 = scalar_select 0, %s9, %s7
  $region1: #{tpu_custom_call.1} parent=0
    #allocation2 [shape = 'u8[4096]{0}', space=vmem, size = 0x1000, scoped, tag = 'input window, operand 1, single buffered']
    #allocation3 [shape = 's32[2]{0}', space=sflag, size = 0x8, scoped, tag = 'scoped memory for tpu_custom_call.1']
    #allocation4 [shape = 'u8[16384]{0}', space=vmem, size = 0x4000, scoped, tag = 'input window, operand 2, single buffered']
    #allocation5 [shape = 's32[1]{0}', space=sflag, size = 0x4, scoped, tag = 'scoped memory for tpu_custom_call.1']
    #allocation6 [shape = 'u8[1179648]{0}', space=vmem, size = 0x120000, scoped, tag = 'input window, operand 3, single buffered']
    #allocation7 [shape = 'u8[512]{0}', space=vmem, size = 0x400, scoped, tag = 'input window, operand 5, single buffered']
    #allocation8 [shape = 's32[1]{0}', space=sflag, size = 0x4, scoped, tag = 'scoped memory for tpu_custom_call.1']
    %11 = vsyncpa [#allocation3], 0
    %12 = vsyncpa [#allocation5], 0
    %13 = vsyncpa [#allocation8], 0
    loop: start=0, step=1, limit=6
    $region2: #{tpu_custom_call.1} parent=1 // loop_pre_header
      _
    $region3: #{tpu_custom_call.1} parent=1 // loop_header
      %s15 = sphi 0, %s19
      %p16 = scmp.ge.s32.totalorder %s15, 6
      %s25 = sphi 0, %s27
      %s28 = sphi 0, %s25
      %s29 = sphi 0, %s28
      %s45 = sphi 0, %s29
      %s49 = sphi 0, %s49
      %s51 = sphi 0, %s49
      %s52 = sphi 0, %s51
      %s66 = sphi 0, %s52
      %s70 = sphi 0, %s70
      %s72 = sphi 0, %s70
      %s73 = sphi 0, %s72
      %s87 = sphi 0, %s73
      %s91 = sphi 0, %s91
      %s93 = sphi 0, %s91
      %s94 = sphi 0, %s93
      %s108 = sphi 0, %s94
      %s112 = sphi 0, %s112
      %s114 = sphi 0, %s112
      %s115 = sphi 0, %s114
      %s129 = sphi 0, %s115
      %s133 = sphi 0, %s133
      %s135 = sphi 0, %s133
      %s136 = sphi 0, %s135
      %s150 = sphi 0, %s136
      %s156 = sphi 0, %s158
      %s159 = sphi 0, %s156
      %s160 = sphi 0, %s159
      %s176 = sphi 0, %s160
    $region4: #{tpu_custom_call.1} parent=1 // loop_header_branch
      %18 = sbr.rel (%p16) target = $region8
    $region5: #{tpu_custom_call.1} parent=1 // loop_body
      %s20 = ssub.s32 %s15, 1
      %s21 = ssub.s32 %s15, 2
      %s22 = sadd.s32 %s15, 1
      %s23 = ssub.s32 %s15, %s22
      %p24 = scmp.eq.s32.totalorder %s23, 0
      %s26 = sadd.s32 %s25, 1
      %s27 = scalar_select %p24, %s25, %s26
      %p30 = pneg %p24
      %p31 = scmp.eq.s32.totalorder %s15, 3
      %p32 = por %p30, %p31
      %p33 = scmp.ne.s32.totalorder %s25, %s28
      %p34 = scmp.eq.s32.totalorder %s15, 0
      %p35 = por %p33, %p34
      %p36 = scmp.ne.s32.totalorder %s25, %s28
      %p37 = scmp.eq.s32.totalorder %s20, 3
      %p38 = por %p36, %p37
      %p39 = scmp.ne.s32.totalorder %s28, %s29
      %p40 = scmp.eq.s32.totalorder %s20, 0
      %p41 = por %p39, %p40
      %p42 = scmp.ne.s32.totalorder %s28, %s29
      %p43 = scmp.eq.s32.totalorder %s21, 3
      %p44 = por %p42, %p43
      %p46 = scmp.ne.s32.totalorder %s29, %s45
      %p47 = scmp.eq.s32.totalorder %s21, 0
      %p48 = por %p46, %p47
      %s50 = sadd.s32 %s49, 1
      %p53 = scmp.eq.s32.totalorder %s15, 3
      %p54 = scmp.ne.s32.totalorder %s49, %s51
      %p55 = scmp.eq.s32.totalorder %s15, 0
      %p56 = por %p54, %p55
      %p57 = scmp.ne.s32.totalorder %s49, %s51
      %p58 = scmp.eq.s32.totalorder %s20, 3
      %p59 = por %p57, %p58
      %p60 = scmp.ne.s32.totalorder %s51, %s52
      %p61 = scmp.eq.s32.totalorder %s20, 0
      %p62 = por %p60, %p61
      %p63 = scmp.ne.s32.totalorder %s51, %s52
      %p64 = scmp.eq.s32.totalorder %s21, 3
      %p65 = por %p63, %p64
      %p67 = scmp.ne.s32.totalorder %s52, %s66
      %p68 = scmp.eq.s32.totalorder %s21, 0
      %p69 = por %p67, %p68
      %s71 = sadd.s32 %s70, 1
      %p74 = scmp.eq.s32.totalorder %s15, 3
      %p75 = scmp.ne.s32.totalorder %s70, %s72
      %p76 = scmp.eq.s32.totalorder %s15, 0
      %p77 = por %p75, %p76
      %p78 = scmp.ne.s32.totalorder %s70, %s72
      %p79 = scmp.eq.s32.totalorder %s20, 3
      %p80 = por %p78, %p79
      %p81 = scmp.ne.s32.totalorder %s72, %s73
      %p82 = scmp.eq.s32.totalorder %s20, 0
      %p83 = por %p81, %p82
      %p84 = scmp.ne.s32.totalorder %s72, %s73
      %p85 = scmp.eq.s32.totalorder %s21, 3
      %p86 = por %p84, %p85
      %p88 = scmp.ne.s32.totalorder %s73, %s87
      %p89 = scmp.eq.s32.totalorder %s21, 0
      %p90 = por %p88, %p89
      %s92 = sadd.s32 %s91, 1
      %p95 = scmp.eq.s32.totalorder %s15, 3
      %p96 = scmp.ne.s32.totalorder %s91, %s93
      %p97 = scmp.eq.s32.totalorder %s15, 0
      %p98 = por %p96, %p97
      %p99 = scmp.ne.s32.totalorder %s91, %s93
      %p100 = scmp.eq.s32.totalorder %s20, 3
      %p101 = por %p99, %p100
      %p102 = scmp.ne.s32.totalorder %s93, %s94
      %p103 = scmp.eq.s32.totalorder %s20, 0
      %p104 = por %p102, %p103
      %p105 = scmp.ne.s32.totalorder %s93, %s94
      %p106 = scmp.eq.s32.totalorder %s21, 3
      %p107 = por %p105, %p106
      %p109 = scmp.ne.s32.totalorder %s94, %s108
      %p110 = scmp.eq.s32.totalorder %s21, 0
      %p111 = por %p109, %p110
      %s113 = sadd.s32 %s112, 1
      %p116 = scmp.eq.s32.totalorder %s15, 3
      %p117 = scmp.ne.s32.totalorder %s112, %s114
      %p118 = scmp.eq.s32.totalorder %s15, 0
      %p119 = por %p117, %p118
      %p120 = scmp.ne.s32.totalorder %s112, %s114
      %p121 = scmp.eq.s32.totalorder %s20, 3
      %p122 = por %p120, %p121
      %p123 = scmp.ne.s32.totalorder %s114, %s115
      %p124 = scmp.eq.s32.totalorder %s20, 0
      %p125 = por %p123, %p124
      %p126 = scmp.ne.s32.totalorder %s114, %s115
      %p127 = scmp.eq.s32.totalorder %s21, 3
      %p128 = por %p126, %p127
      %p130 = scmp.ne.s32.totalorder %s115, %s129
      %p131 = scmp.eq.s32.totalorder %s21, 0
      %p132 = por %p130, %p131
      %s134 = sadd.s32 %s133, 1
      %p137 = scmp.eq.s32.totalorder %s15, 3
      %p138 = scmp.ne.s32.totalorder %s133, %s135
      %p139 = scmp.eq.s32.totalorder %s15, 0
      %p140 = por %p138, %p139
      %p141 = scmp.ne.s32.totalorder %s133, %s135
      %p142 = scmp.eq.s32.totalorder %s20, 3
      %p143 = por %p141, %p142
      %p144 = scmp.ne.s32.totalorder %s135, %s136
      %p145 = scmp.eq.s32.totalorder %s20, 0
      %p146 = por %p144, %p145
      %p147 = scmp.ne.s32.totalorder %s135, %s136
      %p148 = scmp.eq.s32.totalorder %s21, 3
      %p149 = por %p147, %p148
      %p151 = scmp.ne.s32.totalorder %s136, %s150
      %p152 = scmp.eq.s32.totalorder %s21, 0
      %p153 = por %p151, %p152
      %s154 = ssub.s32 %s15, %s22
      %p155 = scmp.eq.s32.totalorder %s154, 0
      %s157 = sadd.s32 %s156, 1
      %s158 = scalar_select %p155, %s156, %s157
      %p161 = pneg %p155
      %p162 = scmp.eq.s32.totalorder %s15, 3
      %p163 = por %p161, %p162
      %p164 = scmp.ne.s32.totalorder %s156, %s159
      %p165 = scmp.eq.s32.totalorder %s15, 0
      %p166 = por %p164, %p165
      %p167 = scmp.ne.s32.totalorder %s156, %s159
      %p168 = scmp.eq.s32.totalorder %s20, 3
      %p169 = por %p167, %p168
      %p170 = scmp.ne.s32.totalorder %s159, %s160
      %p171 = scmp.eq.s32.totalorder %s20, 0
      %p172 = por %p170, %p171
      %p173 = scmp.ne.s32.totalorder %s159, %s160
      %p174 = scmp.eq.s32.totalorder %s21, 3
      %p175 = por %p173, %p174
      %p177 = scmp.ne.s32.totalorder %s160, %s176
      %p178 = scmp.eq.s32.totalorder %s21, 0
      %p179 = por %p177, %p178
      %p180 = scmp.le.s32.totalorder 1, %s15
      %p181 = scmp.lt.s32.totalorder %s15, 5
      %p182 = pnand %p180, %p181
      %p183 = pneg %p182
      // Predicated region
      $region9: #{tpu_custom_call.1} parent=5 // pred_check
        _
      $region10: #{tpu_custom_call.1} parent=5 // pred_check_branch
        %185 = sbr.rel (%p182) target = $region12
      $region11: #{tpu_custom_call.1} parent=5 // pred_region
        %s186 = ssub.s32 %s15, 1
        // Predicated region
        $region13: #{tpu_custom_call.1} parent=11 // pred_check
          %p187 = pneg %p62
        $region14: #{tpu_custom_call.1} parent=11 // pred_check_branch
          %189 = sbr.rel (%p187) target = $region16
        $region15: #{tpu_custom_call.1} parent=11 // pred_region
          %191 = vsyncadd [#allocation3], 0
          %s193 = sshll.u32 %s1, 4
          %s194 = int_to_ptr.hbm [resolvable:$true] %s193
          %s195 = sshll.u32 [#allocation2], 4
          %s196 = int_to_ptr.vmem [resolvable:$true] %s195
          %198 = dma.hbm_to_vmem [thread:$0]  %s194, 128, %s196, [#allocation3]
        $region16: #{tpu_custom_call.1} parent=11 // pred_fallthru
          _
        // Predicated region
        $region17: #{tpu_custom_call.1} parent=11 // pred_check
          %p199 = pneg %p83
        $region18: #{tpu_custom_call.1} parent=11 // pred_check_branch
          %201 = sbr.rel (%p199) target = $region20
        $region19: #{tpu_custom_call.1} parent=11 // pred_region
          %203 = vsyncadd [#allocation5], 0
          %s204 = sshll.u32 %s2, 4
          %s205 = int_to_ptr.hbm [resolvable:$true] %s204
          %s206 = sshll.u32 [#allocation4], 4
          %s207 = int_to_ptr.vmem [resolvable:$true] %s206
          %212 = dma.hbm_to_vmem [thread:$0]  %s205, 512, %s207, [#allocation5], 256, 256, 16
        $region20: #{tpu_custom_call.1} parent=11 // pred_fallthru
          _
        // Predicated region
        $region21: #{tpu_custom_call.1} parent=11 // pred_check
          %p213 = pneg %p104
        $region22: #{tpu_custom_call.1} parent=11 // pred_check_branch
          %215 = sbr.rel (%p213) target = $region24
        $region23: #{tpu_custom_call.1} parent=11 // pred_region
          %217 = vsyncadd [#allocation5], 0
          %s218 = sshll.u32 %s3, 4
          %s219 = int_to_ptr.hbm [resolvable:$true] %s218
          %s220 = sshll.u32 [#allocation6], 4
          %s221 = int_to_ptr.vmem [resolvable:$true] %s220
          %226 = dma.hbm_to_vmem [thread:$0]  %s219, 36864, %s221, [#allocation5], 128, 128, 8
        $region24: #{tpu_custom_call.1} parent=11 // pred_fallthru
          _
        // Predicated region
        $region25: #{tpu_custom_call.1} parent=11 // pred_check
          %p227 = pneg %p125
        $region26: #{tpu_custom_call.1} parent=11 // pred_check_branch
          %229 = sbr.rel (%p227) target = $region28
        $region27: #{tpu_custom_call.1} parent=11 // pred_region
          _
        $region28: #{tpu_custom_call.1} parent=11 // pred_fallthru
          _
        // Predicated region
        $region29: #{tpu_custom_call.1} parent=11 // pred_check
          %p230 = pneg %p146
        $region30: #{tpu_custom_call.1} parent=11 // pred_check_branch
          %232 = sbr.rel (%p230) target = $region32
        $region31: #{tpu_custom_call.1} parent=11 // pred_region
          %234 = vsyncadd [#allocation8], 0
          %s236 = sshll.u32 %s5, 4
          %s237 = int_to_ptr.hbm [resolvable:$true] %s236
          %s238 = sshll.u32 [#allocation7], 4
          %s239 = int_to_ptr.vmem [resolvable:$true] %s238
          %241 = dma.hbm_to_vmem [thread:$0]  %s237, 16, %s239, [#allocation8]
        $region32: #{tpu_custom_call.1} parent=11 // pred_fallthru
          _
      $region12: #{tpu_custom_call.1} parent=5 // pred_fallthru
        _
      %p242 = scmp.lt.s32.totalorder %s15, 4
      // Predicated region
      $region33: #{tpu_custom_call.1} parent=5 // pred_check
        %p243 = pneg %p242
      $region34: #{tpu_custom_call.1} parent=5 // pred_check_branch
        %245 = sbr.rel (%p243) target = $region36
      $region35: #{tpu_custom_call.1} parent=5 // pred_region
        // Predicated region
        $region37: #{tpu_custom_call.1} parent=35 // pred_check
          %p246 = pneg %p35
        $region38: #{tpu_custom_call.1} parent=35 // pred_check_branch
          %248 = sbr.rel (%p246) target = $region40
        $region39: #{tpu_custom_call.1} parent=35 // pred_region
          %s249 = smul.u32 32, %s15
          %p250 = scmp.lt.s32.totalorder %s249, 127
          %s251 = scalar_select %p250, %s249, 127
          %s252 = smul.addr %s251, 8
          %s253 = scalar_lea.vmem %s0, %s252
          %s254 = smul.u32 32, %s15
        $region40: #{tpu_custom_call.1} parent=35 // pred_fallthru
          _
      $region36: #{tpu_custom_call.1} parent=5 // pred_fallthru
        _
      %p255 = scmp.le.s32.totalorder 1, %s15
      %p256 = scmp.lt.s32.totalorder %s15, 5
      %p257 = pnand %p255, %p256
      %p258 = pneg %p257
      // Predicated region
      $region41: #{tpu_custom_call.1} parent=5 // pred_check
        _
      $region42: #{tpu_custom_call.1} parent=5 // pred_check_branch
        %260 = sbr.rel (%p257) target = $region44
      $region43: #{tpu_custom_call.1} parent=5 // pred_region
        %s261 = ssub.s32 %s15, 1
        // Predicated region
        $region45: #{tpu_custom_call.1} parent=43 // pred_check
          %p262 = pneg %p62
        $region46: #{tpu_custom_call.1} parent=43 // pred_check_branch
          %264 = sbr.rel (%p262) target = $region48
        $region47: #{tpu_custom_call.1} parent=43 // pred_region
          %266 = dma.done [#allocation3], 128
        $region48: #{tpu_custom_call.1} parent=43 // pred_fallthru
          _
        // Predicated region
        $region49: #{tpu_custom_call.1} parent=43 // pred_check
          %p267 = pneg %p83
        $region50: #{tpu_custom_call.1} parent=43 // pred_check_branch
          %269 = sbr.rel (%p267) target = $region52
        $region51: #{tpu_custom_call.1} parent=43 // pred_region
          %271 = dma.done [#allocation5], 512
        $region52: #{tpu_custom_call.1} parent=43 // pred_fallthru
          _
        // Predicated region
        $region53: #{tpu_custom_call.1} parent=43 // pred_check
          %p272 = pneg %p104
        $region54: #{tpu_custom_call.1} parent=43 // pred_check_branch
          %274 = sbr.rel (%p272) target = $region56
        $region55: #{tpu_custom_call.1} parent=43 // pred_region
          %276 = dma.done [#allocation5], 36864
        $region56: #{tpu_custom_call.1} parent=43 // pred_fallthru
          _
        // Predicated region
        $region57: #{tpu_custom_call.1} parent=43 // pred_check
          %p277 = pneg %p146
        $region58: #{tpu_custom_call.1} parent=43 // pred_check_branch
          %279 = sbr.rel (%p277) target = $region60
        $region59: #{tpu_custom_call.1} parent=43 // pred_region
          %281 = dma.done [#allocation8], 16
        $region60: #{tpu_custom_call.1} parent=43 // pred_fallthru
          _
        %s282 = smul.u32 32, %s20
        %p283 = scmp.lt.s32.totalorder %s282, 127
        %s284 = scalar_select %p283, %s282, 127
        %s285 = smul.addr %s284, 8
        %s286 = scalar_lea.vmem %s0, %s285
        %p287 = pneg %p41
        %p288 = pneg %p38
        %p289 = pneg %p62
        %p290 = pneg %p59
        %p291 = pneg %p83
        %p292 = pneg %p80
        %p293 = pneg %p104
        %p294 = pneg %p101
        %p295 = pneg %p125
        %p296 = pneg %p122
        %p297 = pneg %p146
        %p298 = pneg %p143
        %p299 = pneg %p172
        %p300 = pneg %p169
        %s301 = smul.u32 32, %s20
        %p302 = scmp.lt.s32.totalorder %s301, 127
        %s303 = scalar_select %p302, %s301, 127
        %s304 = smul.addr %s303, 8
        %s305 = scalar_lea.vmem %s6, %s304
        %s306 = smul.u32 32, %s20
        %p307 = scmp.lt.s32.totalorder %s306, 127
        %s308 = scalar_select %p307, %s306, 127
        %s309 = smul.addr %s308, 8
        %s310 = scalar_lea.vmem %s0, %s309
        %s311 = smul.u32 32, %s20
        %s312 = smul.u32 32, %s20
        %p313 = scmp.lt.s32.totalorder %s312, 127
        %s314 = scalar_select %p313, %s312, 127
        %s315 = smul.addr %s314, 8
        %s316 = scalar_lea.vmem %s6, %s315
        %s317 = smul.u32 32, %s20
        %v318 = vld [vmem:[%s310] sm:$0xff]
        %v319 = vld [vmem:[%s310 + $0x8] sm:$0xff]
        %v320 = vld [vmem:[%s310 + $0x10] sm:$0xff]
        %v321 = vld [vmem:[%s310 + $0x18] sm:$0xff]
        %v322 = vld [vmem:[%s310 + $0x20] sm:$0xff]
        %v323 = vld [vmem:[%s310 + $0x28] sm:$0xff]
        %v324 = vld [vmem:[%s310 + $0x30] sm:$0xff]
        %v325 = vld [vmem:[%s310 + $0x38] sm:$0xff]
        %v326 = vld [vmem:[%s310 + $0x40] sm:$0xff]
        %v327 = vld [vmem:[%s310 + $0x48] sm:$0xff]
        %v328 = vld [vmem:[%s310 + $0x50] sm:$0xff]
        %v329 = vld [vmem:[%s310 + $0x58] sm:$0xff]
        %v330 = vld [vmem:[%s310 + $0x60] sm:$0xff]
        %v331 = vld [vmem:[%s310 + $0x68] sm:$0xff]
        %v332 = vld [vmem:[%s310 + $0x70] sm:$0xff]
        %v333 = vld [vmem:[%s310 + $0x78] sm:$0xff]
        %v334 = vld [vmem:[%s310 + $0x80] sm:$0xff]
        %v335 = vld [vmem:[%s310 + $0x88] sm:$0xff]
        %v336 = vld [vmem:[%s310 + $0x90] sm:$0xff]
        %v337 = vld [vmem:[%s310 + $0x98] sm:$0xff]
        %v338 = vld [vmem:[%s310 + $0xa0] sm:$0xff]
        %v339 = vld [vmem:[%s310 + $0xa8] sm:$0xff]
        %v340 = vld [vmem:[%s310 + $0xb0] sm:$0xff]
        %v341 = vld [vmem:[%s310 + $0xb8] sm:$0xff]
        %v342 = vld [vmem:[%s310 + $0xc0] sm:$0xff]
        %v343 = vld [vmem:[%s310 + $0xc8] sm:$0xff]
        %v344 = vld [vmem:[%s310 + $0xd0] sm:$0xff]
        %v345 = vld [vmem:[%s310 + $0xd8] sm:$0xff]
        %v346 = vld [vmem:[%s310 + $0xe0] sm:$0xff]
        %v347 = vld [vmem:[%s310 + $0xe8] sm:$0xff]
        %v348 = vld [vmem:[%s310 + $0xf0] sm:$0xff]
        %v349 = vld [vmem:[%s310 + $0xf8] sm:$0xff]
        %v350 = vld [vmem:[#allocation2] ss:$4 sm:$0x3]
        %352 = vset.pattern.permute.xlu0 0
        %353 = vperm.xlu0 %352, %v318
        %v354 = vpop.permute.xlu0 %353
        %357 = vset.pattern.permute.xlu0 0
        %358 = vperm.xlu0 %357, %v319
        %v359 = vpop.permute.xlu0 %358
        %362 = vset.pattern.permute.xlu0 0
        %363 = vperm.xlu0 %362, %v320
        %v364 = vpop.permute.xlu0 %363
        %367 = vset.pattern.permute.xlu0 0
        %368 = vperm.xlu0 %367, %v321
        %v369 = vpop.permute.xlu0 %368
        %372 = vset.pattern.permute.xlu0 0
        %373 = vperm.xlu0 %372, %v322
        %v374 = vpop.permute.xlu0 %373
        %377 = vset.pattern.permute.xlu0 0
        %378 = vperm.xlu0 %377, %v323
        %v379 = vpop.permute.xlu0 %378
        %382 = vset.pattern.permute.xlu0 0
        %383 = vperm.xlu0 %382, %v324
        %v384 = vpop.permute.xlu0 %383
        %387 = vset.pattern.permute.xlu0 0
        %388 = vperm.xlu0 %387, %v325
        %v389 = vpop.permute.xlu0 %388
        %392 = vset.pattern.permute.xlu0 0
        %393 = vperm.xlu0 %392, %v326
        %v394 = vpop.permute.xlu0 %393
        %397 = vset.pattern.permute.xlu0 0
        %398 = vperm.xlu0 %397, %v327
        %v399 = vpop.permute.xlu0 %398
        %402 = vset.pattern.permute.xlu0 0
        %403 = vperm.xlu0 %402, %v328
        %v404 = vpop.permute.xlu0 %403
        %407 = vset.pattern.permute.xlu0 0
        %408 = vperm.xlu0 %407, %v329
        %v409 = vpop.permute.xlu0 %408
        %412 = vset.pattern.permute.xlu0 0
        %413 = vperm.xlu0 %412, %v330
        %v414 = vpop.permute.xlu0 %413
        %417 = vset.pattern.permute.xlu0 0
        %418 = vperm.xlu0 %417, %v331
        %v419 = vpop.permute.xlu0 %418
        %422 = vset.pattern.permute.xlu0 0
        %423 = vperm.xlu0 %422, %v332
        %v424 = vpop.permute.xlu0 %423
        %427 = vset.pattern.permute.xlu0 0
        %428 = vperm.xlu0 %427, %v333
        %v429 = vpop.permute.xlu0 %428
        %432 = vset.pattern.permute.xlu0 0
        %433 = vperm.xlu0 %432, %v334
        %v434 = vpop.permute.xlu0 %433
        %437 = vset.pattern.permute.xlu0 0
        %438 = vperm.xlu0 %437, %v335
        %v439 = vpop.permute.xlu0 %438
        %442 = vset.pattern.permute.xlu0 0
        %443 = vperm.xlu0 %442, %v336
        %v444 = vpop.permute.xlu0 %443
        %447 = vset.pattern.permute.xlu0 0
        %448 = vperm.xlu0 %447, %v337
        %v449 = vpop.permute.xlu0 %448
        %452 = vset.pattern.permute.xlu0 0
        %453 = vperm.xlu0 %452, %v338
        %v454 = vpop.permute.xlu0 %453
        %457 = vset.pattern.permute.xlu0 0
        %458 = vperm.xlu0 %457, %v339
        %v459 = vpop.permute.xlu0 %458
        %462 = vset.pattern.permute.xlu0 0
        %463 = vperm.xlu0 %462, %v340
        %v464 = vpop.permute.xlu0 %463
        %467 = vset.pattern.permute.xlu0 0
        %468 = vperm.xlu0 %467, %v341
        %v469 = vpop.permute.xlu0 %468
        %472 = vset.pattern.permute.xlu0 0
        %473 = vperm.xlu0 %472, %v342
        %v474 = vpop.permute.xlu0 %473
        %477 = vset.pattern.permute.xlu0 0
        %478 = vperm.xlu0 %477, %v343
        %v479 = vpop.permute.xlu0 %478
        %482 = vset.pattern.permute.xlu0 0
        %483 = vperm.xlu0 %482, %v344
        %v484 = vpop.permute.xlu0 %483
        %487 = vset.pattern.permute.xlu0 0
        %488 = vperm.xlu0 %487, %v345
        %v489 = vpop.permute.xlu0 %488
        %492 = vset.pattern.permute.xlu0 0
        %493 = vperm.xlu0 %492, %v346
        %v494 = vpop.permute.xlu0 %493
        %497 = vset.pattern.permute.xlu0 0
        %498 = vperm.xlu0 %497, %v347
        %v499 = vpop.permute.xlu0 %498
        %502 = vset.pattern.permute.xlu0 0
        %503 = vperm.xlu0 %502, %v348
        %v504 = vpop.permute.xlu0 %503
        %507 = vset.pattern.permute.xlu0 0
        %508 = vperm.xlu0 %507, %v349
        %v509 = vpop.permute.xlu0 %508
        %v512 = vperm.slane %v350, 0
        %v513 = vperm.slane %v350, 1
        %v516 = vmul.f32 %v354, %v512
        %v517 = vmul.f32 %v354, %v513
        %v518 = vmul.f32 %v359, %v512
        %v519 = vmul.f32 %v359, %v513
        %v520 = vmul.f32 %v364, %v512
        %v521 = vmul.f32 %v364, %v513
        %v522 = vmul.f32 %v369, %v512
        %v523 = vmul.f32 %v369, %v513
        %v524 = vmul.f32 %v374, %v512
        %v525 = vmul.f32 %v374, %v513
        %v526 = vmul.f32 %v379, %v512
        %v527 = vmul.f32 %v379, %v513
        %v528 = vmul.f32 %v384, %v512
        %v529 = vmul.f32 %v384, %v513
        %v530 = vmul.f32 %v389, %v512
        %v531 = vmul.f32 %v389, %v513
        %v532 = vmul.f32 %v394, %v512
        %v533 = vmul.f32 %v394, %v513
        %v534 = vmul.f32 %v399, %v512
        %v535 = vmul.f32 %v399, %v513
        %v536 = vmul.f32 %v404, %v512
        %v537 = vmul.f32 %v404, %v513
        %v538 = vmul.f32 %v409, %v512
        %v539 = vmul.f32 %v409, %v513
        %v540 = vmul.f32 %v414, %v512
        %v541 = vmul.f32 %v414, %v513
        %v542 = vmul.f32 %v419, %v512
        %v543 = vmul.f32 %v419, %v513
        %v544 = vmul.f32 %v424, %v512
        %v545 = vmul.f32 %v424, %v513
        %v546 = vmul.f32 %v429, %v512
        %v547 = vmul.f32 %v429, %v513
        %v548 = vmul.f32 %v434, %v512
        %v549 = vmul.f32 %v434, %v513
        %v550 = vmul.f32 %v439, %v512
        %v551 = vmul.f32 %v439, %v513
        %v552 = vmul.f32 %v444, %v512
        %v553 = vmul.f32 %v444, %v513
        %v554 = vmul.f32 %v449, %v512
        %v555 = vmul.f32 %v449, %v513
        %v556 = vmul.f32 %v454, %v512
        %v557 = vmul.f32 %v454, %v513
        %v558 = vmul.f32 %v459, %v512
        %v559 = vmul.f32 %v459, %v513
        %v560 = vmul.f32 %v464, %v512
        %v561 = vmul.f32 %v464, %v513
        %v562 = vmul.f32 %v469, %v512
        %v563 = vmul.f32 %v469, %v513
        %v564 = vmul.f32 %v474, %v512
        %v565 = vmul.f32 %v474, %v513
        %v566 = vmul.f32 %v479, %v512
        %v567 = vmul.f32 %v479, %v513
        %v568 = vmul.f32 %v484, %v512
        %v569 = vmul.f32 %v484, %v513
        %v570 = vmul.f32 %v489, %v512
        %v571 = vmul.f32 %v489, %v513
        %v572 = vmul.f32 %v494, %v512
        %v573 = vmul.f32 %v494, %v513
        %v574 = vmul.f32 %v499, %v512
        %v575 = vmul.f32 %v499, %v513
        %v576 = vmul.f32 %v504, %v512
        %v577 = vmul.f32 %v504, %v513
        %v578 = vmul.f32 %v509, %v512
        %v579 = vmul.f32 %v509, %v513
        %v580 = vadd.f32 %v516, 0.0
        %v581 = vadd.f32 %v517, 0.0
        %v582 = vadd.f32 %v518, 0.0
        %v583 = vadd.f32 %v519, 0.0
        %v584 = vadd.f32 %v520, 0.0
        %v585 = vadd.f32 %v521, 0.0
        %v586 = vadd.f32 %v522, 0.0
        %v587 = vadd.f32 %v523, 0.0
        %v588 = vadd.f32 %v524, 0.0
        %v589 = vadd.f32 %v525, 0.0
        %v590 = vadd.f32 %v526, 0.0
        %v591 = vadd.f32 %v527, 0.0
        %v592 = vadd.f32 %v528, 0.0
        %v593 = vadd.f32 %v529, 0.0
        %v594 = vadd.f32 %v530, 0.0
        %v595 = vadd.f32 %v531, 0.0
        %v596 = vadd.f32 %v532, 0.0
        %v597 = vadd.f32 %v533, 0.0
        %v598 = vadd.f32 %v534, 0.0
        %v599 = vadd.f32 %v535, 0.0
        %v600 = vadd.f32 %v536, 0.0
        %v601 = vadd.f32 %v537, 0.0
        %v602 = vadd.f32 %v538, 0.0
        %v603 = vadd.f32 %v539, 0.0
        %v604 = vadd.f32 %v540, 0.0
        %v605 = vadd.f32 %v541, 0.0
        %v606 = vadd.f32 %v542, 0.0
        %v607 = vadd.f32 %v543, 0.0
        %v608 = vadd.f32 %v544, 0.0
        %v609 = vadd.f32 %v545, 0.0
        %v610 = vadd.f32 %v546, 0.0
        %v611 = vadd.f32 %v547, 0.0
        %v612 = vadd.f32 %v548, 0.0
        %v613 = vadd.f32 %v549, 0.0
        %v614 = vadd.f32 %v550, 0.0
        %v615 = vadd.f32 %v551, 0.0
        %v616 = vadd.f32 %v552, 0.0
        %v617 = vadd.f32 %v553, 0.0
        %v618 = vadd.f32 %v554, 0.0
        %v619 = vadd.f32 %v555, 0.0
        %v620 = vadd.f32 %v556, 0.0
        %v621 = vadd.f32 %v557, 0.0
        %v622 = vadd.f32 %v558, 0.0
        %v623 = vadd.f32 %v559, 0.0
        %v624 = vadd.f32 %v560, 0.0
        %v625 = vadd.f32 %v561, 0.0
        %v626 = vadd.f32 %v562, 0.0
        %v627 = vadd.f32 %v563, 0.0
        %v628 = vadd.f32 %v564, 0.0
        %v629 = vadd.f32 %v565, 0.0
        %v630 = vadd.f32 %v566, 0.0
        %v631 = vadd.f32 %v567, 0.0
        %v632 = vadd.f32 %v568, 0.0
        %v633 = vadd.f32 %v569, 0.0
        %v634 = vadd.f32 %v570, 0.0
        %v635 = vadd.f32 %v571, 0.0
        %v636 = vadd.f32 %v572, 0.0
        %v637 = vadd.f32 %v573, 0.0
        %v638 = vadd.f32 %v574, 0.0
        %v639 = vadd.f32 %v575, 0.0
        %v640 = vadd.f32 %v576, 0.0
        %v641 = vadd.f32 %v577, 0.0
        %v642 = vadd.f32 %v578, 0.0
        %v643 = vadd.f32 %v579, 0.0
        %s644 = scalar_lea.vmem [#allocation2], 1
        %v645 = vld [vmem:[%s644] ss:$4 sm:$0x3]
        %646 = vset.pattern.permute.xlu0 1
        %647 = vperm.xlu0 %646, %v318
        %v648 = vpop.permute.xlu0 %647
        %650 = vset.pattern.permute.xlu0 1
        %651 = vperm.xlu0 %650, %v319
        %v652 = vpop.permute.xlu0 %651
        %654 = vset.pattern.permute.xlu0 1
        %655 = vperm.xlu0 %654, %v320
        %v656 = vpop.permute.xlu0 %655
        %658 = vset.pattern.permute.xlu0 1
        %659 = vperm.xlu0 %658, %v321
        %v660 = vpop.permute.xlu0 %659
        %662 = vset.pattern.permute.xlu0 1
        %663 = vperm.xlu0 %662, %v322
        %v664 = vpop.permute.xlu0 %663
        %666 = vset.pattern.permute.xlu0 1
        %667 = vperm.xlu0 %666, %v323
        %v668 = vpop.permute.xlu0 %667
        %670 = vset.pattern.permute.xlu0 1
        %671 = vperm.xlu0 %670, %v324
        %v672 = vpop.permute.xlu0 %671
        %674 = vset.pattern.permute.xlu0 1
        %675 = vperm.xlu0 %674, %v325
        %v676 = vpop.permute.xlu0 %675
        %678 = vset.pattern.permute.xlu0 1
        %679 = vperm.xlu0 %678, %v326
        %v680 = vpop.permute.xlu0 %679
        %682 = vset.pattern.permute.xlu0 1
        %683 = vperm.xlu0 %682, %v327
        %v684 = vpop.permute.xlu0 %683
        %686 = vset.pattern.permute.xlu0 1
        %687 = vperm.xlu0 %686, %v328
        %v688 = vpop.permute.xlu0 %687
        %690 = vset.pattern.permute.xlu0 1
        %691 = vperm.xlu0 %690, %v329
        %v692 = vpop.permute.xlu0 %691
        %694 = vset.pattern.permute.xlu0 1
        %695 = vperm.xlu0 %694, %v330
        %v696 = vpop.permute.xlu0 %695
        %698 = vset.pattern.permute.xlu0 1
        %699 = vperm.xlu0 %698, %v331
        %v700 = vpop.permute.xlu0 %699
        %702 = vset.pattern.permute.xlu0 1
        %703 = vperm.xlu0 %702, %v332
        %v704 = vpop.permute.xlu0 %703
        %706 = vset.pattern.permute.xlu0 1
        %707 = vperm.xlu0 %706, %v333
        %v708 = vpop.permute.xlu0 %707
        %710 = vset.pattern.permute.xlu0 1
        %711 = vperm.xlu0 %710, %v334
        %v712 = vpop.permute.xlu0 %711
        %714 = vset.pattern.permute.xlu0 1
        %715 = vperm.xlu0 %714, %v335
        %v716 = vpop.permute.xlu0 %715
        %718 = vset.pattern.permute.xlu0 1
        %719 = vperm.xlu0 %718, %v336
        %v720 = vpop.permute.xlu0 %719
        %722 = vset.pattern.permute.xlu0 1
        %723 = vperm.xlu0 %722, %v337
        %v724 = vpop.permute.xlu0 %723
        %726 = vset.pattern.permute.xlu0 1
        %727 = vperm.xlu0 %726, %v338
        %v728 = vpop.permute.xlu0 %727
        %730 = vset.pattern.permute.xlu0 1
        %731 = vperm.xlu0 %730, %v339
        %v732 = vpop.permute.xlu0 %731
        %734 = vset.pattern.permute.xlu0 1
        %735 = vperm.xlu0 %734, %v340
        %v736 = vpop.permute.xlu0 %735
        %738 = vset.pattern.permute.xlu0 1
        %739 = vperm.xlu0 %738, %v341
        %v740 = vpop.permute.xlu0 %739
        %742 = vset.pattern.permute.xlu0 1
        %743 = vperm.xlu0 %742, %v342
        %v744 = vpop.permute.xlu0 %743
        %746 = vset.pattern.permute.xlu0 1
        %747 = vperm.xlu0 %746, %v343
        %v748 = vpop.permute.xlu0 %747
        %750 = vset.pattern.permute.xlu0 1
        %751 = vperm.xlu0 %750, %v344
        %v752 = vpop.permute.xlu0 %751
        %754 = vset.pattern.permute.xlu0 1
        %755 = vperm.xlu0 %754, %v345
        %v756 = vpop.permute.xlu0 %755
        %758 = vset.pattern.permute.xlu0 1
        %759 = vperm.xlu0 %758, %v346
        %v760 = vpop.permute.xlu0 %759
        %762 = vset.pattern.permute.xlu0 1
        %763 = vperm.xlu0 %762, %v347
        %v764 = vpop.permute.xlu0 %763
        %766 = vset.pattern.permute.xlu0 1
        %767 = vperm.xlu0 %766, %v348
        %v768 = vpop.permute.xlu0 %767
        %770 = vset.pattern.permute.xlu0 1
        %771 = vperm.xlu0 %770, %v349
        %v772 = vpop.permute.xlu0 %771
        %v775 = vperm.slane %v645, 0
        %v776 = vperm.slane %v645, 1
        %v779 = vmul.f32 %v648, %v775
        %v780 = vmul.f32 %v648, %v776
        %v781 = vmul.f32 %v652, %v775
        %v782 = vmul.f32 %v652, %v776
        %v783 = vmul.f32 %v656, %v775
        %v784 = vmul.f32 %v656, %v776
        %v785 = vmul.f32 %v660, %v775
        %v786 = vmul.f32 %v660, %v776
        %v787 = vmul.f32 %v664, %v775
        %v788 = vmul.f32 %v664, %v776
        %v789 = vmul.f32 %v668, %v775
        %v790 = vmul.f32 %v668, %v776
        %v791 = vmul.f32 %v672, %v775
        %v792 = vmul.f32 %v672, %v776
        %v793 = vmul.f32 %v676, %v775
        %v794 = vmul.f32 %v676, %v776
        %v795 = vmul.f32 %v680, %v775
        %v796 = vmul.f32 %v680, %v776
        %v797 = vmul.f32 %v684, %v775
        %v798 = vmul.f32 %v684, %v776
        %v799 = vmul.f32 %v688, %v775
        %v800 = vmul.f32 %v688, %v776
        %v801 = vmul.f32 %v692, %v775
        %v802 = vmul.f32 %v692, %v776
        %v803 = vmul.f32 %v696, %v775
        %v804 = vmul.f32 %v696, %v776
        %v805 = vmul.f32 %v700, %v775
        %v806 = vmul.f32 %v700, %v776
        %v807 = vmul.f32 %v704, %v775
        %v808 = vmul.f32 %v704, %v776
        %v809 = vmul.f32 %v708, %v775
        %v810 = vmul.f32 %v708, %v776
        %v811 = vmul.f32 %v712, %v775
        %v812 = vmul.f32 %v712, %v776
        %v813 = vmul.f32 %v716, %v775
        %v814 = vmul.f32 %v716, %v776
        %v815 = vmul.f32 %v720, %v775
        %v816 = vmul.f32 %v720, %v776
        %v817 = vmul.f32 %v724, %v775
        %v818 = vmul.f32 %v724, %v776
        %v819 = vmul.f32 %v728, %v775
        %v820 = vmul.f32 %v728, %v776
        %v821 = vmul.f32 %v732, %v775
        %v822 = vmul.f32 %v732, %v776
        %v823 = vmul.f32 %v736, %v775
        %v824 = vmul.f32 %v736, %v776
        %v825 = vmul.f32 %v740, %v775
        %v826 = vmul.f32 %v740, %v776
        %v827 = vmul.f32 %v744, %v775
        %v828 = vmul.f32 %v744, %v776
        %v829 = vmul.f32 %v748, %v775
        %v830 = vmul.f32 %v748, %v776
        %v831 = vmul.f32 %v752, %v775
        %v832 = vmul.f32 %v752, %v776
        %v833 = vmul.f32 %v756, %v775
        %v834 = vmul.f32 %v756, %v776
        %v835 = vmul.f32 %v760, %v775
        %v836 = vmul.f32 %v760, %v776
        %v837 = vmul.f32 %v764, %v775
        %v838 = vmul.f32 %v764, %v776
        %v839 = vmul.f32 %v768, %v775
        %v840 = vmul.f32 %v768, %v776
        %v841 = vmul.f32 %v772, %v775
        %v842 = vmul.f32 %v772, %v776
        %v843 = vadd.f32 %v580, %v779
        %v844 = vadd.f32 %v581, %v780
        %v845 = vadd.f32 %v582, %v781
        %v846 = vadd.f32 %v583, %v782
        %v847 = vadd.f32 %v584, %v783
        %v848 = vadd.f32 %v585, %v784
        %v849 = vadd.f32 %v586, %v785
        %v850 = vadd.f32 %v587, %v786
        %v851 = vadd.f32 %v588, %v787
        %v852 = vadd.f32 %v589, %v788
        %v853 = vadd.f32 %v590, %v789
        %v854 = vadd.f32 %v591, %v790
        %v855 = vadd.f32 %v592, %v791
        %v856 = vadd.f32 %v593, %v792
        %v857 = vadd.f32 %v594, %v793
        %v858 = vadd.f32 %v595, %v794
        %v859 = vadd.f32 %v596, %v795
        %v860 = vadd.f32 %v597, %v796
        %v861 = vadd.f32 %v598, %v797
        %v862 = vadd.f32 %v599, %v798
        %v863 = vadd.f32 %v600, %v799
        %v864 = vadd.f32 %v601, %v800
        %v865 = vadd.f32 %v602, %v801
        %v866 = vadd.f32 %v603, %v802
        %v867 = vadd.f32 %v604, %v803
        %v868 = vadd.f32 %v605, %v804
        %v869 = vadd.f32 %v606, %v805
        %v870 = vadd.f32 %v607, %v806
        %v871 = vadd.f32 %v608, %v807
        %v872 = vadd.f32 %v609, %v808
        %v873 = vadd.f32 %v610, %v809
        %v874 = vadd.f32 %v611, %v810
        %v875 = vadd.f32 %v612, %v811
        %v876 = vadd.f32 %v613, %v812
        %v877 = vadd.f32 %v614, %v813
        %v878 = vadd.f32 %v615, %v814
        %v879 = vadd.f32 %v616, %v815
        %v880 = vadd.f32 %v617, %v816
        %v881 = vadd.f32 %v618, %v817
        %v882 = vadd.f32 %v619, %v818
        %v883 = vadd.f32 %v620, %v819
        %v884 = vadd.f32 %v621, %v820
        %v885 = vadd.f32 %v622, %v821
        %v886 = vadd.f32 %v623, %v822
        %v887 = vadd.f32 %v624, %v823
        %v888 = vadd.f32 %v625, %v824
        %v889 = vadd.f32 %v626, %v825
        %v890 = vadd.f32 %v627, %v826
        %v891 = vadd.f32 %v628, %v827
        %v892 = vadd.f32 %v629, %v828
        %v893 = vadd.f32 %v630, %v829
        %v894 = vadd.f32 %v631, %v830
        %v895 = vadd.f32 %v632, %v831
        %v896 = vadd.f32 %v633, %v832
        %v897 = vadd.f32 %v634, %v833
        %v898 = vadd.f32 %v635, %v834
        %v899 = vadd.f32 %v636, %v835
        %v900 = vadd.f32 %v637, %v836
        %v901 = vadd.f32 %v638, %v837
        %v902 = vadd.f32 %v639, %v838
        %v903 = vadd.f32 %v640, %v839
        %v904 = vadd.f32 %v641, %v840
        %v905 = vadd.f32 %v642, %v841
        %v906 = vadd.f32 %v643, %v842
        %s907 = scalar_lea.vmem [#allocation2], 2
        %v908 = vld [vmem:[%s907] ss:$4 sm:$0x3]
        %909 = vset.pattern.permute.xlu0 2
        %910 = vperm.xlu0 %909, %v318
        %v911 = vpop.permute.xlu0 %910
        %913 = vset.pattern.permute.xlu0 2
        %914 = vperm.xlu0 %913, %v319
        %v915 = vpop.permute.xlu0 %914
        %917 = vset.pattern.permute.xlu0 2
        %918 = vperm.xlu0 %917, %v320
        %v919 = vpop.permute.xlu0 %918
        %921 = vset.pattern.permute.xlu0 2
        %922 = vperm.xlu0 %921, %v321
        %v923 = vpop.permute.xlu0 %922
        %925 = vset.pattern.permute.xlu0 2
        %926 = vperm.xlu0 %925, %v322
        %v927 = vpop.permute.xlu0 %926
        %929 = vset.pattern.permute.xlu0 2
        %930 = vperm.xlu0 %929, %v323
        %v931 = vpop.permute.xlu0 %930
        %933 = vset.pattern.permute.xlu0 2
        %934 = vperm.xlu0 %933, %v324
        %v935 = vpop.permute.xlu0 %934
        %937 = vset.pattern.permute.xlu0 2
        %938 = vperm.xlu0 %937, %v325
        %v939 = vpop.permute.xlu0 %938
        %941 = vset.pattern.permute.xlu0 2
        %942 = vperm.xlu0 %941, %v326
        %v943 = vpop.permute.xlu0 %942
        %945 = vset.pattern.permute.xlu0 2
        %946 = vperm.xlu0 %945, %v327
        %v947 = vpop.permute.xlu0 %946
        %949 = vset.pattern.permute.xlu0 2
        %950 = vperm.xlu0 %949, %v328
        %v951 = vpop.permute.xlu0 %950
        %953 = vset.pattern.permute.xlu0 2
        %954 = vperm.xlu0 %953, %v329
        %v955 = vpop.permute.xlu0 %954
        %957 = vset.pattern.permute.xlu0 2
        %958 = vperm.xlu0 %957, %v330
        %v959 = vpop.permute.xlu0 %958
        %961 = vset.pattern.permute.xlu0 2
        %962 = vperm.xlu0 %961, %v331
        %v963 = vpop.permute.xlu0 %962
        %965 = vset.pattern.permute.xlu0 2
        %966 = vperm.xlu0 %965, %v332
        %v967 = vpop.permute.xlu0 %966
        %969 = vset.pattern.permute.xlu0 2
        %970 = vperm.xlu0 %969, %v333
        %v971 = vpop.permute.xlu0 %970
        %973 = vset.pattern.permute.xlu0 2
        %974 = vperm.xlu0 %973, %v334
        %v975 = vpop.permute.xlu0 %974
        %977 = vset.pattern.permute.xlu0 2
        %978 = vperm.xlu0 %977, %v335
        %v979 = vpop.permute.xlu0 %978
        %981 = vset.pattern.permute.xlu0 2
        %982 = vperm.xlu0 %981, %v336
        %v983 = vpop.permute.xlu0 %982
        %985 = vset.pattern.permute.xlu0 2
        %986 = vperm.xlu0 %985, %v337
        %v987 = vpop.permute.xlu0 %986
        %989 = vset.pattern.permute.xlu0 2
        %990 = vperm.xlu0 %989, %v338
        %v991 = vpop.permute.xlu0 %990
        %993 = vset.pattern.permute.xlu0 2
        %994 = vperm.xlu0 %993, %v339
        %v995 = vpop.permute.xlu0 %994
        %997 = vset.pattern.permute.xlu0 2
        %998 = vperm.xlu0 %997, %v340
        %v999 = vpop.permute.xlu0 %998
        %1001 = vset.pattern.permute.xlu0 2
        %1002 = vperm.xlu0 %1001, %v341
        %v1003 = vpop.permute.xlu0 %1002
        %1005 = vset.pattern.permute.xlu0 2
        %1006 = vperm.xlu0 %1005, %v342
        %v1007 = vpop.permute.xlu0 %1006
        %1009 = vset.pattern.permute.xlu0 2
        %1010 = vperm.xlu0 %1009, %v343
        %v1011 = vpop.permute.xlu0 %1010
        %1013 = vset.pattern.permute.xlu0 2
        %1014 = vperm.xlu0 %1013, %v344
        %v1015 = vpop.permute.xlu0 %1014
        %1017 = vset.pattern.permute.xlu0 2
        %1018 = vperm.xlu0 %1017, %v345
        %v1019 = vpop.permute.xlu0 %1018
        %1021 = vset.pattern.permute.xlu0 2
        %1022 = vperm.xlu0 %1021, %v346
        %v1023 = vpop.permute.xlu0 %1022
        %1025 = vset.pattern.permute.xlu0 2
        %1026 = vperm.xlu0 %1025, %v347
        %v1027 = vpop.permute.xlu0 %1026
        %1029 = vset.pattern.permute.xlu0 2
        %1030 = vperm.xlu0 %1029, %v348
        %v1031 = vpop.permute.xlu0 %1030
        %1033 = vset.pattern.permute.xlu0 2
        %1034 = vperm.xlu0 %1033, %v349
        %v1035 = vpop.permute.xlu0 %1034
        %v1038 = vperm.slane %v908, 0
        %v1039 = vperm.slane %v908, 1
        %v1042 = vmul.f32 %v911, %v1038
        %v1043 = vmul.f32 %v911, %v1039
        %v1044 = vmul.f32 %v915, %v1038
        %v1045 = vmul.f32 %v915, %v1039
        %v1046 = vmul.f32 %v919, %v1038
        %v1047 = vmul.f32 %v919, %v1039
        %v1048 = vmul.f32 %v923, %v1038
        %v1049 = vmul.f32 %v923, %v1039
        %v1050 = vmul.f32 %v927, %v1038
        %v1051 = vmul.f32 %v927, %v1039
        %v1052 = vmul.f32 %v931, %v1038
        %v1053 = vmul.f32 %v931, %v1039
        %v1054 = vmul.f32 %v935, %v1038
        %v1055 = vmul.f32 %v935, %v1039
        %v1056 = vmul.f32 %v939, %v1038
        %v1057 = vmul.f32 %v939, %v1039
        %v1058 = vmul.f32 %v943, %v1038
        %v1059 = vmul.f32 %v943, %v1039
        %v1060 = vmul.f32 %v947, %v1038
        %v1061 = vmul.f32 %v947, %v1039
        %v1062 = vmul.f32 %v951, %v1038
        %v1063 = vmul.f32 %v951, %v1039
        %v1064 = vmul.f32 %v955, %v1038
        %v1065 = vmul.f32 %v955, %v1039
        %v1066 = vmul.f32 %v959, %v1038
        %v1067 = vmul.f32 %v959, %v1039
        %v1068 = vmul.f32 %v963, %v1038
        %v1069 = vmul.f32 %v963, %v1039
        %v1070 = vmul.f32 %v967, %v1038
        %v1071 = vmul.f32 %v967, %v1039
        %v1072 = vmul.f32 %v971, %v1038
        %v1073 = vmul.f32 %v971, %v1039
        %v1074 = vmul.f32 %v975, %v1038
        %v1075 = vmul.f32 %v975, %v1039
        %v1076 = vmul.f32 %v979, %v1038
        %v1077 = vmul.f32 %v979, %v1039
        %v1078 = vmul.f32 %v983, %v1038
        %v1079 = vmul.f32 %v983, %v1039
        %v1080 = vmul.f32 %v987, %v1038
        %v1081 = vmul.f32 %v987, %v1039
        %v1082 = vmul.f32 %v991, %v1038
        %v1083 = vmul.f32 %v991, %v1039
        %v1084 = vmul.f32 %v995, %v1038
        %v1085 = vmul.f32 %v995, %v1039
        %v1086 = vmul.f32 %v999, %v1038
        %v1087 = vmul.f32 %v999, %v1039
        %v1088 = vmul.f32 %v1003, %v1038
        %v1089 = vmul.f32 %v1003, %v1039
        %v1090 = vmul.f32 %v1007, %v1038
        %v1091 = vmul.f32 %v1007, %v1039
        %v1092 = vmul.f32 %v1011, %v1038
        %v1093 = vmul.f32 %v1011, %v1039
        %v1094 = vmul.f32 %v1015, %v1038
        %v1095 = vmul.f32 %v1015, %v1039
        %v1096 = vmul.f32 %v1019, %v1038
        %v1097 = vmul.f32 %v1019, %v1039
        %v1098 = vmul.f32 %v1023, %v1038
        %v1099 = vmul.f32 %v1023, %v1039
        %v1100 = vmul.f32 %v1027, %v1038
        %v1101 = vmul.f32 %v1027, %v1039
        %v1102 = vmul.f32 %v1031, %v1038
        %v1103 = vmul.f32 %v1031, %v1039
        %v1104 = vmul.f32 %v1035, %v1038
        %v1105 = vmul.f32 %v1035, %v1039
        %v1106 = vadd.f32 %v843, %v1042
        %v1107 = vadd.f32 %v844, %v1043
        %v1108 = vadd.f32 %v845, %v1044
        %v1109 = vadd.f32 %v846, %v1045
        %v1110 = vadd.f32 %v847, %v1046
        %v1111 = vadd.f32 %v848, %v1047
        %v1112 = vadd.f32 %v849, %v1048
        %v1113 = vadd.f32 %v850, %v1049
        %v1114 = vadd.f32 %v851, %v1050
        %v1115 = vadd.f32 %v852, %v1051
        %v1116 = vadd.f32 %v853, %v1052
        %v1117 = vadd.f32 %v854, %v1053
        %v1118 = vadd.f32 %v855, %v1054
        %v1119 = vadd.f32 %v856, %v1055
        %v1120 = vadd.f32 %v857, %v1056
        %v1121 = vadd.f32 %v858, %v1057
        %v1122 = vadd.f32 %v859, %v1058
        %v1123 = vadd.f32 %v860, %v1059
        %v1124 = vadd.f32 %v861, %v1060
        %v1125 = vadd.f32 %v862, %v1061
        %v1126 = vadd.f32 %v863, %v1062
        %v1127 = vadd.f32 %v864, %v1063
        %v1128 = vadd.f32 %v865, %v1064
        %v1129 = vadd.f32 %v866, %v1065
        %v1130 = vadd.f32 %v867, %v1066
        %v1131 = vadd.f32 %v868, %v1067
        %v1132 = vadd.f32 %v869, %v1068
        %v1133 = vadd.f32 %v870, %v1069
        %v1134 = vadd.f32 %v871, %v1070
        %v1135 = vadd.f32 %v872, %v1071
        %v1136 = vadd.f32 %v873, %v1072
        %v1137 = vadd.f32 %v874, %v1073
        %v1138 = vadd.f32 %v875, %v1074
        %v1139 = vadd.f32 %v876, %v1075
        %v1140 = vadd.f32 %v877, %v1076
        %v1141 = vadd.f32 %v878, %v1077
        %v1142 = vadd.f32 %v879, %v1078
        %v1143 = vadd.f32 %v880, %v1079
        %v1144 = vadd.f32 %v881, %v1080
        %v1145 = vadd.f32 %v882, %v1081
        %v1146 = vadd.f32 %v883, %v1082
        %v1147 = vadd.f32 %v884, %v1083
        %v1148 = vadd.f32 %v885, %v1084
        %v1149 = vadd.f32 %v886, %v1085
        %v1150 = vadd.f32 %v887, %v1086
        %v1151 = vadd.f32 %v888, %v1087
        %v1152 = vadd.f32 %v889, %v1088
        %v1153 = vadd.f32 %v890, %v1089
        %v1154 = vadd.f32 %v891, %v1090
        %v1155 = vadd.f32 %v892, %v1091
        %v1156 = vadd.f32 %v893, %v1092
        %v1157 = vadd.f32 %v894, %v1093
        %v1158 = vadd.f32 %v895, %v1094
        %v1159 = vadd.f32 %v896, %v1095
        %v1160 = vadd.f32 %v897, %v1096
        %v1161 = vadd.f32 %v898, %v1097
        %v1162 = vadd.f32 %v899, %v1098
        %v1163 = vadd.f32 %v900, %v1099
        %v1164 = vadd.f32 %v901, %v1100
        %v1165 = vadd.f32 %v902, %v1101
        %v1166 = vadd.f32 %v903, %v1102
        %v1167 = vadd.f32 %v904, %v1103
        %v1168 = vadd.f32 %v905, %v1104
        %v1169 = vadd.f32 %v906, %v1105
        %v1170 = vld [vmem:[#allocation4] ss:$8 sm:$0x3]
        %v1172 = vperm.slane %v1170, 0
        %v1173 = vperm.slane %v1170, 1
        %v1176 = vadd.f32 %v1106, %v1172
        %v1177 = vadd.f32 %v1107, %v1173
        %v1178 = vadd.f32 %v1108, %v1172
        %v1179 = vadd.f32 %v1109, %v1173
        %v1180 = vadd.f32 %v1110, %v1172
        %v1181 = vadd.f32 %v1111, %v1173
        %v1182 = vadd.f32 %v1112, %v1172
        %v1183 = vadd.f32 %v1113, %v1173
        %v1184 = vadd.f32 %v1114, %v1172
        %v1185 = vadd.f32 %v1115, %v1173
        %v1186 = vadd.f32 %v1116, %v1172
        %v1187 = vadd.f32 %v1117, %v1173
        %v1188 = vadd.f32 %v1118, %v1172
        %v1189 = vadd.f32 %v1119, %v1173
        %v1190 = vadd.f32 %v1120, %v1172
        %v1191 = vadd.f32 %v1121, %v1173
        %v1192 = vadd.f32 %v1122, %v1172
        %v1193 = vadd.f32 %v1123, %v1173
        %v1194 = vadd.f32 %v1124, %v1172
        %v1195 = vadd.f32 %v1125, %v1173
        %v1196 = vadd.f32 %v1126, %v1172
        %v1197 = vadd.f32 %v1127, %v1173
        %v1198 = vadd.f32 %v1128, %v1172
        %v1199 = vadd.f32 %v1129, %v1173
        %v1200 = vadd.f32 %v1130, %v1172
        %v1201 = vadd.f32 %v1131, %v1173
        %v1202 = vadd.f32 %v1132, %v1172
        %v1203 = vadd.f32 %v1133, %v1173
        %v1204 = vadd.f32 %v1134, %v1172
        %v1205 = vadd.f32 %v1135, %v1173
        %v1206 = vadd.f32 %v1136, %v1172
        %v1207 = vadd.f32 %v1137, %v1173
        %v1208 = vadd.f32 %v1138, %v1172
        %v1209 = vadd.f32 %v1139, %v1173
        %v1210 = vadd.f32 %v1140, %v1172
        %v1211 = vadd.f32 %v1141, %v1173
        %v1212 = vadd.f32 %v1142, %v1172
        %v1213 = vadd.f32 %v1143, %v1173
        %v1214 = vadd.f32 %v1144, %v1172
        %v1215 = vadd.f32 %v1145, %v1173
        %v1216 = vadd.f32 %v1146, %v1172
        %v1217 = vadd.f32 %v1147, %v1173
        %v1218 = vadd.f32 %v1148, %v1172
        %v1219 = vadd.f32 %v1149, %v1173
        %v1220 = vadd.f32 %v1150, %v1172
        %v1221 = vadd.f32 %v1151, %v1173
        %v1222 = vadd.f32 %v1152, %v1172
        %v1223 = vadd.f32 %v1153, %v1173
        %v1224 = vadd.f32 %v1154, %v1172
        %v1225 = vadd.f32 %v1155, %v1173
        %v1226 = vadd.f32 %v1156, %v1172
        %v1227 = vadd.f32 %v1157, %v1173
        %v1228 = vadd.f32 %v1158, %v1172
        %v1229 = vadd.f32 %v1159, %v1173
        %v1230 = vadd.f32 %v1160, %v1172
        %v1231 = vadd.f32 %v1161, %v1173
        %v1232 = vadd.f32 %v1162, %v1172
        %v1233 = vadd.f32 %v1163, %v1173
        %v1234 = vadd.f32 %v1164, %v1172
        %v1235 = vadd.f32 %v1165, %v1173
        %v1236 = vadd.f32 %v1166, %v1172
        %v1237 = vadd.f32 %v1167, %v1173
        %v1238 = vadd.f32 %v1168, %v1172
        %v1239 = vadd.f32 %v1169, %v1173
        %v1240 = vmax.f32 %v1176, 0.0
        %v1241 = vmax.f32 %v1177, 0.0
        %v1242 = vmax.f32 %v1178, 0.0
        %v1243 = vmax.f32 %v1179, 0.0
        %v1244 = vmax.f32 %v1180, 0.0
        %v1245 = vmax.f32 %v1181, 0.0
        %v1246 = vmax.f32 %v1182, 0.0
        %v1247 = vmax.f32 %v1183, 0.0
        %v1248 = vmax.f32 %v1184, 0.0
        %v1249 = vmax.f32 %v1185, 0.0
        %v1250 = vmax.f32 %v1186, 0.0
        %v1251 = vmax.f32 %v1187, 0.0
        %v1252 = vmax.f32 %v1188, 0.0
        %v1253 = vmax.f32 %v1189, 0.0
        %v1254 = vmax.f32 %v1190, 0.0
        %v1255 = vmax.f32 %v1191, 0.0
        %v1256 = vmax.f32 %v1192, 0.0
        %v1257 = vmax.f32 %v1193, 0.0
        %v1258 = vmax.f32 %v1194, 0.0
        %v1259 = vmax.f32 %v1195, 0.0
        %v1260 = vmax.f32 %v1196, 0.0
        %v1261 = vmax.f32 %v1197, 0.0
        %v1262 = vmax.f32 %v1198, 0.0
        %v1263 = vmax.f32 %v1199, 0.0
        %v1264 = vmax.f32 %v1200, 0.0
        %v1265 = vmax.f32 %v1201, 0.0
        %v1266 = vmax.f32 %v1202, 0.0
        %v1267 = vmax.f32 %v1203, 0.0
        %v1268 = vmax.f32 %v1204, 0.0
        %v1269 = vmax.f32 %v1205, 0.0
        %v1270 = vmax.f32 %v1206, 0.0
        %v1271 = vmax.f32 %v1207, 0.0
        %v1272 = vmax.f32 %v1208, 0.0
        %v1273 = vmax.f32 %v1209, 0.0
        %v1274 = vmax.f32 %v1210, 0.0
        %v1275 = vmax.f32 %v1211, 0.0
        %v1276 = vmax.f32 %v1212, 0.0
        %v1277 = vmax.f32 %v1213, 0.0
        %v1278 = vmax.f32 %v1214, 0.0
        %v1279 = vmax.f32 %v1215, 0.0
        %v1280 = vmax.f32 %v1216, 0.0
        %v1281 = vmax.f32 %v1217, 0.0
        %v1282 = vmax.f32 %v1218, 0.0
        %v1283 = vmax.f32 %v1219, 0.0
        %v1284 = vmax.f32 %v1220, 0.0
        %v1285 = vmax.f32 %v1221, 0.0
        %v1286 = vmax.f32 %v1222, 0.0
        %v1287 = vmax.f32 %v1223, 0.0
        %v1288 = vmax.f32 %v1224, 0.0
        %v1289 = vmax.f32 %v1225, 0.0
        %v1290 = vmax.f32 %v1226, 0.0
        %v1291 = vmax.f32 %v1227, 0.0
        %v1292 = vmax.f32 %v1228, 0.0
        %v1293 = vmax.f32 %v1229, 0.0
        %v1294 = vmax.f32 %v1230, 0.0
        %v1295 = vmax.f32 %v1231, 0.0
        %v1296 = vmax.f32 %v1232, 0.0
        %v1297 = vmax.f32 %v1233, 0.0
        %v1298 = vmax.f32 %v1234, 0.0
        %v1299 = vmax.f32 %v1235, 0.0
        %v1300 = vmax.f32 %v1236, 0.0
        %v1301 = vmax.f32 %v1237, 0.0
        %v1302 = vmax.f32 %v1238, 0.0
        %v1303 = vmax.f32 %v1239, 0.0
        %v1304 = vpack.c.bf16 %v1242, %v1240
        %v1305 = vpack.c.bf16 %v1243, %v1241
        %v1306 = vpack.c.bf16 %v1246, %v1244
        %v1307 = vpack.c.bf16 %v1247, %v1245
        %v1308 = vpack.c.bf16 %v1250, %v1248
        %v1309 = vpack.c.bf16 %v1251, %v1249
        %v1310 = vpack.c.bf16 %v1254, %v1252
        %v1311 = vpack.c.bf16 %v1255, %v1253
        %v1312 = vpack.c.bf16 %v1258, %v1256
        %v1313 = vpack.c.bf16 %v1259, %v1257
        %v1314 = vpack.c.bf16 %v1262, %v1260
        %v1315 = vpack.c.bf16 %v1263, %v1261
        %v1316 = vpack.c.bf16 %v1266, %v1264
        %v1317 = vpack.c.bf16 %v1267, %v1265
        %v1318 = vpack.c.bf16 %v1270, %v1268
        %v1319 = vpack.c.bf16 %v1271, %v1269
        %v1320 = vpack.c.bf16 %v1274, %v1272
        %v1321 = vpack.c.bf16 %v1275, %v1273
        %v1322 = vpack.c.bf16 %v1278, %v1276
        %v1323 = vpack.c.bf16 %v1279, %v1277
        %v1324 = vpack.c.bf16 %v1282, %v1280
        %v1325 = vpack.c.bf16 %v1283, %v1281
        %v1326 = vpack.c.bf16 %v1286, %v1284
        %v1327 = vpack.c.bf16 %v1287, %v1285
        %v1328 = vpack.c.bf16 %v1290, %v1288
        %v1329 = vpack.c.bf16 %v1291, %v1289
        %v1330 = vpack.c.bf16 %v1294, %v1292
        %v1331 = vpack.c.bf16 %v1295, %v1293
        %v1332 = vpack.c.bf16 %v1298, %v1296
        %v1333 = vpack.c.bf16 %v1299, %v1297
        %v1334 = vpack.c.bf16 %v1302, %v1300
        %v1335 = vpack.c.bf16 %v1303, %v1301
        %v1336 = vld [vmem:[#allocation6] sm:$0xff]
        %v1337 = vld [vmem:[#allocation6 + $0x8] sm:$0xff]
        %v1338 = vld [vmem:[#allocation6 + $0x10] sm:$0xff]
        %v1339 = vld [vmem:[#allocation6 + $0x18] sm:$0xff]
        %v1340 = vld [vmem:[#allocation6 + $0x20] sm:$0xff]
        %v1341 = vld [vmem:[#allocation6 + $0x28] sm:$0xff]
        %v1342 = vld [vmem:[#allocation6 + $0x30] sm:$0xff]
        %v1343 = vld [vmem:[#allocation6 + $0x38] sm:$0xff]
        %v1344 = vld [vmem:[#allocation6 + $0x40] sm:$0xff]
        %v1345 = vld [vmem:[#allocation6 + $0x48] sm:$0xff]
        %v1346 = vld [vmem:[#allocation6 + $0x50] sm:$0xff]
        %v1347 = vld [vmem:[#allocation6 + $0x58] sm:$0xff]
        %v1348 = vld [vmem:[#allocation6 + $0x60] sm:$0xff]
        %v1349 = vld [vmem:[#allocation6 + $0x68] sm:$0xff]
        %v1350 = vld [vmem:[#allocation6 + $0x70] sm:$0xff]
        %v1351 = vld [vmem:[#allocation6 + $0x78] sm:$0xff]
        %v1352 = vld [vmem:[#allocation6 + $0x80] sm:$0xff]
        %v1353 = vld [vmem:[#allocation6 + $0x88] sm:$0xff]
        %v1354 = vld [vmem:[#allocation6 + $0x90] sm:$0xff]
        %v1355 = vld [vmem:[#allocation6 + $0x98] sm:$0xff]
        %v1356 = vld [vmem:[#allocation6 + $0xa0] sm:$0xff]
        %v1357 = vld [vmem:[#allocation6 + $0xa8] sm:$0xff]
        %v1358 = vld [vmem:[#allocation6 + $0xb0] sm:$0xff]
        %v1359 = vld [vmem:[#allocation6 + $0xb8] sm:$0xff]
        %v1360 = vld [vmem:[#allocation6 + $0xc0] sm:$0xff]
        %v1361 = vld [vmem:[#allocation6 + $0xc8] sm:$0xff]
        %v1362 = vld [vmem:[#allocation6 + $0xd0] sm:$0xff]
        %v1363 = vld [vmem:[#allocation6 + $0xd8] sm:$0xff]
        %v1364 = vld [vmem:[#allocation6 + $0xe0] sm:$0xff]
        %v1365 = vld [vmem:[#allocation6 + $0xe8] sm:$0xff]
        %v1366 = vld [vmem:[#allocation6 + $0xf0] sm:$0xff]
        %v1367 = vld [vmem:[#allocation6 + $0xf8] sm:$0xff]
        %s1368 = scalar_lea.vmem [#allocation4], 1
        %v1369 = vld [vmem:[%s1368] ss:$8 sm:$0x3]
        %v1371 = vperm.slane %v1369, 0
        %v1372 = vperm.slane %v1369, 1
        %v1407 = vunpack.c.l.b16 %v1336
        %v1408 = vunpack.c.h.b16 %v1336
        %v1409 = vunpack.c.l.b16 %v1337
        %v1410 = vunpack.c.h.b16 %v1337
        %v1411 = vunpack.c.l.b16 %v1338
        %v1412 = vunpack.c.h.b16 %v1338
        %v1413 = vunpack.c.l.b16 %v1339
        %v1414 = vunpack.c.h.b16 %v1339
        %v1415 = vunpack.c.l.b16 %v1340
        %v1416 = vunpack.c.h.b16 %v1340
        %v1417 = vunpack.c.l.b16 %v1341
        %v1418 = vunpack.c.h.b16 %v1341
        %v1419 = vunpack.c.l.b16 %v1342
        %v1420 = vunpack.c.h.b16 %v1342
        %v1421 = vunpack.c.l.b16 %v1343
        %v1422 = vunpack.c.h.b16 %v1343
        %v1423 = vunpack.c.l.b16 %v1344
        %v1424 = vunpack.c.h.b16 %v1344
        %v1425 = vunpack.c.l.b16 %v1345
        %v1426 = vunpack.c.h.b16 %v1345
        %v1427 = vunpack.c.l.b16 %v1346
        %v1428 = vunpack.c.h.b16 %v1346
        %v1429 = vunpack.c.l.b16 %v1347
        %v1430 = vunpack.c.h.b16 %v1347
        %v1431 = vunpack.c.l.b16 %v1348
        %v1432 = vunpack.c.h.b16 %v1348
        %v1433 = vunpack.c.l.b16 %v1349
        %v1434 = vunpack.c.h.b16 %v1349
        %v1435 = vunpack.c.l.b16 %v1350
        %v1436 = vunpack.c.h.b16 %v1350
        %v1437 = vunpack.c.l.b16 %v1351
        %v1438 = vunpack.c.h.b16 %v1351
        %v1439 = vunpack.c.l.b16 %v1352
        %v1440 = vunpack.c.h.b16 %v1352
        %v1441 = vunpack.c.l.b16 %v1353
        %v1442 = vunpack.c.h.b16 %v1353
        %v1443 = vunpack.c.l.b16 %v1354
        %v1444 = vunpack.c.h.b16 %v1354
        %v1445 = vunpack.c.l.b16 %v1355
        %v1446 = vunpack.c.h.b16 %v1355
        %v1447 = vunpack.c.l.b16 %v1356
        %v1448 = vunpack.c.h.b16 %v1356
        %v1449 = vunpack.c.l.b16 %v1357
        %v1450 = vunpack.c.h.b16 %v1357
        %v1451 = vunpack.c.l.b16 %v1358
        %v1452 = vunpack.c.h.b16 %v1358
        %v1453 = vunpack.c.l.b16 %v1359
        %v1454 = vunpack.c.h.b16 %v1359
        %v1455 = vunpack.c.l.b16 %v1360
        %v1456 = vunpack.c.h.b16 %v1360
        %v1457 = vunpack.c.l.b16 %v1361
        %v1458 = vunpack.c.h.b16 %v1361
        %v1459 = vunpack.c.l.b16 %v1362
        %v1460 = vunpack.c.h.b16 %v1362
        %v1461 = vunpack.c.l.b16 %v1363
        %v1462 = vunpack.c.h.b16 %v1363
        %v1463 = vunpack.c.l.b16 %v1364
        %v1464 = vunpack.c.h.b16 %v1364
        %v1465 = vunpack.c.l.b16 %v1365
        %v1466 = vunpack.c.h.b16 %v1365
        %v1467 = vunpack.c.l.b16 %v1366
        %v1468 = vunpack.c.h.b16 %v1366
        %v1469 = vunpack.c.l.b16 %v1367
        %v1470 = vunpack.c.h.b16 %v1367
        %v1471 = vpack.c.b16 %v1409, %v1407
        %v1472 = vpack.c.b16 %v1410, %v1408
        %v1473 = vpack.c.b16 %v1413, %v1411
        %v1474 = vpack.c.b16 %v1414, %v1412
        %v1475 = vpack.c.b16 %v1417, %v1415
        %v1476 = vpack.c.b16 %v1418, %v1416
        %v1477 = vpack.c.b16 %v1421, %v1419
        %v1478 = vpack.c.b16 %v1422, %v1420
        %v1479 = vpack.c.b16 %v1425, %v1423
        %v1480 = vpack.c.b16 %v1426, %v1424
        %v1481 = vpack.c.b16 %v1429, %v1427
        %v1482 = vpack.c.b16 %v1430, %v1428
        %v1483 = vpack.c.b16 %v1433, %v1431
        %v1484 = vpack.c.b16 %v1434, %v1432
        %v1485 = vpack.c.b16 %v1437, %v1435
        %v1486 = vpack.c.b16 %v1438, %v1436
        %v1487 = vpack.c.b16 %v1441, %v1439
        %v1488 = vpack.c.b16 %v1442, %v1440
        %v1489 = vpack.c.b16 %v1445, %v1443
        %v1490 = vpack.c.b16 %v1446, %v1444
        %v1491 = vpack.c.b16 %v1449, %v1447
        %v1492 = vpack.c.b16 %v1450, %v1448
        %v1493 = vpack.c.b16 %v1453, %v1451
        %v1494 = vpack.c.b16 %v1454, %v1452
        %v1495 = vpack.c.b16 %v1457, %v1455
        %v1496 = vpack.c.b16 %v1458, %v1456
        %v1497 = vpack.c.b16 %v1461, %v1459
        %v1498 = vpack.c.b16 %v1462, %v1460
        %v1499 = vpack.c.b16 %v1465, %v1463
        %v1500 = vpack.c.b16 %v1466, %v1464
        %v1501 = vpack.c.b16 %v1469, %v1467
        %v1502 = vpack.c.b16 %v1470, %v1468
        %1535 = vmatpush.bf16.msra.mxu0 %v1485
        %1536 = vmatpush.bf16.msra.mxu0 %v1483
        %1537 = vmatpush.bf16.msra.mxu0 %v1481
        %1538 = vmatpush.bf16.msra.mxu0 %v1479
        %1539 = vmatpush.bf16.msra.mxu0 %v1477
        %1540 = vmatpush.bf16.msra.mxu0 %v1475
        %1541 = vmatpush.bf16.msra.mxu0 %v1473
        %1542 = vmatpush.bf16.msra.mxu0 %v1471
        %1543 = vmatmul.bf16.gmra.mxu0 %v1304
        %v1544 = vpop.f32.mrf.mxu0
        %v1545 = vadd.f32 %v1371, %v1544
        %v1546 = vpop.f32.mrf.mxu0
        %v1547 = vadd.f32 %v1371, %v1546
        %1548 = vmatmul.bf16.gmra.mxu0 %v1306
        %v1549 = vpop.f32.mrf.mxu0
        %v1550 = vadd.f32 %v1371, %v1549
        %v1551 = vpop.f32.mrf.mxu0
        %v1552 = vadd.f32 %v1371, %v1551
        %1553 = vmatmul.bf16.gmra.mxu0 %v1308
        %v1554 = vpop.f32.mrf.mxu0
        %v1555 = vadd.f32 %v1371, %v1554
        %v1556 = vpop.f32.mrf.mxu0
        %v1557 = vadd.f32 %v1371, %v1556
        %1558 = vmatmul.bf16.gmra.mxu0 %v1310
        %v1559 = vpop.f32.mrf.mxu0
        %v1560 = vadd.f32 %v1371, %v1559
        %v1561 = vpop.f32.mrf.mxu0
        %v1562 = vadd.f32 %v1371, %v1561
        %1563 = vmatmul.bf16.gmra.mxu0 %v1312
        %v1564 = vpop.f32.mrf.mxu0
        %v1565 = vadd.f32 %v1371, %v1564
        %v1566 = vpop.f32.mrf.mxu0
        %v1567 = vadd.f32 %v1371, %v1566
        %1568 = vmatmul.bf16.gmra.mxu0 %v1314
        %v1569 = vpop.f32.mrf.mxu0
        %v1570 = vadd.f32 %v1371, %v1569
        %v1571 = vpop.f32.mrf.mxu0
        %v1572 = vadd.f32 %v1371, %v1571
        %1573 = vmatmul.bf16.gmra.mxu0 %v1316
        %v1574 = vpop.f32.mrf.mxu0
        %v1575 = vadd.f32 %v1371, %v1574
        %v1576 = vpop.f32.mrf.mxu0
        %v1577 = vadd.f32 %v1371, %v1576
        %1578 = vmatmul.bf16.gmra.mxu0 %v1318
        %v1579 = vpop.f32.mrf.mxu0
        %v1580 = vadd.f32 %v1371, %v1579
        %v1581 = vpop.f32.mrf.mxu0
        %v1582 = vadd.f32 %v1371, %v1581
        %1583 = vmatmul.bf16.gmra.mxu0 %v1320
        %v1584 = vpop.f32.mrf.mxu0
        %v1585 = vadd.f32 %v1371, %v1584
        %v1586 = vpop.f32.mrf.mxu0
        %v1587 = vadd.f32 %v1371, %v1586
        %1588 = vmatmul.bf16.gmra.mxu0 %v1322
        %v1589 = vpop.f32.mrf.mxu0
        %v1590 = vadd.f32 %v1371, %v1589
        %v1591 = vpop.f32.mrf.mxu0
        %v1592 = vadd.f32 %v1371, %v1591
        %1593 = vmatmul.bf16.gmra.mxu0 %v1324
        %v1594 = vpop.f32.mrf.mxu0
        %v1595 = vadd.f32 %v1371, %v1594
        %v1596 = vpop.f32.mrf.mxu0
        %v1597 = vadd.f32 %v1371, %v1596
        %1598 = vmatmul.bf16.gmra.mxu0 %v1326
        %v1599 = vpop.f32.mrf.mxu0
        %v1600 = vadd.f32 %v1371, %v1599
        %v1601 = vpop.f32.mrf.mxu0
        %v1602 = vadd.f32 %v1371, %v1601
        %1603 = vmatmul.bf16.gmra.mxu0 %v1328
        %v1604 = vpop.f32.mrf.mxu0
        %v1605 = vadd.f32 %v1371, %v1604
        %v1606 = vpop.f32.mrf.mxu0
        %v1607 = vadd.f32 %v1371, %v1606
        %1608 = vmatmul.bf16.gmra.mxu0 %v1330
        %v1609 = vpop.f32.mrf.mxu0
        %v1610 = vadd.f32 %v1371, %v1609
        %v1611 = vpop.f32.mrf.mxu0
        %v1612 = vadd.f32 %v1371, %v1611
        %1613 = vmatmul.bf16.gmra.mxu0 %v1332
        %v1614 = vpop.f32.mrf.mxu0
        %v1615 = vadd.f32 %v1371, %v1614
        %v1616 = vpop.f32.mrf.mxu0
        %v1617 = vadd.f32 %v1371, %v1616
        %1618 = vmatmul.bf16.gmra.mxu0 %v1334
        %v1619 = vpop.f32.mrf.mxu0
        %v1620 = vadd.f32 %v1371, %v1619
        %v1621 = vpop.f32.mrf.mxu0
        %v1622 = vadd.f32 %v1371, %v1621
        %1623 = vdwg.mxu0
        %1624 = vmatpush.bf16.msra.mxu0 %v1501
        %1625 = vmatpush.bf16.msra.mxu0 %v1499
        %1626 = vmatpush.bf16.msra.mxu0 %v1497
        %1627 = vmatpush.bf16.msra.mxu0 %v1495
        %1628 = vmatpush.bf16.msra.mxu0 %v1493
        %1629 = vmatpush.bf16.msra.mxu0 %v1491
        %1630 = vmatpush.bf16.msra.mxu0 %v1489
        %1631 = vmatpush.bf16.msra.mxu0 %v1487
        %1632 = vmatmul.bf16.gmra.mxu0 %v1305
        %v1633 = vpop.f32.mrf.mxu0
        %v1634 = vadd.f32 %v1545, %v1633
        %v1635 = vpop.f32.mrf.mxu0
        %v1636 = vadd.f32 %v1547, %v1635
        %1637 = vmatmul.bf16.gmra.mxu0 %v1307
        %v1638 = vpop.f32.mrf.mxu0
        %v1639 = vadd.f32 %v1550, %v1638
        %v1640 = vpop.f32.mrf.mxu0
        %v1641 = vadd.f32 %v1552, %v1640
        %1642 = vmatmul.bf16.gmra.mxu0 %v1309
        %v1643 = vpop.f32.mrf.mxu0
        %v1644 = vadd.f32 %v1555, %v1643
        %v1645 = vpop.f32.mrf.mxu0
        %v1646 = vadd.f32 %v1557, %v1645
        %1647 = vmatmul.bf16.gmra.mxu0 %v1311
        %v1648 = vpop.f32.mrf.mxu0
        %v1649 = vadd.f32 %v1560, %v1648
        %v1650 = vpop.f32.mrf.mxu0
        %v1651 = vadd.f32 %v1562, %v1650
        %1652 = vmatmul.bf16.gmra.mxu0 %v1313
        %v1653 = vpop.f32.mrf.mxu0
        %v1654 = vadd.f32 %v1565, %v1653
        %v1655 = vpop.f32.mrf.mxu0
        %v1656 = vadd.f32 %v1567, %v1655
        %1657 = vmatmul.bf16.gmra.mxu0 %v1315
        %v1658 = vpop.f32.mrf.mxu0
        %v1659 = vadd.f32 %v1570, %v1658
        %v1660 = vpop.f32.mrf.mxu0
        %v1661 = vadd.f32 %v1572, %v1660
        %1662 = vmatmul.bf16.gmra.mxu0 %v1317
        %v1663 = vpop.f32.mrf.mxu0
        %v1664 = vadd.f32 %v1575, %v1663
        %v1665 = vpop.f32.mrf.mxu0
        %v1666 = vadd.f32 %v1577, %v1665
        %1667 = vmatmul.bf16.gmra.mxu0 %v1319
        %v1668 = vpop.f32.mrf.mxu0
        %v1669 = vadd.f32 %v1580, %v1668
        %v1670 = vpop.f32.mrf.mxu0
        %v1671 = vadd.f32 %v1582, %v1670
        %1672 = vmatmul.bf16.gmra.mxu0 %v1321
        %v1673 = vpop.f32.mrf.mxu0
        %v1674 = vadd.f32 %v1585, %v1673
        %v1675 = vpop.f32.mrf.mxu0
        %v1676 = vadd.f32 %v1587, %v1675
        %1677 = vmatmul.bf16.gmra.mxu0 %v1323
        %v1678 = vpop.f32.mrf.mxu0
        %v1679 = vadd.f32 %v1590, %v1678
        %v1680 = vpop.f32.mrf.mxu0
        %v1681 = vadd.f32 %v1592, %v1680
        %1682 = vmatmul.bf16.gmra.mxu0 %v1325
        %v1683 = vpop.f32.mrf.mxu0
        %v1684 = vadd.f32 %v1595, %v1683
        %v1685 = vpop.f32.mrf.mxu0
        %v1686 = vadd.f32 %v1597, %v1685
        %1687 = vmatmul.bf16.gmra.mxu0 %v1327
        %v1688 = vpop.f32.mrf.mxu0
        %v1689 = vadd.f32 %v1600, %v1688
        %v1690 = vpop.f32.mrf.mxu0
        %v1691 = vadd.f32 %v1602, %v1690
        %1692 = vmatmul.bf16.gmra.mxu0 %v1329
        %v1693 = vpop.f32.mrf.mxu0
        %v1694 = vadd.f32 %v1605, %v1693
        %v1695 = vpop.f32.mrf.mxu0
        %v1696 = vadd.f32 %v1607, %v1695
        %1697 = vmatmul.bf16.gmra.mxu0 %v1331
        %v1698 = vpop.f32.mrf.mxu0
        %v1699 = vadd.f32 %v1610, %v1698
        %v1700 = vpop.f32.mrf.mxu0
        %v1701 = vadd.f32 %v1612, %v1700
        %1702 = vmatmul.bf16.gmra.mxu0 %v1333
        %v1703 = vpop.f32.mrf.mxu0
        %v1704 = vadd.f32 %v1615, %v1703
        %v1705 = vpop.f32.mrf.mxu0
        %v1706 = vadd.f32 %v1617, %v1705
        %1707 = vmatmul.bf16.gmra.mxu0 %v1335
        %v1708 = vpop.f32.mrf.mxu0
        %v1709 = vadd.f32 %v1620, %v1708
        %v1710 = vpop.f32.mrf.mxu0
        %v1711 = vadd.f32 %v1622, %v1710
        %1712 = vdwg.mxu0
        %1713 = vmatpush.bf16.msra.mxu0 %v1486
        %1714 = vmatpush.bf16.msra.mxu0 %v1484
        %1715 = vmatpush.bf16.msra.mxu0 %v1482
        %1716 = vmatpush.bf16.msra.mxu0 %v1480
        %1717 = vmatpush.bf16.msra.mxu0 %v1478
        %1718 = vmatpush.bf16.msra.mxu0 %v1476
        %1719 = vmatpush.bf16.msra.mxu0 %v1474
        %1720 = vmatpush.bf16.msra.mxu0 %v1472
        %1721 = vmatmul.bf16.gmra.mxu0 %v1304
        %v1722 = vpop.f32.mrf.mxu0
        %v1723 = vadd.f32 %v1372, %v1722
        %v1724 = vpop.f32.mrf.mxu0
        %v1725 = vadd.f32 %v1372, %v1724
        %1726 = vmatmul.bf16.gmra.mxu0 %v1306
        %v1727 = vpop.f32.mrf.mxu0
        %v1728 = vadd.f32 %v1372, %v1727
        %v1729 = vpop.f32.mrf.mxu0
        %v1730 = vadd.f32 %v1372, %v1729
        %1731 = vmatmul.bf16.gmra.mxu0 %v1308
        %v1732 = vpop.f32.mrf.mxu0
        %v1733 = vadd.f32 %v1372, %v1732
        %v1734 = vpop.f32.mrf.mxu0
        %v1735 = vadd.f32 %v1372, %v1734
        %1736 = vmatmul.bf16.gmra.mxu0 %v1310
        %v1737 = vpop.f32.mrf.mxu0
        %v1738 = vadd.f32 %v1372, %v1737
        %v1739 = vpop.f32.mrf.mxu0
        %v1740 = vadd.f32 %v1372, %v1739
        %1741 = vmatmul.bf16.gmra.mxu0 %v1312
        %v1742 = vpop.f32.mrf.mxu0
        %v1743 = vadd.f32 %v1372, %v1742
        %v1744 = vpop.f32.mrf.mxu0
        %v1745 = vadd.f32 %v1372, %v1744
        %1746 = vmatmul.bf16.gmra.mxu0 %v1314
        %v1747 = vpop.f32.mrf.mxu0
        %v1748 = vadd.f32 %v1372, %v1747
        %v1749 = vpop.f32.mrf.mxu0
        %v1750 = vadd.f32 %v1372, %v1749
        %1751 = vmatmul.bf16.gmra.mxu0 %v1316
        %v1752 = vpop.f32.mrf.mxu0
        %v1753 = vadd.f32 %v1372, %v1752
        %v1754 = vpop.f32.mrf.mxu0
        %v1755 = vadd.f32 %v1372, %v1754
        %1756 = vmatmul.bf16.gmra.mxu0 %v1318
        %v1757 = vpop.f32.mrf.mxu0
        %v1758 = vadd.f32 %v1372, %v1757
        %v1759 = vpop.f32.mrf.mxu0
        %v1760 = vadd.f32 %v1372, %v1759
        %1761 = vmatmul.bf16.gmra.mxu0 %v1320
        %v1762 = vpop.f32.mrf.mxu0
        %v1763 = vadd.f32 %v1372, %v1762
        %v1764 = vpop.f32.mrf.mxu0
        %v1765 = vadd.f32 %v1372, %v1764
        %1766 = vmatmul.bf16.gmra.mxu0 %v1322
        %v1767 = vpop.f32.mrf.mxu0
        %v1768 = vadd.f32 %v1372, %v1767
        %v1769 = vpop.f32.mrf.mxu0
        %v1770 = vadd.f32 %v1372, %v1769
        %1771 = vmatmul.bf16.gmra.mxu0 %v1324
        %v1772 = vpop.f32.mrf.mxu0
        %v1773 = vadd.f32 %v1372, %v1772
        %v1774 = vpop.f32.mrf.mxu0
        %v1775 = vadd.f32 %v1372, %v1774
        %1776 = vmatmul.bf16.gmra.mxu0 %v1326
        %v1777 = vpop.f32.mrf.mxu0
        %v1778 = vadd.f32 %v1372, %v1777
        %v1779 = vpop.f32.mrf.mxu0
        %v1780 = vadd.f32 %v1372, %v1779
        %1781 = vmatmul.bf16.gmra.mxu0 %v1328
        %v1782 = vpop.f32.mrf.mxu0
        %v1783 = vadd.f32 %v1372, %v1782
        %v1784 = vpop.f32.mrf.mxu0
        %v1785 = vadd.f32 %v1372, %v1784
        %1786 = vmatmul.bf16.gmra.mxu0 %v1330
        %v1787 = vpop.f32.mrf.mxu0
        %v1788 = vadd.f32 %v1372, %v1787
        %v1789 = vpop.f32.mrf.mxu0
        %v1790 = vadd.f32 %v1372, %v1789
        %1791 = vmatmul.bf16.gmra.mxu0 %v1332
        %v1792 = vpop.f32.mrf.mxu0
        %v1793 = vadd.f32 %v1372, %v1792
        %v1794 = vpop.f32.mrf.mxu0
        %v1795 = vadd.f32 %v1372, %v1794
        %1796 = vmatmul.bf16.gmra.mxu0 %v1334
        %v1797 = vpop.f32.mrf.mxu0
        %v1798 = vadd.f32 %v1372, %v1797
        %v1799 = vpop.f32.mrf.mxu0
        %v1800 = vadd.f32 %v1372, %v1799
        %1801 = vdwg.mxu0
        %1802 = vmatpush.bf16.msra.mxu0 %v1502
        %1803 = vmatpush.bf16.msra.mxu0 %v1500
        %1804 = vmatpush.bf16.msra.mxu0 %v1498
        %1805 = vmatpush.bf16.msra.mxu0 %v1496
        %1806 = vmatpush.bf16.msra.mxu0 %v1494
        %1807 = vmatpush.bf16.msra.mxu0 %v1492
        %1808 = vmatpush.bf16.msra.mxu0 %v1490
        %1809 = vmatpush.bf16.msra.mxu0 %v1488
        %1810 = vmatmul.bf16.gmra.mxu0 %v1305
        %v1811 = vpop.f32.mrf.mxu0
        %v1812 = vadd.f32 %v1723, %v1811
        %v1813 = vpop.f32.mrf.mxu0
        %v1814 = vadd.f32 %v1725, %v1813
        %1815 = vmatmul.bf16.gmra.mxu0 %v1307
        %v1816 = vpop.f32.mrf.mxu0
        %v1817 = vadd.f32 %v1728, %v1816
        %v1818 = vpop.f32.mrf.mxu0
        %v1819 = vadd.f32 %v1730, %v1818
        %1820 = vmatmul.bf16.gmra.mxu0 %v1309
        %v1821 = vpop.f32.mrf.mxu0
        %v1822 = vadd.f32 %v1733, %v1821
        %v1823 = vpop.f32.mrf.mxu0
        %v1824 = vadd.f32 %v1735, %v1823
        %1825 = vmatmul.bf16.gmra.mxu0 %v1311
        %v1826 = vpop.f32.mrf.mxu0
        %v1827 = vadd.f32 %v1738, %v1826
        %v1828 = vpop.f32.mrf.mxu0
        %v1829 = vadd.f32 %v1740, %v1828
        %1830 = vmatmul.bf16.gmra.mxu0 %v1313
        %v1831 = vpop.f32.mrf.mxu0
        %v1832 = vadd.f32 %v1743, %v1831
        %v1833 = vpop.f32.mrf.mxu0
        %v1834 = vadd.f32 %v1745, %v1833
        %1835 = vmatmul.bf16.gmra.mxu0 %v1315
        %v1836 = vpop.f32.mrf.mxu0
        %v1837 = vadd.f32 %v1748, %v1836
        %v1838 = vpop.f32.mrf.mxu0
        %v1839 = vadd.f32 %v1750, %v1838
        %1840 = vmatmul.bf16.gmra.mxu0 %v1317
        %v1841 = vpop.f32.mrf.mxu0
        %v1842 = vadd.f32 %v1753, %v1841
        %v1843 = vpop.f32.mrf.mxu0
        %v1844 = vadd.f32 %v1755, %v1843
        %1845 = vmatmul.bf16.gmra.mxu0 %v1319
        %v1846 = vpop.f32.mrf.mxu0
        %v1847 = vadd.f32 %v1758, %v1846
        %v1848 = vpop.f32.mrf.mxu0
        %v1849 = vadd.f32 %v1760, %v1848
        %1850 = vmatmul.bf16.gmra.mxu0 %v1321
        %v1851 = vpop.f32.mrf.mxu0
        %v1852 = vadd.f32 %v1763, %v1851
        %v1853 = vpop.f32.mrf.mxu0
        %v1854 = vadd.f32 %v1765, %v1853
        %1855 = vmatmul.bf16.gmra.mxu0 %v1323
        %v1856 = vpop.f32.mrf.mxu0
        %v1857 = vadd.f32 %v1768, %v1856
        %v1858 = vpop.f32.mrf.mxu0
        %v1859 = vadd.f32 %v1770, %v1858
        %1860 = vmatmul.bf16.gmra.mxu0 %v1325
        %v1861 = vpop.f32.mrf.mxu0
        %v1862 = vadd.f32 %v1773, %v1861
        %v1863 = vpop.f32.mrf.mxu0
        %v1864 = vadd.f32 %v1775, %v1863
        %1865 = vmatmul.bf16.gmra.mxu0 %v1327
        %v1866 = vpop.f32.mrf.mxu0
        %v1867 = vadd.f32 %v1778, %v1866
        %v1868 = vpop.f32.mrf.mxu0
        %v1869 = vadd.f32 %v1780, %v1868
        %1870 = vmatmul.bf16.gmra.mxu0 %v1329
        %v1871 = vpop.f32.mrf.mxu0
        %v1872 = vadd.f32 %v1783, %v1871
        %v1873 = vpop.f32.mrf.mxu0
        %v1874 = vadd.f32 %v1785, %v1873
        %1875 = vmatmul.bf16.gmra.mxu0 %v1331
        %v1876 = vpop.f32.mrf.mxu0
        %v1877 = vadd.f32 %v1788, %v1876
        %v1878 = vpop.f32.mrf.mxu0
        %v1879 = vadd.f32 %v1790, %v1878
        %1880 = vmatmul.bf16.gmra.mxu0 %v1333
        %v1881 = vpop.f32.mrf.mxu0
        %v1882 = vadd.f32 %v1793, %v1881
        %v1883 = vpop.f32.mrf.mxu0
        %v1884 = vadd.f32 %v1795, %v1883
        %1885 = vmatmul.bf16.gmra.mxu0 %v1335
        %v1886 = vpop.f32.mrf.mxu0
        %v1887 = vadd.f32 %v1798, %v1886
        %v1888 = vpop.f32.mrf.mxu0
        %v1889 = vadd.f32 %v1800, %v1888
        %1890 = vdwg.mxu0
        %v1891 = vmax.f32 %v1634, 0.0
        %v1892 = vmax.f32 %v1812, 0.0
        %v1893 = vmax.f32 %v1636, 0.0
        %v1894 = vmax.f32 %v1814, 0.0
        %v1895 = vmax.f32 %v1639, 0.0
        %v1896 = vmax.f32 %v1817, 0.0
        %v1897 = vmax.f32 %v1641, 0.0
        %v1898 = vmax.f32 %v1819, 0.0
        %v1899 = vmax.f32 %v1644, 0.0
        %v1900 = vmax.f32 %v1822, 0.0
        %v1901 = vmax.f32 %v1646, 0.0
        %v1902 = vmax.f32 %v1824, 0.0
        %v1903 = vmax.f32 %v1649, 0.0
        %v1904 = vmax.f32 %v1827, 0.0
        %v1905 = vmax.f32 %v1651, 0.0
        %v1906 = vmax.f32 %v1829, 0.0
        %v1907 = vmax.f32 %v1654, 0.0
        %v1908 = vmax.f32 %v1832, 0.0
        %v1909 = vmax.f32 %v1656, 0.0
        %v1910 = vmax.f32 %v1834, 0.0
        %v1911 = vmax.f32 %v1659, 0.0
        %v1912 = vmax.f32 %v1837, 0.0
        %v1913 = vmax.f32 %v1661, 0.0
        %v1914 = vmax.f32 %v1839, 0.0
        %v1915 = vmax.f32 %v1664, 0.0
        %v1916 = vmax.f32 %v1842, 0.0
        %v1917 = vmax.f32 %v1666, 0.0
        %v1918 = vmax.f32 %v1844, 0.0
        %v1919 = vmax.f32 %v1669, 0.0
        %v1920 = vmax.f32 %v1847, 0.0
        %v1921 = vmax.f32 %v1671, 0.0
        %v1922 = vmax.f32 %v1849, 0.0
        %v1923 = vmax.f32 %v1674, 0.0
        %v1924 = vmax.f32 %v1852, 0.0
        %v1925 = vmax.f32 %v1676, 0.0
        %v1926 = vmax.f32 %v1854, 0.0
        %v1927 = vmax.f32 %v1679, 0.0
        %v1928 = vmax.f32 %v1857, 0.0
        %v1929 = vmax.f32 %v1681, 0.0
        %v1930 = vmax.f32 %v1859, 0.0
        %v1931 = vmax.f32 %v1684, 0.0
        %v1932 = vmax.f32 %v1862, 0.0
        %v1933 = vmax.f32 %v1686, 0.0
        %v1934 = vmax.f32 %v1864, 0.0
        %v1935 = vmax.f32 %v1689, 0.0
        %v1936 = vmax.f32 %v1867, 0.0
        %v1937 = vmax.f32 %v1691, 0.0
        %v1938 = vmax.f32 %v1869, 0.0
        %v1939 = vmax.f32 %v1694, 0.0
        %v1940 = vmax.f32 %v1872, 0.0
        %v1941 = vmax.f32 %v1696, 0.0
        %v1942 = vmax.f32 %v1874, 0.0
        %v1943 = vmax.f32 %v1699, 0.0
        %v1944 = vmax.f32 %v1877, 0.0
        %v1945 = vmax.f32 %v1701, 0.0
        %v1946 = vmax.f32 %v1879, 0.0
        %v1947 = vmax.f32 %v1704, 0.0
        %v1948 = vmax.f32 %v1882, 0.0
        %v1949 = vmax.f32 %v1706, 0.0
        %v1950 = vmax.f32 %v1884, 0.0
        %v1951 = vmax.f32 %v1709, 0.0
        %v1952 = vmax.f32 %v1887, 0.0
        %v1953 = vmax.f32 %v1711, 0.0
        %v1954 = vmax.f32 %v1889, 0.0
        %v1955 = vpack.c.bf16 %v1893, %v1891
        %v1956 = vpack.c.bf16 %v1894, %v1892
        %v1957 = vpack.c.bf16 %v1897, %v1895
        %v1958 = vpack.c.bf16 %v1898, %v1896
        %v1959 = vpack.c.bf16 %v1901, %v1899
        %v1960 = vpack.c.bf16 %v1902, %v1900
        %v1961 = vpack.c.bf16 %v1905, %v1903
        %v1962 = vpack.c.bf16 %v1906, %v1904
        %v1963 = vpack.c.bf16 %v1909, %v1907
        %v1964 = vpack.c.bf16 %v1910, %v1908
        %v1965 = vpack.c.bf16 %v1913, %v1911
        %v1966 = vpack.c.bf16 %v1914, %v1912
        %v1967 = vpack.c.bf16 %v1917, %v1915
        %v1968 = vpack.c.bf16 %v1918, %v1916
        %v1969 = vpack.c.bf16 %v1921, %v1919
        %v1970 = vpack.c.bf16 %v1922, %v1920
        %v1971 = vpack.c.bf16 %v1925, %v1923
        %v1972 = vpack.c.bf16 %v1926, %v1924
        %v1973 = vpack.c.bf16 %v1929, %v1927
        %v1974 = vpack.c.bf16 %v1930, %v1928
        %v1975 = vpack.c.bf16 %v1933, %v1931
        %v1976 = vpack.c.bf16 %v1934, %v1932
        %v1977 = vpack.c.bf16 %v1937, %v1935
        %v1978 = vpack.c.bf16 %v1938, %v1936
        %v1979 = vpack.c.bf16 %v1941, %v1939
        %v1980 = vpack.c.bf16 %v1942, %v1940
        %v1981 = vpack.c.bf16 %v1945, %v1943
        %v1982 = vpack.c.bf16 %v1946, %v1944
        %v1983 = vpack.c.bf16 %v1949, %v1947
        %v1984 = vpack.c.bf16 %v1950, %v1948
        %v1985 = vpack.c.bf16 %v1953, %v1951
        %v1986 = vpack.c.bf16 %v1954, %v1952
        %s1987 = scalar_lea.vmem [#allocation6], 256
        %v1988 = vld [vmem:[%s1987] sm:$0xff]
        %v1989 = vld [vmem:[%s1987 + $0x8] sm:$0xff]
        %v1990 = vld [vmem:[%s1987 + $0x10] sm:$0xff]
        %v1991 = vld [vmem:[%s1987 + $0x18] sm:$0xff]
        %v1992 = vld [vmem:[%s1987 + $0x20] sm:$0xff]
        %v1993 = vld [vmem:[%s1987 + $0x28] sm:$0xff]
        %v1994 = vld [vmem:[%s1987 + $0x30] sm:$0xff]
        %v1995 = vld [vmem:[%s1987 + $0x38] sm:$0xff]
        %v1996 = vld [vmem:[%s1987 + $0x40] sm:$0xff]
        %v1997 = vld [vmem:[%s1987 + $0x48] sm:$0xff]
        %v1998 = vld [vmem:[%s1987 + $0x50] sm:$0xff]
        %v1999 = vld [vmem:[%s1987 + $0x58] sm:$0xff]
        %v2000 = vld [vmem:[%s1987 + $0x60] sm:$0xff]
        %v2001 = vld [vmem:[%s1987 + $0x68] sm:$0xff]
        %v2002 = vld [vmem:[%s1987 + $0x70] sm:$0xff]
        %v2003 = vld [vmem:[%s1987 + $0x78] sm:$0xff]
        %v2004 = vld [vmem:[%s1987 + $0x80] sm:$0xff]
        %v2005 = vld [vmem:[%s1987 + $0x88] sm:$0xff]
        %v2006 = vld [vmem:[%s1987 + $0x90] sm:$0xff]
        %v2007 = vld [vmem:[%s1987 + $0x98] sm:$0xff]
        %v2008 = vld [vmem:[%s1987 + $0xa0] sm:$0xff]
        %v2009 = vld [vmem:[%s1987 + $0xa8] sm:$0xff]
        %v2010 = vld [vmem:[%s1987 + $0xb0] sm:$0xff]
        %v2011 = vld [vmem:[%s1987 + $0xb8] sm:$0xff]
        %v2012 = vld [vmem:[%s1987 + $0xc0] sm:$0xff]
        %v2013 = vld [vmem:[%s1987 + $0xc8] sm:$0xff]
        %v2014 = vld [vmem:[%s1987 + $0xd0] sm:$0xff]
        %v2015 = vld [vmem:[%s1987 + $0xd8] sm:$0xff]
        %v2016 = vld [vmem:[%s1987 + $0xe0] sm:$0xff]
        %v2017 = vld [vmem:[%s1987 + $0xe8] sm:$0xff]
        %v2018 = vld [vmem:[%s1987 + $0xf0] sm:$0xff]
        %v2019 = vld [vmem:[%s1987 + $0xf8] sm:$0xff]
        %s2020 = scalar_lea.vmem [#allocation4], 2
        %v2021 = vld [vmem:[%s2020] ss:$8 sm:$0x3]
        %v2023 = vperm.slane %v2021, 0
        %v2024 = vperm.slane %v2021, 1
        %v2059 = vunpack.c.l.b16 %v1988
        %v2060 = vunpack.c.h.b16 %v1988
        %v2061 = vunpack.c.l.b16 %v1989
        %v2062 = vunpack.c.h.b16 %v1989
        %v2063 = vunpack.c.l.b16 %v1990
        %v2064 = vunpack.c.h.b16 %v1990
        %v2065 = vunpack.c.l.b16 %v1991
        %v2066 = vunpack.c.h.b16 %v1991
        %v2067 = vunpack.c.l.b16 %v1992
        %v2068 = vunpack.c.h.b16 %v1992
        %v2069 = vunpack.c.l.b16 %v1993
        %v2070 = vunpack.c.h.b16 %v1993
        %v2071 = vunpack.c.l.b16 %v1994
        %v2072 = vunpack.c.h.b16 %v1994
        %v2073 = vunpack.c.l.b16 %v1995
        %v2074 = vunpack.c.h.b16 %v1995
        %v2075 = vunpack.c.l.b16 %v1996
        %v2076 = vunpack.c.h.b16 %v1996
        %v2077 = vunpack.c.l.b16 %v1997
        %v2078 = vunpack.c.h.b16 %v1997
        %v2079 = vunpack.c.l.b16 %v1998
        %v2080 = vunpack.c.h.b16 %v1998
        %v2081 = vunpack.c.l.b16 %v1999
        %v2082 = vunpack.c.h.b16 %v1999
        %v2083 = vunpack.c.l.b16 %v2000
        %v2084 = vunpack.c.h.b16 %v2000
        %v2085 = vunpack.c.l.b16 %v2001
        %v2086 = vunpack.c.h.b16 %v2001
        %v2087 = vunpack.c.l.b16 %v2002
        %v2088 = vunpack.c.h.b16 %v2002
        %v2089 = vunpack.c.l.b16 %v2003
        %v2090 = vunpack.c.h.b16 %v2003
        %v2091 = vunpack.c.l.b16 %v2004
        %v2092 = vunpack.c.h.b16 %v2004
        %v2093 = vunpack.c.l.b16 %v2005
        %v2094 = vunpack.c.h.b16 %v2005
        %v2095 = vunpack.c.l.b16 %v2006
        %v2096 = vunpack.c.h.b16 %v2006
        %v2097 = vunpack.c.l.b16 %v2007
        %v2098 = vunpack.c.h.b16 %v2007
        %v2099 = vunpack.c.l.b16 %v2008
        %v2100 = vunpack.c.h.b16 %v2008
        %v2101 = vunpack.c.l.b16 %v2009
        %v2102 = vunpack.c.h.b16 %v2009
        %v2103 = vunpack.c.l.b16 %v2010
        %v2104 = vunpack.c.h.b16 %v2010
        %v2105 = vunpack.c.l.b16 %v2011
        %v2106 = vunpack.c.h.b16 %v2011
        %v2107 = vunpack.c.l.b16 %v2012
        %v2108 = vunpack.c.h.b16 %v2012
        %v2109 = vunpack.c.l.b16 %v2013
        %v2110 = vunpack.c.h.b16 %v2013
        %v2111 = vunpack.c.l.b16 %v2014
        %v2112 = vunpack.c.h.b16 %v2014
        %v2113 = vunpack.c.l.b16 %v2015
        %v2114 = vunpack.c.h.b16 %v2015
        %v2115 = vunpack.c.l.b16 %v2016
        %v2116 = vunpack.c.h.b16 %v2016
        %v2117 = vunpack.c.l.b16 %v2017
        %v2118 = vunpack.c.h.b16 %v2017
        %v2119 = vunpack.c.l.b16 %v2018
        %v2120 = vunpack.c.h.b16 %v2018
        %v2121 = vunpack.c.l.b16 %v2019
        %v2122 = vunpack.c.h.b16 %v2019
        %v2123 = vpack.c.b16 %v2061, %v2059
        %v2124 = vpack.c.b16 %v2062, %v2060
        %v2125 = vpack.c.b16 %v2065, %v2063
        %v2126 = vpack.c.b16 %v2066, %v2064
        %v2127 = vpack.c.b16 %v2069, %v2067
        %v2128 = vpack.c.b16 %v2070, %v2068
        %v2129 = vpack.c.b16 %v2073, %v2071
        %v2130 = vpack.c.b16 %v2074, %v2072
        %v2131 = vpack.c.b16 %v2077, %v2075
        %v2132 = vpack.c.b16 %v2078, %v2076
        %v2133 = vpack.c.b16 %v2081, %v2079
        %v2134 = vpack.c.b16 %v2082, %v2080
        %v2135 = vpack.c.b16 %v2085, %v2083
        %v2136 = vpack.c.b16 %v2086, %v2084
        %v2137 = vpack.c.b16 %v2089, %v2087
        %v2138 = vpack.c.b16 %v2090, %v2088
        %v2139 = vpack.c.b16 %v2093, %v2091
        %v2140 = vpack.c.b16 %v2094, %v2092
        %v2141 = vpack.c.b16 %v2097, %v2095
        %v2142 = vpack.c.b16 %v2098, %v2096
        %v2143 = vpack.c.b16 %v2101, %v2099
        %v2144 = vpack.c.b16 %v2102, %v2100
        %v2145 = vpack.c.b16 %v2105, %v2103
        %v2146 = vpack.c.b16 %v2106, %v2104
        %v2147 = vpack.c.b16 %v2109, %v2107
        %v2148 = vpack.c.b16 %v2110, %v2108
        %v2149 = vpack.c.b16 %v2113, %v2111
        %v2150 = vpack.c.b16 %v2114, %v2112
        %v2151 = vpack.c.b16 %v2117, %v2115
        %v2152 = vpack.c.b16 %v2118, %v2116
        %v2153 = vpack.c.b16 %v2121, %v2119
        %v2154 = vpack.c.b16 %v2122, %v2120
        %2187 = vmatpush.bf16.msra.mxu0 %v2137
        %2188 = vmatpush.bf16.msra.mxu0 %v2135
        %2189 = vmatpush.bf16.msra.mxu0 %v2133
        %2190 = vmatpush.bf16.msra.mxu0 %v2131
        %2191 = vmatpush.bf16.msra.mxu0 %v2129
        %2192 = vmatpush.bf16.msra.mxu0 %v2127
        %2193 = vmatpush.bf16.msra.mxu0 %v2125
        %2194 = vmatpush.bf16.msra.mxu0 %v2123
        %2195 = vmatmul.bf16.gmra.mxu0 %v1955
        %v2196 = vpop.f32.mrf.mxu0
        %v2197 = vadd.f32 %v2023, %v2196
        %v2198 = vpop.f32.mrf.mxu0
        %v2199 = vadd.f32 %v2023, %v2198
        %2200 = vmatmul.bf16.gmra.mxu0 %v1957
        %v2201 = vpop.f32.mrf.mxu0
        %v2202 = vadd.f32 %v2023, %v2201
        %v2203 = vpop.f32.mrf.mxu0
        %v2204 = vadd.f32 %v2023, %v2203
        %2205 = vmatmul.bf16.gmra.mxu0 %v1959
        %v2206 = vpop.f32.mrf.mxu0
        %v2207 = vadd.f32 %v2023, %v2206
        %v2208 = vpop.f32.mrf.mxu0
        %v2209 = vadd.f32 %v2023, %v2208
        %2210 = vmatmul.bf16.gmra.mxu0 %v1961
        %v2211 = vpop.f32.mrf.mxu0
        %v2212 = vadd.f32 %v2023, %v2211
        %v2213 = vpop.f32.mrf.mxu0
        %v2214 = vadd.f32 %v2023, %v2213
        %2215 = vmatmul.bf16.gmra.mxu0 %v1963
        %v2216 = vpop.f32.mrf.mxu0
        %v2217 = vadd.f32 %v2023, %v2216
        %v2218 = vpop.f32.mrf.mxu0
        %v2219 = vadd.f32 %v2023, %v2218
        %2220 = vmatmul.bf16.gmra.mxu0 %v1965
        %v2221 = vpop.f32.mrf.mxu0
        %v2222 = vadd.f32 %v2023, %v2221
        %v2223 = vpop.f32.mrf.mxu0
        %v2224 = vadd.f32 %v2023, %v2223
        %2225 = vmatmul.bf16.gmra.mxu0 %v1967
        %v2226 = vpop.f32.mrf.mxu0
        %v2227 = vadd.f32 %v2023, %v2226
        %v2228 = vpop.f32.mrf.mxu0
        %v2229 = vadd.f32 %v2023, %v2228
        %2230 = vmatmul.bf16.gmra.mxu0 %v1969
        %v2231 = vpop.f32.mrf.mxu0
        %v2232 = vadd.f32 %v2023, %v2231
        %v2233 = vpop.f32.mrf.mxu0
        %v2234 = vadd.f32 %v2023, %v2233
        %2235 = vmatmul.bf16.gmra.mxu0 %v1971
        %v2236 = vpop.f32.mrf.mxu0
        %v2237 = vadd.f32 %v2023, %v2236
        %v2238 = vpop.f32.mrf.mxu0
        %v2239 = vadd.f32 %v2023, %v2238
        %2240 = vmatmul.bf16.gmra.mxu0 %v1973
        %v2241 = vpop.f32.mrf.mxu0
        %v2242 = vadd.f32 %v2023, %v2241
        %v2243 = vpop.f32.mrf.mxu0
        %v2244 = vadd.f32 %v2023, %v2243
        %2245 = vmatmul.bf16.gmra.mxu0 %v1975
        %v2246 = vpop.f32.mrf.mxu0
        %v2247 = vadd.f32 %v2023, %v2246
        %v2248 = vpop.f32.mrf.mxu0
        %v2249 = vadd.f32 %v2023, %v2248
        %2250 = vmatmul.bf16.gmra.mxu0 %v1977
        %v2251 = vpop.f32.mrf.mxu0
        %v2252 = vadd.f32 %v2023, %v2251
        %v2253 = vpop.f32.mrf.mxu0
        %v2254 = vadd.f32 %v2023, %v2253
        %2255 = vmatmul.bf16.gmra.mxu0 %v1979
        %v2256 = vpop.f32.mrf.mxu0
        %v2257 = vadd.f32 %v2023, %v2256
        %v2258 = vpop.f32.mrf.mxu0
        %v2259 = vadd.f32 %v2023, %v2258
        %2260 = vmatmul.bf16.gmra.mxu0 %v1981
        %v2261 = vpop.f32.mrf.mxu0
        %v2262 = vadd.f32 %v2023, %v2261
        %v2263 = vpop.f32.mrf.mxu0
        %v2264 = vadd.f32 %v2023, %v2263
        %2265 = vmatmul.bf16.gmra.mxu0 %v1983
        %v2266 = vpop.f32.mrf.mxu0
        %v2267 = vadd.f32 %v2023, %v2266
        %v2268 = vpop.f32.mrf.mxu0
        %v2269 = vadd.f32 %v2023, %v2268
        %2270 = vmatmul.bf16.gmra.mxu0 %v1985
        %v2271 = vpop.f32.mrf.mxu0
        %v2272 = vadd.f32 %v2023, %v2271
        %v2273 = vpop.f32.mrf.mxu0
        %v2274 = vadd.f32 %v2023, %v2273
        %2275 = vdwg.mxu0
        %2276 = vmatpush.bf16.msra.mxu0 %v2153
        %2277 = vmatpush.bf16.msra.mxu0 %v2151
        %2278 = vmatpush.bf16.msra.mxu0 %v2149
        %2279 = vmatpush.bf16.msra.mxu0 %v2147
        %2280 = vmatpush.bf16.msra.mxu0 %v2145
        %2281 = vmatpush.bf16.msra.mxu0 %v2143
        %2282 = vmatpush.bf16.msra.mxu0 %v2141
        %2283 = vmatpush.bf16.msra.mxu0 %v2139
        %2284 = vmatmul.bf16.gmra.mxu0 %v1956
        %v2285 = vpop.f32.mrf.mxu0
        %v2286 = vadd.f32 %v2197, %v2285
        %v2287 = vpop.f32.mrf.mxu0
        %v2288 = vadd.f32 %v2199, %v2287
        %2289 = vmatmul.bf16.gmra.mxu0 %v1958
        %v2290 = vpop.f32.mrf.mxu0
        %v2291 = vadd.f32 %v2202, %v2290
        %v2292 = vpop.f32.mrf.mxu0
        %v2293 = vadd.f32 %v2204, %v2292
        %2294 = vmatmul.bf16.gmra.mxu0 %v1960
        %v2295 = vpop.f32.mrf.mxu0
        %v2296 = vadd.f32 %v2207, %v2295
        %v2297 = vpop.f32.mrf.mxu0
        %v2298 = vadd.f32 %v2209, %v2297
        %2299 = vmatmul.bf16.gmra.mxu0 %v1962
        %v2300 = vpop.f32.mrf.mxu0
        %v2301 = vadd.f32 %v2212, %v2300
        %v2302 = vpop.f32.mrf.mxu0
        %v2303 = vadd.f32 %v2214, %v2302
        %2304 = vmatmul.bf16.gmra.mxu0 %v1964
        %v2305 = vpop.f32.mrf.mxu0
        %v2306 = vadd.f32 %v2217, %v2305
        %v2307 = vpop.f32.mrf.mxu0
        %v2308 = vadd.f32 %v2219, %v2307
        %2309 = vmatmul.bf16.gmra.mxu0 %v1966
        %v2310 = vpop.f32.mrf.mxu0
        %v2311 = vadd.f32 %v2222, %v2310
        %v2312 = vpop.f32.mrf.mxu0
        %v2313 = vadd.f32 %v2224, %v2312
        %2314 = vmatmul.bf16.gmra.mxu0 %v1968
        %v2315 = vpop.f32.mrf.mxu0
        %v2316 = vadd.f32 %v2227, %v2315
        %v2317 = vpop.f32.mrf.mxu0
        %v2318 = vadd.f32 %v2229, %v2317
        %2319 = vmatmul.bf16.gmra.mxu0 %v1970
        %v2320 = vpop.f32.mrf.mxu0
        %v2321 = vadd.f32 %v2232, %v2320
        %v2322 = vpop.f32.mrf.mxu0
        %v2323 = vadd.f32 %v2234, %v2322
        %2324 = vmatmul.bf16.gmra.mxu0 %v1972
        %v2325 = vpop.f32.mrf.mxu0
        %v2326 = vadd.f32 %v2237, %v2325
        %v2327 = vpop.f32.mrf.mxu0
        %v2328 = vadd.f32 %v2239, %v2327
        %2329 = vmatmul.bf16.gmra.mxu0 %v1974
        %v2330 = vpop.f32.mrf.mxu0
        %v2331 = vadd.f32 %v2242, %v2330
        %v2332 = vpop.f32.mrf.mxu0
        %v2333 = vadd.f32 %v2244, %v2332
        %2334 = vmatmul.bf16.gmra.mxu0 %v1976
        %v2335 = vpop.f32.mrf.mxu0
        %v2336 = vadd.f32 %v2247, %v2335
        %v2337 = vpop.f32.mrf.mxu0
        %v2338 = vadd.f32 %v2249, %v2337
        %2339 = vmatmul.bf16.gmra.mxu0 %v1978
        %v2340 = vpop.f32.mrf.mxu0
        %v2341 = vadd.f32 %v2252, %v2340
        %v2342 = vpop.f32.mrf.mxu0
        %v2343 = vadd.f32 %v2254, %v2342
        %2344 = vmatmul.bf16.gmra.mxu0 %v1980
        %v2345 = vpop.f32.mrf.mxu0
        %v2346 = vadd.f32 %v2257, %v2345
        %v2347 = vpop.f32.mrf.mxu0
        %v2348 = vadd.f32 %v2259, %v2347
        %2349 = vmatmul.bf16.gmra.mxu0 %v1982
        %v2350 = vpop.f32.mrf.mxu0
        %v2351 = vadd.f32 %v2262, %v2350
        %v2352 = vpop.f32.mrf.mxu0
        %v2353 = vadd.f32 %v2264, %v2352
        %2354 = vmatmul.bf16.gmra.mxu0 %v1984
        %v2355 = vpop.f32.mrf.mxu0
        %v2356 = vadd.f32 %v2267, %v2355
        %v2357 = vpop.f32.mrf.mxu0
        %v2358 = vadd.f32 %v2269, %v2357
        %2359 = vmatmul.bf16.gmra.mxu0 %v1986
        %v2360 = vpop.f32.mrf.mxu0
        %v2361 = vadd.f32 %v2272, %v2360
        %v2362 = vpop.f32.mrf.mxu0
        %v2363 = vadd.f32 %v2274, %v2362
        %2364 = vdwg.mxu0
        %2365 = vmatpush.bf16.msra.mxu0 %v2138
        %2366 = vmatpush.bf16.msra.mxu0 %v2136
        %2367 = vmatpush.bf16.msra.mxu0 %v2134
        %2368 = vmatpush.bf16.msra.mxu0 %v2132
        %2369 = vmatpush.bf16.msra.mxu0 %v2130
        %2370 = vmatpush.bf16.msra.mxu0 %v2128
        %2371 = vmatpush.bf16.msra.mxu0 %v2126
        %2372 = vmatpush.bf16.msra.mxu0 %v2124
        %2373 = vmatmul.bf16.gmra.mxu0 %v1955
        %v2374 = vpop.f32.mrf.mxu0
        %v2375 = vadd.f32 %v2024, %v2374
        %v2376 = vpop.f32.mrf.mxu0
        %v2377 = vadd.f32 %v2024, %v2376
        %2378 = vmatmul.bf16.gmra.mxu0 %v1957
        %v2379 = vpop.f32.mrf.mxu0
        %v2380 = vadd.f32 %v2024, %v2379
        %v2381 = vpop.f32.mrf.mxu0
        %v2382 = vadd.f32 %v2024, %v2381
        %2383 = vmatmul.bf16.gmra.mxu0 %v1959
        %v2384 = vpop.f32.mrf.mxu0
        %v2385 = vadd.f32 %v2024, %v2384
        %v2386 = vpop.f32.mrf.mxu0
        %v2387 = vadd.f32 %v2024, %v2386
        %2388 = vmatmul.bf16.gmra.mxu0 %v1961
        %v2389 = vpop.f32.mrf.mxu0
        %v2390 = vadd.f32 %v2024, %v2389
        %v2391 = vpop.f32.mrf.mxu0
        %v2392 = vadd.f32 %v2024, %v2391
        %2393 = vmatmul.bf16.gmra.mxu0 %v1963
        %v2394 = vpop.f32.mrf.mxu0
        %v2395 = vadd.f32 %v2024, %v2394
        %v2396 = vpop.f32.mrf.mxu0
        %v2397 = vadd.f32 %v2024, %v2396
        %2398 = vmatmul.bf16.gmra.mxu0 %v1965
        %v2399 = vpop.f32.mrf.mxu0
        %v2400 = vadd.f32 %v2024, %v2399
        %v2401 = vpop.f32.mrf.mxu0
        %v2402 = vadd.f32 %v2024, %v2401
        %2403 = vmatmul.bf16.gmra.mxu0 %v1967
        %v2404 = vpop.f32.mrf.mxu0
        %v2405 = vadd.f32 %v2024, %v2404
        %v2406 = vpop.f32.mrf.mxu0
        %v2407 = vadd.f32 %v2024, %v2406
        %2408 = vmatmul.bf16.gmra.mxu0 %v1969
        %v2409 = vpop.f32.mrf.mxu0
        %v2410 = vadd.f32 %v2024, %v2409
        %v2411 = vpop.f32.mrf.mxu0
        %v2412 = vadd.f32 %v2024, %v2411
        %2413 = vmatmul.bf16.gmra.mxu0 %v1971
        %v2414 = vpop.f32.mrf.mxu0
        %v2415 = vadd.f32 %v2024, %v2414
        %v2416 = vpop.f32.mrf.mxu0
        %v2417 = vadd.f32 %v2024, %v2416
        %2418 = vmatmul.bf16.gmra.mxu0 %v1973
        %v2419 = vpop.f32.mrf.mxu0
        %v2420 = vadd.f32 %v2024, %v2419
        %v2421 = vpop.f32.mrf.mxu0
        %v2422 = vadd.f32 %v2024, %v2421
        %2423 = vmatmul.bf16.gmra.mxu0 %v1975
        %v2424 = vpop.f32.mrf.mxu0
        %v2425 = vadd.f32 %v2024, %v2424
        %v2426 = vpop.f32.mrf.mxu0
        %v2427 = vadd.f32 %v2024, %v2426
        %2428 = vmatmul.bf16.gmra.mxu0 %v1977
        %v2429 = vpop.f32.mrf.mxu0
        %v2430 = vadd.f32 %v2024, %v2429
        %v2431 = vpop.f32.mrf.mxu0
        %v2432 = vadd.f32 %v2024, %v2431
        %2433 = vmatmul.bf16.gmra.mxu0 %v1979
        %v2434 = vpop.f32.mrf.mxu0
        %v2435 = vadd.f32 %v2024, %v2434
        %v2436 = vpop.f32.mrf.mxu0
        %v2437 = vadd.f32 %v2024, %v2436
        %2438 = vmatmul.bf16.gmra.mxu0 %v1981
        %v2439 = vpop.f32.mrf.mxu0
        %v2440 = vadd.f32 %v2024, %v2439
        %v2441 = vpop.f32.mrf.mxu0
        %v2442 = vadd.f32 %v2024, %v2441
        %2443 = vmatmul.bf16.gmra.mxu0 %v1983
        %v2444 = vpop.f32.mrf.mxu0
        %v2445 = vadd.f32 %v2024, %v2444
        %v2446 = vpop.f32.mrf.mxu0
        %v2447 = vadd.f32 %v2024, %v2446
        %2448 = vmatmul.bf16.gmra.mxu0 %v1985
        %v2449 = vpop.f32.mrf.mxu0
        %v2450 = vadd.f32 %v2024, %v2449
        %v2451 = vpop.f32.mrf.mxu0
        %v2452 = vadd.f32 %v2024, %v2451
        %2453 = vdwg.mxu0
        %2454 = vmatpush.bf16.msra.mxu0 %v2154
        %2455 = vmatpush.bf16.msra.mxu0 %v2152
        %2456 = vmatpush.bf16.msra.mxu0 %v2150
        %2457 = vmatpush.bf16.msra.mxu0 %v2148
        %2458 = vmatpush.bf16.msra.mxu0 %v2146
        %2459 = vmatpush.bf16.msra.mxu0 %v2144
        %2460 = vmatpush.bf16.msra.mxu0 %v2142
        %2461 = vmatpush.bf16.msra.mxu0 %v2140
        %2462 = vmatmul.bf16.gmra.mxu0 %v1956
        %v2463 = vpop.f32.mrf.mxu0
        %v2464 = vadd.f32 %v2375, %v2463
        %v2465 = vpop.f32.mrf.mxu0
        %v2466 = vadd.f32 %v2377, %v2465
        %2467 = vmatmul.bf16.gmra.mxu0 %v1958
        %v2468 = vpop.f32.mrf.mxu0
        %v2469 = vadd.f32 %v2380, %v2468
        %v2470 = vpop.f32.mrf.mxu0
        %v2471 = vadd.f32 %v2382, %v2470
        %2472 = vmatmul.bf16.gmra.mxu0 %v1960
        %v2473 = vpop.f32.mrf.mxu0
        %v2474 = vadd.f32 %v2385, %v2473
        %v2475 = vpop.f32.mrf.mxu0
        %v2476 = vadd.f32 %v2387, %v2475
        %2477 = vmatmul.bf16.gmra.mxu0 %v1962
        %v2478 = vpop.f32.mrf.mxu0
        %v2479 = vadd.f32 %v2390, %v2478
        %v2480 = vpop.f32.mrf.mxu0
        %v2481 = vadd.f32 %v2392, %v2480
        %2482 = vmatmul.bf16.gmra.mxu0 %v1964
        %v2483 = vpop.f32.mrf.mxu0
        %v2484 = vadd.f32 %v2395, %v2483
        %v2485 = vpop.f32.mrf.mxu0
        %v2486 = vadd.f32 %v2397, %v2485
        %2487 = vmatmul.bf16.gmra.mxu0 %v1966
        %v2488 = vpop.f32.mrf.mxu0
        %v2489 = vadd.f32 %v2400, %v2488
        %v2490 = vpop.f32.mrf.mxu0
        %v2491 = vadd.f32 %v2402, %v2490
        %2492 = vmatmul.bf16.gmra.mxu0 %v1968
        %v2493 = vpop.f32.mrf.mxu0
        %v2494 = vadd.f32 %v2405, %v2493
        %v2495 = vpop.f32.mrf.mxu0
        %v2496 = vadd.f32 %v2407, %v2495
        %2497 = vmatmul.bf16.gmra.mxu0 %v1970
        %v2498 = vpop.f32.mrf.mxu0
        %v2499 = vadd.f32 %v2410, %v2498
        %v2500 = vpop.f32.mrf.mxu0
        %v2501 = vadd.f32 %v2412, %v2500
        %2502 = vmatmul.bf16.gmra.mxu0 %v1972
        %v2503 = vpop.f32.mrf.mxu0
        %v2504 = vadd.f32 %v2415, %v2503
        %v2505 = vpop.f32.mrf.mxu0
        %v2506 = vadd.f32 %v2417, %v2505
        %2507 = vmatmul.bf16.gmra.mxu0 %v1974
        %v2508 = vpop.f32.mrf.mxu0
        %v2509 = vadd.f32 %v2420, %v2508
        %v2510 = vpop.f32.mrf.mxu0
        %v2511 = vadd.f32 %v2422, %v2510
        %2512 = vmatmul.bf16.gmra.mxu0 %v1976
        %v2513 = vpop.f32.mrf.mxu0
        %v2514 = vadd.f32 %v2425, %v2513
        %v2515 = vpop.f32.mrf.mxu0
        %v2516 = vadd.f32 %v2427, %v2515
        %2517 = vmatmul.bf16.gmra.mxu0 %v1978
        %v2518 = vpop.f32.mrf.mxu0
        %v2519 = vadd.f32 %v2430, %v2518
        %v2520 = vpop.f32.mrf.mxu0
        %v2521 = vadd.f32 %v2432, %v2520
        %2522 = vmatmul.bf16.gmra.mxu0 %v1980
        %v2523 = vpop.f32.mrf.mxu0
        %v2524 = vadd.f32 %v2435, %v2523
        %v2525 = vpop.f32.mrf.mxu0
        %v2526 = vadd.f32 %v2437, %v2525
        %2527 = vmatmul.bf16.gmra.mxu0 %v1982
        %v2528 = vpop.f32.mrf.mxu0
        %v2529 = vadd.f32 %v2440, %v2528
        %v2530 = vpop.f32.mrf.mxu0
        %v2531 = vadd.f32 %v2442, %v2530
        %2532 = vmatmul.bf16.gmra.mxu0 %v1984
        %v2533 = vpop.f32.mrf.mxu0
        %v2534 = vadd.f32 %v2445, %v2533
        %v2535 = vpop.f32.mrf.mxu0
        %v2536 = vadd.f32 %v2447, %v2535
        %2537 = vmatmul.bf16.gmra.mxu0 %v1986
        %v2538 = vpop.f32.mrf.mxu0
        %v2539 = vadd.f32 %v2450, %v2538
        %v2540 = vpop.f32.mrf.mxu0
        %v2541 = vadd.f32 %v2452, %v2540
        %2542 = vdwg.mxu0
        %v2543 = vmax.f32 %v2286, 0.0
        %v2544 = vmax.f32 %v2464, 0.0
        %v2545 = vmax.f32 %v2288, 0.0
        %v2546 = vmax.f32 %v2466, 0.0
        %v2547 = vmax.f32 %v2291, 0.0
        %v2548 = vmax.f32 %v2469, 0.0
        %v2549 = vmax.f32 %v2293, 0.0
        %v2550 = vmax.f32 %v2471, 0.0
        %v2551 = vmax.f32 %v2296, 0.0
        %v2552 = vmax.f32 %v2474, 0.0
        %v2553 = vmax.f32 %v2298, 0.0
        %v2554 = vmax.f32 %v2476, 0.0
        %v2555 = vmax.f32 %v2301, 0.0
        %v2556 = vmax.f32 %v2479, 0.0
        %v2557 = vmax.f32 %v2303, 0.0
        %v2558 = vmax.f32 %v2481, 0.0
        %v2559 = vmax.f32 %v2306, 0.0
        %v2560 = vmax.f32 %v2484, 0.0
        %v2561 = vmax.f32 %v2308, 0.0
        %v2562 = vmax.f32 %v2486, 0.0
        %v2563 = vmax.f32 %v2311, 0.0
        %v2564 = vmax.f32 %v2489, 0.0
        %v2565 = vmax.f32 %v2313, 0.0
        %v2566 = vmax.f32 %v2491, 0.0
        %v2567 = vmax.f32 %v2316, 0.0
        %v2568 = vmax.f32 %v2494, 0.0
        %v2569 = vmax.f32 %v2318, 0.0
        %v2570 = vmax.f32 %v2496, 0.0
        %v2571 = vmax.f32 %v2321, 0.0
        %v2572 = vmax.f32 %v2499, 0.0
        %v2573 = vmax.f32 %v2323, 0.0
        %v2574 = vmax.f32 %v2501, 0.0
        %v2575 = vmax.f32 %v2326, 0.0
        %v2576 = vmax.f32 %v2504, 0.0
        %v2577 = vmax.f32 %v2328, 0.0
        %v2578 = vmax.f32 %v2506, 0.0
        %v2579 = vmax.f32 %v2331, 0.0
        %v2580 = vmax.f32 %v2509, 0.0
        %v2581 = vmax.f32 %v2333, 0.0
        %v2582 = vmax.f32 %v2511, 0.0
        %v2583 = vmax.f32 %v2336, 0.0
        %v2584 = vmax.f32 %v2514, 0.0
        %v2585 = vmax.f32 %v2338, 0.0
        %v2586 = vmax.f32 %v2516, 0.0
        %v2587 = vmax.f32 %v2341, 0.0
        %v2588 = vmax.f32 %v2519, 0.0
        %v2589 = vmax.f32 %v2343, 0.0
        %v2590 = vmax.f32 %v2521, 0.0
        %v2591 = vmax.f32 %v2346, 0.0
        %v2592 = vmax.f32 %v2524, 0.0
        %v2593 = vmax.f32 %v2348, 0.0
        %v2594 = vmax.f32 %v2526, 0.0
        %v2595 = vmax.f32 %v2351, 0.0
        %v2596 = vmax.f32 %v2529, 0.0
        %v2597 = vmax.f32 %v2353, 0.0
        %v2598 = vmax.f32 %v2531, 0.0
        %v2599 = vmax.f32 %v2356, 0.0
        %v2600 = vmax.f32 %v2534, 0.0
        %v2601 = vmax.f32 %v2358, 0.0
        %v2602 = vmax.f32 %v2536, 0.0
        %v2603 = vmax.f32 %v2361, 0.0
        %v2604 = vmax.f32 %v2539, 0.0
        %v2605 = vmax.f32 %v2363, 0.0
        %v2606 = vmax.f32 %v2541, 0.0
        %v2607 = vpack.c.bf16 %v2545, %v2543
        %v2608 = vpack.c.bf16 %v2546, %v2544
        %v2609 = vpack.c.bf16 %v2549, %v2547
        %v2610 = vpack.c.bf16 %v2550, %v2548
        %v2611 = vpack.c.bf16 %v2553, %v2551
        %v2612 = vpack.c.bf16 %v2554, %v2552
        %v2613 = vpack.c.bf16 %v2557, %v2555
        %v2614 = vpack.c.bf16 %v2558, %v2556
        %v2615 = vpack.c.bf16 %v2561, %v2559
        %v2616 = vpack.c.bf16 %v2562, %v2560
        %v2617 = vpack.c.bf16 %v2565, %v2563
        %v2618 = vpack.c.bf16 %v2566, %v2564
        %v2619 = vpack.c.bf16 %v2569, %v2567
        %v2620 = vpack.c.bf16 %v2570, %v2568
        %v2621 = vpack.c.bf16 %v2573, %v2571
        %v2622 = vpack.c.bf16 %v2574, %v2572
        %v2623 = vpack.c.bf16 %v2577, %v2575
        %v2624 = vpack.c.bf16 %v2578, %v2576
        %v2625 = vpack.c.bf16 %v2581, %v2579
        %v2626 = vpack.c.bf16 %v2582, %v2580
        %v2627 = vpack.c.bf16 %v2585, %v2583
        %v2628 = vpack.c.bf16 %v2586, %v2584
        %v2629 = vpack.c.bf16 %v2589, %v2587
        %v2630 = vpack.c.bf16 %v2590, %v2588
        %v2631 = vpack.c.bf16 %v2593, %v2591
        %v2632 = vpack.c.bf16 %v2594, %v2592
        %v2633 = vpack.c.bf16 %v2597, %v2595
        %v2634 = vpack.c.bf16 %v2598, %v2596
        %v2635 = vpack.c.bf16 %v2601, %v2599
        %v2636 = vpack.c.bf16 %v2602, %v2600
        %v2637 = vpack.c.bf16 %v2605, %v2603
        %v2638 = vpack.c.bf16 %v2606, %v2604
        %s2639 = scalar_lea.vmem [#allocation6], 512
        %v2640 = vld [vmem:[%s2639] sm:$0xff]
        %v2641 = vld [vmem:[%s2639 + $0x8] sm:$0xff]
        %v2642 = vld [vmem:[%s2639 + $0x10] sm:$0xff]
        %v2643 = vld [vmem:[%s2639 + $0x18] sm:$0xff]
        %v2644 = vld [vmem:[%s2639 + $0x20] sm:$0xff]
        %v2645 = vld [vmem:[%s2639 + $0x28] sm:$0xff]
        %v2646 = vld [vmem:[%s2639 + $0x30] sm:$0xff]
        %v2647 = vld [vmem:[%s2639 + $0x38] sm:$0xff]
        %v2648 = vld [vmem:[%s2639 + $0x40] sm:$0xff]
        %v2649 = vld [vmem:[%s2639 + $0x48] sm:$0xff]
        %v2650 = vld [vmem:[%s2639 + $0x50] sm:$0xff]
        %v2651 = vld [vmem:[%s2639 + $0x58] sm:$0xff]
        %v2652 = vld [vmem:[%s2639 + $0x60] sm:$0xff]
        %v2653 = vld [vmem:[%s2639 + $0x68] sm:$0xff]
        %v2654 = vld [vmem:[%s2639 + $0x70] sm:$0xff]
        %v2655 = vld [vmem:[%s2639 + $0x78] sm:$0xff]
        %v2656 = vld [vmem:[%s2639 + $0x80] sm:$0xff]
        %v2657 = vld [vmem:[%s2639 + $0x88] sm:$0xff]
        %v2658 = vld [vmem:[%s2639 + $0x90] sm:$0xff]
        %v2659 = vld [vmem:[%s2639 + $0x98] sm:$0xff]
        %v2660 = vld [vmem:[%s2639 + $0xa0] sm:$0xff]
        %v2661 = vld [vmem:[%s2639 + $0xa8] sm:$0xff]
        %v2662 = vld [vmem:[%s2639 + $0xb0] sm:$0xff]
        %v2663 = vld [vmem:[%s2639 + $0xb8] sm:$0xff]
        %v2664 = vld [vmem:[%s2639 + $0xc0] sm:$0xff]
        %v2665 = vld [vmem:[%s2639 + $0xc8] sm:$0xff]
        %v2666 = vld [vmem:[%s2639 + $0xd0] sm:$0xff]
        %v2667 = vld [vmem:[%s2639 + $0xd8] sm:$0xff]
        %v2668 = vld [vmem:[%s2639 + $0xe0] sm:$0xff]
        %v2669 = vld [vmem:[%s2639 + $0xe8] sm:$0xff]
        %v2670 = vld [vmem:[%s2639 + $0xf0] sm:$0xff]
        %v2671 = vld [vmem:[%s2639 + $0xf8] sm:$0xff]
        %s2672 = scalar_lea.vmem [#allocation4], 3
        %v2673 = vld [vmem:[%s2672] ss:$8 sm:$0x3]
        %v2675 = vperm.slane %v2673, 0
        %v2676 = vperm.slane %v2673, 1
        %v2711 = vunpack.c.l.b16 %v2640
        %v2712 = vunpack.c.h.b16 %v2640
        %v2713 = vunpack.c.l.b16 %v2641
        %v2714 = vunpack.c.h.b16 %v2641
        %v2715 = vunpack.c.l.b16 %v2642
        %v2716 = vunpack.c.h.b16 %v2642
        %v2717 = vunpack.c.l.b16 %v2643
        %v2718 = vunpack.c.h.b16 %v2643
        %v2719 = vunpack.c.l.b16 %v2644
        %v2720 = vunpack.c.h.b16 %v2644
        %v2721 = vunpack.c.l.b16 %v2645
        %v2722 = vunpack.c.h.b16 %v2645
        %v2723 = vunpack.c.l.b16 %v2646
        %v2724 = vunpack.c.h.b16 %v2646
        %v2725 = vunpack.c.l.b16 %v2647
        %v2726 = vunpack.c.h.b16 %v2647
        %v2727 = vunpack.c.l.b16 %v2648
        %v2728 = vunpack.c.h.b16 %v2648
        %v2729 = vunpack.c.l.b16 %v2649
        %v2730 = vunpack.c.h.b16 %v2649
        %v2731 = vunpack.c.l.b16 %v2650
        %v2732 = vunpack.c.h.b16 %v2650
        %v2733 = vunpack.c.l.b16 %v2651
        %v2734 = vunpack.c.h.b16 %v2651
        %v2735 = vunpack.c.l.b16 %v2652
        %v2736 = vunpack.c.h.b16 %v2652
        %v2737 = vunpack.c.l.b16 %v2653
        %v2738 = vunpack.c.h.b16 %v2653
        %v2739 = vunpack.c.l.b16 %v2654
        %v2740 = vunpack.c.h.b16 %v2654
        %v2741 = vunpack.c.l.b16 %v2655
        %v2742 = vunpack.c.h.b16 %v2655
        %v2743 = vunpack.c.l.b16 %v2656
        %v2744 = vunpack.c.h.b16 %v2656
        %v2745 = vunpack.c.l.b16 %v2657
        %v2746 = vunpack.c.h.b16 %v2657
        %v2747 = vunpack.c.l.b16 %v2658
        %v2748 = vunpack.c.h.b16 %v2658
        %v2749 = vunpack.c.l.b16 %v2659
        %v2750 = vunpack.c.h.b16 %v2659
        %v2751 = vunpack.c.l.b16 %v2660
        %v2752 = vunpack.c.h.b16 %v2660
        %v2753 = vunpack.c.l.b16 %v2661
        %v2754 = vunpack.c.h.b16 %v2661
        %v2755 = vunpack.c.l.b16 %v2662
        %v2756 = vunpack.c.h.b16 %v2662
        %v2757 = vunpack.c.l.b16 %v2663
        %v2758 = vunpack.c.h.b16 %v2663
        %v2759 = vunpack.c.l.b16 %v2664
        %v2760 = vunpack.c.h.b16 %v2664
        %v2761 = vunpack.c.l.b16 %v2665
        %v2762 = vunpack.c.h.b16 %v2665
        %v2763 = vunpack.c.l.b16 %v2666
        %v2764 = vunpack.c.h.b16 %v2666
        %v2765 = vunpack.c.l.b16 %v2667
        %v2766 = vunpack.c.h.b16 %v2667
        %v2767 = vunpack.c.l.b16 %v2668
        %v2768 = vunpack.c.h.b16 %v2668
        %v2769 = vunpack.c.l.b16 %v2669
        %v2770 = vunpack.c.h.b16 %v2669
        %v2771 = vunpack.c.l.b16 %v2670
        %v2772 = vunpack.c.h.b16 %v2670
        %v2773 = vunpack.c.l.b16 %v2671
        %v2774 = vunpack.c.h.b16 %v2671
        %v2775 = vpack.c.b16 %v2713, %v2711
        %v2776 = vpack.c.b16 %v2714, %v2712
        %v2777 = vpack.c.b16 %v2717, %v2715
        %v2778 = vpack.c.b16 %v2718, %v2716
        %v2779 = vpack.c.b16 %v2721, %v2719
        %v2780 = vpack.c.b16 %v2722, %v2720
        %v2781 = vpack.c.b16 %v2725, %v2723
        %v2782 = vpack.c.b16 %v2726, %v2724
        %v2783 = vpack.c.b16 %v2729, %v2727
        %v2784 = vpack.c.b16 %v2730, %v2728
        %v2785 = vpack.c.b16 %v2733, %v2731
        %v2786 = vpack.c.b16 %v2734, %v2732
        %v2787 = vpack.c.b16 %v2737, %v2735
        %v2788 = vpack.c.b16 %v2738, %v2736
        %v2789 = vpack.c.b16 %v2741, %v2739
        %v2790 = vpack.c.b16 %v2742, %v2740
        %v2791 = vpack.c.b16 %v2745, %v2743
        %v2792 = vpack.c.b16 %v2746, %v2744
        %v2793 = vpack.c.b16 %v2749, %v2747
        %v2794 = vpack.c.b16 %v2750, %v2748
        %v2795 = vpack.c.b16 %v2753, %v2751
        %v2796 = vpack.c.b16 %v2754, %v2752
        %v2797 = vpack.c.b16 %v2757, %v2755
        %v2798 = vpack.c.b16 %v2758, %v2756
        %v2799 = vpack.c.b16 %v2761, %v2759
        %v2800 = vpack.c.b16 %v2762, %v2760
        %v2801 = vpack.c.b16 %v2765, %v2763
        %v2802 = vpack.c.b16 %v2766, %v2764
        %v2803 = vpack.c.b16 %v2769, %v2767
        %v2804 = vpack.c.b16 %v2770, %v2768
        %v2805 = vpack.c.b16 %v2773, %v2771
        %v2806 = vpack.c.b16 %v2774, %v2772
        %2839 = vmatpush.bf16.msra.mxu0 %v2789
        %2840 = vmatpush.bf16.msra.mxu0 %v2787
        %2841 = vmatpush.bf16.msra.mxu0 %v2785
        %2842 = vmatpush.bf16.msra.mxu0 %v2783
        %2843 = vmatpush.bf16.msra.mxu0 %v2781
        %2844 = vmatpush.bf16.msra.mxu0 %v2779
        %2845 = vmatpush.bf16.msra.mxu0 %v2777
        %2846 = vmatpush.bf16.msra.mxu0 %v2775
        %2847 = vmatmul.bf16.gmra.mxu0 %v2607
        %v2848 = vpop.f32.mrf.mxu0
        %v2849 = vadd.f32 %v2675, %v2848
        %v2850 = vpop.f32.mrf.mxu0
        %v2851 = vadd.f32 %v2675, %v2850
        %2852 = vmatmul.bf16.gmra.mxu0 %v2609
        %v2853 = vpop.f32.mrf.mxu0
        %v2854 = vadd.f32 %v2675, %v2853
        %v2855 = vpop.f32.mrf.mxu0
        %v2856 = vadd.f32 %v2675, %v2855
        %2857 = vmatmul.bf16.gmra.mxu0 %v2611
        %v2858 = vpop.f32.mrf.mxu0
        %v2859 = vadd.f32 %v2675, %v2858
        %v2860 = vpop.f32.mrf.mxu0
        %v2861 = vadd.f32 %v2675, %v2860
        %2862 = vmatmul.bf16.gmra.mxu0 %v2613
        %v2863 = vpop.f32.mrf.mxu0
        %v2864 = vadd.f32 %v2675, %v2863
        %v2865 = vpop.f32.mrf.mxu0
        %v2866 = vadd.f32 %v2675, %v2865
        %2867 = vmatmul.bf16.gmra.mxu0 %v2615
        %v2868 = vpop.f32.mrf.mxu0
        %v2869 = vadd.f32 %v2675, %v2868
        %v2870 = vpop.f32.mrf.mxu0
        %v2871 = vadd.f32 %v2675, %v2870
        %2872 = vmatmul.bf16.gmra.mxu0 %v2617
        %v2873 = vpop.f32.mrf.mxu0
        %v2874 = vadd.f32 %v2675, %v2873
        %v2875 = vpop.f32.mrf.mxu0
        %v2876 = vadd.f32 %v2675, %v2875
        %2877 = vmatmul.bf16.gmra.mxu0 %v2619
        %v2878 = vpop.f32.mrf.mxu0
        %v2879 = vadd.f32 %v2675, %v2878
        %v2880 = vpop.f32.mrf.mxu0
        %v2881 = vadd.f32 %v2675, %v2880
        %2882 = vmatmul.bf16.gmra.mxu0 %v2621
        %v2883 = vpop.f32.mrf.mxu0
        %v2884 = vadd.f32 %v2675, %v2883
        %v2885 = vpop.f32.mrf.mxu0
        %v2886 = vadd.f32 %v2675, %v2885
        %2887 = vmatmul.bf16.gmra.mxu0 %v2623
        %v2888 = vpop.f32.mrf.mxu0
        %v2889 = vadd.f32 %v2675, %v2888
        %v2890 = vpop.f32.mrf.mxu0
        %v2891 = vadd.f32 %v2675, %v2890
        %2892 = vmatmul.bf16.gmra.mxu0 %v2625
        %v2893 = vpop.f32.mrf.mxu0
        %v2894 = vadd.f32 %v2675, %v2893
        %v2895 = vpop.f32.mrf.mxu0
        %v2896 = vadd.f32 %v2675, %v2895
        %2897 = vmatmul.bf16.gmra.mxu0 %v2627
        %v2898 = vpop.f32.mrf.mxu0
        %v2899 = vadd.f32 %v2675, %v2898
        %v2900 = vpop.f32.mrf.mxu0
        %v2901 = vadd.f32 %v2675, %v2900
        %2902 = vmatmul.bf16.gmra.mxu0 %v2629
        %v2903 = vpop.f32.mrf.mxu0
        %v2904 = vadd.f32 %v2675, %v2903
        %v2905 = vpop.f32.mrf.mxu0
        %v2906 = vadd.f32 %v2675, %v2905
        %2907 = vmatmul.bf16.gmra.mxu0 %v2631
        %v2908 = vpop.f32.mrf.mxu0
        %v2909 = vadd.f32 %v2675, %v2908
        %v2910 = vpop.f32.mrf.mxu0
        %v2911 = vadd.f32 %v2675, %v2910
        %2912 = vmatmul.bf16.gmra.mxu0 %v2633
        %v2913 = vpop.f32.mrf.mxu0
        %v2914 = vadd.f32 %v2675, %v2913
        %v2915 = vpop.f32.mrf.mxu0
        %v2916 = vadd.f32 %v2675, %v2915
        %2917 = vmatmul.bf16.gmra.mxu0 %v2635
        %v2918 = vpop.f32.mrf.mxu0
        %v2919 = vadd.f32 %v2675, %v2918
        %v2920 = vpop.f32.mrf.mxu0
        %v2921 = vadd.f32 %v2675, %v2920
        %2922 = vmatmul.bf16.gmra.mxu0 %v2637
        %v2923 = vpop.f32.mrf.mxu0
        %v2924 = vadd.f32 %v2675, %v2923
        %v2925 = vpop.f32.mrf.mxu0
        %v2926 = vadd.f32 %v2675, %v2925
        %2927 = vdwg.mxu0
        %2928 = vmatpush.bf16.msra.mxu0 %v2805
        %2929 = vmatpush.bf16.msra.mxu0 %v2803
        %2930 = vmatpush.bf16.msra.mxu0 %v2801
        %2931 = vmatpush.bf16.msra.mxu0 %v2799
        %2932 = vmatpush.bf16.msra.mxu0 %v2797
        %2933 = vmatpush.bf16.msra.mxu0 %v2795
        %2934 = vmatpush.bf16.msra.mxu0 %v2793
        %2935 = vmatpush.bf16.msra.mxu0 %v2791
        %2936 = vmatmul.bf16.gmra.mxu0 %v2608
        %v2937 = vpop.f32.mrf.mxu0
        %v2938 = vadd.f32 %v2849, %v2937
        %v2939 = vpop.f32.mrf.mxu0
        %v2940 = vadd.f32 %v2851, %v2939
        %2941 = vmatmul.bf16.gmra.mxu0 %v2610
        %v2942 = vpop.f32.mrf.mxu0
        %v2943 = vadd.f32 %v2854, %v2942
        %v2944 = vpop.f32.mrf.mxu0
        %v2945 = vadd.f32 %v2856, %v2944
        %2946 = vmatmul.bf16.gmra.mxu0 %v2612
        %v2947 = vpop.f32.mrf.mxu0
        %v2948 = vadd.f32 %v2859, %v2947
        %v2949 = vpop.f32.mrf.mxu0
        %v2950 = vadd.f32 %v2861, %v2949
        %2951 = vmatmul.bf16.gmra.mxu0 %v2614
        %v2952 = vpop.f32.mrf.mxu0
        %v2953 = vadd.f32 %v2864, %v2952
        %v2954 = vpop.f32.mrf.mxu0
        %v2955 = vadd.f32 %v2866, %v2954
        %2956 = vmatmul.bf16.gmra.mxu0 %v2616
        %v2957 = vpop.f32.mrf.mxu0
        %v2958 = vadd.f32 %v2869, %v2957
        %v2959 = vpop.f32.mrf.mxu0
        %v2960 = vadd.f32 %v2871, %v2959
        %2961 = vmatmul.bf16.gmra.mxu0 %v2618
        %v2962 = vpop.f32.mrf.mxu0
        %v2963 = vadd.f32 %v2874, %v2962
        %v2964 = vpop.f32.mrf.mxu0
        %v2965 = vadd.f32 %v2876, %v2964
        %2966 = vmatmul.bf16.gmra.mxu0 %v2620
        %v2967 = vpop.f32.mrf.mxu0
        %v2968 = vadd.f32 %v2879, %v2967
        %v2969 = vpop.f32.mrf.mxu0
        %v2970 = vadd.f32 %v2881, %v2969
        %2971 = vmatmul.bf16.gmra.mxu0 %v2622
        %v2972 = vpop.f32.mrf.mxu0
        %v2973 = vadd.f32 %v2884, %v2972
        %v2974 = vpop.f32.mrf.mxu0
        %v2975 = vadd.f32 %v2886, %v2974
        %2976 = vmatmul.bf16.gmra.mxu0 %v2624
        %v2977 = vpop.f32.mrf.mxu0
        %v2978 = vadd.f32 %v2889, %v2977
        %v2979 = vpop.f32.mrf.mxu0
        %v2980 = vadd.f32 %v2891, %v2979
        %2981 = vmatmul.bf16.gmra.mxu0 %v2626
        %v2982 = vpop.f32.mrf.mxu0
        %v2983 = vadd.f32 %v2894, %v2982
        %v2984 = vpop.f32.mrf.mxu0
        %v2985 = vadd.f32 %v2896, %v2984
        %2986 = vmatmul.bf16.gmra.mxu0 %v2628
        %v2987 = vpop.f32.mrf.mxu0
        %v2988 = vadd.f32 %v2899, %v2987
        %v2989 = vpop.f32.mrf.mxu0
        %v2990 = vadd.f32 %v2901, %v2989
        %2991 = vmatmul.bf16.gmra.mxu0 %v2630
        %v2992 = vpop.f32.mrf.mxu0
        %v2993 = vadd.f32 %v2904, %v2992
        %v2994 = vpop.f32.mrf.mxu0
        %v2995 = vadd.f32 %v2906, %v2994
        %2996 = vmatmul.bf16.gmra.mxu0 %v2632
        %v2997 = vpop.f32.mrf.mxu0
        %v2998 = vadd.f32 %v2909, %v2997
        %v2999 = vpop.f32.mrf.mxu0
        %v3000 = vadd.f32 %v2911, %v2999
        %3001 = vmatmul.bf16.gmra.mxu0 %v2634
        %v3002 = vpop.f32.mrf.mxu0
        %v3003 = vadd.f32 %v2914, %v3002
        %v3004 = vpop.f32.mrf.mxu0
        %v3005 = vadd.f32 %v2916, %v3004
        %3006 = vmatmul.bf16.gmra.mxu0 %v2636
        %v3007 = vpop.f32.mrf.mxu0
        %v3008 = vadd.f32 %v2919, %v3007
        %v3009 = vpop.f32.mrf.mxu0
        %v3010 = vadd.f32 %v2921, %v3009
        %3011 = vmatmul.bf16.gmra.mxu0 %v2638
        %v3012 = vpop.f32.mrf.mxu0
        %v3013 = vadd.f32 %v2924, %v3012
        %v3014 = vpop.f32.mrf.mxu0
        %v3015 = vadd.f32 %v2926, %v3014
        %3016 = vdwg.mxu0
        %3017 = vmatpush.bf16.msra.mxu0 %v2790
        %3018 = vmatpush.bf16.msra.mxu0 %v2788
        %3019 = vmatpush.bf16.msra.mxu0 %v2786
        %3020 = vmatpush.bf16.msra.mxu0 %v2784
        %3021 = vmatpush.bf16.msra.mxu0 %v2782
        %3022 = vmatpush.bf16.msra.mxu0 %v2780
        %3023 = vmatpush.bf16.msra.mxu0 %v2778
        %3024 = vmatpush.bf16.msra.mxu0 %v2776
        %3025 = vmatmul.bf16.gmra.mxu0 %v2607
        %v3026 = vpop.f32.mrf.mxu0
        %v3027 = vadd.f32 %v2676, %v3026
        %v3028 = vpop.f32.mrf.mxu0
        %v3029 = vadd.f32 %v2676, %v3028
        %3030 = vmatmul.bf16.gmra.mxu0 %v2609
        %v3031 = vpop.f32.mrf.mxu0
        %v3032 = vadd.f32 %v2676, %v3031
        %v3033 = vpop.f32.mrf.mxu0
        %v3034 = vadd.f32 %v2676, %v3033
        %3035 = vmatmul.bf16.gmra.mxu0 %v2611
        %v3036 = vpop.f32.mrf.mxu0
        %v3037 = vadd.f32 %v2676, %v3036
        %v3038 = vpop.f32.mrf.mxu0
        %v3039 = vadd.f32 %v2676, %v3038
        %3040 = vmatmul.bf16.gmra.mxu0 %v2613
        %v3041 = vpop.f32.mrf.mxu0
        %v3042 = vadd.f32 %v2676, %v3041
        %v3043 = vpop.f32.mrf.mxu0
        %v3044 = vadd.f32 %v2676, %v3043
        %3045 = vmatmul.bf16.gmra.mxu0 %v2615
        %v3046 = vpop.f32.mrf.mxu0
        %v3047 = vadd.f32 %v2676, %v3046
        %v3048 = vpop.f32.mrf.mxu0
        %v3049 = vadd.f32 %v2676, %v3048
        %3050 = vmatmul.bf16.gmra.mxu0 %v2617
        %v3051 = vpop.f32.mrf.mxu0
        %v3052 = vadd.f32 %v2676, %v3051
        %v3053 = vpop.f32.mrf.mxu0
        %v3054 = vadd.f32 %v2676, %v3053
        %3055 = vmatmul.bf16.gmra.mxu0 %v2619
        %v3056 = vpop.f32.mrf.mxu0
        %v3057 = vadd.f32 %v2676, %v3056
        %v3058 = vpop.f32.mrf.mxu0
        %v3059 = vadd.f32 %v2676, %v3058
        %3060 = vmatmul.bf16.gmra.mxu0 %v2621
        %v3061 = vpop.f32.mrf.mxu0
        %v3062 = vadd.f32 %v2676, %v3061
        %v3063 = vpop.f32.mrf.mxu0
        %v3064 = vadd.f32 %v2676, %v3063
        %3065 = vmatmul.bf16.gmra.mxu0 %v2623
        %v3066 = vpop.f32.mrf.mxu0
        %v3067 = vadd.f32 %v2676, %v3066
        %v3068 = vpop.f32.mrf.mxu0
        %v3069 = vadd.f32 %v2676, %v3068
        %3070 = vmatmul.bf16.gmra.mxu0 %v2625
        %v3071 = vpop.f32.mrf.mxu0
        %v3072 = vadd.f32 %v2676, %v3071
        %v3073 = vpop.f32.mrf.mxu0
        %v3074 = vadd.f32 %v2676, %v3073
        %3075 = vmatmul.bf16.gmra.mxu0 %v2627
        %v3076 = vpop.f32.mrf.mxu0
        %v3077 = vadd.f32 %v2676, %v3076
        %v3078 = vpop.f32.mrf.mxu0
        %v3079 = vadd.f32 %v2676, %v3078
        %3080 = vmatmul.bf16.gmra.mxu0 %v2629
        %v3081 = vpop.f32.mrf.mxu0
        %v3082 = vadd.f32 %v2676, %v3081
        %v3083 = vpop.f32.mrf.mxu0
        %v3084 = vadd.f32 %v2676, %v3083
        %3085 = vmatmul.bf16.gmra.mxu0 %v2631
        %v3086 = vpop.f32.mrf.mxu0
        %v3087 = vadd.f32 %v2676, %v3086
        %v3088 = vpop.f32.mrf.mxu0
        %v3089 = vadd.f32 %v2676, %v3088
        %3090 = vmatmul.bf16.gmra.mxu0 %v2633
        %v3091 = vpop.f32.mrf.mxu0
        %v3092 = vadd.f32 %v2676, %v3091
        %v3093 = vpop.f32.mrf.mxu0
        %v3094 = vadd.f32 %v2676, %v3093
        %3095 = vmatmul.bf16.gmra.mxu0 %v2635
        %v3096 = vpop.f32.mrf.mxu0
        %v3097 = vadd.f32 %v2676, %v3096
        %v3098 = vpop.f32.mrf.mxu0
        %v3099 = vadd.f32 %v2676, %v3098
        %3100 = vmatmul.bf16.gmra.mxu0 %v2637
        %v3101 = vpop.f32.mrf.mxu0
        %v3102 = vadd.f32 %v2676, %v3101
        %v3103 = vpop.f32.mrf.mxu0
        %v3104 = vadd.f32 %v2676, %v3103
        %3105 = vdwg.mxu0
        %3106 = vmatpush.bf16.msra.mxu0 %v2806
        %3107 = vmatpush.bf16.msra.mxu0 %v2804
        %3108 = vmatpush.bf16.msra.mxu0 %v2802
        %3109 = vmatpush.bf16.msra.mxu0 %v2800
        %3110 = vmatpush.bf16.msra.mxu0 %v2798
        %3111 = vmatpush.bf16.msra.mxu0 %v2796
        %3112 = vmatpush.bf16.msra.mxu0 %v2794
        %3113 = vmatpush.bf16.msra.mxu0 %v2792
        %3114 = vmatmul.bf16.gmra.mxu0 %v2608
        %v3115 = vpop.f32.mrf.mxu0
        %v3116 = vadd.f32 %v3027, %v3115
        %v3117 = vpop.f32.mrf.mxu0
        %v3118 = vadd.f32 %v3029, %v3117
        %3119 = vmatmul.bf16.gmra.mxu0 %v2610
        %v3120 = vpop.f32.mrf.mxu0
        %v3121 = vadd.f32 %v3032, %v3120
        %v3122 = vpop.f32.mrf.mxu0
        %v3123 = vadd.f32 %v3034, %v3122
        %3124 = vmatmul.bf16.gmra.mxu0 %v2612
        %v3125 = vpop.f32.mrf.mxu0
        %v3126 = vadd.f32 %v3037, %v3125
        %v3127 = vpop.f32.mrf.mxu0
        %v3128 = vadd.f32 %v3039, %v3127
        %3129 = vmatmul.bf16.gmra.mxu0 %v2614
        %v3130 = vpop.f32.mrf.mxu0
        %v3131 = vadd.f32 %v3042, %v3130
        %v3132 = vpop.f32.mrf.mxu0
        %v3133 = vadd.f32 %v3044, %v3132
        %3134 = vmatmul.bf16.gmra.mxu0 %v2616
        %v3135 = vpop.f32.mrf.mxu0
        %v3136 = vadd.f32 %v3047, %v3135
        %v3137 = vpop.f32.mrf.mxu0
        %v3138 = vadd.f32 %v3049, %v3137
        %3139 = vmatmul.bf16.gmra.mxu0 %v2618
        %v3140 = vpop.f32.mrf.mxu0
        %v3141 = vadd.f32 %v3052, %v3140
        %v3142 = vpop.f32.mrf.mxu0
        %v3143 = vadd.f32 %v3054, %v3142
        %3144 = vmatmul.bf16.gmra.mxu0 %v2620
        %v3145 = vpop.f32.mrf.mxu0
        %v3146 = vadd.f32 %v3057, %v3145
        %v3147 = vpop.f32.mrf.mxu0
        %v3148 = vadd.f32 %v3059, %v3147
        %3149 = vmatmul.bf16.gmra.mxu0 %v2622
        %v3150 = vpop.f32.mrf.mxu0
        %v3151 = vadd.f32 %v3062, %v3150
        %v3152 = vpop.f32.mrf.mxu0
        %v3153 = vadd.f32 %v3064, %v3152
        %3154 = vmatmul.bf16.gmra.mxu0 %v2624
        %v3155 = vpop.f32.mrf.mxu0
        %v3156 = vadd.f32 %v3067, %v3155
        %v3157 = vpop.f32.mrf.mxu0
        %v3158 = vadd.f32 %v3069, %v3157
        %3159 = vmatmul.bf16.gmra.mxu0 %v2626
        %v3160 = vpop.f32.mrf.mxu0
        %v3161 = vadd.f32 %v3072, %v3160
        %v3162 = vpop.f32.mrf.mxu0
        %v3163 = vadd.f32 %v3074, %v3162
        %3164 = vmatmul.bf16.gmra.mxu0 %v2628
        %v3165 = vpop.f32.mrf.mxu0
        %v3166 = vadd.f32 %v3077, %v3165
        %v3167 = vpop.f32.mrf.mxu0
        %v3168 = vadd.f32 %v3079, %v3167
        %3169 = vmatmul.bf16.gmra.mxu0 %v2630
        %v3170 = vpop.f32.mrf.mxu0
        %v3171 = vadd.f32 %v3082, %v3170
        %v3172 = vpop.f32.mrf.mxu0
        %v3173 = vadd.f32 %v3084, %v3172
        %3174 = vmatmul.bf16.gmra.mxu0 %v2632
        %v3175 = vpop.f32.mrf.mxu0
        %v3176 = vadd.f32 %v3087, %v3175
        %v3177 = vpop.f32.mrf.mxu0
        %v3178 = vadd.f32 %v3089, %v3177
        %3179 = vmatmul.bf16.gmra.mxu0 %v2634
        %v3180 = vpop.f32.mrf.mxu0
        %v3181 = vadd.f32 %v3092, %v3180
        %v3182 = vpop.f32.mrf.mxu0
        %v3183 = vadd.f32 %v3094, %v3182
        %3184 = vmatmul.bf16.gmra.mxu0 %v2636
        %v3185 = vpop.f32.mrf.mxu0
        %v3186 = vadd.f32 %v3097, %v3185
        %v3187 = vpop.f32.mrf.mxu0
        %v3188 = vadd.f32 %v3099, %v3187
        %3189 = vmatmul.bf16.gmra.mxu0 %v2638
        %v3190 = vpop.f32.mrf.mxu0
        %v3191 = vadd.f32 %v3102, %v3190
        %v3192 = vpop.f32.mrf.mxu0
        %v3193 = vadd.f32 %v3104, %v3192
        %3194 = vdwg.mxu0
        %v3195 = vmax.f32 %v2938, 0.0
        %v3196 = vmax.f32 %v3116, 0.0
        %v3197 = vmax.f32 %v2940, 0.0
        %v3198 = vmax.f32 %v3118, 0.0
        %v3199 = vmax.f32 %v2943, 0.0
        %v3200 = vmax.f32 %v3121, 0.0
        %v3201 = vmax.f32 %v2945, 0.0
        %v3202 = vmax.f32 %v3123, 0.0
        %v3203 = vmax.f32 %v2948, 0.0
        %v3204 = vmax.f32 %v3126, 0.0
        %v3205 = vmax.f32 %v2950, 0.0
        %v3206 = vmax.f32 %v3128, 0.0
        %v3207 = vmax.f32 %v2953, 0.0
        %v3208 = vmax.f32 %v3131, 0.0
        %v3209 = vmax.f32 %v2955, 0.0
        %v3210 = vmax.f32 %v3133, 0.0
        %v3211 = vmax.f32 %v2958, 0.0
        %v3212 = vmax.f32 %v3136, 0.0
        %v3213 = vmax.f32 %v2960, 0.0
        %v3214 = vmax.f32 %v3138, 0.0
        %v3215 = vmax.f32 %v2963, 0.0
        %v3216 = vmax.f32 %v3141, 0.0
        %v3217 = vmax.f32 %v2965, 0.0
        %v3218 = vmax.f32 %v3143, 0.0
        %v3219 = vmax.f32 %v2968, 0.0
        %v3220 = vmax.f32 %v3146, 0.0
        %v3221 = vmax.f32 %v2970, 0.0
        %v3222 = vmax.f32 %v3148, 0.0
        %v3223 = vmax.f32 %v2973, 0.0
        %v3224 = vmax.f32 %v3151, 0.0
        %v3225 = vmax.f32 %v2975, 0.0
        %v3226 = vmax.f32 %v3153, 0.0
        %v3227 = vmax.f32 %v2978, 0.0
        %v3228 = vmax.f32 %v3156, 0.0
        %v3229 = vmax.f32 %v2980, 0.0
        %v3230 = vmax.f32 %v3158, 0.0
        %v3231 = vmax.f32 %v2983, 0.0
        %v3232 = vmax.f32 %v3161, 0.0
        %v3233 = vmax.f32 %v2985, 0.0
        %v3234 = vmax.f32 %v3163, 0.0
        %v3235 = vmax.f32 %v2988, 0.0
        %v3236 = vmax.f32 %v3166, 0.0
        %v3237 = vmax.f32 %v2990, 0.0
        %v3238 = vmax.f32 %v3168, 0.0
        %v3239 = vmax.f32 %v2993, 0.0
        %v3240 = vmax.f32 %v3171, 0.0
        %v3241 = vmax.f32 %v2995, 0.0
        %v3242 = vmax.f32 %v3173, 0.0
        %v3243 = vmax.f32 %v2998, 0.0
        %v3244 = vmax.f32 %v3176, 0.0
        %v3245 = vmax.f32 %v3000, 0.0
        %v3246 = vmax.f32 %v3178, 0.0
        %v3247 = vmax.f32 %v3003, 0.0
        %v3248 = vmax.f32 %v3181, 0.0
        %v3249 = vmax.f32 %v3005, 0.0
        %v3250 = vmax.f32 %v3183, 0.0
        %v3251 = vmax.f32 %v3008, 0.0
        %v3252 = vmax.f32 %v3186, 0.0
        %v3253 = vmax.f32 %v3010, 0.0
        %v3254 = vmax.f32 %v3188, 0.0
        %v3255 = vmax.f32 %v3013, 0.0
        %v3256 = vmax.f32 %v3191, 0.0
        %v3257 = vmax.f32 %v3015, 0.0
        %v3258 = vmax.f32 %v3193, 0.0
        %v3259 = vpack.c.bf16 %v3197, %v3195
        %v3260 = vpack.c.bf16 %v3198, %v3196
        %v3261 = vpack.c.bf16 %v3201, %v3199
        %v3262 = vpack.c.bf16 %v3202, %v3200
        %v3263 = vpack.c.bf16 %v3205, %v3203
        %v3264 = vpack.c.bf16 %v3206, %v3204
        %v3265 = vpack.c.bf16 %v3209, %v3207
        %v3266 = vpack.c.bf16 %v3210, %v3208
        %v3267 = vpack.c.bf16 %v3213, %v3211
        %v3268 = vpack.c.bf16 %v3214, %v3212
        %v3269 = vpack.c.bf16 %v3217, %v3215
        %v3270 = vpack.c.bf16 %v3218, %v3216
        %v3271 = vpack.c.bf16 %v3221, %v3219
        %v3272 = vpack.c.bf16 %v3222, %v3220
        %v3273 = vpack.c.bf16 %v3225, %v3223
        %v3274 = vpack.c.bf16 %v3226, %v3224
        %v3275 = vpack.c.bf16 %v3229, %v3227
        %v3276 = vpack.c.bf16 %v3230, %v3228
        %v3277 = vpack.c.bf16 %v3233, %v3231
        %v3278 = vpack.c.bf16 %v3234, %v3232
        %v3279 = vpack.c.bf16 %v3237, %v3235
        %v3280 = vpack.c.bf16 %v3238, %v3236
        %v3281 = vpack.c.bf16 %v3241, %v3239
        %v3282 = vpack.c.bf16 %v3242, %v3240
        %v3283 = vpack.c.bf16 %v3245, %v3243
        %v3284 = vpack.c.bf16 %v3246, %v3244
        %v3285 = vpack.c.bf16 %v3249, %v3247
        %v3286 = vpack.c.bf16 %v3250, %v3248
        %v3287 = vpack.c.bf16 %v3253, %v3251
        %v3288 = vpack.c.bf16 %v3254, %v3252
        %v3289 = vpack.c.bf16 %v3257, %v3255
        %v3290 = vpack.c.bf16 %v3258, %v3256
        %s3291 = scalar_lea.vmem [#allocation6], 768
        %v3292 = vld [vmem:[%s3291] sm:$0xff]
        %v3293 = vld [vmem:[%s3291 + $0x8] sm:$0xff]
        %v3294 = vld [vmem:[%s3291 + $0x10] sm:$0xff]
        %v3295 = vld [vmem:[%s3291 + $0x18] sm:$0xff]
        %v3296 = vld [vmem:[%s3291 + $0x20] sm:$0xff]
        %v3297 = vld [vmem:[%s3291 + $0x28] sm:$0xff]
        %v3298 = vld [vmem:[%s3291 + $0x30] sm:$0xff]
        %v3299 = vld [vmem:[%s3291 + $0x38] sm:$0xff]
        %v3300 = vld [vmem:[%s3291 + $0x40] sm:$0xff]
        %v3301 = vld [vmem:[%s3291 + $0x48] sm:$0xff]
        %v3302 = vld [vmem:[%s3291 + $0x50] sm:$0xff]
        %v3303 = vld [vmem:[%s3291 + $0x58] sm:$0xff]
        %v3304 = vld [vmem:[%s3291 + $0x60] sm:$0xff]
        %v3305 = vld [vmem:[%s3291 + $0x68] sm:$0xff]
        %v3306 = vld [vmem:[%s3291 + $0x70] sm:$0xff]
        %v3307 = vld [vmem:[%s3291 + $0x78] sm:$0xff]
        %v3308 = vld [vmem:[%s3291 + $0x80] sm:$0xff]
        %v3309 = vld [vmem:[%s3291 + $0x88] sm:$0xff]
        %v3310 = vld [vmem:[%s3291 + $0x90] sm:$0xff]
        %v3311 = vld [vmem:[%s3291 + $0x98] sm:$0xff]
        %v3312 = vld [vmem:[%s3291 + $0xa0] sm:$0xff]
        %v3313 = vld [vmem:[%s3291 + $0xa8] sm:$0xff]
        %v3314 = vld [vmem:[%s3291 + $0xb0] sm:$0xff]
        %v3315 = vld [vmem:[%s3291 + $0xb8] sm:$0xff]
        %v3316 = vld [vmem:[%s3291 + $0xc0] sm:$0xff]
        %v3317 = vld [vmem:[%s3291 + $0xc8] sm:$0xff]
        %v3318 = vld [vmem:[%s3291 + $0xd0] sm:$0xff]
        %v3319 = vld [vmem:[%s3291 + $0xd8] sm:$0xff]
        %v3320 = vld [vmem:[%s3291 + $0xe0] sm:$0xff]
        %v3321 = vld [vmem:[%s3291 + $0xe8] sm:$0xff]
        %v3322 = vld [vmem:[%s3291 + $0xf0] sm:$0xff]
        %v3323 = vld [vmem:[%s3291 + $0xf8] sm:$0xff]
        %s3324 = scalar_lea.vmem [#allocation4], 4
        %v3325 = vld [vmem:[%s3324] ss:$8 sm:$0x3]
        %v3327 = vperm.slane %v3325, 0
        %v3328 = vperm.slane %v3325, 1
        %v3363 = vunpack.c.l.b16 %v3292
        %v3364 = vunpack.c.h.b16 %v3292
        %v3365 = vunpack.c.l.b16 %v3293
        %v3366 = vunpack.c.h.b16 %v3293
        %v3367 = vunpack.c.l.b16 %v3294
        %v3368 = vunpack.c.h.b16 %v3294
        %v3369 = vunpack.c.l.b16 %v3295
        %v3370 = vunpack.c.h.b16 %v3295
        %v3371 = vunpack.c.l.b16 %v3296
        %v3372 = vunpack.c.h.b16 %v3296
        %v3373 = vunpack.c.l.b16 %v3297
        %v3374 = vunpack.c.h.b16 %v3297
        %v3375 = vunpack.c.l.b16 %v3298
        %v3376 = vunpack.c.h.b16 %v3298
        %v3377 = vunpack.c.l.b16 %v3299
        %v3378 = vunpack.c.h.b16 %v3299
        %v3379 = vunpack.c.l.b16 %v3300
        %v3380 = vunpack.c.h.b16 %v3300
        %v3381 = vunpack.c.l.b16 %v3301
        %v3382 = vunpack.c.h.b16 %v3301
        %v3383 = vunpack.c.l.b16 %v3302
        %v3384 = vunpack.c.h.b16 %v3302
        %v3385 = vunpack.c.l.b16 %v3303
        %v3386 = vunpack.c.h.b16 %v3303
        %v3387 = vunpack.c.l.b16 %v3304
        %v3388 = vunpack.c.h.b16 %v3304
        %v3389 = vunpack.c.l.b16 %v3305
        %v3390 = vunpack.c.h.b16 %v3305
        %v3391 = vunpack.c.l.b16 %v3306
        %v3392 = vunpack.c.h.b16 %v3306
        %v3393 = vunpack.c.l.b16 %v3307
        %v3394 = vunpack.c.h.b16 %v3307
        %v3395 = vunpack.c.l.b16 %v3308
        %v3396 = vunpack.c.h.b16 %v3308
        %v3397 = vunpack.c.l.b16 %v3309
        %v3398 = vunpack.c.h.b16 %v3309
        %v3399 = vunpack.c.l.b16 %v3310
        %v3400 = vunpack.c.h.b16 %v3310
        %v3401 = vunpack.c.l.b16 %v3311
        %v3402 = vunpack.c.h.b16 %v3311
        %v3403 = vunpack.c.l.b16 %v3312
        %v3404 = vunpack.c.h.b16 %v3312
        %v3405 = vunpack.c.l.b16 %v3313
        %v3406 = vunpack.c.h.b16 %v3313
        %v3407 = vunpack.c.l.b16 %v3314
        %v3408 = vunpack.c.h.b16 %v3314
        %v3409 = vunpack.c.l.b16 %v3315
        %v3410 = vunpack.c.h.b16 %v3315
        %v3411 = vunpack.c.l.b16 %v3316
        %v3412 = vunpack.c.h.b16 %v3316
        %v3413 = vunpack.c.l.b16 %v3317
        %v3414 = vunpack.c.h.b16 %v3317
        %v3415 = vunpack.c.l.b16 %v3318
        %v3416 = vunpack.c.h.b16 %v3318
        %v3417 = vunpack.c.l.b16 %v3319
        %v3418 = vunpack.c.h.b16 %v3319
        %v3419 = vunpack.c.l.b16 %v3320
        %v3420 = vunpack.c.h.b16 %v3320
        %v3421 = vunpack.c.l.b16 %v3321
        %v3422 = vunpack.c.h.b16 %v3321
        %v3423 = vunpack.c.l.b16 %v3322
        %v3424 = vunpack.c.h.b16 %v3322
        %v3425 = vunpack.c.l.b16 %v3323
        %v3426 = vunpack.c.h.b16 %v3323
        %v3427 = vpack.c.b16 %v3365, %v3363
        %v3428 = vpack.c.b16 %v3366, %v3364
        %v3429 = vpack.c.b16 %v3369, %v3367
        %v3430 = vpack.c.b16 %v3370, %v3368
        %v3431 = vpack.c.b16 %v3373, %v3371
        %v3432 = vpack.c.b16 %v3374, %v3372
        %v3433 = vpack.c.b16 %v3377, %v3375
        %v3434 = vpack.c.b16 %v3378, %v3376
        %v3435 = vpack.c.b16 %v3381, %v3379
        %v3436 = vpack.c.b16 %v3382, %v3380
        %v3437 = vpack.c.b16 %v3385, %v3383
        %v3438 = vpack.c.b16 %v3386, %v3384
        %v3439 = vpack.c.b16 %v3389, %v3387
        %v3440 = vpack.c.b16 %v3390, %v3388
        %v3441 = vpack.c.b16 %v3393, %v3391
        %v3442 = vpack.c.b16 %v3394, %v3392
        %v3443 = vpack.c.b16 %v3397, %v3395
        %v3444 = vpack.c.b16 %v3398, %v3396
        %v3445 = vpack.c.b16 %v3401, %v3399
        %v3446 = vpack.c.b16 %v3402, %v3400
        %v3447 = vpack.c.b16 %v3405, %v3403
        %v3448 = vpack.c.b16 %v3406, %v3404
        %v3449 = vpack.c.b16 %v3409, %v3407
        %v3450 = vpack.c.b16 %v3410, %v3408
        %v3451 = vpack.c.b16 %v3413, %v3411
        %v3452 = vpack.c.b16 %v3414, %v3412
        %v3453 = vpack.c.b16 %v3417, %v3415
        %v3454 = vpack.c.b16 %v3418, %v3416
        %v3455 = vpack.c.b16 %v3421, %v3419
        %v3456 = vpack.c.b16 %v3422, %v3420
        %v3457 = vpack.c.b16 %v3425, %v3423
        %v3458 = vpack.c.b16 %v3426, %v3424
        %3491 = vmatpush.bf16.msra.mxu0 %v3441
        %3492 = vmatpush.bf16.msra.mxu0 %v3439
        %3493 = vmatpush.bf16.msra.mxu0 %v3437
        %3494 = vmatpush.bf16.msra.mxu0 %v3435
        %3495 = vmatpush.bf16.msra.mxu0 %v3433
        %3496 = vmatpush.bf16.msra.mxu0 %v3431
        %3497 = vmatpush.bf16.msra.mxu0 %v3429
        %3498 = vmatpush.bf16.msra.mxu0 %v3427
        %3499 = vmatmul.bf16.gmra.mxu0 %v3259
        %v3500 = vpop.f32.mrf.mxu0
        %v3501 = vadd.f32 %v3327, %v3500
        %v3502 = vpop.f32.mrf.mxu0
        %v3503 = vadd.f32 %v3327, %v3502
        %3504 = vmatmul.bf16.gmra.mxu0 %v3261
        %v3505 = vpop.f32.mrf.mxu0
        %v3506 = vadd.f32 %v3327, %v3505
        %v3507 = vpop.f32.mrf.mxu0
        %v3508 = vadd.f32 %v3327, %v3507
        %3509 = vmatmul.bf16.gmra.mxu0 %v3263
        %v3510 = vpop.f32.mrf.mxu0
        %v3511 = vadd.f32 %v3327, %v3510
        %v3512 = vpop.f32.mrf.mxu0
        %v3513 = vadd.f32 %v3327, %v3512
        %3514 = vmatmul.bf16.gmra.mxu0 %v3265
        %v3515 = vpop.f32.mrf.mxu0
        %v3516 = vadd.f32 %v3327, %v3515
        %v3517 = vpop.f32.mrf.mxu0
        %v3518 = vadd.f32 %v3327, %v3517
        %3519 = vmatmul.bf16.gmra.mxu0 %v3267
        %v3520 = vpop.f32.mrf.mxu0
        %v3521 = vadd.f32 %v3327, %v3520
        %v3522 = vpop.f32.mrf.mxu0
        %v3523 = vadd.f32 %v3327, %v3522
        %3524 = vmatmul.bf16.gmra.mxu0 %v3269
        %v3525 = vpop.f32.mrf.mxu0
        %v3526 = vadd.f32 %v3327, %v3525
        %v3527 = vpop.f32.mrf.mxu0
        %v3528 = vadd.f32 %v3327, %v3527
        %3529 = vmatmul.bf16.gmra.mxu0 %v3271
        %v3530 = vpop.f32.mrf.mxu0
        %v3531 = vadd.f32 %v3327, %v3530
        %v3532 = vpop.f32.mrf.mxu0
        %v3533 = vadd.f32 %v3327, %v3532
        %3534 = vmatmul.bf16.gmra.mxu0 %v3273
        %v3535 = vpop.f32.mrf.mxu0
        %v3536 = vadd.f32 %v3327, %v3535
        %v3537 = vpop.f32.mrf.mxu0
        %v3538 = vadd.f32 %v3327, %v3537
        %3539 = vmatmul.bf16.gmra.mxu0 %v3275
        %v3540 = vpop.f32.mrf.mxu0
        %v3541 = vadd.f32 %v3327, %v3540
        %v3542 = vpop.f32.mrf.mxu0
        %v3543 = vadd.f32 %v3327, %v3542
        %3544 = vmatmul.bf16.gmra.mxu0 %v3277
        %v3545 = vpop.f32.mrf.mxu0
        %v3546 = vadd.f32 %v3327, %v3545
        %v3547 = vpop.f32.mrf.mxu0
        %v3548 = vadd.f32 %v3327, %v3547
        %3549 = vmatmul.bf16.gmra.mxu0 %v3279
        %v3550 = vpop.f32.mrf.mxu0
        %v3551 = vadd.f32 %v3327, %v3550
        %v3552 = vpop.f32.mrf.mxu0
        %v3553 = vadd.f32 %v3327, %v3552
        %3554 = vmatmul.bf16.gmra.mxu0 %v3281
        %v3555 = vpop.f32.mrf.mxu0
        %v3556 = vadd.f32 %v3327, %v3555
        %v3557 = vpop.f32.mrf.mxu0
        %v3558 = vadd.f32 %v3327, %v3557
        %3559 = vmatmul.bf16.gmra.mxu0 %v3283
        %v3560 = vpop.f32.mrf.mxu0
        %v3561 = vadd.f32 %v3327, %v3560
        %v3562 = vpop.f32.mrf.mxu0
        %v3563 = vadd.f32 %v3327, %v3562
        %3564 = vmatmul.bf16.gmra.mxu0 %v3285
        %v3565 = vpop.f32.mrf.mxu0
        %v3566 = vadd.f32 %v3327, %v3565
        %v3567 = vpop.f32.mrf.mxu0
        %v3568 = vadd.f32 %v3327, %v3567
        %3569 = vmatmul.bf16.gmra.mxu0 %v3287
        %v3570 = vpop.f32.mrf.mxu0
        %v3571 = vadd.f32 %v3327, %v3570
        %v3572 = vpop.f32.mrf.mxu0
        %v3573 = vadd.f32 %v3327, %v3572
        %3574 = vmatmul.bf16.gmra.mxu0 %v3289
        %v3575 = vpop.f32.mrf.mxu0
        %v3576 = vadd.f32 %v3327, %v3575
        %v3577 = vpop.f32.mrf.mxu0
        %v3578 = vadd.f32 %v3327, %v3577
        %3579 = vdwg.mxu0
        %3580 = vmatpush.bf16.msra.mxu0 %v3457
        %3581 = vmatpush.bf16.msra.mxu0 %v3455
        %3582 = vmatpush.bf16.msra.mxu0 %v3453
        %3583 = vmatpush.bf16.msra.mxu0 %v3451
        %3584 = vmatpush.bf16.msra.mxu0 %v3449
        %3585 = vmatpush.bf16.msra.mxu0 %v3447
        %3586 = vmatpush.bf16.msra.mxu0 %v3445
        %3587 = vmatpush.bf16.msra.mxu0 %v3443
        %3588 = vmatmul.bf16.gmra.mxu0 %v3260
        %v3589 = vpop.f32.mrf.mxu0
        %v3590 = vadd.f32 %v3501, %v3589
        %v3591 = vpop.f32.mrf.mxu0
        %v3592 = vadd.f32 %v3503, %v3591
        %3593 = vmatmul.bf16.gmra.mxu0 %v3262
        %v3594 = vpop.f32.mrf.mxu0
        %v3595 = vadd.f32 %v3506, %v3594
        %v3596 = vpop.f32.mrf.mxu0
        %v3597 = vadd.f32 %v3508, %v3596
        %3598 = vmatmul.bf16.gmra.mxu0 %v3264
        %v3599 = vpop.f32.mrf.mxu0
        %v3600 = vadd.f32 %v3511, %v3599
        %v3601 = vpop.f32.mrf.mxu0
        %v3602 = vadd.f32 %v3513, %v3601
        %3603 = vmatmul.bf16.gmra.mxu0 %v3266
        %v3604 = vpop.f32.mrf.mxu0
        %v3605 = vadd.f32 %v3516, %v3604
        %v3606 = vpop.f32.mrf.mxu0
        %v3607 = vadd.f32 %v3518, %v3606
        %3608 = vmatmul.bf16.gmra.mxu0 %v3268
        %v3609 = vpop.f32.mrf.mxu0
        %v3610 = vadd.f32 %v3521, %v3609
        %v3611 = vpop.f32.mrf.mxu0
        %v3612 = vadd.f32 %v3523, %v3611
        %3613 = vmatmul.bf16.gmra.mxu0 %v3270
        %v3614 = vpop.f32.mrf.mxu0
        %v3615 = vadd.f32 %v3526, %v3614
        %v3616 = vpop.f32.mrf.mxu0
        %v3617 = vadd.f32 %v3528, %v3616
        %3618 = vmatmul.bf16.gmra.mxu0 %v3272
        %v3619 = vpop.f32.mrf.mxu0
        %v3620 = vadd.f32 %v3531, %v3619
        %v3621 = vpop.f32.mrf.mxu0
        %v3622 = vadd.f32 %v3533, %v3621
        %3623 = vmatmul.bf16.gmra.mxu0 %v3274
        %v3624 = vpop.f32.mrf.mxu0
        %v3625 = vadd.f32 %v3536, %v3624
        %v3626 = vpop.f32.mrf.mxu0
        %v3627 = vadd.f32 %v3538, %v3626
        %3628 = vmatmul.bf16.gmra.mxu0 %v3276
        %v3629 = vpop.f32.mrf.mxu0
        %v3630 = vadd.f32 %v3541, %v3629
        %v3631 = vpop.f32.mrf.mxu0
        %v3632 = vadd.f32 %v3543, %v3631
        %3633 = vmatmul.bf16.gmra.mxu0 %v3278
        %v3634 = vpop.f32.mrf.mxu0
        %v3635 = vadd.f32 %v3546, %v3634
        %v3636 = vpop.f32.mrf.mxu0
        %v3637 = vadd.f32 %v3548, %v3636
        %3638 = vmatmul.bf16.gmra.mxu0 %v3280
        %v3639 = vpop.f32.mrf.mxu0
        %v3640 = vadd.f32 %v3551, %v3639
        %v3641 = vpop.f32.mrf.mxu0
        %v3642 = vadd.f32 %v3553, %v3641
        %3643 = vmatmul.bf16.gmra.mxu0 %v3282
        %v3644 = vpop.f32.mrf.mxu0
        %v3645 = vadd.f32 %v3556, %v3644
        %v3646 = vpop.f32.mrf.mxu0
        %v3647 = vadd.f32 %v3558, %v3646
        %3648 = vmatmul.bf16.gmra.mxu0 %v3284
        %v3649 = vpop.f32.mrf.mxu0
        %v3650 = vadd.f32 %v3561, %v3649
        %v3651 = vpop.f32.mrf.mxu0
        %v3652 = vadd.f32 %v3563, %v3651
        %3653 = vmatmul.bf16.gmra.mxu0 %v3286
        %v3654 = vpop.f32.mrf.mxu0
        %v3655 = vadd.f32 %v3566, %v3654
        %v3656 = vpop.f32.mrf.mxu0
        %v3657 = vadd.f32 %v3568, %v3656
        %3658 = vmatmul.bf16.gmra.mxu0 %v3288
        %v3659 = vpop.f32.mrf.mxu0
        %v3660 = vadd.f32 %v3571, %v3659
        %v3661 = vpop.f32.mrf.mxu0
        %v3662 = vadd.f32 %v3573, %v3661
        %3663 = vmatmul.bf16.gmra.mxu0 %v3290
        %v3664 = vpop.f32.mrf.mxu0
        %v3665 = vadd.f32 %v3576, %v3664
        %v3666 = vpop.f32.mrf.mxu0
        %v3667 = vadd.f32 %v3578, %v3666
        %3668 = vdwg.mxu0
        %3669 = vmatpush.bf16.msra.mxu0 %v3442
        %3670 = vmatpush.bf16.msra.mxu0 %v3440
        %3671 = vmatpush.bf16.msra.mxu0 %v3438
        %3672 = vmatpush.bf16.msra.mxu0 %v3436
        %3673 = vmatpush.bf16.msra.mxu0 %v3434
        %3674 = vmatpush.bf16.msra.mxu0 %v3432
        %3675 = vmatpush.bf16.msra.mxu0 %v3430
        %3676 = vmatpush.bf16.msra.mxu0 %v3428
        %3677 = vmatmul.bf16.gmra.mxu0 %v3259
        %v3678 = vpop.f32.mrf.mxu0
        %v3679 = vadd.f32 %v3328, %v3678
        %v3680 = vpop.f32.mrf.mxu0
        %v3681 = vadd.f32 %v3328, %v3680
        %3682 = vmatmul.bf16.gmra.mxu0 %v3261
        %v3683 = vpop.f32.mrf.mxu0
        %v3684 = vadd.f32 %v3328, %v3683
        %v3685 = vpop.f32.mrf.mxu0
        %v3686 = vadd.f32 %v3328, %v3685
        %3687 = vmatmul.bf16.gmra.mxu0 %v3263
        %v3688 = vpop.f32.mrf.mxu0
        %v3689 = vadd.f32 %v3328, %v3688
        %v3690 = vpop.f32.mrf.mxu0
        %v3691 = vadd.f32 %v3328, %v3690
        %3692 = vmatmul.bf16.gmra.mxu0 %v3265
        %v3693 = vpop.f32.mrf.mxu0
        %v3694 = vadd.f32 %v3328, %v3693
        %v3695 = vpop.f32.mrf.mxu0
        %v3696 = vadd.f32 %v3328, %v3695
        %3697 = vmatmul.bf16.gmra.mxu0 %v3267
        %v3698 = vpop.f32.mrf.mxu0
        %v3699 = vadd.f32 %v3328, %v3698
        %v3700 = vpop.f32.mrf.mxu0
        %v3701 = vadd.f32 %v3328, %v3700
        %3702 = vmatmul.bf16.gmra.mxu0 %v3269
        %v3703 = vpop.f32.mrf.mxu0
        %v3704 = vadd.f32 %v3328, %v3703
        %v3705 = vpop.f32.mrf.mxu0
        %v3706 = vadd.f32 %v3328, %v3705
        %3707 = vmatmul.bf16.gmra.mxu0 %v3271
        %v3708 = vpop.f32.mrf.mxu0
        %v3709 = vadd.f32 %v3328, %v3708
        %v3710 = vpop.f32.mrf.mxu0
        %v3711 = vadd.f32 %v3328, %v3710
        %3712 = vmatmul.bf16.gmra.mxu0 %v3273
        %v3713 = vpop.f32.mrf.mxu0
        %v3714 = vadd.f32 %v3328, %v3713
        %v3715 = vpop.f32.mrf.mxu0
        %v3716 = vadd.f32 %v3328, %v3715
        %3717 = vmatmul.bf16.gmra.mxu0 %v3275
        %v3718 = vpop.f32.mrf.mxu0
        %v3719 = vadd.f32 %v3328, %v3718
        %v3720 = vpop.f32.mrf.mxu0
        %v3721 = vadd.f32 %v3328, %v3720
        %3722 = vmatmul.bf16.gmra.mxu0 %v3277
        %v3723 = vpop.f32.mrf.mxu0
        %v3724 = vadd.f32 %v3328, %v3723
        %v3725 = vpop.f32.mrf.mxu0
        %v3726 = vadd.f32 %v3328, %v3725
        %3727 = vmatmul.bf16.gmra.mxu0 %v3279
        %v3728 = vpop.f32.mrf.mxu0
        %v3729 = vadd.f32 %v3328, %v3728
        %v3730 = vpop.f32.mrf.mxu0
        %v3731 = vadd.f32 %v3328, %v3730
        %3732 = vmatmul.bf16.gmra.mxu0 %v3281
        %v3733 = vpop.f32.mrf.mxu0
        %v3734 = vadd.f32 %v3328, %v3733
        %v3735 = vpop.f32.mrf.mxu0
        %v3736 = vadd.f32 %v3328, %v3735
        %3737 = vmatmul.bf16.gmra.mxu0 %v3283
        %v3738 = vpop.f32.mrf.mxu0
        %v3739 = vadd.f32 %v3328, %v3738
        %v3740 = vpop.f32.mrf.mxu0
        %v3741 = vadd.f32 %v3328, %v3740
        %3742 = vmatmul.bf16.gmra.mxu0 %v3285
        %v3743 = vpop.f32.mrf.mxu0
        %v3744 = vadd.f32 %v3328, %v3743
        %v3745 = vpop.f32.mrf.mxu0
        %v3746 = vadd.f32 %v3328, %v3745
        %3747 = vmatmul.bf16.gmra.mxu0 %v3287
        %v3748 = vpop.f32.mrf.mxu0
        %v3749 = vadd.f32 %v3328, %v3748
        %v3750 = vpop.f32.mrf.mxu0
        %v3751 = vadd.f32 %v3328, %v3750
        %3752 = vmatmul.bf16.gmra.mxu0 %v3289
        %v3753 = vpop.f32.mrf.mxu0
        %v3754 = vadd.f32 %v3328, %v3753
        %v3755 = vpop.f32.mrf.mxu0
        %v3756 = vadd.f32 %v3328, %v3755
        %3757 = vdwg.mxu0
        %3758 = vmatpush.bf16.msra.mxu0 %v3458
        %3759 = vmatpush.bf16.msra.mxu0 %v3456
        %3760 = vmatpush.bf16.msra.mxu0 %v3454
        %3761 = vmatpush.bf16.msra.mxu0 %v3452
        %3762 = vmatpush.bf16.msra.mxu0 %v3450
        %3763 = vmatpush.bf16.msra.mxu0 %v3448
        %3764 = vmatpush.bf16.msra.mxu0 %v3446
        %3765 = vmatpush.bf16.msra.mxu0 %v3444
        %3766 = vmatmul.bf16.gmra.mxu0 %v3260
        %v3767 = vpop.f32.mrf.mxu0
        %v3768 = vadd.f32 %v3679, %v3767
        %v3769 = vpop.f32.mrf.mxu0
        %v3770 = vadd.f32 %v3681, %v3769
        %3771 = vmatmul.bf16.gmra.mxu0 %v3262
        %v3772 = vpop.f32.mrf.mxu0
        %v3773 = vadd.f32 %v3684, %v3772
        %v3774 = vpop.f32.mrf.mxu0
        %v3775 = vadd.f32 %v3686, %v3774
        %3776 = vmatmul.bf16.gmra.mxu0 %v3264
        %v3777 = vpop.f32.mrf.mxu0
        %v3778 = vadd.f32 %v3689, %v3777
        %v3779 = vpop.f32.mrf.mxu0
        %v3780 = vadd.f32 %v3691, %v3779
        %3781 = vmatmul.bf16.gmra.mxu0 %v3266
        %v3782 = vpop.f32.mrf.mxu0
        %v3783 = vadd.f32 %v3694, %v3782
        %v3784 = vpop.f32.mrf.mxu0
        %v3785 = vadd.f32 %v3696, %v3784
        %3786 = vmatmul.bf16.gmra.mxu0 %v3268
        %v3787 = vpop.f32.mrf.mxu0
        %v3788 = vadd.f32 %v3699, %v3787
        %v3789 = vpop.f32.mrf.mxu0
        %v3790 = vadd.f32 %v3701, %v3789
        %3791 = vmatmul.bf16.gmra.mxu0 %v3270
        %v3792 = vpop.f32.mrf.mxu0
        %v3793 = vadd.f32 %v3704, %v3792
        %v3794 = vpop.f32.mrf.mxu0
        %v3795 = vadd.f32 %v3706, %v3794
        %3796 = vmatmul.bf16.gmra.mxu0 %v3272
        %v3797 = vpop.f32.mrf.mxu0
        %v3798 = vadd.f32 %v3709, %v3797
        %v3799 = vpop.f32.mrf.mxu0
        %v3800 = vadd.f32 %v3711, %v3799
        %3801 = vmatmul.bf16.gmra.mxu0 %v3274
        %v3802 = vpop.f32.mrf.mxu0
        %v3803 = vadd.f32 %v3714, %v3802
        %v3804 = vpop.f32.mrf.mxu0
        %v3805 = vadd.f32 %v3716, %v3804
        %3806 = vmatmul.bf16.gmra.mxu0 %v3276
        %v3807 = vpop.f32.mrf.mxu0
        %v3808 = vadd.f32 %v3719, %v3807
        %v3809 = vpop.f32.mrf.mxu0
        %v3810 = vadd.f32 %v3721, %v3809
        %3811 = vmatmul.bf16.gmra.mxu0 %v3278
        %v3812 = vpop.f32.mrf.mxu0
        %v3813 = vadd.f32 %v3724, %v3812
        %v3814 = vpop.f32.mrf.mxu0
        %v3815 = vadd.f32 %v3726, %v3814
        %3816 = vmatmul.bf16.gmra.mxu0 %v3280
        %v3817 = vpop.f32.mrf.mxu0
        %v3818 = vadd.f32 %v3729, %v3817
        %v3819 = vpop.f32.mrf.mxu0
        %v3820 = vadd.f32 %v3731, %v3819
        %3821 = vmatmul.bf16.gmra.mxu0 %v3282
        %v3822 = vpop.f32.mrf.mxu0
        %v3823 = vadd.f32 %v3734, %v3822
        %v3824 = vpop.f32.mrf.mxu0
        %v3825 = vadd.f32 %v3736, %v3824
        %3826 = vmatmul.bf16.gmra.mxu0 %v3284
        %v3827 = vpop.f32.mrf.mxu0
        %v3828 = vadd.f32 %v3739, %v3827
        %v3829 = vpop.f32.mrf.mxu0
        %v3830 = vadd.f32 %v3741, %v3829
        %3831 = vmatmul.bf16.gmra.mxu0 %v3286
        %v3832 = vpop.f32.mrf.mxu0
        %v3833 = vadd.f32 %v3744, %v3832
        %v3834 = vpop.f32.mrf.mxu0
        %v3835 = vadd.f32 %v3746, %v3834
        %3836 = vmatmul.bf16.gmra.mxu0 %v3288
        %v3837 = vpop.f32.mrf.mxu0
        %v3838 = vadd.f32 %v3749, %v3837
        %v3839 = vpop.f32.mrf.mxu0
        %v3840 = vadd.f32 %v3751, %v3839
        %3841 = vmatmul.bf16.gmra.mxu0 %v3290
        %v3842 = vpop.f32.mrf.mxu0
        %v3843 = vadd.f32 %v3754, %v3842
        %v3844 = vpop.f32.mrf.mxu0
        %v3845 = vadd.f32 %v3756, %v3844
        %3846 = vdwg.mxu0
        %v3847 = vmax.f32 %v3590, 0.0
        %v3848 = vmax.f32 %v3768, 0.0
        %v3849 = vmax.f32 %v3592, 0.0
        %v3850 = vmax.f32 %v3770, 0.0
        %v3851 = vmax.f32 %v3595, 0.0
        %v3852 = vmax.f32 %v3773, 0.0
        %v3853 = vmax.f32 %v3597, 0.0
        %v3854 = vmax.f32 %v3775, 0.0
        %v3855 = vmax.f32 %v3600, 0.0
        %v3856 = vmax.f32 %v3778, 0.0
        %v3857 = vmax.f32 %v3602, 0.0
        %v3858 = vmax.f32 %v3780, 0.0
        %v3859 = vmax.f32 %v3605, 0.0
        %v3860 = vmax.f32 %v3783, 0.0
        %v3861 = vmax.f32 %v3607, 0.0
        %v3862 = vmax.f32 %v3785, 0.0
        %v3863 = vmax.f32 %v3610, 0.0
        %v3864 = vmax.f32 %v3788, 0.0
        %v3865 = vmax.f32 %v3612, 0.0
        %v3866 = vmax.f32 %v3790, 0.0
        %v3867 = vmax.f32 %v3615, 0.0
        %v3868 = vmax.f32 %v3793, 0.0
        %v3869 = vmax.f32 %v3617, 0.0
        %v3870 = vmax.f32 %v3795, 0.0
        %v3871 = vmax.f32 %v3620, 0.0
        %v3872 = vmax.f32 %v3798, 0.0
        %v3873 = vmax.f32 %v3622, 0.0
        %v3874 = vmax.f32 %v3800, 0.0
        %v3875 = vmax.f32 %v3625, 0.0
        %v3876 = vmax.f32 %v3803, 0.0
        %v3877 = vmax.f32 %v3627, 0.0
        %v3878 = vmax.f32 %v3805, 0.0
        %v3879 = vmax.f32 %v3630, 0.0
        %v3880 = vmax.f32 %v3808, 0.0
        %v3881 = vmax.f32 %v3632, 0.0
        %v3882 = vmax.f32 %v3810, 0.0
        %v3883 = vmax.f32 %v3635, 0.0
        %v3884 = vmax.f32 %v3813, 0.0
        %v3885 = vmax.f32 %v3637, 0.0
        %v3886 = vmax.f32 %v3815, 0.0
        %v3887 = vmax.f32 %v3640, 0.0
        %v3888 = vmax.f32 %v3818, 0.0
        %v3889 = vmax.f32 %v3642, 0.0
        %v3890 = vmax.f32 %v3820, 0.0
        %v3891 = vmax.f32 %v3645, 0.0
        %v3892 = vmax.f32 %v3823, 0.0
        %v3893 = vmax.f32 %v3647, 0.0
        %v3894 = vmax.f32 %v3825, 0.0
        %v3895 = vmax.f32 %v3650, 0.0
        %v3896 = vmax.f32 %v3828, 0.0
        %v3897 = vmax.f32 %v3652, 0.0
        %v3898 = vmax.f32 %v3830, 0.0
        %v3899 = vmax.f32 %v3655, 0.0
        %v3900 = vmax.f32 %v3833, 0.0
        %v3901 = vmax.f32 %v3657, 0.0
        %v3902 = vmax.f32 %v3835, 0.0
        %v3903 = vmax.f32 %v3660, 0.0
        %v3904 = vmax.f32 %v3838, 0.0
        %v3905 = vmax.f32 %v3662, 0.0
        %v3906 = vmax.f32 %v3840, 0.0
        %v3907 = vmax.f32 %v3665, 0.0
        %v3908 = vmax.f32 %v3843, 0.0
        %v3909 = vmax.f32 %v3667, 0.0
        %v3910 = vmax.f32 %v3845, 0.0
        %v3911 = vpack.c.bf16 %v3849, %v3847
        %v3912 = vpack.c.bf16 %v3850, %v3848
        %v3913 = vpack.c.bf16 %v3853, %v3851
        %v3914 = vpack.c.bf16 %v3854, %v3852
        %v3915 = vpack.c.bf16 %v3857, %v3855
        %v3916 = vpack.c.bf16 %v3858, %v3856
        %v3917 = vpack.c.bf16 %v3861, %v3859
        %v3918 = vpack.c.bf16 %v3862, %v3860
        %v3919 = vpack.c.bf16 %v3865, %v3863
        %v3920 = vpack.c.bf16 %v3866, %v3864
        %v3921 = vpack.c.bf16 %v3869, %v3867
        %v3922 = vpack.c.bf16 %v3870, %v3868
        %v3923 = vpack.c.bf16 %v3873, %v3871
        %v3924 = vpack.c.bf16 %v3874, %v3872
        %v3925 = vpack.c.bf16 %v3877, %v3875
        %v3926 = vpack.c.bf16 %v3878, %v3876
        %v3927 = vpack.c.bf16 %v3881, %v3879
        %v3928 = vpack.c.bf16 %v3882, %v3880
        %v3929 = vpack.c.bf16 %v3885, %v3883
        %v3930 = vpack.c.bf16 %v3886, %v3884
        %v3931 = vpack.c.bf16 %v3889, %v3887
        %v3932 = vpack.c.bf16 %v3890, %v3888
        %v3933 = vpack.c.bf16 %v3893, %v3891
        %v3934 = vpack.c.bf16 %v3894, %v3892
        %v3935 = vpack.c.bf16 %v3897, %v3895
        %v3936 = vpack.c.bf16 %v3898, %v3896
        %v3937 = vpack.c.bf16 %v3901, %v3899
        %v3938 = vpack.c.bf16 %v3902, %v3900
        %v3939 = vpack.c.bf16 %v3905, %v3903
        %v3940 = vpack.c.bf16 %v3906, %v3904
        %v3941 = vpack.c.bf16 %v3909, %v3907
        %v3942 = vpack.c.bf16 %v3910, %v3908
        %s3943 = scalar_lea.vmem [#allocation6], 1024
        %v3944 = vld [vmem:[%s3943] sm:$0xff]
        %v3945 = vld [vmem:[%s3943 + $0x8] sm:$0xff]
        %v3946 = vld [vmem:[%s3943 + $0x10] sm:$0xff]
        %v3947 = vld [vmem:[%s3943 + $0x18] sm:$0xff]
        %v3948 = vld [vmem:[%s3943 + $0x20] sm:$0xff]
        %v3949 = vld [vmem:[%s3943 + $0x28] sm:$0xff]
        %v3950 = vld [vmem:[%s3943 + $0x30] sm:$0xff]
        %v3951 = vld [vmem:[%s3943 + $0x38] sm:$0xff]
        %v3952 = vld [vmem:[%s3943 + $0x40] sm:$0xff]
        %v3953 = vld [vmem:[%s3943 + $0x48] sm:$0xff]
        %v3954 = vld [vmem:[%s3943 + $0x50] sm:$0xff]
        %v3955 = vld [vmem:[%s3943 + $0x58] sm:$0xff]
        %v3956 = vld [vmem:[%s3943 + $0x60] sm:$0xff]
        %v3957 = vld [vmem:[%s3943 + $0x68] sm:$0xff]
        %v3958 = vld [vmem:[%s3943 + $0x70] sm:$0xff]
        %v3959 = vld [vmem:[%s3943 + $0x78] sm:$0xff]
        %v3960 = vld [vmem:[%s3943 + $0x80] sm:$0xff]
        %v3961 = vld [vmem:[%s3943 + $0x88] sm:$0xff]
        %v3962 = vld [vmem:[%s3943 + $0x90] sm:$0xff]
        %v3963 = vld [vmem:[%s3943 + $0x98] sm:$0xff]
        %v3964 = vld [vmem:[%s3943 + $0xa0] sm:$0xff]
        %v3965 = vld [vmem:[%s3943 + $0xa8] sm:$0xff]
        %v3966 = vld [vmem:[%s3943 + $0xb0] sm:$0xff]
        %v3967 = vld [vmem:[%s3943 + $0xb8] sm:$0xff]
        %v3968 = vld [vmem:[%s3943 + $0xc0] sm:$0xff]
        %v3969 = vld [vmem:[%s3943 + $0xc8] sm:$0xff]
        %v3970 = vld [vmem:[%s3943 + $0xd0] sm:$0xff]
        %v3971 = vld [vmem:[%s3943 + $0xd8] sm:$0xff]
        %v3972 = vld [vmem:[%s3943 + $0xe0] sm:$0xff]
        %v3973 = vld [vmem:[%s3943 + $0xe8] sm:$0xff]
        %v3974 = vld [vmem:[%s3943 + $0xf0] sm:$0xff]
        %v3975 = vld [vmem:[%s3943 + $0xf8] sm:$0xff]
        %s3976 = scalar_lea.vmem [#allocation4], 5
        %v3977 = vld [vmem:[%s3976] ss:$8 sm:$0x3]
        %v3979 = vperm.slane %v3977, 0
        %v3980 = vperm.slane %v3977, 1
        %v4015 = vunpack.c.l.b16 %v3944
        %v4016 = vunpack.c.h.b16 %v3944
        %v4017 = vunpack.c.l.b16 %v3945
        %v4018 = vunpack.c.h.b16 %v3945
        %v4019 = vunpack.c.l.b16 %v3946
        %v4020 = vunpack.c.h.b16 %v3946
        %v4021 = vunpack.c.l.b16 %v3947
        %v4022 = vunpack.c.h.b16 %v3947
        %v4023 = vunpack.c.l.b16 %v3948
        %v4024 = vunpack.c.h.b16 %v3948
        %v4025 = vunpack.c.l.b16 %v3949
        %v4026 = vunpack.c.h.b16 %v3949
        %v4027 = vunpack.c.l.b16 %v3950
        %v4028 = vunpack.c.h.b16 %v3950
        %v4029 = vunpack.c.l.b16 %v3951
        %v4030 = vunpack.c.h.b16 %v3951
        %v4031 = vunpack.c.l.b16 %v3952
        %v4032 = vunpack.c.h.b16 %v3952
        %v4033 = vunpack.c.l.b16 %v3953
        %v4034 = vunpack.c.h.b16 %v3953
        %v4035 = vunpack.c.l.b16 %v3954
        %v4036 = vunpack.c.h.b16 %v3954
        %v4037 = vunpack.c.l.b16 %v3955
        %v4038 = vunpack.c.h.b16 %v3955
        %v4039 = vunpack.c.l.b16 %v3956
        %v4040 = vunpack.c.h.b16 %v3956
        %v4041 = vunpack.c.l.b16 %v3957
        %v4042 = vunpack.c.h.b16 %v3957
        %v4043 = vunpack.c.l.b16 %v3958
        %v4044 = vunpack.c.h.b16 %v3958
        %v4045 = vunpack.c.l.b16 %v3959
        %v4046 = vunpack.c.h.b16 %v3959
        %v4047 = vunpack.c.l.b16 %v3960
        %v4048 = vunpack.c.h.b16 %v3960
        %v4049 = vunpack.c.l.b16 %v3961
        %v4050 = vunpack.c.h.b16 %v3961
        %v4051 = vunpack.c.l.b16 %v3962
        %v4052 = vunpack.c.h.b16 %v3962
        %v4053 = vunpack.c.l.b16 %v3963
        %v4054 = vunpack.c.h.b16 %v3963
        %v4055 = vunpack.c.l.b16 %v3964
        %v4056 = vunpack.c.h.b16 %v3964
        %v4057 = vunpack.c.l.b16 %v3965
        %v4058 = vunpack.c.h.b16 %v3965
        %v4059 = vunpack.c.l.b16 %v3966
        %v4060 = vunpack.c.h.b16 %v3966
        %v4061 = vunpack.c.l.b16 %v3967
        %v4062 = vunpack.c.h.b16 %v3967
        %v4063 = vunpack.c.l.b16 %v3968
        %v4064 = vunpack.c.h.b16 %v3968
        %v4065 = vunpack.c.l.b16 %v3969
        %v4066 = vunpack.c.h.b16 %v3969
        %v4067 = vunpack.c.l.b16 %v3970
        %v4068 = vunpack.c.h.b16 %v3970
        %v4069 = vunpack.c.l.b16 %v3971
        %v4070 = vunpack.c.h.b16 %v3971
        %v4071 = vunpack.c.l.b16 %v3972
        %v4072 = vunpack.c.h.b16 %v3972
        %v4073 = vunpack.c.l.b16 %v3973
        %v4074 = vunpack.c.h.b16 %v3973
        %v4075 = vunpack.c.l.b16 %v3974
        %v4076 = vunpack.c.h.b16 %v3974
        %v4077 = vunpack.c.l.b16 %v3975
        %v4078 = vunpack.c.h.b16 %v3975
        %v4079 = vpack.c.b16 %v4017, %v4015
        %v4080 = vpack.c.b16 %v4018, %v4016
        %v4081 = vpack.c.b16 %v4021, %v4019
        %v4082 = vpack.c.b16 %v4022, %v4020
        %v4083 = vpack.c.b16 %v4025, %v4023
        %v4084 = vpack.c.b16 %v4026, %v4024
        %v4085 = vpack.c.b16 %v4029, %v4027
        %v4086 = vpack.c.b16 %v4030, %v4028
        %v4087 = vpack.c.b16 %v4033, %v4031
        %v4088 = vpack.c.b16 %v4034, %v4032
        %v4089 = vpack.c.b16 %v4037, %v4035
        %v4090 = vpack.c.b16 %v4038, %v4036
        %v4091 = vpack.c.b16 %v4041, %v4039
        %v4092 = vpack.c.b16 %v4042, %v4040
        %v4093 = vpack.c.b16 %v4045, %v4043
        %v4094 = vpack.c.b16 %v4046, %v4044
        %v4095 = vpack.c.b16 %v4049, %v4047
        %v4096 = vpack.c.b16 %v4050, %v4048
        %v4097 = vpack.c.b16 %v4053, %v4051
        %v4098 = vpack.c.b16 %v4054, %v4052
        %v4099 = vpack.c.b16 %v4057, %v4055
        %v4100 = vpack.c.b16 %v4058, %v4056
        %v4101 = vpack.c.b16 %v4061, %v4059
        %v4102 = vpack.c.b16 %v4062, %v4060
        %v4103 = vpack.c.b16 %v4065, %v4063
        %v4104 = vpack.c.b16 %v4066, %v4064
        %v4105 = vpack.c.b16 %v4069, %v4067
        %v4106 = vpack.c.b16 %v4070, %v4068
        %v4107 = vpack.c.b16 %v4073, %v4071
        %v4108 = vpack.c.b16 %v4074, %v4072
        %v4109 = vpack.c.b16 %v4077, %v4075
        %v4110 = vpack.c.b16 %v4078, %v4076
        %4143 = vmatpush.bf16.msra.mxu0 %v4093
        %4144 = vmatpush.bf16.msra.mxu0 %v4091
        %4145 = vmatpush.bf16.msra.mxu0 %v4089
        %4146 = vmatpush.bf16.msra.mxu0 %v4087
        %4147 = vmatpush.bf16.msra.mxu0 %v4085
        %4148 = vmatpush.bf16.msra.mxu0 %v4083
        %4149 = vmatpush.bf16.msra.mxu0 %v4081
        %4150 = vmatpush.bf16.msra.mxu0 %v4079
        %4151 = vmatmul.bf16.gmra.mxu0 %v3911
        %v4152 = vpop.f32.mrf.mxu0
        %v4153 = vadd.f32 %v3979, %v4152
        %v4154 = vpop.f32.mrf.mxu0
        %v4155 = vadd.f32 %v3979, %v4154
        %4156 = vmatmul.bf16.gmra.mxu0 %v3913
        %v4157 = vpop.f32.mrf.mxu0
        %v4158 = vadd.f32 %v3979, %v4157
        %v4159 = vpop.f32.mrf.mxu0
        %v4160 = vadd.f32 %v3979, %v4159
        %4161 = vmatmul.bf16.gmra.mxu0 %v3915
        %v4162 = vpop.f32.mrf.mxu0
        %v4163 = vadd.f32 %v3979, %v4162
        %v4164 = vpop.f32.mrf.mxu0
        %v4165 = vadd.f32 %v3979, %v4164
        %4166 = vmatmul.bf16.gmra.mxu0 %v3917
        %v4167 = vpop.f32.mrf.mxu0
        %v4168 = vadd.f32 %v3979, %v4167
        %v4169 = vpop.f32.mrf.mxu0
        %v4170 = vadd.f32 %v3979, %v4169
        %4171 = vmatmul.bf16.gmra.mxu0 %v3919
        %v4172 = vpop.f32.mrf.mxu0
        %v4173 = vadd.f32 %v3979, %v4172
        %v4174 = vpop.f32.mrf.mxu0
        %v4175 = vadd.f32 %v3979, %v4174
        %4176 = vmatmul.bf16.gmra.mxu0 %v3921
        %v4177 = vpop.f32.mrf.mxu0
        %v4178 = vadd.f32 %v3979, %v4177
        %v4179 = vpop.f32.mrf.mxu0
        %v4180 = vadd.f32 %v3979, %v4179
        %4181 = vmatmul.bf16.gmra.mxu0 %v3923
        %v4182 = vpop.f32.mrf.mxu0
        %v4183 = vadd.f32 %v3979, %v4182
        %v4184 = vpop.f32.mrf.mxu0
        %v4185 = vadd.f32 %v3979, %v4184
        %4186 = vmatmul.bf16.gmra.mxu0 %v3925
        %v4187 = vpop.f32.mrf.mxu0
        %v4188 = vadd.f32 %v3979, %v4187
        %v4189 = vpop.f32.mrf.mxu0
        %v4190 = vadd.f32 %v3979, %v4189
        %4191 = vmatmul.bf16.gmra.mxu0 %v3927
        %v4192 = vpop.f32.mrf.mxu0
        %v4193 = vadd.f32 %v3979, %v4192
        %v4194 = vpop.f32.mrf.mxu0
        %v4195 = vadd.f32 %v3979, %v4194
        %4196 = vmatmul.bf16.gmra.mxu0 %v3929
        %v4197 = vpop.f32.mrf.mxu0
        %v4198 = vadd.f32 %v3979, %v4197
        %v4199 = vpop.f32.mrf.mxu0
        %v4200 = vadd.f32 %v3979, %v4199
        %4201 = vmatmul.bf16.gmra.mxu0 %v3931
        %v4202 = vpop.f32.mrf.mxu0
        %v4203 = vadd.f32 %v3979, %v4202
        %v4204 = vpop.f32.mrf.mxu0
        %v4205 = vadd.f32 %v3979, %v4204
        %4206 = vmatmul.bf16.gmra.mxu0 %v3933
        %v4207 = vpop.f32.mrf.mxu0
        %v4208 = vadd.f32 %v3979, %v4207
        %v4209 = vpop.f32.mrf.mxu0
        %v4210 = vadd.f32 %v3979, %v4209
        %4211 = vmatmul.bf16.gmra.mxu0 %v3935
        %v4212 = vpop.f32.mrf.mxu0
        %v4213 = vadd.f32 %v3979, %v4212
        %v4214 = vpop.f32.mrf.mxu0
        %v4215 = vadd.f32 %v3979, %v4214
        %4216 = vmatmul.bf16.gmra.mxu0 %v3937
        %v4217 = vpop.f32.mrf.mxu0
        %v4218 = vadd.f32 %v3979, %v4217
        %v4219 = vpop.f32.mrf.mxu0
        %v4220 = vadd.f32 %v3979, %v4219
        %4221 = vmatmul.bf16.gmra.mxu0 %v3939
        %v4222 = vpop.f32.mrf.mxu0
        %v4223 = vadd.f32 %v3979, %v4222
        %v4224 = vpop.f32.mrf.mxu0
        %v4225 = vadd.f32 %v3979, %v4224
        %4226 = vmatmul.bf16.gmra.mxu0 %v3941
        %v4227 = vpop.f32.mrf.mxu0
        %v4228 = vadd.f32 %v3979, %v4227
        %v4229 = vpop.f32.mrf.mxu0
        %v4230 = vadd.f32 %v3979, %v4229
        %4231 = vdwg.mxu0
        %4232 = vmatpush.bf16.msra.mxu0 %v4109
        %4233 = vmatpush.bf16.msra.mxu0 %v4107
        %4234 = vmatpush.bf16.msra.mxu0 %v4105
        %4235 = vmatpush.bf16.msra.mxu0 %v4103
        %4236 = vmatpush.bf16.msra.mxu0 %v4101
        %4237 = vmatpush.bf16.msra.mxu0 %v4099
        %4238 = vmatpush.bf16.msra.mxu0 %v4097
        %4239 = vmatpush.bf16.msra.mxu0 %v4095
        %4240 = vmatmul.bf16.gmra.mxu0 %v3912
        %v4241 = vpop.f32.mrf.mxu0
        %v4242 = vadd.f32 %v4153, %v4241
        %v4243 = vpop.f32.mrf.mxu0
        %v4244 = vadd.f32 %v4155, %v4243
        %4245 = vmatmul.bf16.gmra.mxu0 %v3914
        %v4246 = vpop.f32.mrf.mxu0
        %v4247 = vadd.f32 %v4158, %v4246
        %v4248 = vpop.f32.mrf.mxu0
        %v4249 = vadd.f32 %v4160, %v4248
        %4250 = vmatmul.bf16.gmra.mxu0 %v3916
        %v4251 = vpop.f32.mrf.mxu0
        %v4252 = vadd.f32 %v4163, %v4251
        %v4253 = vpop.f32.mrf.mxu0
        %v4254 = vadd.f32 %v4165, %v4253
        %4255 = vmatmul.bf16.gmra.mxu0 %v3918
        %v4256 = vpop.f32.mrf.mxu0
        %v4257 = vadd.f32 %v4168, %v4256
        %v4258 = vpop.f32.mrf.mxu0
        %v4259 = vadd.f32 %v4170, %v4258
        %4260 = vmatmul.bf16.gmra.mxu0 %v3920
        %v4261 = vpop.f32.mrf.mxu0
        %v4262 = vadd.f32 %v4173, %v4261
        %v4263 = vpop.f32.mrf.mxu0
        %v4264 = vadd.f32 %v4175, %v4263
        %4265 = vmatmul.bf16.gmra.mxu0 %v3922
        %v4266 = vpop.f32.mrf.mxu0
        %v4267 = vadd.f32 %v4178, %v4266
        %v4268 = vpop.f32.mrf.mxu0
        %v4269 = vadd.f32 %v4180, %v4268
        %4270 = vmatmul.bf16.gmra.mxu0 %v3924
        %v4271 = vpop.f32.mrf.mxu0
        %v4272 = vadd.f32 %v4183, %v4271
        %v4273 = vpop.f32.mrf.mxu0
        %v4274 = vadd.f32 %v4185, %v4273
        %4275 = vmatmul.bf16.gmra.mxu0 %v3926
        %v4276 = vpop.f32.mrf.mxu0
        %v4277 = vadd.f32 %v4188, %v4276
        %v4278 = vpop.f32.mrf.mxu0
        %v4279 = vadd.f32 %v4190, %v4278
        %4280 = vmatmul.bf16.gmra.mxu0 %v3928
        %v4281 = vpop.f32.mrf.mxu0
        %v4282 = vadd.f32 %v4193, %v4281
        %v4283 = vpop.f32.mrf.mxu0
        %v4284 = vadd.f32 %v4195, %v4283
        %4285 = vmatmul.bf16.gmra.mxu0 %v3930
        %v4286 = vpop.f32.mrf.mxu0
        %v4287 = vadd.f32 %v4198, %v4286
        %v4288 = vpop.f32.mrf.mxu0
        %v4289 = vadd.f32 %v4200, %v4288
        %4290 = vmatmul.bf16.gmra.mxu0 %v3932
        %v4291 = vpop.f32.mrf.mxu0
        %v4292 = vadd.f32 %v4203, %v4291
        %v4293 = vpop.f32.mrf.mxu0
        %v4294 = vadd.f32 %v4205, %v4293
        %4295 = vmatmul.bf16.gmra.mxu0 %v3934
        %v4296 = vpop.f32.mrf.mxu0
        %v4297 = vadd.f32 %v4208, %v4296
        %v4298 = vpop.f32.mrf.mxu0
        %v4299 = vadd.f32 %v4210, %v4298
        %4300 = vmatmul.bf16.gmra.mxu0 %v3936
        %v4301 = vpop.f32.mrf.mxu0
        %v4302 = vadd.f32 %v4213, %v4301
        %v4303 = vpop.f32.mrf.mxu0
        %v4304 = vadd.f32 %v4215, %v4303
        %4305 = vmatmul.bf16.gmra.mxu0 %v3938
        %v4306 = vpop.f32.mrf.mxu0
        %v4307 = vadd.f32 %v4218, %v4306
        %v4308 = vpop.f32.mrf.mxu0
        %v4309 = vadd.f32 %v4220, %v4308
        %4310 = vmatmul.bf16.gmra.mxu0 %v3940
        %v4311 = vpop.f32.mrf.mxu0
        %v4312 = vadd.f32 %v4223, %v4311
        %v4313 = vpop.f32.mrf.mxu0
        %v4314 = vadd.f32 %v4225, %v4313
        %4315 = vmatmul.bf16.gmra.mxu0 %v3942
        %v4316 = vpop.f32.mrf.mxu0
        %v4317 = vadd.f32 %v4228, %v4316
        %v4318 = vpop.f32.mrf.mxu0
        %v4319 = vadd.f32 %v4230, %v4318
        %4320 = vdwg.mxu0
        %4321 = vmatpush.bf16.msra.mxu0 %v4094
        %4322 = vmatpush.bf16.msra.mxu0 %v4092
        %4323 = vmatpush.bf16.msra.mxu0 %v4090
        %4324 = vmatpush.bf16.msra.mxu0 %v4088
        %4325 = vmatpush.bf16.msra.mxu0 %v4086
        %4326 = vmatpush.bf16.msra.mxu0 %v4084
        %4327 = vmatpush.bf16.msra.mxu0 %v4082
        %4328 = vmatpush.bf16.msra.mxu0 %v4080
        %4329 = vmatmul.bf16.gmra.mxu0 %v3911
        %v4330 = vpop.f32.mrf.mxu0
        %v4331 = vadd.f32 %v3980, %v4330
        %v4332 = vpop.f32.mrf.mxu0
        %v4333 = vadd.f32 %v3980, %v4332
        %4334 = vmatmul.bf16.gmra.mxu0 %v3913
        %v4335 = vpop.f32.mrf.mxu0
        %v4336 = vadd.f32 %v3980, %v4335
        %v4337 = vpop.f32.mrf.mxu0
        %v4338 = vadd.f32 %v3980, %v4337
        %4339 = vmatmul.bf16.gmra.mxu0 %v3915
        %v4340 = vpop.f32.mrf.mxu0
        %v4341 = vadd.f32 %v3980, %v4340
        %v4342 = vpop.f32.mrf.mxu0
        %v4343 = vadd.f32 %v3980, %v4342
        %4344 = vmatmul.bf16.gmra.mxu0 %v3917
        %v4345 = vpop.f32.mrf.mxu0
        %v4346 = vadd.f32 %v3980, %v4345
        %v4347 = vpop.f32.mrf.mxu0
        %v4348 = vadd.f32 %v3980, %v4347
        %4349 = vmatmul.bf16.gmra.mxu0 %v3919
        %v4350 = vpop.f32.mrf.mxu0
        %v4351 = vadd.f32 %v3980, %v4350
        %v4352 = vpop.f32.mrf.mxu0
        %v4353 = vadd.f32 %v3980, %v4352
        %4354 = vmatmul.bf16.gmra.mxu0 %v3921
        %v4355 = vpop.f32.mrf.mxu0
        %v4356 = vadd.f32 %v3980, %v4355
        %v4357 = vpop.f32.mrf.mxu0
        %v4358 = vadd.f32 %v3980, %v4357
        %4359 = vmatmul.bf16.gmra.mxu0 %v3923
        %v4360 = vpop.f32.mrf.mxu0
        %v4361 = vadd.f32 %v3980, %v4360
        %v4362 = vpop.f32.mrf.mxu0
        %v4363 = vadd.f32 %v3980, %v4362
        %4364 = vmatmul.bf16.gmra.mxu0 %v3925
        %v4365 = vpop.f32.mrf.mxu0
        %v4366 = vadd.f32 %v3980, %v4365
        %v4367 = vpop.f32.mrf.mxu0
        %v4368 = vadd.f32 %v3980, %v4367
        %4369 = vmatmul.bf16.gmra.mxu0 %v3927
        %v4370 = vpop.f32.mrf.mxu0
        %v4371 = vadd.f32 %v3980, %v4370
        %v4372 = vpop.f32.mrf.mxu0
        %v4373 = vadd.f32 %v3980, %v4372
        %4374 = vmatmul.bf16.gmra.mxu0 %v3929
        %v4375 = vpop.f32.mrf.mxu0
        %v4376 = vadd.f32 %v3980, %v4375
        %v4377 = vpop.f32.mrf.mxu0
        %v4378 = vadd.f32 %v3980, %v4377
        %4379 = vmatmul.bf16.gmra.mxu0 %v3931
        %v4380 = vpop.f32.mrf.mxu0
        %v4381 = vadd.f32 %v3980, %v4380
        %v4382 = vpop.f32.mrf.mxu0
        %v4383 = vadd.f32 %v3980, %v4382
        %4384 = vmatmul.bf16.gmra.mxu0 %v3933
        %v4385 = vpop.f32.mrf.mxu0
        %v4386 = vadd.f32 %v3980, %v4385
        %v4387 = vpop.f32.mrf.mxu0
        %v4388 = vadd.f32 %v3980, %v4387
        %4389 = vmatmul.bf16.gmra.mxu0 %v3935
        %v4390 = vpop.f32.mrf.mxu0
        %v4391 = vadd.f32 %v3980, %v4390
        %v4392 = vpop.f32.mrf.mxu0
        %v4393 = vadd.f32 %v3980, %v4392
        %4394 = vmatmul.bf16.gmra.mxu0 %v3937
        %v4395 = vpop.f32.mrf.mxu0
        %v4396 = vadd.f32 %v3980, %v4395
        %v4397 = vpop.f32.mrf.mxu0
        %v4398 = vadd.f32 %v3980, %v4397
        %4399 = vmatmul.bf16.gmra.mxu0 %v3939
        %v4400 = vpop.f32.mrf.mxu0
        %v4401 = vadd.f32 %v3980, %v4400
        %v4402 = vpop.f32.mrf.mxu0
        %v4403 = vadd.f32 %v3980, %v4402
        %4404 = vmatmul.bf16.gmra.mxu0 %v3941
        %v4405 = vpop.f32.mrf.mxu0
        %v4406 = vadd.f32 %v3980, %v4405
        %v4407 = vpop.f32.mrf.mxu0
        %v4408 = vadd.f32 %v3980, %v4407
        %4409 = vdwg.mxu0
        %4410 = vmatpush.bf16.msra.mxu0 %v4110
        %4411 = vmatpush.bf16.msra.mxu0 %v4108
        %4412 = vmatpush.bf16.msra.mxu0 %v4106
        %4413 = vmatpush.bf16.msra.mxu0 %v4104
        %4414 = vmatpush.bf16.msra.mxu0 %v4102
        %4415 = vmatpush.bf16.msra.mxu0 %v4100
        %4416 = vmatpush.bf16.msra.mxu0 %v4098
        %4417 = vmatpush.bf16.msra.mxu0 %v4096
        %4418 = vmatmul.bf16.gmra.mxu0 %v3912
        %v4419 = vpop.f32.mrf.mxu0
        %v4420 = vadd.f32 %v4331, %v4419
        %v4421 = vpop.f32.mrf.mxu0
        %v4422 = vadd.f32 %v4333, %v4421
        %4423 = vmatmul.bf16.gmra.mxu0 %v3914
        %v4424 = vpop.f32.mrf.mxu0
        %v4425 = vadd.f32 %v4336, %v4424
        %v4426 = vpop.f32.mrf.mxu0
        %v4427 = vadd.f32 %v4338, %v4426
        %4428 = vmatmul.bf16.gmra.mxu0 %v3916
        %v4429 = vpop.f32.mrf.mxu0
        %v4430 = vadd.f32 %v4341, %v4429
        %v4431 = vpop.f32.mrf.mxu0
        %v4432 = vadd.f32 %v4343, %v4431
        %4433 = vmatmul.bf16.gmra.mxu0 %v3918
        %v4434 = vpop.f32.mrf.mxu0
        %v4435 = vadd.f32 %v4346, %v4434
        %v4436 = vpop.f32.mrf.mxu0
        %v4437 = vadd.f32 %v4348, %v4436
        %4438 = vmatmul.bf16.gmra.mxu0 %v3920
        %v4439 = vpop.f32.mrf.mxu0
        %v4440 = vadd.f32 %v4351, %v4439
        %v4441 = vpop.f32.mrf.mxu0
        %v4442 = vadd.f32 %v4353, %v4441
        %4443 = vmatmul.bf16.gmra.mxu0 %v3922
        %v4444 = vpop.f32.mrf.mxu0
        %v4445 = vadd.f32 %v4356, %v4444
        %v4446 = vpop.f32.mrf.mxu0
        %v4447 = vadd.f32 %v4358, %v4446
        %4448 = vmatmul.bf16.gmra.mxu0 %v3924
        %v4449 = vpop.f32.mrf.mxu0
        %v4450 = vadd.f32 %v4361, %v4449
        %v4451 = vpop.f32.mrf.mxu0
        %v4452 = vadd.f32 %v4363, %v4451
        %4453 = vmatmul.bf16.gmra.mxu0 %v3926
        %v4454 = vpop.f32.mrf.mxu0
        %v4455 = vadd.f32 %v4366, %v4454
        %v4456 = vpop.f32.mrf.mxu0
        %v4457 = vadd.f32 %v4368, %v4456
        %4458 = vmatmul.bf16.gmra.mxu0 %v3928
        %v4459 = vpop.f32.mrf.mxu0
        %v4460 = vadd.f32 %v4371, %v4459
        %v4461 = vpop.f32.mrf.mxu0
        %v4462 = vadd.f32 %v4373, %v4461
        %4463 = vmatmul.bf16.gmra.mxu0 %v3930
        %v4464 = vpop.f32.mrf.mxu0
        %v4465 = vadd.f32 %v4376, %v4464
        %v4466 = vpop.f32.mrf.mxu0
        %v4467 = vadd.f32 %v4378, %v4466
        %4468 = vmatmul.bf16.gmra.mxu0 %v3932
        %v4469 = vpop.f32.mrf.mxu0
        %v4470 = vadd.f32 %v4381, %v4469
        %v4471 = vpop.f32.mrf.mxu0
        %v4472 = vadd.f32 %v4383, %v4471
        %4473 = vmatmul.bf16.gmra.mxu0 %v3934
        %v4474 = vpop.f32.mrf.mxu0
        %v4475 = vadd.f32 %v4386, %v4474
        %v4476 = vpop.f32.mrf.mxu0
        %v4477 = vadd.f32 %v4388, %v4476
        %4478 = vmatmul.bf16.gmra.mxu0 %v3936
        %v4479 = vpop.f32.mrf.mxu0
        %v4480 = vadd.f32 %v4391, %v4479
        %v4481 = vpop.f32.mrf.mxu0
        %v4482 = vadd.f32 %v4393, %v4481
        %4483 = vmatmul.bf16.gmra.mxu0 %v3938
        %v4484 = vpop.f32.mrf.mxu0
        %v4485 = vadd.f32 %v4396, %v4484
        %v4486 = vpop.f32.mrf.mxu0
        %v4487 = vadd.f32 %v4398, %v4486
        %4488 = vmatmul.bf16.gmra.mxu0 %v3940
        %v4489 = vpop.f32.mrf.mxu0
        %v4490 = vadd.f32 %v4401, %v4489
        %v4491 = vpop.f32.mrf.mxu0
        %v4492 = vadd.f32 %v4403, %v4491
        %4493 = vmatmul.bf16.gmra.mxu0 %v3942
        %v4494 = vpop.f32.mrf.mxu0
        %v4495 = vadd.f32 %v4406, %v4494
        %v4496 = vpop.f32.mrf.mxu0
        %v4497 = vadd.f32 %v4408, %v4496
        %4498 = vdwg.mxu0
        %v4499 = vmax.f32 %v4242, 0.0
        %v4500 = vmax.f32 %v4420, 0.0
        %v4501 = vmax.f32 %v4244, 0.0
        %v4502 = vmax.f32 %v4422, 0.0
        %v4503 = vmax.f32 %v4247, 0.0
        %v4504 = vmax.f32 %v4425, 0.0
        %v4505 = vmax.f32 %v4249, 0.0
        %v4506 = vmax.f32 %v4427, 0.0
        %v4507 = vmax.f32 %v4252, 0.0
        %v4508 = vmax.f32 %v4430, 0.0
        %v4509 = vmax.f32 %v4254, 0.0
        %v4510 = vmax.f32 %v4432, 0.0
        %v4511 = vmax.f32 %v4257, 0.0
        %v4512 = vmax.f32 %v4435, 0.0
        %v4513 = vmax.f32 %v4259, 0.0
        %v4514 = vmax.f32 %v4437, 0.0
        %v4515 = vmax.f32 %v4262, 0.0
        %v4516 = vmax.f32 %v4440, 0.0
        %v4517 = vmax.f32 %v4264, 0.0
        %v4518 = vmax.f32 %v4442, 0.0
        %v4519 = vmax.f32 %v4267, 0.0
        %v4520 = vmax.f32 %v4445, 0.0
        %v4521 = vmax.f32 %v4269, 0.0
        %v4522 = vmax.f32 %v4447, 0.0
        %v4523 = vmax.f32 %v4272, 0.0
        %v4524 = vmax.f32 %v4450, 0.0
        %v4525 = vmax.f32 %v4274, 0.0
        %v4526 = vmax.f32 %v4452, 0.0
        %v4527 = vmax.f32 %v4277, 0.0
        %v4528 = vmax.f32 %v4455, 0.0
        %v4529 = vmax.f32 %v4279, 0.0
        %v4530 = vmax.f32 %v4457, 0.0
        %v4531 = vmax.f32 %v4282, 0.0
        %v4532 = vmax.f32 %v4460, 0.0
        %v4533 = vmax.f32 %v4284, 0.0
        %v4534 = vmax.f32 %v4462, 0.0
        %v4535 = vmax.f32 %v4287, 0.0
        %v4536 = vmax.f32 %v4465, 0.0
        %v4537 = vmax.f32 %v4289, 0.0
        %v4538 = vmax.f32 %v4467, 0.0
        %v4539 = vmax.f32 %v4292, 0.0
        %v4540 = vmax.f32 %v4470, 0.0
        %v4541 = vmax.f32 %v4294, 0.0
        %v4542 = vmax.f32 %v4472, 0.0
        %v4543 = vmax.f32 %v4297, 0.0
        %v4544 = vmax.f32 %v4475, 0.0
        %v4545 = vmax.f32 %v4299, 0.0
        %v4546 = vmax.f32 %v4477, 0.0
        %v4547 = vmax.f32 %v4302, 0.0
        %v4548 = vmax.f32 %v4480, 0.0
        %v4549 = vmax.f32 %v4304, 0.0
        %v4550 = vmax.f32 %v4482, 0.0
        %v4551 = vmax.f32 %v4307, 0.0
        %v4552 = vmax.f32 %v4485, 0.0
        %v4553 = vmax.f32 %v4309, 0.0
        %v4554 = vmax.f32 %v4487, 0.0
        %v4555 = vmax.f32 %v4312, 0.0
        %v4556 = vmax.f32 %v4490, 0.0
        %v4557 = vmax.f32 %v4314, 0.0
        %v4558 = vmax.f32 %v4492, 0.0
        %v4559 = vmax.f32 %v4317, 0.0
        %v4560 = vmax.f32 %v4495, 0.0
        %v4561 = vmax.f32 %v4319, 0.0
        %v4562 = vmax.f32 %v4497, 0.0
        %v4563 = vpack.c.bf16 %v4501, %v4499
        %v4564 = vpack.c.bf16 %v4502, %v4500
        %v4565 = vpack.c.bf16 %v4505, %v4503
        %v4566 = vpack.c.bf16 %v4506, %v4504
        %v4567 = vpack.c.bf16 %v4509, %v4507
        %v4568 = vpack.c.bf16 %v4510, %v4508
        %v4569 = vpack.c.bf16 %v4513, %v4511
        %v4570 = vpack.c.bf16 %v4514, %v4512
        %v4571 = vpack.c.bf16 %v4517, %v4515
        %v4572 = vpack.c.bf16 %v4518, %v4516
        %v4573 = vpack.c.bf16 %v4521, %v4519
        %v4574 = vpack.c.bf16 %v4522, %v4520
        %v4575 = vpack.c.bf16 %v4525, %v4523
        %v4576 = vpack.c.bf16 %v4526, %v4524
        %v4577 = vpack.c.bf16 %v4529, %v4527
        %v4578 = vpack.c.bf16 %v4530, %v4528
        %v4579 = vpack.c.bf16 %v4533, %v4531
        %v4580 = vpack.c.bf16 %v4534, %v4532
        %v4581 = vpack.c.bf16 %v4537, %v4535
        %v4582 = vpack.c.bf16 %v4538, %v4536
        %v4583 = vpack.c.bf16 %v4541, %v4539
        %v4584 = vpack.c.bf16 %v4542, %v4540
        %v4585 = vpack.c.bf16 %v4545, %v4543
        %v4586 = vpack.c.bf16 %v4546, %v4544
        %v4587 = vpack.c.bf16 %v4549, %v4547
        %v4588 = vpack.c.bf16 %v4550, %v4548
        %v4589 = vpack.c.bf16 %v4553, %v4551
        %v4590 = vpack.c.bf16 %v4554, %v4552
        %v4591 = vpack.c.bf16 %v4557, %v4555
        %v4592 = vpack.c.bf16 %v4558, %v4556
        %v4593 = vpack.c.bf16 %v4561, %v4559
        %v4594 = vpack.c.bf16 %v4562, %v4560
        %s4595 = scalar_lea.vmem [#allocation6], 1280
        %v4596 = vld [vmem:[%s4595] sm:$0xff]
        %v4597 = vld [vmem:[%s4595 + $0x8] sm:$0xff]
        %v4598 = vld [vmem:[%s4595 + $0x10] sm:$0xff]
        %v4599 = vld [vmem:[%s4595 + $0x18] sm:$0xff]
        %v4600 = vld [vmem:[%s4595 + $0x20] sm:$0xff]
        %v4601 = vld [vmem:[%s4595 + $0x28] sm:$0xff]
        %v4602 = vld [vmem:[%s4595 + $0x30] sm:$0xff]
        %v4603 = vld [vmem:[%s4595 + $0x38] sm:$0xff]
        %v4604 = vld [vmem:[%s4595 + $0x40] sm:$0xff]
        %v4605 = vld [vmem:[%s4595 + $0x48] sm:$0xff]
        %v4606 = vld [vmem:[%s4595 + $0x50] sm:$0xff]
        %v4607 = vld [vmem:[%s4595 + $0x58] sm:$0xff]
        %v4608 = vld [vmem:[%s4595 + $0x60] sm:$0xff]
        %v4609 = vld [vmem:[%s4595 + $0x68] sm:$0xff]
        %v4610 = vld [vmem:[%s4595 + $0x70] sm:$0xff]
        %v4611 = vld [vmem:[%s4595 + $0x78] sm:$0xff]
        %v4612 = vld [vmem:[%s4595 + $0x80] sm:$0xff]
        %v4613 = vld [vmem:[%s4595 + $0x88] sm:$0xff]
        %v4614 = vld [vmem:[%s4595 + $0x90] sm:$0xff]
        %v4615 = vld [vmem:[%s4595 + $0x98] sm:$0xff]
        %v4616 = vld [vmem:[%s4595 + $0xa0] sm:$0xff]
        %v4617 = vld [vmem:[%s4595 + $0xa8] sm:$0xff]
        %v4618 = vld [vmem:[%s4595 + $0xb0] sm:$0xff]
        %v4619 = vld [vmem:[%s4595 + $0xb8] sm:$0xff]
        %v4620 = vld [vmem:[%s4595 + $0xc0] sm:$0xff]
        %v4621 = vld [vmem:[%s4595 + $0xc8] sm:$0xff]
        %v4622 = vld [vmem:[%s4595 + $0xd0] sm:$0xff]
        %v4623 = vld [vmem:[%s4595 + $0xd8] sm:$0xff]
        %v4624 = vld [vmem:[%s4595 + $0xe0] sm:$0xff]
        %v4625 = vld [vmem:[%s4595 + $0xe8] sm:$0xff]
        %v4626 = vld [vmem:[%s4595 + $0xf0] sm:$0xff]
        %v4627 = vld [vmem:[%s4595 + $0xf8] sm:$0xff]
        %s4628 = scalar_lea.vmem [#allocation4], 6
        %v4629 = vld [vmem:[%s4628] ss:$8 sm:$0x3]
        %v4631 = vperm.slane %v4629, 0
        %v4632 = vperm.slane %v4629, 1
        %v4667 = vunpack.c.l.b16 %v4596
        %v4668 = vunpack.c.h.b16 %v4596
        %v4669 = vunpack.c.l.b16 %v4597
        %v4670 = vunpack.c.h.b16 %v4597
        %v4671 = vunpack.c.l.b16 %v4598
        %v4672 = vunpack.c.h.b16 %v4598
        %v4673 = vunpack.c.l.b16 %v4599
        %v4674 = vunpack.c.h.b16 %v4599
        %v4675 = vunpack.c.l.b16 %v4600
        %v4676 = vunpack.c.h.b16 %v4600
        %v4677 = vunpack.c.l.b16 %v4601
        %v4678 = vunpack.c.h.b16 %v4601
        %v4679 = vunpack.c.l.b16 %v4602
        %v4680 = vunpack.c.h.b16 %v4602
        %v4681 = vunpack.c.l.b16 %v4603
        %v4682 = vunpack.c.h.b16 %v4603
        %v4683 = vunpack.c.l.b16 %v4604
        %v4684 = vunpack.c.h.b16 %v4604
        %v4685 = vunpack.c.l.b16 %v4605
        %v4686 = vunpack.c.h.b16 %v4605
        %v4687 = vunpack.c.l.b16 %v4606
        %v4688 = vunpack.c.h.b16 %v4606
        %v4689 = vunpack.c.l.b16 %v4607
        %v4690 = vunpack.c.h.b16 %v4607
        %v4691 = vunpack.c.l.b16 %v4608
        %v4692 = vunpack.c.h.b16 %v4608
        %v4693 = vunpack.c.l.b16 %v4609
        %v4694 = vunpack.c.h.b16 %v4609
        %v4695 = vunpack.c.l.b16 %v4610
        %v4696 = vunpack.c.h.b16 %v4610
        %v4697 = vunpack.c.l.b16 %v4611
        %v4698 = vunpack.c.h.b16 %v4611
        %v4699 = vunpack.c.l.b16 %v4612
        %v4700 = vunpack.c.h.b16 %v4612
        %v4701 = vunpack.c.l.b16 %v4613
        %v4702 = vunpack.c.h.b16 %v4613
        %v4703 = vunpack.c.l.b16 %v4614
        %v4704 = vunpack.c.h.b16 %v4614
        %v4705 = vunpack.c.l.b16 %v4615
        %v4706 = vunpack.c.h.b16 %v4615
        %v4707 = vunpack.c.l.b16 %v4616
        %v4708 = vunpack.c.h.b16 %v4616
        %v4709 = vunpack.c.l.b16 %v4617
        %v4710 = vunpack.c.h.b16 %v4617
        %v4711 = vunpack.c.l.b16 %v4618
        %v4712 = vunpack.c.h.b16 %v4618
        %v4713 = vunpack.c.l.b16 %v4619
        %v4714 = vunpack.c.h.b16 %v4619
        %v4715 = vunpack.c.l.b16 %v4620
        %v4716 = vunpack.c.h.b16 %v4620
        %v4717 = vunpack.c.l.b16 %v4621
        %v4718 = vunpack.c.h.b16 %v4621
        %v4719 = vunpack.c.l.b16 %v4622
        %v4720 = vunpack.c.h.b16 %v4622
        %v4721 = vunpack.c.l.b16 %v4623
        %v4722 = vunpack.c.h.b16 %v4623
        %v4723 = vunpack.c.l.b16 %v4624
        %v4724 = vunpack.c.h.b16 %v4624
        %v4725 = vunpack.c.l.b16 %v4625
        %v4726 = vunpack.c.h.b16 %v4625
        %v4727 = vunpack.c.l.b16 %v4626
        %v4728 = vunpack.c.h.b16 %v4626
        %v4729 = vunpack.c.l.b16 %v4627
        %v4730 = vunpack.c.h.b16 %v4627
        %v4731 = vpack.c.b16 %v4669, %v4667
        %v4732 = vpack.c.b16 %v4670, %v4668
        %v4733 = vpack.c.b16 %v4673, %v4671
        %v4734 = vpack.c.b16 %v4674, %v4672
        %v4735 = vpack.c.b16 %v4677, %v4675
        %v4736 = vpack.c.b16 %v4678, %v4676
        %v4737 = vpack.c.b16 %v4681, %v4679
        %v4738 = vpack.c.b16 %v4682, %v4680
        %v4739 = vpack.c.b16 %v4685, %v4683
        %v4740 = vpack.c.b16 %v4686, %v4684
        %v4741 = vpack.c.b16 %v4689, %v4687
        %v4742 = vpack.c.b16 %v4690, %v4688
        %v4743 = vpack.c.b16 %v4693, %v4691
        %v4744 = vpack.c.b16 %v4694, %v4692
        %v4745 = vpack.c.b16 %v4697, %v4695
        %v4746 = vpack.c.b16 %v4698, %v4696
        %v4747 = vpack.c.b16 %v4701, %v4699
        %v4748 = vpack.c.b16 %v4702, %v4700
        %v4749 = vpack.c.b16 %v4705, %v4703
        %v4750 = vpack.c.b16 %v4706, %v4704
        %v4751 = vpack.c.b16 %v4709, %v4707
        %v4752 = vpack.c.b16 %v4710, %v4708
        %v4753 = vpack.c.b16 %v4713, %v4711
        %v4754 = vpack.c.b16 %v4714, %v4712
        %v4755 = vpack.c.b16 %v4717, %v4715
        %v4756 = vpack.c.b16 %v4718, %v4716
        %v4757 = vpack.c.b16 %v4721, %v4719
        %v4758 = vpack.c.b16 %v4722, %v4720
        %v4759 = vpack.c.b16 %v4725, %v4723
        %v4760 = vpack.c.b16 %v4726, %v4724
        %v4761 = vpack.c.b16 %v4729, %v4727
        %v4762 = vpack.c.b16 %v4730, %v4728
        %4795 = vmatpush.bf16.msra.mxu0 %v4745
        %4796 = vmatpush.bf16.msra.mxu0 %v4743
        %4797 = vmatpush.bf16.msra.mxu0 %v4741
        %4798 = vmatpush.bf16.msra.mxu0 %v4739
        %4799 = vmatpush.bf16.msra.mxu0 %v4737
        %4800 = vmatpush.bf16.msra.mxu0 %v4735
        %4801 = vmatpush.bf16.msra.mxu0 %v4733
        %4802 = vmatpush.bf16.msra.mxu0 %v4731
        %4803 = vmatmul.bf16.gmra.mxu0 %v4563
        %v4804 = vpop.f32.mrf.mxu0
        %v4805 = vadd.f32 %v4631, %v4804
        %v4806 = vpop.f32.mrf.mxu0
        %v4807 = vadd.f32 %v4631, %v4806
        %4808 = vmatmul.bf16.gmra.mxu0 %v4565
        %v4809 = vpop.f32.mrf.mxu0
        %v4810 = vadd.f32 %v4631, %v4809
        %v4811 = vpop.f32.mrf.mxu0
        %v4812 = vadd.f32 %v4631, %v4811
        %4813 = vmatmul.bf16.gmra.mxu0 %v4567
        %v4814 = vpop.f32.mrf.mxu0
        %v4815 = vadd.f32 %v4631, %v4814
        %v4816 = vpop.f32.mrf.mxu0
        %v4817 = vadd.f32 %v4631, %v4816
        %4818 = vmatmul.bf16.gmra.mxu0 %v4569
        %v4819 = vpop.f32.mrf.mxu0
        %v4820 = vadd.f32 %v4631, %v4819
        %v4821 = vpop.f32.mrf.mxu0
        %v4822 = vadd.f32 %v4631, %v4821
        %4823 = vmatmul.bf16.gmra.mxu0 %v4571
        %v4824 = vpop.f32.mrf.mxu0
        %v4825 = vadd.f32 %v4631, %v4824
        %v4826 = vpop.f32.mrf.mxu0
        %v4827 = vadd.f32 %v4631, %v4826
        %4828 = vmatmul.bf16.gmra.mxu0 %v4573
        %v4829 = vpop.f32.mrf.mxu0
        %v4830 = vadd.f32 %v4631, %v4829
        %v4831 = vpop.f32.mrf.mxu0
        %v4832 = vadd.f32 %v4631, %v4831
        %4833 = vmatmul.bf16.gmra.mxu0 %v4575
        %v4834 = vpop.f32.mrf.mxu0
        %v4835 = vadd.f32 %v4631, %v4834
        %v4836 = vpop.f32.mrf.mxu0
        %v4837 = vadd.f32 %v4631, %v4836
        %4838 = vmatmul.bf16.gmra.mxu0 %v4577
        %v4839 = vpop.f32.mrf.mxu0
        %v4840 = vadd.f32 %v4631, %v4839
        %v4841 = vpop.f32.mrf.mxu0
        %v4842 = vadd.f32 %v4631, %v4841
        %4843 = vmatmul.bf16.gmra.mxu0 %v4579
        %v4844 = vpop.f32.mrf.mxu0
        %v4845 = vadd.f32 %v4631, %v4844
        %v4846 = vpop.f32.mrf.mxu0
        %v4847 = vadd.f32 %v4631, %v4846
        %4848 = vmatmul.bf16.gmra.mxu0 %v4581
        %v4849 = vpop.f32.mrf.mxu0
        %v4850 = vadd.f32 %v4631, %v4849
        %v4851 = vpop.f32.mrf.mxu0
        %v4852 = vadd.f32 %v4631, %v4851
        %4853 = vmatmul.bf16.gmra.mxu0 %v4583
        %v4854 = vpop.f32.mrf.mxu0
        %v4855 = vadd.f32 %v4631, %v4854
        %v4856 = vpop.f32.mrf.mxu0
        %v4857 = vadd.f32 %v4631, %v4856
        %4858 = vmatmul.bf16.gmra.mxu0 %v4585
        %v4859 = vpop.f32.mrf.mxu0
        %v4860 = vadd.f32 %v4631, %v4859
        %v4861 = vpop.f32.mrf.mxu0
        %v4862 = vadd.f32 %v4631, %v4861
        %4863 = vmatmul.bf16.gmra.mxu0 %v4587
        %v4864 = vpop.f32.mrf.mxu0
        %v4865 = vadd.f32 %v4631, %v4864
        %v4866 = vpop.f32.mrf.mxu0
        %v4867 = vadd.f32 %v4631, %v4866
        %4868 = vmatmul.bf16.gmra.mxu0 %v4589
        %v4869 = vpop.f32.mrf.mxu0
        %v4870 = vadd.f32 %v4631, %v4869
        %v4871 = vpop.f32.mrf.mxu0
        %v4872 = vadd.f32 %v4631, %v4871
        %4873 = vmatmul.bf16.gmra.mxu0 %v4591
        %v4874 = vpop.f32.mrf.mxu0
        %v4875 = vadd.f32 %v4631, %v4874
        %v4876 = vpop.f32.mrf.mxu0
        %v4877 = vadd.f32 %v4631, %v4876
        %4878 = vmatmul.bf16.gmra.mxu0 %v4593
        %v4879 = vpop.f32.mrf.mxu0
        %v4880 = vadd.f32 %v4631, %v4879
        %v4881 = vpop.f32.mrf.mxu0
        %v4882 = vadd.f32 %v4631, %v4881
        %4883 = vdwg.mxu0
        %4884 = vmatpush.bf16.msra.mxu0 %v4761
        %4885 = vmatpush.bf16.msra.mxu0 %v4759
        %4886 = vmatpush.bf16.msra.mxu0 %v4757
        %4887 = vmatpush.bf16.msra.mxu0 %v4755
        %4888 = vmatpush.bf16.msra.mxu0 %v4753
        %4889 = vmatpush.bf16.msra.mxu0 %v4751
        %4890 = vmatpush.bf16.msra.mxu0 %v4749
        %4891 = vmatpush.bf16.msra.mxu0 %v4747
        %4892 = vmatmul.bf16.gmra.mxu0 %v4564
        %v4893 = vpop.f32.mrf.mxu0
        %v4894 = vadd.f32 %v4805, %v4893
        %v4895 = vpop.f32.mrf.mxu0
        %v4896 = vadd.f32 %v4807, %v4895
        %4897 = vmatmul.bf16.gmra.mxu0 %v4566
        %v4898 = vpop.f32.mrf.mxu0
        %v4899 = vadd.f32 %v4810, %v4898
        %v4900 = vpop.f32.mrf.mxu0
        %v4901 = vadd.f32 %v4812, %v4900
        %4902 = vmatmul.bf16.gmra.mxu0 %v4568
        %v4903 = vpop.f32.mrf.mxu0
        %v4904 = vadd.f32 %v4815, %v4903
        %v4905 = vpop.f32.mrf.mxu0
        %v4906 = vadd.f32 %v4817, %v4905
        %4907 = vmatmul.bf16.gmra.mxu0 %v4570
        %v4908 = vpop.f32.mrf.mxu0
        %v4909 = vadd.f32 %v4820, %v4908
        %v4910 = vpop.f32.mrf.mxu0
        %v4911 = vadd.f32 %v4822, %v4910
        %4912 = vmatmul.bf16.gmra.mxu0 %v4572
        %v4913 = vpop.f32.mrf.mxu0
        %v4914 = vadd.f32 %v4825, %v4913
        %v4915 = vpop.f32.mrf.mxu0
        %v4916 = vadd.f32 %v4827, %v4915
        %4917 = vmatmul.bf16.gmra.mxu0 %v4574
        %v4918 = vpop.f32.mrf.mxu0
        %v4919 = vadd.f32 %v4830, %v4918
        %v4920 = vpop.f32.mrf.mxu0
        %v4921 = vadd.f32 %v4832, %v4920
        %4922 = vmatmul.bf16.gmra.mxu0 %v4576
        %v4923 = vpop.f32.mrf.mxu0
        %v4924 = vadd.f32 %v4835, %v4923
        %v4925 = vpop.f32.mrf.mxu0
        %v4926 = vadd.f32 %v4837, %v4925
        %4927 = vmatmul.bf16.gmra.mxu0 %v4578
        %v4928 = vpop.f32.mrf.mxu0
        %v4929 = vadd.f32 %v4840, %v4928
        %v4930 = vpop.f32.mrf.mxu0
        %v4931 = vadd.f32 %v4842, %v4930
        %4932 = vmatmul.bf16.gmra.mxu0 %v4580
        %v4933 = vpop.f32.mrf.mxu0
        %v4934 = vadd.f32 %v4845, %v4933
        %v4935 = vpop.f32.mrf.mxu0
        %v4936 = vadd.f32 %v4847, %v4935
        %4937 = vmatmul.bf16.gmra.mxu0 %v4582
        %v4938 = vpop.f32.mrf.mxu0
        %v4939 = vadd.f32 %v4850, %v4938
        %v4940 = vpop.f32.mrf.mxu0
        %v4941 = vadd.f32 %v4852, %v4940
        %4942 = vmatmul.bf16.gmra.mxu0 %v4584
        %v4943 = vpop.f32.mrf.mxu0
        %v4944 = vadd.f32 %v4855, %v4943
        %v4945 = vpop.f32.mrf.mxu0
        %v4946 = vadd.f32 %v4857, %v4945
        %4947 = vmatmul.bf16.gmra.mxu0 %v4586
        %v4948 = vpop.f32.mrf.mxu0
        %v4949 = vadd.f32 %v4860, %v4948
        %v4950 = vpop.f32.mrf.mxu0
        %v4951 = vadd.f32 %v4862, %v4950
        %4952 = vmatmul.bf16.gmra.mxu0 %v4588
        %v4953 = vpop.f32.mrf.mxu0
        %v4954 = vadd.f32 %v4865, %v4953
        %v4955 = vpop.f32.mrf.mxu0
        %v4956 = vadd.f32 %v4867, %v4955
        %4957 = vmatmul.bf16.gmra.mxu0 %v4590
        %v4958 = vpop.f32.mrf.mxu0
        %v4959 = vadd.f32 %v4870, %v4958
        %v4960 = vpop.f32.mrf.mxu0
        %v4961 = vadd.f32 %v4872, %v4960
        %4962 = vmatmul.bf16.gmra.mxu0 %v4592
        %v4963 = vpop.f32.mrf.mxu0
        %v4964 = vadd.f32 %v4875, %v4963
        %v4965 = vpop.f32.mrf.mxu0
        %v4966 = vadd.f32 %v4877, %v4965
        %4967 = vmatmul.bf16.gmra.mxu0 %v4594
        %v4968 = vpop.f32.mrf.mxu0
        %v4969 = vadd.f32 %v4880, %v4968
        %v4970 = vpop.f32.mrf.mxu0
        %v4971 = vadd.f32 %v4882, %v4970
        %4972 = vdwg.mxu0
        %4973 = vmatpush.bf16.msra.mxu0 %v4746
        %4974 = vmatpush.bf16.msra.mxu0 %v4744
        %4975 = vmatpush.bf16.msra.mxu0 %v4742
        %4976 = vmatpush.bf16.msra.mxu0 %v4740
        %4977 = vmatpush.bf16.msra.mxu0 %v4738
        %4978 = vmatpush.bf16.msra.mxu0 %v4736
        %4979 = vmatpush.bf16.msra.mxu0 %v4734
        %4980 = vmatpush.bf16.msra.mxu0 %v4732
        %4981 = vmatmul.bf16.gmra.mxu0 %v4563
        %v4982 = vpop.f32.mrf.mxu0
        %v4983 = vadd.f32 %v4632, %v4982
        %v4984 = vpop.f32.mrf.mxu0
        %v4985 = vadd.f32 %v4632, %v4984
        %4986 = vmatmul.bf16.gmra.mxu0 %v4565
        %v4987 = vpop.f32.mrf.mxu0
        %v4988 = vadd.f32 %v4632, %v4987
        %v4989 = vpop.f32.mrf.mxu0
        %v4990 = vadd.f32 %v4632, %v4989
        %4991 = vmatmul.bf16.gmra.mxu0 %v4567
        %v4992 = vpop.f32.mrf.mxu0
        %v4993 = vadd.f32 %v4632, %v4992
        %v4994 = vpop.f32.mrf.mxu0
        %v4995 = vadd.f32 %v4632, %v4994
        %4996 = vmatmul.bf16.gmra.mxu0 %v4569
        %v4997 = vpop.f32.mrf.mxu0
        %v4998 = vadd.f32 %v4632, %v4997
        %v4999 = vpop.f32.mrf.mxu0
        %v5000 = vadd.f32 %v4632, %v4999
        %5001 = vmatmul.bf16.gmra.mxu0 %v4571
        %v5002 = vpop.f32.mrf.mxu0
        %v5003 = vadd.f32 %v4632, %v5002
        %v5004 = vpop.f32.mrf.mxu0
        %v5005 = vadd.f32 %v4632, %v5004
        %5006 = vmatmul.bf16.gmra.mxu0 %v4573
        %v5007 = vpop.f32.mrf.mxu0
        %v5008 = vadd.f32 %v4632, %v5007
        %v5009 = vpop.f32.mrf.mxu0
        %v5010 = vadd.f32 %v4632, %v5009
        %5011 = vmatmul.bf16.gmra.mxu0 %v4575
        %v5012 = vpop.f32.mrf.mxu0
        %v5013 = vadd.f32 %v4632, %v5012
        %v5014 = vpop.f32.mrf.mxu0
        %v5015 = vadd.f32 %v4632, %v5014
        %5016 = vmatmul.bf16.gmra.mxu0 %v4577
        %v5017 = vpop.f32.mrf.mxu0
        %v5018 = vadd.f32 %v4632, %v5017
        %v5019 = vpop.f32.mrf.mxu0
        %v5020 = vadd.f32 %v4632, %v5019
        %5021 = vmatmul.bf16.gmra.mxu0 %v4579
        %v5022 = vpop.f32.mrf.mxu0
        %v5023 = vadd.f32 %v4632, %v5022
        %v5024 = vpop.f32.mrf.mxu0
        %v5025 = vadd.f32 %v4632, %v5024
        %5026 = vmatmul.bf16.gmra.mxu0 %v4581
        %v5027 = vpop.f32.mrf.mxu0
        %v5028 = vadd.f32 %v4632, %v5027
        %v5029 = vpop.f32.mrf.mxu0
        %v5030 = vadd.f32 %v4632, %v5029
        %5031 = vmatmul.bf16.gmra.mxu0 %v4583
        %v5032 = vpop.f32.mrf.mxu0
        %v5033 = vadd.f32 %v4632, %v5032
        %v5034 = vpop.f32.mrf.mxu0
        %v5035 = vadd.f32 %v4632, %v5034
        %5036 = vmatmul.bf16.gmra.mxu0 %v4585
        %v5037 = vpop.f32.mrf.mxu0
        %v5038 = vadd.f32 %v4632, %v5037
        %v5039 = vpop.f32.mrf.mxu0
        %v5040 = vadd.f32 %v4632, %v5039
        %5041 = vmatmul.bf16.gmra.mxu0 %v4587
        %v5042 = vpop.f32.mrf.mxu0
        %v5043 = vadd.f32 %v4632, %v5042
        %v5044 = vpop.f32.mrf.mxu0
        %v5045 = vadd.f32 %v4632, %v5044
        %5046 = vmatmul.bf16.gmra.mxu0 %v4589
        %v5047 = vpop.f32.mrf.mxu0
        %v5048 = vadd.f32 %v4632, %v5047
        %v5049 = vpop.f32.mrf.mxu0
        %v5050 = vadd.f32 %v4632, %v5049
        %5051 = vmatmul.bf16.gmra.mxu0 %v4591
        %v5052 = vpop.f32.mrf.mxu0
        %v5053 = vadd.f32 %v4632, %v5052
        %v5054 = vpop.f32.mrf.mxu0
        %v5055 = vadd.f32 %v4632, %v5054
        %5056 = vmatmul.bf16.gmra.mxu0 %v4593
        %v5057 = vpop.f32.mrf.mxu0
        %v5058 = vadd.f32 %v4632, %v5057
        %v5059 = vpop.f32.mrf.mxu0
        %v5060 = vadd.f32 %v4632, %v5059
        %5061 = vdwg.mxu0
        %5062 = vmatpush.bf16.msra.mxu0 %v4762
        %5063 = vmatpush.bf16.msra.mxu0 %v4760
        %5064 = vmatpush.bf16.msra.mxu0 %v4758
        %5065 = vmatpush.bf16.msra.mxu0 %v4756
        %5066 = vmatpush.bf16.msra.mxu0 %v4754
        %5067 = vmatpush.bf16.msra.mxu0 %v4752
        %5068 = vmatpush.bf16.msra.mxu0 %v4750
        %5069 = vmatpush.bf16.msra.mxu0 %v4748
        %5070 = vmatmul.bf16.gmra.mxu0 %v4564
        %v5071 = vpop.f32.mrf.mxu0
        %v5072 = vadd.f32 %v4983, %v5071
        %v5073 = vpop.f32.mrf.mxu0
        %v5074 = vadd.f32 %v4985, %v5073
        %5075 = vmatmul.bf16.gmra.mxu0 %v4566
        %v5076 = vpop.f32.mrf.mxu0
        %v5077 = vadd.f32 %v4988, %v5076
        %v5078 = vpop.f32.mrf.mxu0
        %v5079 = vadd.f32 %v4990, %v5078
        %5080 = vmatmul.bf16.gmra.mxu0 %v4568
        %v5081 = vpop.f32.mrf.mxu0
        %v5082 = vadd.f32 %v4993, %v5081
        %v5083 = vpop.f32.mrf.mxu0
        %v5084 = vadd.f32 %v4995, %v5083
        %5085 = vmatmul.bf16.gmra.mxu0 %v4570
        %v5086 = vpop.f32.mrf.mxu0
        %v5087 = vadd.f32 %v4998, %v5086
        %v5088 = vpop.f32.mrf.mxu0
        %v5089 = vadd.f32 %v5000, %v5088
        %5090 = vmatmul.bf16.gmra.mxu0 %v4572
        %v5091 = vpop.f32.mrf.mxu0
        %v5092 = vadd.f32 %v5003, %v5091
        %v5093 = vpop.f32.mrf.mxu0
        %v5094 = vadd.f32 %v5005, %v5093
        %5095 = vmatmul.bf16.gmra.mxu0 %v4574
        %v5096 = vpop.f32.mrf.mxu0
        %v5097 = vadd.f32 %v5008, %v5096
        %v5098 = vpop.f32.mrf.mxu0
        %v5099 = vadd.f32 %v5010, %v5098
        %5100 = vmatmul.bf16.gmra.mxu0 %v4576
        %v5101 = vpop.f32.mrf.mxu0
        %v5102 = vadd.f32 %v5013, %v5101
        %v5103 = vpop.f32.mrf.mxu0
        %v5104 = vadd.f32 %v5015, %v5103
        %5105 = vmatmul.bf16.gmra.mxu0 %v4578
        %v5106 = vpop.f32.mrf.mxu0
        %v5107 = vadd.f32 %v5018, %v5106
        %v5108 = vpop.f32.mrf.mxu0
        %v5109 = vadd.f32 %v5020, %v5108
        %5110 = vmatmul.bf16.gmra.mxu0 %v4580
        %v5111 = vpop.f32.mrf.mxu0
        %v5112 = vadd.f32 %v5023, %v5111
        %v5113 = vpop.f32.mrf.mxu0
        %v5114 = vadd.f32 %v5025, %v5113
        %5115 = vmatmul.bf16.gmra.mxu0 %v4582
        %v5116 = vpop.f32.mrf.mxu0
        %v5117 = vadd.f32 %v5028, %v5116
        %v5118 = vpop.f32.mrf.mxu0
        %v5119 = vadd.f32 %v5030, %v5118
        %5120 = vmatmul.bf16.gmra.mxu0 %v4584
        %v5121 = vpop.f32.mrf.mxu0
        %v5122 = vadd.f32 %v5033, %v5121
        %v5123 = vpop.f32.mrf.mxu0
        %v5124 = vadd.f32 %v5035, %v5123
        %5125 = vmatmul.bf16.gmra.mxu0 %v4586
        %v5126 = vpop.f32.mrf.mxu0
        %v5127 = vadd.f32 %v5038, %v5126
        %v5128 = vpop.f32.mrf.mxu0
        %v5129 = vadd.f32 %v5040, %v5128
        %5130 = vmatmul.bf16.gmra.mxu0 %v4588
        %v5131 = vpop.f32.mrf.mxu0
        %v5132 = vadd.f32 %v5043, %v5131
        %v5133 = vpop.f32.mrf.mxu0
        %v5134 = vadd.f32 %v5045, %v5133
        %5135 = vmatmul.bf16.gmra.mxu0 %v4590
        %v5136 = vpop.f32.mrf.mxu0
        %v5137 = vadd.f32 %v5048, %v5136
        %v5138 = vpop.f32.mrf.mxu0
        %v5139 = vadd.f32 %v5050, %v5138
        %5140 = vmatmul.bf16.gmra.mxu0 %v4592
        %v5141 = vpop.f32.mrf.mxu0
        %v5142 = vadd.f32 %v5053, %v5141
        %v5143 = vpop.f32.mrf.mxu0
        %v5144 = vadd.f32 %v5055, %v5143
        %5145 = vmatmul.bf16.gmra.mxu0 %v4594
        %v5146 = vpop.f32.mrf.mxu0
        %v5147 = vadd.f32 %v5058, %v5146
        %v5148 = vpop.f32.mrf.mxu0
        %v5149 = vadd.f32 %v5060, %v5148
        %5150 = vdwg.mxu0
        %v5151 = vmax.f32 %v4894, 0.0
        %v5152 = vmax.f32 %v5072, 0.0
        %v5153 = vmax.f32 %v4896, 0.0
        %v5154 = vmax.f32 %v5074, 0.0
        %v5155 = vmax.f32 %v4899, 0.0
        %v5156 = vmax.f32 %v5077, 0.0
        %v5157 = vmax.f32 %v4901, 0.0
        %v5158 = vmax.f32 %v5079, 0.0
        %v5159 = vmax.f32 %v4904, 0.0
        %v5160 = vmax.f32 %v5082, 0.0
        %v5161 = vmax.f32 %v4906, 0.0
        %v5162 = vmax.f32 %v5084, 0.0
        %v5163 = vmax.f32 %v4909, 0.0
        %v5164 = vmax.f32 %v5087, 0.0
        %v5165 = vmax.f32 %v4911, 0.0
        %v5166 = vmax.f32 %v5089, 0.0
        %v5167 = vmax.f32 %v4914, 0.0
        %v5168 = vmax.f32 %v5092, 0.0
        %v5169 = vmax.f32 %v4916, 0.0
        %v5170 = vmax.f32 %v5094, 0.0
        %v5171 = vmax.f32 %v4919, 0.0
        %v5172 = vmax.f32 %v5097, 0.0
        %v5173 = vmax.f32 %v4921, 0.0
        %v5174 = vmax.f32 %v5099, 0.0
        %v5175 = vmax.f32 %v4924, 0.0
        %v5176 = vmax.f32 %v5102, 0.0
        %v5177 = vmax.f32 %v4926, 0.0
        %v5178 = vmax.f32 %v5104, 0.0
        %v5179 = vmax.f32 %v4929, 0.0
        %v5180 = vmax.f32 %v5107, 0.0
        %v5181 = vmax.f32 %v4931, 0.0
        %v5182 = vmax.f32 %v5109, 0.0
        %v5183 = vmax.f32 %v4934, 0.0
        %v5184 = vmax.f32 %v5112, 0.0
        %v5185 = vmax.f32 %v4936, 0.0
        %v5186 = vmax.f32 %v5114, 0.0
        %v5187 = vmax.f32 %v4939, 0.0
        %v5188 = vmax.f32 %v5117, 0.0
        %v5189 = vmax.f32 %v4941, 0.0
        %v5190 = vmax.f32 %v5119, 0.0
        %v5191 = vmax.f32 %v4944, 0.0
        %v5192 = vmax.f32 %v5122, 0.0
        %v5193 = vmax.f32 %v4946, 0.0
        %v5194 = vmax.f32 %v5124, 0.0
        %v5195 = vmax.f32 %v4949, 0.0
        %v5196 = vmax.f32 %v5127, 0.0
        %v5197 = vmax.f32 %v4951, 0.0
        %v5198 = vmax.f32 %v5129, 0.0
        %v5199 = vmax.f32 %v4954, 0.0
        %v5200 = vmax.f32 %v5132, 0.0
        %v5201 = vmax.f32 %v4956, 0.0
        %v5202 = vmax.f32 %v5134, 0.0
        %v5203 = vmax.f32 %v4959, 0.0
        %v5204 = vmax.f32 %v5137, 0.0
        %v5205 = vmax.f32 %v4961, 0.0
        %v5206 = vmax.f32 %v5139, 0.0
        %v5207 = vmax.f32 %v4964, 0.0
        %v5208 = vmax.f32 %v5142, 0.0
        %v5209 = vmax.f32 %v4966, 0.0
        %v5210 = vmax.f32 %v5144, 0.0
        %v5211 = vmax.f32 %v4969, 0.0
        %v5212 = vmax.f32 %v5147, 0.0
        %v5213 = vmax.f32 %v4971, 0.0
        %v5214 = vmax.f32 %v5149, 0.0
        %v5215 = vpack.c.bf16 %v5153, %v5151
        %v5216 = vpack.c.bf16 %v5154, %v5152
        %v5217 = vpack.c.bf16 %v5157, %v5155
        %v5218 = vpack.c.bf16 %v5158, %v5156
        %v5219 = vpack.c.bf16 %v5161, %v5159
        %v5220 = vpack.c.bf16 %v5162, %v5160
        %v5221 = vpack.c.bf16 %v5165, %v5163
        %v5222 = vpack.c.bf16 %v5166, %v5164
        %v5223 = vpack.c.bf16 %v5169, %v5167
        %v5224 = vpack.c.bf16 %v5170, %v5168
        %v5225 = vpack.c.bf16 %v5173, %v5171
        %v5226 = vpack.c.bf16 %v5174, %v5172
        %v5227 = vpack.c.bf16 %v5177, %v5175
        %v5228 = vpack.c.bf16 %v5178, %v5176
        %v5229 = vpack.c.bf16 %v5181, %v5179
        %v5230 = vpack.c.bf16 %v5182, %v5180
        %v5231 = vpack.c.bf16 %v5185, %v5183
        %v5232 = vpack.c.bf16 %v5186, %v5184
        %v5233 = vpack.c.bf16 %v5189, %v5187
        %v5234 = vpack.c.bf16 %v5190, %v5188
        %v5235 = vpack.c.bf16 %v5193, %v5191
        %v5236 = vpack.c.bf16 %v5194, %v5192
        %v5237 = vpack.c.bf16 %v5197, %v5195
        %v5238 = vpack.c.bf16 %v5198, %v5196
        %v5239 = vpack.c.bf16 %v5201, %v5199
        %v5240 = vpack.c.bf16 %v5202, %v5200
        %v5241 = vpack.c.bf16 %v5205, %v5203
        %v5242 = vpack.c.bf16 %v5206, %v5204
        %v5243 = vpack.c.bf16 %v5209, %v5207
        %v5244 = vpack.c.bf16 %v5210, %v5208
        %v5245 = vpack.c.bf16 %v5213, %v5211
        %v5246 = vpack.c.bf16 %v5214, %v5212
        %s5247 = scalar_lea.vmem [#allocation6], 1536
        %v5248 = vld [vmem:[%s5247] sm:$0xff]
        %v5249 = vld [vmem:[%s5247 + $0x8] sm:$0xff]
        %v5250 = vld [vmem:[%s5247 + $0x10] sm:$0xff]
        %v5251 = vld [vmem:[%s5247 + $0x18] sm:$0xff]
        %v5252 = vld [vmem:[%s5247 + $0x20] sm:$0xff]
        %v5253 = vld [vmem:[%s5247 + $0x28] sm:$0xff]
        %v5254 = vld [vmem:[%s5247 + $0x30] sm:$0xff]
        %v5255 = vld [vmem:[%s5247 + $0x38] sm:$0xff]
        %v5256 = vld [vmem:[%s5247 + $0x40] sm:$0xff]
        %v5257 = vld [vmem:[%s5247 + $0x48] sm:$0xff]
        %v5258 = vld [vmem:[%s5247 + $0x50] sm:$0xff]
        %v5259 = vld [vmem:[%s5247 + $0x58] sm:$0xff]
        %v5260 = vld [vmem:[%s5247 + $0x60] sm:$0xff]
        %v5261 = vld [vmem:[%s5247 + $0x68] sm:$0xff]
        %v5262 = vld [vmem:[%s5247 + $0x70] sm:$0xff]
        %v5263 = vld [vmem:[%s5247 + $0x78] sm:$0xff]
        %v5264 = vld [vmem:[%s5247 + $0x80] sm:$0xff]
        %v5265 = vld [vmem:[%s5247 + $0x88] sm:$0xff]
        %v5266 = vld [vmem:[%s5247 + $0x90] sm:$0xff]
        %v5267 = vld [vmem:[%s5247 + $0x98] sm:$0xff]
        %v5268 = vld [vmem:[%s5247 + $0xa0] sm:$0xff]
        %v5269 = vld [vmem:[%s5247 + $0xa8] sm:$0xff]
        %v5270 = vld [vmem:[%s5247 + $0xb0] sm:$0xff]
        %v5271 = vld [vmem:[%s5247 + $0xb8] sm:$0xff]
        %v5272 = vld [vmem:[%s5247 + $0xc0] sm:$0xff]
        %v5273 = vld [vmem:[%s5247 + $0xc8] sm:$0xff]
        %v5274 = vld [vmem:[%s5247 + $0xd0] sm:$0xff]
        %v5275 = vld [vmem:[%s5247 + $0xd8] sm:$0xff]
        %v5276 = vld [vmem:[%s5247 + $0xe0] sm:$0xff]
        %v5277 = vld [vmem:[%s5247 + $0xe8] sm:$0xff]
        %v5278 = vld [vmem:[%s5247 + $0xf0] sm:$0xff]
        %v5279 = vld [vmem:[%s5247 + $0xf8] sm:$0xff]
        %s5280 = scalar_lea.vmem [#allocation4], 7
        %v5281 = vld [vmem:[%s5280] ss:$8 sm:$0x3]
        %v5283 = vperm.slane %v5281, 0
        %v5284 = vperm.slane %v5281, 1
        %v5319 = vunpack.c.l.b16 %v5248
        %v5320 = vunpack.c.h.b16 %v5248
        %v5321 = vunpack.c.l.b16 %v5249
        %v5322 = vunpack.c.h.b16 %v5249
        %v5323 = vunpack.c.l.b16 %v5250
        %v5324 = vunpack.c.h.b16 %v5250
        %v5325 = vunpack.c.l.b16 %v5251
        %v5326 = vunpack.c.h.b16 %v5251
        %v5327 = vunpack.c.l.b16 %v5252
        %v5328 = vunpack.c.h.b16 %v5252
        %v5329 = vunpack.c.l.b16 %v5253
        %v5330 = vunpack.c.h.b16 %v5253
        %v5331 = vunpack.c.l.b16 %v5254
        %v5332 = vunpack.c.h.b16 %v5254
        %v5333 = vunpack.c.l.b16 %v5255
        %v5334 = vunpack.c.h.b16 %v5255
        %v5335 = vunpack.c.l.b16 %v5256
        %v5336 = vunpack.c.h.b16 %v5256
        %v5337 = vunpack.c.l.b16 %v5257
        %v5338 = vunpack.c.h.b16 %v5257
        %v5339 = vunpack.c.l.b16 %v5258
        %v5340 = vunpack.c.h.b16 %v5258
        %v5341 = vunpack.c.l.b16 %v5259
        %v5342 = vunpack.c.h.b16 %v5259
        %v5343 = vunpack.c.l.b16 %v5260
        %v5344 = vunpack.c.h.b16 %v5260
        %v5345 = vunpack.c.l.b16 %v5261
        %v5346 = vunpack.c.h.b16 %v5261
        %v5347 = vunpack.c.l.b16 %v5262
        %v5348 = vunpack.c.h.b16 %v5262
        %v5349 = vunpack.c.l.b16 %v5263
        %v5350 = vunpack.c.h.b16 %v5263
        %v5351 = vunpack.c.l.b16 %v5264
        %v5352 = vunpack.c.h.b16 %v5264
        %v5353 = vunpack.c.l.b16 %v5265
        %v5354 = vunpack.c.h.b16 %v5265
        %v5355 = vunpack.c.l.b16 %v5266
        %v5356 = vunpack.c.h.b16 %v5266
        %v5357 = vunpack.c.l.b16 %v5267
        %v5358 = vunpack.c.h.b16 %v5267
        %v5359 = vunpack.c.l.b16 %v5268
        %v5360 = vunpack.c.h.b16 %v5268
        %v5361 = vunpack.c.l.b16 %v5269
        %v5362 = vunpack.c.h.b16 %v5269
        %v5363 = vunpack.c.l.b16 %v5270
        %v5364 = vunpack.c.h.b16 %v5270
        %v5365 = vunpack.c.l.b16 %v5271
        %v5366 = vunpack.c.h.b16 %v5271
        %v5367 = vunpack.c.l.b16 %v5272
        %v5368 = vunpack.c.h.b16 %v5272
        %v5369 = vunpack.c.l.b16 %v5273
        %v5370 = vunpack.c.h.b16 %v5273
        %v5371 = vunpack.c.l.b16 %v5274
        %v5372 = vunpack.c.h.b16 %v5274
        %v5373 = vunpack.c.l.b16 %v5275
        %v5374 = vunpack.c.h.b16 %v5275
        %v5375 = vunpack.c.l.b16 %v5276
        %v5376 = vunpack.c.h.b16 %v5276
        %v5377 = vunpack.c.l.b16 %v5277
        %v5378 = vunpack.c.h.b16 %v5277
        %v5379 = vunpack.c.l.b16 %v5278
        %v5380 = vunpack.c.h.b16 %v5278
        %v5381 = vunpack.c.l.b16 %v5279
        %v5382 = vunpack.c.h.b16 %v5279
        %v5383 = vpack.c.b16 %v5321, %v5319
        %v5384 = vpack.c.b16 %v5322, %v5320
        %v5385 = vpack.c.b16 %v5325, %v5323
        %v5386 = vpack.c.b16 %v5326, %v5324
        %v5387 = vpack.c.b16 %v5329, %v5327
        %v5388 = vpack.c.b16 %v5330, %v5328
        %v5389 = vpack.c.b16 %v5333, %v5331
        %v5390 = vpack.c.b16 %v5334, %v5332
        %v5391 = vpack.c.b16 %v5337, %v5335
        %v5392 = vpack.c.b16 %v5338, %v5336
        %v5393 = vpack.c.b16 %v5341, %v5339
        %v5394 = vpack.c.b16 %v5342, %v5340
        %v5395 = vpack.c.b16 %v5345, %v5343
        %v5396 = vpack.c.b16 %v5346, %v5344
        %v5397 = vpack.c.b16 %v5349, %v5347
        %v5398 = vpack.c.b16 %v5350, %v5348
        %v5399 = vpack.c.b16 %v5353, %v5351
        %v5400 = vpack.c.b16 %v5354, %v5352
        %v5401 = vpack.c.b16 %v5357, %v5355
        %v5402 = vpack.c.b16 %v5358, %v5356
        %v5403 = vpack.c.b16 %v5361, %v5359
        %v5404 = vpack.c.b16 %v5362, %v5360
        %v5405 = vpack.c.b16 %v5365, %v5363
        %v5406 = vpack.c.b16 %v5366, %v5364
        %v5407 = vpack.c.b16 %v5369, %v5367
        %v5408 = vpack.c.b16 %v5370, %v5368
        %v5409 = vpack.c.b16 %v5373, %v5371
        %v5410 = vpack.c.b16 %v5374, %v5372
        %v5411 = vpack.c.b16 %v5377, %v5375
        %v5412 = vpack.c.b16 %v5378, %v5376
        %v5413 = vpack.c.b16 %v5381, %v5379
        %v5414 = vpack.c.b16 %v5382, %v5380
        %5447 = vmatpush.bf16.msra.mxu0 %v5397
        %5448 = vmatpush.bf16.msra.mxu0 %v5395
        %5449 = vmatpush.bf16.msra.mxu0 %v5393
        %5450 = vmatpush.bf16.msra.mxu0 %v5391
        %5451 = vmatpush.bf16.msra.mxu0 %v5389
        %5452 = vmatpush.bf16.msra.mxu0 %v5387
        %5453 = vmatpush.bf16.msra.mxu0 %v5385
        %5454 = vmatpush.bf16.msra.mxu0 %v5383
        %5455 = vmatmul.bf16.gmra.mxu0 %v5215
        %v5456 = vpop.f32.mrf.mxu0
        %v5457 = vadd.f32 %v5283, %v5456
        %v5458 = vpop.f32.mrf.mxu0
        %v5459 = vadd.f32 %v5283, %v5458
        %5460 = vmatmul.bf16.gmra.mxu0 %v5217
        %v5461 = vpop.f32.mrf.mxu0
        %v5462 = vadd.f32 %v5283, %v5461
        %v5463 = vpop.f32.mrf.mxu0
        %v5464 = vadd.f32 %v5283, %v5463
        %5465 = vmatmul.bf16.gmra.mxu0 %v5219
        %v5466 = vpop.f32.mrf.mxu0
        %v5467 = vadd.f32 %v5283, %v5466
        %v5468 = vpop.f32.mrf.mxu0
        %v5469 = vadd.f32 %v5283, %v5468
        %5470 = vmatmul.bf16.gmra.mxu0 %v5221
        %v5471 = vpop.f32.mrf.mxu0
        %v5472 = vadd.f32 %v5283, %v5471
        %v5473 = vpop.f32.mrf.mxu0
        %v5474 = vadd.f32 %v5283, %v5473
        %5475 = vmatmul.bf16.gmra.mxu0 %v5223
        %v5476 = vpop.f32.mrf.mxu0
        %v5477 = vadd.f32 %v5283, %v5476
        %v5478 = vpop.f32.mrf.mxu0
        %v5479 = vadd.f32 %v5283, %v5478
        %5480 = vmatmul.bf16.gmra.mxu0 %v5225
        %v5481 = vpop.f32.mrf.mxu0
        %v5482 = vadd.f32 %v5283, %v5481
        %v5483 = vpop.f32.mrf.mxu0
        %v5484 = vadd.f32 %v5283, %v5483
        %5485 = vmatmul.bf16.gmra.mxu0 %v5227
        %v5486 = vpop.f32.mrf.mxu0
        %v5487 = vadd.f32 %v5283, %v5486
        %v5488 = vpop.f32.mrf.mxu0
        %v5489 = vadd.f32 %v5283, %v5488
        %5490 = vmatmul.bf16.gmra.mxu0 %v5229
        %v5491 = vpop.f32.mrf.mxu0
        %v5492 = vadd.f32 %v5283, %v5491
        %v5493 = vpop.f32.mrf.mxu0
        %v5494 = vadd.f32 %v5283, %v5493
        %5495 = vmatmul.bf16.gmra.mxu0 %v5231
        %v5496 = vpop.f32.mrf.mxu0
        %v5497 = vadd.f32 %v5283, %v5496
        %v5498 = vpop.f32.mrf.mxu0
        %v5499 = vadd.f32 %v5283, %v5498
        %5500 = vmatmul.bf16.gmra.mxu0 %v5233
        %v5501 = vpop.f32.mrf.mxu0
        %v5502 = vadd.f32 %v5283, %v5501
        %v5503 = vpop.f32.mrf.mxu0
        %v5504 = vadd.f32 %v5283, %v5503
        %5505 = vmatmul.bf16.gmra.mxu0 %v5235
        %v5506 = vpop.f32.mrf.mxu0
        %v5507 = vadd.f32 %v5283, %v5506
        %v5508 = vpop.f32.mrf.mxu0
        %v5509 = vadd.f32 %v5283, %v5508
        %5510 = vmatmul.bf16.gmra.mxu0 %v5237
        %v5511 = vpop.f32.mrf.mxu0
        %v5512 = vadd.f32 %v5283, %v5511
        %v5513 = vpop.f32.mrf.mxu0
        %v5514 = vadd.f32 %v5283, %v5513
        %5515 = vmatmul.bf16.gmra.mxu0 %v5239
        %v5516 = vpop.f32.mrf.mxu0
        %v5517 = vadd.f32 %v5283, %v5516
        %v5518 = vpop.f32.mrf.mxu0
        %v5519 = vadd.f32 %v5283, %v5518
        %5520 = vmatmul.bf16.gmra.mxu0 %v5241
        %v5521 = vpop.f32.mrf.mxu0
        %v5522 = vadd.f32 %v5283, %v5521
        %v5523 = vpop.f32.mrf.mxu0
        %v5524 = vadd.f32 %v5283, %v5523
        %5525 = vmatmul.bf16.gmra.mxu0 %v5243
        %v5526 = vpop.f32.mrf.mxu0
        %v5527 = vadd.f32 %v5283, %v5526
        %v5528 = vpop.f32.mrf.mxu0
        %v5529 = vadd.f32 %v5283, %v5528
        %5530 = vmatmul.bf16.gmra.mxu0 %v5245
        %v5531 = vpop.f32.mrf.mxu0
        %v5532 = vadd.f32 %v5283, %v5531
        %v5533 = vpop.f32.mrf.mxu0
        %v5534 = vadd.f32 %v5283, %v5533
        %5535 = vdwg.mxu0
        %5536 = vmatpush.bf16.msra.mxu0 %v5413
        %5537 = vmatpush.bf16.msra.mxu0 %v5411
        %5538 = vmatpush.bf16.msra.mxu0 %v5409
        %5539 = vmatpush.bf16.msra.mxu0 %v5407
        %5540 = vmatpush.bf16.msra.mxu0 %v5405
        %5541 = vmatpush.bf16.msra.mxu0 %v5403
        %5542 = vmatpush.bf16.msra.mxu0 %v5401
        %5543 = vmatpush.bf16.msra.mxu0 %v5399
        %5544 = vmatmul.bf16.gmra.mxu0 %v5216
        %v5545 = vpop.f32.mrf.mxu0
        %v5546 = vadd.f32 %v5457, %v5545
        %v5547 = vpop.f32.mrf.mxu0
        %v5548 = vadd.f32 %v5459, %v5547
        %5549 = vmatmul.bf16.gmra.mxu0 %v5218
        %v5550 = vpop.f32.mrf.mxu0
        %v5551 = vadd.f32 %v5462, %v5550
        %v5552 = vpop.f32.mrf.mxu0
        %v5553 = vadd.f32 %v5464, %v5552
        %5554 = vmatmul.bf16.gmra.mxu0 %v5220
        %v5555 = vpop.f32.mrf.mxu0
        %v5556 = vadd.f32 %v5467, %v5555
        %v5557 = vpop.f32.mrf.mxu0
        %v5558 = vadd.f32 %v5469, %v5557
        %5559 = vmatmul.bf16.gmra.mxu0 %v5222
        %v5560 = vpop.f32.mrf.mxu0
        %v5561 = vadd.f32 %v5472, %v5560
        %v5562 = vpop.f32.mrf.mxu0
        %v5563 = vadd.f32 %v5474, %v5562
        %5564 = vmatmul.bf16.gmra.mxu0 %v5224
        %v5565 = vpop.f32.mrf.mxu0
        %v5566 = vadd.f32 %v5477, %v5565
        %v5567 = vpop.f32.mrf.mxu0
        %v5568 = vadd.f32 %v5479, %v5567
        %5569 = vmatmul.bf16.gmra.mxu0 %v5226
        %v5570 = vpop.f32.mrf.mxu0
        %v5571 = vadd.f32 %v5482, %v5570
        %v5572 = vpop.f32.mrf.mxu0
        %v5573 = vadd.f32 %v5484, %v5572
        %5574 = vmatmul.bf16.gmra.mxu0 %v5228
        %v5575 = vpop.f32.mrf.mxu0
        %v5576 = vadd.f32 %v5487, %v5575
        %v5577 = vpop.f32.mrf.mxu0
        %v5578 = vadd.f32 %v5489, %v5577
        %5579 = vmatmul.bf16.gmra.mxu0 %v5230
        %v5580 = vpop.f32.mrf.mxu0
        %v5581 = vadd.f32 %v5492, %v5580
        %v5582 = vpop.f32.mrf.mxu0
        %v5583 = vadd.f32 %v5494, %v5582
        %5584 = vmatmul.bf16.gmra.mxu0 %v5232
        %v5585 = vpop.f32.mrf.mxu0
        %v5586 = vadd.f32 %v5497, %v5585
        %v5587 = vpop.f32.mrf.mxu0
        %v5588 = vadd.f32 %v5499, %v5587
        %5589 = vmatmul.bf16.gmra.mxu0 %v5234
        %v5590 = vpop.f32.mrf.mxu0
        %v5591 = vadd.f32 %v5502, %v5590
        %v5592 = vpop.f32.mrf.mxu0
        %v5593 = vadd.f32 %v5504, %v5592
        %5594 = vmatmul.bf16.gmra.mxu0 %v5236
        %v5595 = vpop.f32.mrf.mxu0
        %v5596 = vadd.f32 %v5507, %v5595
        %v5597 = vpop.f32.mrf.mxu0
        %v5598 = vadd.f32 %v5509, %v5597
        %5599 = vmatmul.bf16.gmra.mxu0 %v5238
        %v5600 = vpop.f32.mrf.mxu0
        %v5601 = vadd.f32 %v5512, %v5600
        %v5602 = vpop.f32.mrf.mxu0
        %v5603 = vadd.f32 %v5514, %v5602
        %5604 = vmatmul.bf16.gmra.mxu0 %v5240
        %v5605 = vpop.f32.mrf.mxu0
        %v5606 = vadd.f32 %v5517, %v5605
        %v5607 = vpop.f32.mrf.mxu0
        %v5608 = vadd.f32 %v5519, %v5607
        %5609 = vmatmul.bf16.gmra.mxu0 %v5242
        %v5610 = vpop.f32.mrf.mxu0
        %v5611 = vadd.f32 %v5522, %v5610
        %v5612 = vpop.f32.mrf.mxu0
        %v5613 = vadd.f32 %v5524, %v5612
        %5614 = vmatmul.bf16.gmra.mxu0 %v5244
        %v5615 = vpop.f32.mrf.mxu0
        %v5616 = vadd.f32 %v5527, %v5615
        %v5617 = vpop.f32.mrf.mxu0
        %v5618 = vadd.f32 %v5529, %v5617
        %5619 = vmatmul.bf16.gmra.mxu0 %v5246
        %v5620 = vpop.f32.mrf.mxu0
        %v5621 = vadd.f32 %v5532, %v5620
        %v5622 = vpop.f32.mrf.mxu0
        %v5623 = vadd.f32 %v5534, %v5622
        %5624 = vdwg.mxu0
        %5625 = vmatpush.bf16.msra.mxu0 %v5398
        %5626 = vmatpush.bf16.msra.mxu0 %v5396
        %5627 = vmatpush.bf16.msra.mxu0 %v5394
        %5628 = vmatpush.bf16.msra.mxu0 %v5392
        %5629 = vmatpush.bf16.msra.mxu0 %v5390
        %5630 = vmatpush.bf16.msra.mxu0 %v5388
        %5631 = vmatpush.bf16.msra.mxu0 %v5386
        %5632 = vmatpush.bf16.msra.mxu0 %v5384
        %5633 = vmatmul.bf16.gmra.mxu0 %v5215
        %v5634 = vpop.f32.mrf.mxu0
        %v5635 = vadd.f32 %v5284, %v5634
        %v5636 = vpop.f32.mrf.mxu0
        %v5637 = vadd.f32 %v5284, %v5636
        %5638 = vmatmul.bf16.gmra.mxu0 %v5217
        %v5639 = vpop.f32.mrf.mxu0
        %v5640 = vadd.f32 %v5284, %v5639
        %v5641 = vpop.f32.mrf.mxu0
        %v5642 = vadd.f32 %v5284, %v5641
        %5643 = vmatmul.bf16.gmra.mxu0 %v5219
        %v5644 = vpop.f32.mrf.mxu0
        %v5645 = vadd.f32 %v5284, %v5644
        %v5646 = vpop.f32.mrf.mxu0
        %v5647 = vadd.f32 %v5284, %v5646
        %5648 = vmatmul.bf16.gmra.mxu0 %v5221
        %v5649 = vpop.f32.mrf.mxu0
        %v5650 = vadd.f32 %v5284, %v5649
        %v5651 = vpop.f32.mrf.mxu0
        %v5652 = vadd.f32 %v5284, %v5651
        %5653 = vmatmul.bf16.gmra.mxu0 %v5223
        %v5654 = vpop.f32.mrf.mxu0
        %v5655 = vadd.f32 %v5284, %v5654
        %v5656 = vpop.f32.mrf.mxu0
        %v5657 = vadd.f32 %v5284, %v5656
        %5658 = vmatmul.bf16.gmra.mxu0 %v5225
        %v5659 = vpop.f32.mrf.mxu0
        %v5660 = vadd.f32 %v5284, %v5659
        %v5661 = vpop.f32.mrf.mxu0
        %v5662 = vadd.f32 %v5284, %v5661
        %5663 = vmatmul.bf16.gmra.mxu0 %v5227
        %v5664 = vpop.f32.mrf.mxu0
        %v5665 = vadd.f32 %v5284, %v5664
        %v5666 = vpop.f32.mrf.mxu0
        %v5667 = vadd.f32 %v5284, %v5666
        %5668 = vmatmul.bf16.gmra.mxu0 %v5229
        %v5669 = vpop.f32.mrf.mxu0
        %v5670 = vadd.f32 %v5284, %v5669
        %v5671 = vpop.f32.mrf.mxu0
        %v5672 = vadd.f32 %v5284, %v5671
        %5673 = vmatmul.bf16.gmra.mxu0 %v5231
        %v5674 = vpop.f32.mrf.mxu0
        %v5675 = vadd.f32 %v5284, %v5674
        %v5676 = vpop.f32.mrf.mxu0
        %v5677 = vadd.f32 %v5284, %v5676
        %5678 = vmatmul.bf16.gmra.mxu0 %v5233
        %v5679 = vpop.f32.mrf.mxu0
        %v5680 = vadd.f32 %v5284, %v5679
        %v5681 = vpop.f32.mrf.mxu0
        %v5682 = vadd.f32 %v5284, %v5681
        %5683 = vmatmul.bf16.gmra.mxu0 %v5235
        %v5684 = vpop.f32.mrf.mxu0
        %v5685 = vadd.f32 %v5284, %v5684
        %v5686 = vpop.f32.mrf.mxu0
        %v5687 = vadd.f32 %v5284, %v5686
        %5688 = vmatmul.bf16.gmra.mxu0 %v5237
        %v5689 = vpop.f32.mrf.mxu0
        %v5690 = vadd.f32 %v5284, %v5689
        %v5691 = vpop.f32.mrf.mxu0
        %v5692 = vadd.f32 %v5284, %v5691
        %5693 = vmatmul.bf16.gmra.mxu0 %v5239
        %v5694 = vpop.f32.mrf.mxu0
        %v5695 = vadd.f32 %v5284, %v5694
        %v5696 = vpop.f32.mrf.mxu0
        %v5697 = vadd.f32 %v5284, %v5696
        %5698 = vmatmul.bf16.gmra.mxu0 %v5241
        %v5699 = vpop.f32.mrf.mxu0
        %v5700 = vadd.f32 %v5284, %v5699
        %v5701 = vpop.f32.mrf.mxu0
        %v5702 = vadd.f32 %v5284, %v5701
        %5703 = vmatmul.bf16.gmra.mxu0 %v5243
        %v5704 = vpop.f32.mrf.mxu0
        %v5705 = vadd.f32 %v5284, %v5704
        %v5706 = vpop.f32.mrf.mxu0
        %v5707 = vadd.f32 %v5284, %v5706
        %5708 = vmatmul.bf16.gmra.mxu0 %v5245
        %v5709 = vpop.f32.mrf.mxu0
        %v5710 = vadd.f32 %v5284, %v5709
        %v5711 = vpop.f32.mrf.mxu0
        %v5712 = vadd.f32 %v5284, %v5711
        %5713 = vdwg.mxu0
        %5714 = vmatpush.bf16.msra.mxu0 %v5414
        %5715 = vmatpush.bf16.msra.mxu0 %v5412
        %5716 = vmatpush.bf16.msra.mxu0 %v5410
        %5717 = vmatpush.bf16.msra.mxu0 %v5408
        %5718 = vmatpush.bf16.msra.mxu0 %v5406
        %5719 = vmatpush.bf16.msra.mxu0 %v5404
        %5720 = vmatpush.bf16.msra.mxu0 %v5402
        %5721 = vmatpush.bf16.msra.mxu0 %v5400
        %5722 = vmatmul.bf16.gmra.mxu0 %v5216
        %v5723 = vpop.f32.mrf.mxu0
        %v5724 = vadd.f32 %v5635, %v5723
        %v5725 = vpop.f32.mrf.mxu0
        %v5726 = vadd.f32 %v5637, %v5725
        %5727 = vmatmul.bf16.gmra.mxu0 %v5218
        %v5728 = vpop.f32.mrf.mxu0
        %v5729 = vadd.f32 %v5640, %v5728
        %v5730 = vpop.f32.mrf.mxu0
        %v5731 = vadd.f32 %v5642, %v5730
        %5732 = vmatmul.bf16.gmra.mxu0 %v5220
        %v5733 = vpop.f32.mrf.mxu0
        %v5734 = vadd.f32 %v5645, %v5733
        %v5735 = vpop.f32.mrf.mxu0
        %v5736 = vadd.f32 %v5647, %v5735
        %5737 = vmatmul.bf16.gmra.mxu0 %v5222
        %v5738 = vpop.f32.mrf.mxu0
        %v5739 = vadd.f32 %v5650, %v5738
        %v5740 = vpop.f32.mrf.mxu0
        %v5741 = vadd.f32 %v5652, %v5740
        %5742 = vmatmul.bf16.gmra.mxu0 %v5224
        %v5743 = vpop.f32.mrf.mxu0
        %v5744 = vadd.f32 %v5655, %v5743
        %v5745 = vpop.f32.mrf.mxu0
        %v5746 = vadd.f32 %v5657, %v5745
        %5747 = vmatmul.bf16.gmra.mxu0 %v5226
        %v5748 = vpop.f32.mrf.mxu0
        %v5749 = vadd.f32 %v5660, %v5748
        %v5750 = vpop.f32.mrf.mxu0
        %v5751 = vadd.f32 %v5662, %v5750
        %5752 = vmatmul.bf16.gmra.mxu0 %v5228
        %v5753 = vpop.f32.mrf.mxu0
        %v5754 = vadd.f32 %v5665, %v5753
        %v5755 = vpop.f32.mrf.mxu0
        %v5756 = vadd.f32 %v5667, %v5755
        %5757 = vmatmul.bf16.gmra.mxu0 %v5230
        %v5758 = vpop.f32.mrf.mxu0
        %v5759 = vadd.f32 %v5670, %v5758
        %v5760 = vpop.f32.mrf.mxu0
        %v5761 = vadd.f32 %v5672, %v5760
        %5762 = vmatmul.bf16.gmra.mxu0 %v5232
        %v5763 = vpop.f32.mrf.mxu0
        %v5764 = vadd.f32 %v5675, %v5763
        %v5765 = vpop.f32.mrf.mxu0
        %v5766 = vadd.f32 %v5677, %v5765
        %5767 = vmatmul.bf16.gmra.mxu0 %v5234
        %v5768 = vpop.f32.mrf.mxu0
        %v5769 = vadd.f32 %v5680, %v5768
        %v5770 = vpop.f32.mrf.mxu0
        %v5771 = vadd.f32 %v5682, %v5770
        %5772 = vmatmul.bf16.gmra.mxu0 %v5236
        %v5773 = vpop.f32.mrf.mxu0
        %v5774 = vadd.f32 %v5685, %v5773
        %v5775 = vpop.f32.mrf.mxu0
        %v5776 = vadd.f32 %v5687, %v5775
        %5777 = vmatmul.bf16.gmra.mxu0 %v5238
        %v5778 = vpop.f32.mrf.mxu0
        %v5779 = vadd.f32 %v5690, %v5778
        %v5780 = vpop.f32.mrf.mxu0
        %v5781 = vadd.f32 %v5692, %v5780
        %5782 = vmatmul.bf16.gmra.mxu0 %v5240
        %v5783 = vpop.f32.mrf.mxu0
        %v5784 = vadd.f32 %v5695, %v5783
        %v5785 = vpop.f32.mrf.mxu0
        %v5786 = vadd.f32 %v5697, %v5785
        %5787 = vmatmul.bf16.gmra.mxu0 %v5242
        %v5788 = vpop.f32.mrf.mxu0
        %v5789 = vadd.f32 %v5700, %v5788
        %v5790 = vpop.f32.mrf.mxu0
        %v5791 = vadd.f32 %v5702, %v5790
        %5792 = vmatmul.bf16.gmra.mxu0 %v5244
        %v5793 = vpop.f32.mrf.mxu0
        %v5794 = vadd.f32 %v5705, %v5793
        %v5795 = vpop.f32.mrf.mxu0
        %v5796 = vadd.f32 %v5707, %v5795
        %5797 = vmatmul.bf16.gmra.mxu0 %v5246
        %v5798 = vpop.f32.mrf.mxu0
        %v5799 = vadd.f32 %v5710, %v5798
        %v5800 = vpop.f32.mrf.mxu0
        %v5801 = vadd.f32 %v5712, %v5800
        %5802 = vdwg.mxu0
        %v5803 = vmax.f32 %v5546, 0.0
        %v5804 = vmax.f32 %v5724, 0.0
        %v5805 = vmax.f32 %v5548, 0.0
        %v5806 = vmax.f32 %v5726, 0.0
        %v5807 = vmax.f32 %v5551, 0.0
        %v5808 = vmax.f32 %v5729, 0.0
        %v5809 = vmax.f32 %v5553, 0.0
        %v5810 = vmax.f32 %v5731, 0.0
        %v5811 = vmax.f32 %v5556, 0.0
        %v5812 = vmax.f32 %v5734, 0.0
        %v5813 = vmax.f32 %v5558, 0.0
        %v5814 = vmax.f32 %v5736, 0.0
        %v5815 = vmax.f32 %v5561, 0.0
        %v5816 = vmax.f32 %v5739, 0.0
        %v5817 = vmax.f32 %v5563, 0.0
        %v5818 = vmax.f32 %v5741, 0.0
        %v5819 = vmax.f32 %v5566, 0.0
        %v5820 = vmax.f32 %v5744, 0.0
        %v5821 = vmax.f32 %v5568, 0.0
        %v5822 = vmax.f32 %v5746, 0.0
        %v5823 = vmax.f32 %v5571, 0.0
        %v5824 = vmax.f32 %v5749, 0.0
        %v5825 = vmax.f32 %v5573, 0.0
        %v5826 = vmax.f32 %v5751, 0.0
        %v5827 = vmax.f32 %v5576, 0.0
        %v5828 = vmax.f32 %v5754, 0.0
        %v5829 = vmax.f32 %v5578, 0.0
        %v5830 = vmax.f32 %v5756, 0.0
        %v5831 = vmax.f32 %v5581, 0.0
        %v5832 = vmax.f32 %v5759, 0.0
        %v5833 = vmax.f32 %v5583, 0.0
        %v5834 = vmax.f32 %v5761, 0.0
        %v5835 = vmax.f32 %v5586, 0.0
        %v5836 = vmax.f32 %v5764, 0.0
        %v5837 = vmax.f32 %v5588, 0.0
        %v5838 = vmax.f32 %v5766, 0.0
        %v5839 = vmax.f32 %v5591, 0.0
        %v5840 = vmax.f32 %v5769, 0.0
        %v5841 = vmax.f32 %v5593, 0.0
        %v5842 = vmax.f32 %v5771, 0.0
        %v5843 = vmax.f32 %v5596, 0.0
        %v5844 = vmax.f32 %v5774, 0.0
        %v5845 = vmax.f32 %v5598, 0.0
        %v5846 = vmax.f32 %v5776, 0.0
        %v5847 = vmax.f32 %v5601, 0.0
        %v5848 = vmax.f32 %v5779, 0.0
        %v5849 = vmax.f32 %v5603, 0.0
        %v5850 = vmax.f32 %v5781, 0.0
        %v5851 = vmax.f32 %v5606, 0.0
        %v5852 = vmax.f32 %v5784, 0.0
        %v5853 = vmax.f32 %v5608, 0.0
        %v5854 = vmax.f32 %v5786, 0.0
        %v5855 = vmax.f32 %v5611, 0.0
        %v5856 = vmax.f32 %v5789, 0.0
        %v5857 = vmax.f32 %v5613, 0.0
        %v5858 = vmax.f32 %v5791, 0.0
        %v5859 = vmax.f32 %v5616, 0.0
        %v5860 = vmax.f32 %v5794, 0.0
        %v5861 = vmax.f32 %v5618, 0.0
        %v5862 = vmax.f32 %v5796, 0.0
        %v5863 = vmax.f32 %v5621, 0.0
        %v5864 = vmax.f32 %v5799, 0.0
        %v5865 = vmax.f32 %v5623, 0.0
        %v5866 = vmax.f32 %v5801, 0.0
        %v5867 = vpack.c.bf16 %v5805, %v5803
        %v5868 = vpack.c.bf16 %v5806, %v5804
        %v5869 = vpack.c.bf16 %v5809, %v5807
        %v5870 = vpack.c.bf16 %v5810, %v5808
        %v5871 = vpack.c.bf16 %v5813, %v5811
        %v5872 = vpack.c.bf16 %v5814, %v5812
        %v5873 = vpack.c.bf16 %v5817, %v5815
        %v5874 = vpack.c.bf16 %v5818, %v5816
        %v5875 = vpack.c.bf16 %v5821, %v5819
        %v5876 = vpack.c.bf16 %v5822, %v5820
        %v5877 = vpack.c.bf16 %v5825, %v5823
        %v5878 = vpack.c.bf16 %v5826, %v5824
        %v5879 = vpack.c.bf16 %v5829, %v5827
        %v5880 = vpack.c.bf16 %v5830, %v5828
        %v5881 = vpack.c.bf16 %v5833, %v5831
        %v5882 = vpack.c.bf16 %v5834, %v5832
        %v5883 = vpack.c.bf16 %v5837, %v5835
        %v5884 = vpack.c.bf16 %v5838, %v5836
        %v5885 = vpack.c.bf16 %v5841, %v5839
        %v5886 = vpack.c.bf16 %v5842, %v5840
        %v5887 = vpack.c.bf16 %v5845, %v5843
        %v5888 = vpack.c.bf16 %v5846, %v5844
        %v5889 = vpack.c.bf16 %v5849, %v5847
        %v5890 = vpack.c.bf16 %v5850, %v5848
        %v5891 = vpack.c.bf16 %v5853, %v5851
        %v5892 = vpack.c.bf16 %v5854, %v5852
        %v5893 = vpack.c.bf16 %v5857, %v5855
        %v5894 = vpack.c.bf16 %v5858, %v5856
        %v5895 = vpack.c.bf16 %v5861, %v5859
        %v5896 = vpack.c.bf16 %v5862, %v5860
        %v5897 = vpack.c.bf16 %v5865, %v5863
        %v5898 = vpack.c.bf16 %v5866, %v5864
        %s5899 = scalar_lea.vmem [#allocation6], 1792
        %v5900 = vld [vmem:[%s5899] sm:$0xff]
        %v5901 = vld [vmem:[%s5899 + $0x8] sm:$0xff]
        %v5902 = vld [vmem:[%s5899 + $0x10] sm:$0xff]
        %v5903 = vld [vmem:[%s5899 + $0x18] sm:$0xff]
        %v5904 = vld [vmem:[%s5899 + $0x20] sm:$0xff]
        %v5905 = vld [vmem:[%s5899 + $0x28] sm:$0xff]
        %v5906 = vld [vmem:[%s5899 + $0x30] sm:$0xff]
        %v5907 = vld [vmem:[%s5899 + $0x38] sm:$0xff]
        %v5908 = vld [vmem:[%s5899 + $0x40] sm:$0xff]
        %v5909 = vld [vmem:[%s5899 + $0x48] sm:$0xff]
        %v5910 = vld [vmem:[%s5899 + $0x50] sm:$0xff]
        %v5911 = vld [vmem:[%s5899 + $0x58] sm:$0xff]
        %v5912 = vld [vmem:[%s5899 + $0x60] sm:$0xff]
        %v5913 = vld [vmem:[%s5899 + $0x68] sm:$0xff]
        %v5914 = vld [vmem:[%s5899 + $0x70] sm:$0xff]
        %v5915 = vld [vmem:[%s5899 + $0x78] sm:$0xff]
        %v5916 = vld [vmem:[%s5899 + $0x80] sm:$0xff]
        %v5917 = vld [vmem:[%s5899 + $0x88] sm:$0xff]
        %v5918 = vld [vmem:[%s5899 + $0x90] sm:$0xff]
        %v5919 = vld [vmem:[%s5899 + $0x98] sm:$0xff]
        %v5920 = vld [vmem:[%s5899 + $0xa0] sm:$0xff]
        %v5921 = vld [vmem:[%s5899 + $0xa8] sm:$0xff]
        %v5922 = vld [vmem:[%s5899 + $0xb0] sm:$0xff]
        %v5923 = vld [vmem:[%s5899 + $0xb8] sm:$0xff]
        %v5924 = vld [vmem:[%s5899 + $0xc0] sm:$0xff]
        %v5925 = vld [vmem:[%s5899 + $0xc8] sm:$0xff]
        %v5926 = vld [vmem:[%s5899 + $0xd0] sm:$0xff]
        %v5927 = vld [vmem:[%s5899 + $0xd8] sm:$0xff]
        %v5928 = vld [vmem:[%s5899 + $0xe0] sm:$0xff]
        %v5929 = vld [vmem:[%s5899 + $0xe8] sm:$0xff]
        %v5930 = vld [vmem:[%s5899 + $0xf0] sm:$0xff]
        %v5931 = vld [vmem:[%s5899 + $0xf8] sm:$0xff]
        %s5932 = scalar_lea.vmem [#allocation4], 16
        %v5933 = vld [vmem:[%s5932] ss:$8 sm:$0x3]
        %v5935 = vperm.slane %v5933, 0
        %v5936 = vperm.slane %v5933, 1
        %v5971 = vunpack.c.l.b16 %v5900
        %v5972 = vunpack.c.h.b16 %v5900
        %v5973 = vunpack.c.l.b16 %v5901
        %v5974 = vunpack.c.h.b16 %v5901
        %v5975 = vunpack.c.l.b16 %v5902
        %v5976 = vunpack.c.h.b16 %v5902
        %v5977 = vunpack.c.l.b16 %v5903
        %v5978 = vunpack.c.h.b16 %v5903
        %v5979 = vunpack.c.l.b16 %v5904
        %v5980 = vunpack.c.h.b16 %v5904
        %v5981 = vunpack.c.l.b16 %v5905
        %v5982 = vunpack.c.h.b16 %v5905
        %v5983 = vunpack.c.l.b16 %v5906
        %v5984 = vunpack.c.h.b16 %v5906
        %v5985 = vunpack.c.l.b16 %v5907
        %v5986 = vunpack.c.h.b16 %v5907
        %v5987 = vunpack.c.l.b16 %v5908
        %v5988 = vunpack.c.h.b16 %v5908
        %v5989 = vunpack.c.l.b16 %v5909
        %v5990 = vunpack.c.h.b16 %v5909
        %v5991 = vunpack.c.l.b16 %v5910
        %v5992 = vunpack.c.h.b16 %v5910
        %v5993 = vunpack.c.l.b16 %v5911
        %v5994 = vunpack.c.h.b16 %v5911
        %v5995 = vunpack.c.l.b16 %v5912
        %v5996 = vunpack.c.h.b16 %v5912
        %v5997 = vunpack.c.l.b16 %v5913
        %v5998 = vunpack.c.h.b16 %v5913
        %v5999 = vunpack.c.l.b16 %v5914
        %v6000 = vunpack.c.h.b16 %v5914
        %v6001 = vunpack.c.l.b16 %v5915
        %v6002 = vunpack.c.h.b16 %v5915
        %v6003 = vunpack.c.l.b16 %v5916
        %v6004 = vunpack.c.h.b16 %v5916
        %v6005 = vunpack.c.l.b16 %v5917
        %v6006 = vunpack.c.h.b16 %v5917
        %v6007 = vunpack.c.l.b16 %v5918
        %v6008 = vunpack.c.h.b16 %v5918
        %v6009 = vunpack.c.l.b16 %v5919
        %v6010 = vunpack.c.h.b16 %v5919
        %v6011 = vunpack.c.l.b16 %v5920
        %v6012 = vunpack.c.h.b16 %v5920
        %v6013 = vunpack.c.l.b16 %v5921
        %v6014 = vunpack.c.h.b16 %v5921
        %v6015 = vunpack.c.l.b16 %v5922
        %v6016 = vunpack.c.h.b16 %v5922
        %v6017 = vunpack.c.l.b16 %v5923
        %v6018 = vunpack.c.h.b16 %v5923
        %v6019 = vunpack.c.l.b16 %v5924
        %v6020 = vunpack.c.h.b16 %v5924
        %v6021 = vunpack.c.l.b16 %v5925
        %v6022 = vunpack.c.h.b16 %v5925
        %v6023 = vunpack.c.l.b16 %v5926
        %v6024 = vunpack.c.h.b16 %v5926
        %v6025 = vunpack.c.l.b16 %v5927
        %v6026 = vunpack.c.h.b16 %v5927
        %v6027 = vunpack.c.l.b16 %v5928
        %v6028 = vunpack.c.h.b16 %v5928
        %v6029 = vunpack.c.l.b16 %v5929
        %v6030 = vunpack.c.h.b16 %v5929
        %v6031 = vunpack.c.l.b16 %v5930
        %v6032 = vunpack.c.h.b16 %v5930
        %v6033 = vunpack.c.l.b16 %v5931
        %v6034 = vunpack.c.h.b16 %v5931
        %v6035 = vpack.c.b16 %v5973, %v5971
        %v6036 = vpack.c.b16 %v5974, %v5972
        %v6037 = vpack.c.b16 %v5977, %v5975
        %v6038 = vpack.c.b16 %v5978, %v5976
        %v6039 = vpack.c.b16 %v5981, %v5979
        %v6040 = vpack.c.b16 %v5982, %v5980
        %v6041 = vpack.c.b16 %v5985, %v5983
        %v6042 = vpack.c.b16 %v5986, %v5984
        %v6043 = vpack.c.b16 %v5989, %v5987
        %v6044 = vpack.c.b16 %v5990, %v5988
        %v6045 = vpack.c.b16 %v5993, %v5991
        %v6046 = vpack.c.b16 %v5994, %v5992
        %v6047 = vpack.c.b16 %v5997, %v5995
        %v6048 = vpack.c.b16 %v5998, %v5996
        %v6049 = vpack.c.b16 %v6001, %v5999
        %v6050 = vpack.c.b16 %v6002, %v6000
        %v6051 = vpack.c.b16 %v6005, %v6003
        %v6052 = vpack.c.b16 %v6006, %v6004
        %v6053 = vpack.c.b16 %v6009, %v6007
        %v6054 = vpack.c.b16 %v6010, %v6008
        %v6055 = vpack.c.b16 %v6013, %v6011
        %v6056 = vpack.c.b16 %v6014, %v6012
        %v6057 = vpack.c.b16 %v6017, %v6015
        %v6058 = vpack.c.b16 %v6018, %v6016
        %v6059 = vpack.c.b16 %v6021, %v6019
        %v6060 = vpack.c.b16 %v6022, %v6020
        %v6061 = vpack.c.b16 %v6025, %v6023
        %v6062 = vpack.c.b16 %v6026, %v6024
        %v6063 = vpack.c.b16 %v6029, %v6027
        %v6064 = vpack.c.b16 %v6030, %v6028
        %v6065 = vpack.c.b16 %v6033, %v6031
        %v6066 = vpack.c.b16 %v6034, %v6032
        %6099 = vmatpush.bf16.msra.mxu0 %v6049
        %6100 = vmatpush.bf16.msra.mxu0 %v6047
        %6101 = vmatpush.bf16.msra.mxu0 %v6045
        %6102 = vmatpush.bf16.msra.mxu0 %v6043
        %6103 = vmatpush.bf16.msra.mxu0 %v6041
        %6104 = vmatpush.bf16.msra.mxu0 %v6039
        %6105 = vmatpush.bf16.msra.mxu0 %v6037
        %6106 = vmatpush.bf16.msra.mxu0 %v6035
        %6107 = vmatmul.bf16.gmra.mxu0 %v5867
        %v6108 = vpop.f32.mrf.mxu0
        %v6109 = vadd.f32 %v5935, %v6108
        %v6110 = vpop.f32.mrf.mxu0
        %v6111 = vadd.f32 %v5935, %v6110
        %6112 = vmatmul.bf16.gmra.mxu0 %v5869
        %v6113 = vpop.f32.mrf.mxu0
        %v6114 = vadd.f32 %v5935, %v6113
        %v6115 = vpop.f32.mrf.mxu0
        %v6116 = vadd.f32 %v5935, %v6115
        %6117 = vmatmul.bf16.gmra.mxu0 %v5871
        %v6118 = vpop.f32.mrf.mxu0
        %v6119 = vadd.f32 %v5935, %v6118
        %v6120 = vpop.f32.mrf.mxu0
        %v6121 = vadd.f32 %v5935, %v6120
        %6122 = vmatmul.bf16.gmra.mxu0 %v5873
        %v6123 = vpop.f32.mrf.mxu0
        %v6124 = vadd.f32 %v5935, %v6123
        %v6125 = vpop.f32.mrf.mxu0
        %v6126 = vadd.f32 %v5935, %v6125
        %6127 = vmatmul.bf16.gmra.mxu0 %v5875
        %v6128 = vpop.f32.mrf.mxu0
        %v6129 = vadd.f32 %v5935, %v6128
        %v6130 = vpop.f32.mrf.mxu0
        %v6131 = vadd.f32 %v5935, %v6130
        %6132 = vmatmul.bf16.gmra.mxu0 %v5877
        %v6133 = vpop.f32.mrf.mxu0
        %v6134 = vadd.f32 %v5935, %v6133
        %v6135 = vpop.f32.mrf.mxu0
        %v6136 = vadd.f32 %v5935, %v6135
        %6137 = vmatmul.bf16.gmra.mxu0 %v5879
        %v6138 = vpop.f32.mrf.mxu0
        %v6139 = vadd.f32 %v5935, %v6138
        %v6140 = vpop.f32.mrf.mxu0
        %v6141 = vadd.f32 %v5935, %v6140
        %6142 = vmatmul.bf16.gmra.mxu0 %v5881
        %v6143 = vpop.f32.mrf.mxu0
        %v6144 = vadd.f32 %v5935, %v6143
        %v6145 = vpop.f32.mrf.mxu0
        %v6146 = vadd.f32 %v5935, %v6145
        %6147 = vmatmul.bf16.gmra.mxu0 %v5883
        %v6148 = vpop.f32.mrf.mxu0
        %v6149 = vadd.f32 %v5935, %v6148
        %v6150 = vpop.f32.mrf.mxu0
        %v6151 = vadd.f32 %v5935, %v6150
        %6152 = vmatmul.bf16.gmra.mxu0 %v5885
        %v6153 = vpop.f32.mrf.mxu0
        %v6154 = vadd.f32 %v5935, %v6153
        %v6155 = vpop.f32.mrf.mxu0
        %v6156 = vadd.f32 %v5935, %v6155
        %6157 = vmatmul.bf16.gmra.mxu0 %v5887
        %v6158 = vpop.f32.mrf.mxu0
        %v6159 = vadd.f32 %v5935, %v6158
        %v6160 = vpop.f32.mrf.mxu0
        %v6161 = vadd.f32 %v5935, %v6160
        %6162 = vmatmul.bf16.gmra.mxu0 %v5889
        %v6163 = vpop.f32.mrf.mxu0
        %v6164 = vadd.f32 %v5935, %v6163
        %v6165 = vpop.f32.mrf.mxu0
        %v6166 = vadd.f32 %v5935, %v6165
        %6167 = vmatmul.bf16.gmra.mxu0 %v5891
        %v6168 = vpop.f32.mrf.mxu0
        %v6169 = vadd.f32 %v5935, %v6168
        %v6170 = vpop.f32.mrf.mxu0
        %v6171 = vadd.f32 %v5935, %v6170
        %6172 = vmatmul.bf16.gmra.mxu0 %v5893
        %v6173 = vpop.f32.mrf.mxu0
        %v6174 = vadd.f32 %v5935, %v6173
        %v6175 = vpop.f32.mrf.mxu0
        %v6176 = vadd.f32 %v5935, %v6175
        %6177 = vmatmul.bf16.gmra.mxu0 %v5895
        %v6178 = vpop.f32.mrf.mxu0
        %v6179 = vadd.f32 %v5935, %v6178
        %v6180 = vpop.f32.mrf.mxu0
        %v6181 = vadd.f32 %v5935, %v6180
        %6182 = vmatmul.bf16.gmra.mxu0 %v5897
        %v6183 = vpop.f32.mrf.mxu0
        %v6184 = vadd.f32 %v5935, %v6183
        %v6185 = vpop.f32.mrf.mxu0
        %v6186 = vadd.f32 %v5935, %v6185
        %6187 = vdwg.mxu0
        %6188 = vmatpush.bf16.msra.mxu0 %v6065
        %6189 = vmatpush.bf16.msra.mxu0 %v6063
        %6190 = vmatpush.bf16.msra.mxu0 %v6061
        %6191 = vmatpush.bf16.msra.mxu0 %v6059
        %6192 = vmatpush.bf16.msra.mxu0 %v6057
        %6193 = vmatpush.bf16.msra.mxu0 %v6055
        %6194 = vmatpush.bf16.msra.mxu0 %v6053
        %6195 = vmatpush.bf16.msra.mxu0 %v6051
        %6196 = vmatmul.bf16.gmra.mxu0 %v5868
        %v6197 = vpop.f32.mrf.mxu0
        %v6198 = vadd.f32 %v6109, %v6197
        %v6199 = vpop.f32.mrf.mxu0
        %v6200 = vadd.f32 %v6111, %v6199
        %6201 = vmatmul.bf16.gmra.mxu0 %v5870
        %v6202 = vpop.f32.mrf.mxu0
        %v6203 = vadd.f32 %v6114, %v6202
        %v6204 = vpop.f32.mrf.mxu0
        %v6205 = vadd.f32 %v6116, %v6204
        %6206 = vmatmul.bf16.gmra.mxu0 %v5872
        %v6207 = vpop.f32.mrf.mxu0
        %v6208 = vadd.f32 %v6119, %v6207
        %v6209 = vpop.f32.mrf.mxu0
        %v6210 = vadd.f32 %v6121, %v6209
        %6211 = vmatmul.bf16.gmra.mxu0 %v5874
        %v6212 = vpop.f32.mrf.mxu0
        %v6213 = vadd.f32 %v6124, %v6212
        %v6214 = vpop.f32.mrf.mxu0
        %v6215 = vadd.f32 %v6126, %v6214
        %6216 = vmatmul.bf16.gmra.mxu0 %v5876
        %v6217 = vpop.f32.mrf.mxu0
        %v6218 = vadd.f32 %v6129, %v6217
        %v6219 = vpop.f32.mrf.mxu0
        %v6220 = vadd.f32 %v6131, %v6219
        %6221 = vmatmul.bf16.gmra.mxu0 %v5878
        %v6222 = vpop.f32.mrf.mxu0
        %v6223 = vadd.f32 %v6134, %v6222
        %v6224 = vpop.f32.mrf.mxu0
        %v6225 = vadd.f32 %v6136, %v6224
        %6226 = vmatmul.bf16.gmra.mxu0 %v5880
        %v6227 = vpop.f32.mrf.mxu0
        %v6228 = vadd.f32 %v6139, %v6227
        %v6229 = vpop.f32.mrf.mxu0
        %v6230 = vadd.f32 %v6141, %v6229
        %6231 = vmatmul.bf16.gmra.mxu0 %v5882
        %v6232 = vpop.f32.mrf.mxu0
        %v6233 = vadd.f32 %v6144, %v6232
        %v6234 = vpop.f32.mrf.mxu0
        %v6235 = vadd.f32 %v6146, %v6234
        %6236 = vmatmul.bf16.gmra.mxu0 %v5884
        %v6237 = vpop.f32.mrf.mxu0
        %v6238 = vadd.f32 %v6149, %v6237
        %v6239 = vpop.f32.mrf.mxu0
        %v6240 = vadd.f32 %v6151, %v6239
        %6241 = vmatmul.bf16.gmra.mxu0 %v5886
        %v6242 = vpop.f32.mrf.mxu0
        %v6243 = vadd.f32 %v6154, %v6242
        %v6244 = vpop.f32.mrf.mxu0
        %v6245 = vadd.f32 %v6156, %v6244
        %6246 = vmatmul.bf16.gmra.mxu0 %v5888
        %v6247 = vpop.f32.mrf.mxu0
        %v6248 = vadd.f32 %v6159, %v6247
        %v6249 = vpop.f32.mrf.mxu0
        %v6250 = vadd.f32 %v6161, %v6249
        %6251 = vmatmul.bf16.gmra.mxu0 %v5890
        %v6252 = vpop.f32.mrf.mxu0
        %v6253 = vadd.f32 %v6164, %v6252
        %v6254 = vpop.f32.mrf.mxu0
        %v6255 = vadd.f32 %v6166, %v6254
        %6256 = vmatmul.bf16.gmra.mxu0 %v5892
        %v6257 = vpop.f32.mrf.mxu0
        %v6258 = vadd.f32 %v6169, %v6257
        %v6259 = vpop.f32.mrf.mxu0
        %v6260 = vadd.f32 %v6171, %v6259
        %6261 = vmatmul.bf16.gmra.mxu0 %v5894
        %v6262 = vpop.f32.mrf.mxu0
        %v6263 = vadd.f32 %v6174, %v6262
        %v6264 = vpop.f32.mrf.mxu0
        %v6265 = vadd.f32 %v6176, %v6264
        %6266 = vmatmul.bf16.gmra.mxu0 %v5896
        %v6267 = vpop.f32.mrf.mxu0
        %v6268 = vadd.f32 %v6179, %v6267
        %v6269 = vpop.f32.mrf.mxu0
        %v6270 = vadd.f32 %v6181, %v6269
        %6271 = vmatmul.bf16.gmra.mxu0 %v5898
        %v6272 = vpop.f32.mrf.mxu0
        %v6273 = vadd.f32 %v6184, %v6272
        %v6274 = vpop.f32.mrf.mxu0
        %v6275 = vadd.f32 %v6186, %v6274
        %6276 = vdwg.mxu0
        %6277 = vmatpush.bf16.msra.mxu0 %v6050
        %6278 = vmatpush.bf16.msra.mxu0 %v6048
        %6279 = vmatpush.bf16.msra.mxu0 %v6046
        %6280 = vmatpush.bf16.msra.mxu0 %v6044
        %6281 = vmatpush.bf16.msra.mxu0 %v6042
        %6282 = vmatpush.bf16.msra.mxu0 %v6040
        %6283 = vmatpush.bf16.msra.mxu0 %v6038
        %6284 = vmatpush.bf16.msra.mxu0 %v6036
        %6285 = vmatmul.bf16.gmra.mxu0 %v5867
        %v6286 = vpop.f32.mrf.mxu0
        %v6287 = vadd.f32 %v5936, %v6286
        %v6288 = vpop.f32.mrf.mxu0
        %v6289 = vadd.f32 %v5936, %v6288
        %6290 = vmatmul.bf16.gmra.mxu0 %v5869
        %v6291 = vpop.f32.mrf.mxu0
        %v6292 = vadd.f32 %v5936, %v6291
        %v6293 = vpop.f32.mrf.mxu0
        %v6294 = vadd.f32 %v5936, %v6293
        %6295 = vmatmul.bf16.gmra.mxu0 %v5871
        %v6296 = vpop.f32.mrf.mxu0
        %v6297 = vadd.f32 %v5936, %v6296
        %v6298 = vpop.f32.mrf.mxu0
        %v6299 = vadd.f32 %v5936, %v6298
        %6300 = vmatmul.bf16.gmra.mxu0 %v5873
        %v6301 = vpop.f32.mrf.mxu0
        %v6302 = vadd.f32 %v5936, %v6301
        %v6303 = vpop.f32.mrf.mxu0
        %v6304 = vadd.f32 %v5936, %v6303
        %6305 = vmatmul.bf16.gmra.mxu0 %v5875
        %v6306 = vpop.f32.mrf.mxu0
        %v6307 = vadd.f32 %v5936, %v6306
        %v6308 = vpop.f32.mrf.mxu0
        %v6309 = vadd.f32 %v5936, %v6308
        %6310 = vmatmul.bf16.gmra.mxu0 %v5877
        %v6311 = vpop.f32.mrf.mxu0
        %v6312 = vadd.f32 %v5936, %v6311
        %v6313 = vpop.f32.mrf.mxu0
        %v6314 = vadd.f32 %v5936, %v6313
        %6315 = vmatmul.bf16.gmra.mxu0 %v5879
        %v6316 = vpop.f32.mrf.mxu0
        %v6317 = vadd.f32 %v5936, %v6316
        %v6318 = vpop.f32.mrf.mxu0
        %v6319 = vadd.f32 %v5936, %v6318
        %6320 = vmatmul.bf16.gmra.mxu0 %v5881
        %v6321 = vpop.f32.mrf.mxu0
        %v6322 = vadd.f32 %v5936, %v6321
        %v6323 = vpop.f32.mrf.mxu0
        %v6324 = vadd.f32 %v5936, %v6323
        %6325 = vmatmul.bf16.gmra.mxu0 %v5883
        %v6326 = vpop.f32.mrf.mxu0
        %v6327 = vadd.f32 %v5936, %v6326
        %v6328 = vpop.f32.mrf.mxu0
        %v6329 = vadd.f32 %v5936, %v6328
        %6330 = vmatmul.bf16.gmra.mxu0 %v5885
        %v6331 = vpop.f32.mrf.mxu0
        %v6332 = vadd.f32 %v5936, %v6331
        %v6333 = vpop.f32.mrf.mxu0
        %v6334 = vadd.f32 %v5936, %v6333
        %6335 = vmatmul.bf16.gmra.mxu0 %v5887
        %v6336 = vpop.f32.mrf.mxu0
        %v6337 = vadd.f32 %v5936, %v6336
        %v6338 = vpop.f32.mrf.mxu0
        %v6339 = vadd.f32 %v5936, %v6338
        %6340 = vmatmul.bf16.gmra.mxu0 %v5889
        %v6341 = vpop.f32.mrf.mxu0
        %v6342 = vadd.f32 %v5936, %v6341
        %v6343 = vpop.f32.mrf.mxu0
        %v6344 = vadd.f32 %v5936, %v6343
        %6345 = vmatmul.bf16.gmra.mxu0 %v5891
        %v6346 = vpop.f32.mrf.mxu0
        %v6347 = vadd.f32 %v5936, %v6346
        %v6348 = vpop.f32.mrf.mxu0
        %v6349 = vadd.f32 %v5936, %v6348
        %6350 = vmatmul.bf16.gmra.mxu0 %v5893
        %v6351 = vpop.f32.mrf.mxu0
        %v6352 = vadd.f32 %v5936, %v6351
        %v6353 = vpop.f32.mrf.mxu0
        %v6354 = vadd.f32 %v5936, %v6353
        %6355 = vmatmul.bf16.gmra.mxu0 %v5895
        %v6356 = vpop.f32.mrf.mxu0
        %v6357 = vadd.f32 %v5936, %v6356
        %v6358 = vpop.f32.mrf.mxu0
        %v6359 = vadd.f32 %v5936, %v6358
        %6360 = vmatmul.bf16.gmra.mxu0 %v5897
        %v6361 = vpop.f32.mrf.mxu0
        %v6362 = vadd.f32 %v5936, %v6361
        %v6363 = vpop.f32.mrf.mxu0
        %v6364 = vadd.f32 %v5936, %v6363
        %6365 = vdwg.mxu0
        %6366 = vmatpush.bf16.msra.mxu0 %v6066
        %6367 = vmatpush.bf16.msra.mxu0 %v6064
        %6368 = vmatpush.bf16.msra.mxu0 %v6062
        %6369 = vmatpush.bf16.msra.mxu0 %v6060
        %6370 = vmatpush.bf16.msra.mxu0 %v6058
        %6371 = vmatpush.bf16.msra.mxu0 %v6056
        %6372 = vmatpush.bf16.msra.mxu0 %v6054
        %6373 = vmatpush.bf16.msra.mxu0 %v6052
        %6374 = vmatmul.bf16.gmra.mxu0 %v5868
        %v6375 = vpop.f32.mrf.mxu0
        %v6376 = vadd.f32 %v6287, %v6375
        %v6377 = vpop.f32.mrf.mxu0
        %v6378 = vadd.f32 %v6289, %v6377
        %6379 = vmatmul.bf16.gmra.mxu0 %v5870
        %v6380 = vpop.f32.mrf.mxu0
        %v6381 = vadd.f32 %v6292, %v6380
        %v6382 = vpop.f32.mrf.mxu0
        %v6383 = vadd.f32 %v6294, %v6382
        %6384 = vmatmul.bf16.gmra.mxu0 %v5872
        %v6385 = vpop.f32.mrf.mxu0
        %v6386 = vadd.f32 %v6297, %v6385
        %v6387 = vpop.f32.mrf.mxu0
        %v6388 = vadd.f32 %v6299, %v6387
        %6389 = vmatmul.bf16.gmra.mxu0 %v5874
        %v6390 = vpop.f32.mrf.mxu0
        %v6391 = vadd.f32 %v6302, %v6390
        %v6392 = vpop.f32.mrf.mxu0
        %v6393 = vadd.f32 %v6304, %v6392
        %6394 = vmatmul.bf16.gmra.mxu0 %v5876
        %v6395 = vpop.f32.mrf.mxu0
        %v6396 = vadd.f32 %v6307, %v6395
        %v6397 = vpop.f32.mrf.mxu0
        %v6398 = vadd.f32 %v6309, %v6397
        %6399 = vmatmul.bf16.gmra.mxu0 %v5878
        %v6400 = vpop.f32.mrf.mxu0
        %v6401 = vadd.f32 %v6312, %v6400
        %v6402 = vpop.f32.mrf.mxu0
        %v6403 = vadd.f32 %v6314, %v6402
        %6404 = vmatmul.bf16.gmra.mxu0 %v5880
        %v6405 = vpop.f32.mrf.mxu0
        %v6406 = vadd.f32 %v6317, %v6405
        %v6407 = vpop.f32.mrf.mxu0
        %v6408 = vadd.f32 %v6319, %v6407
        %6409 = vmatmul.bf16.gmra.mxu0 %v5882
        %v6410 = vpop.f32.mrf.mxu0
        %v6411 = vadd.f32 %v6322, %v6410
        %v6412 = vpop.f32.mrf.mxu0
        %v6413 = vadd.f32 %v6324, %v6412
        %6414 = vmatmul.bf16.gmra.mxu0 %v5884
        %v6415 = vpop.f32.mrf.mxu0
        %v6416 = vadd.f32 %v6327, %v6415
        %v6417 = vpop.f32.mrf.mxu0
        %v6418 = vadd.f32 %v6329, %v6417
        %6419 = vmatmul.bf16.gmra.mxu0 %v5886
        %v6420 = vpop.f32.mrf.mxu0
        %v6421 = vadd.f32 %v6332, %v6420
        %v6422 = vpop.f32.mrf.mxu0
        %v6423 = vadd.f32 %v6334, %v6422
        %6424 = vmatmul.bf16.gmra.mxu0 %v5888
        %v6425 = vpop.f32.mrf.mxu0
        %v6426 = vadd.f32 %v6337, %v6425
        %v6427 = vpop.f32.mrf.mxu0
        %v6428 = vadd.f32 %v6339, %v6427
        %6429 = vmatmul.bf16.gmra.mxu0 %v5890
        %v6430 = vpop.f32.mrf.mxu0
        %v6431 = vadd.f32 %v6342, %v6430
        %v6432 = vpop.f32.mrf.mxu0
        %v6433 = vadd.f32 %v6344, %v6432
        %6434 = vmatmul.bf16.gmra.mxu0 %v5892
        %v6435 = vpop.f32.mrf.mxu0
        %v6436 = vadd.f32 %v6347, %v6435
        %v6437 = vpop.f32.mrf.mxu0
        %v6438 = vadd.f32 %v6349, %v6437
        %6439 = vmatmul.bf16.gmra.mxu0 %v5894
        %v6440 = vpop.f32.mrf.mxu0
        %v6441 = vadd.f32 %v6352, %v6440
        %v6442 = vpop.f32.mrf.mxu0
        %v6443 = vadd.f32 %v6354, %v6442
        %6444 = vmatmul.bf16.gmra.mxu0 %v5896
        %v6445 = vpop.f32.mrf.mxu0
        %v6446 = vadd.f32 %v6357, %v6445
        %v6447 = vpop.f32.mrf.mxu0
        %v6448 = vadd.f32 %v6359, %v6447
        %6449 = vmatmul.bf16.gmra.mxu0 %v5898
        %v6450 = vpop.f32.mrf.mxu0
        %v6451 = vadd.f32 %v6362, %v6450
        %v6452 = vpop.f32.mrf.mxu0
        %v6453 = vadd.f32 %v6364, %v6452
        %6454 = vdwg.mxu0
        %v6455 = vmax.f32 %v6198, 0.0
        %v6456 = vmax.f32 %v6376, 0.0
        %v6457 = vmax.f32 %v6200, 0.0
        %v6458 = vmax.f32 %v6378, 0.0
        %v6459 = vmax.f32 %v6203, 0.0
        %v6460 = vmax.f32 %v6381, 0.0
        %v6461 = vmax.f32 %v6205, 0.0
        %v6462 = vmax.f32 %v6383, 0.0
        %v6463 = vmax.f32 %v6208, 0.0
        %v6464 = vmax.f32 %v6386, 0.0
        %v6465 = vmax.f32 %v6210, 0.0
        %v6466 = vmax.f32 %v6388, 0.0
        %v6467 = vmax.f32 %v6213, 0.0
        %v6468 = vmax.f32 %v6391, 0.0
        %v6469 = vmax.f32 %v6215, 0.0
        %v6470 = vmax.f32 %v6393, 0.0
        %v6471 = vmax.f32 %v6218, 0.0
        %v6472 = vmax.f32 %v6396, 0.0
        %v6473 = vmax.f32 %v6220, 0.0
        %v6474 = vmax.f32 %v6398, 0.0
        %v6475 = vmax.f32 %v6223, 0.0
        %v6476 = vmax.f32 %v6401, 0.0
        %v6477 = vmax.f32 %v6225, 0.0
        %v6478 = vmax.f32 %v6403, 0.0
        %v6479 = vmax.f32 %v6228, 0.0
        %v6480 = vmax.f32 %v6406, 0.0
        %v6481 = vmax.f32 %v6230, 0.0
        %v6482 = vmax.f32 %v6408, 0.0
        %v6483 = vmax.f32 %v6233, 0.0
        %v6484 = vmax.f32 %v6411, 0.0
        %v6485 = vmax.f32 %v6235, 0.0
        %v6486 = vmax.f32 %v6413, 0.0
        %v6487 = vmax.f32 %v6238, 0.0
        %v6488 = vmax.f32 %v6416, 0.0
        %v6489 = vmax.f32 %v6240, 0.0
        %v6490 = vmax.f32 %v6418, 0.0
        %v6491 = vmax.f32 %v6243, 0.0
        %v6492 = vmax.f32 %v6421, 0.0
        %v6493 = vmax.f32 %v6245, 0.0
        %v6494 = vmax.f32 %v6423, 0.0
        %v6495 = vmax.f32 %v6248, 0.0
        %v6496 = vmax.f32 %v6426, 0.0
        %v6497 = vmax.f32 %v6250, 0.0
        %v6498 = vmax.f32 %v6428, 0.0
        %v6499 = vmax.f32 %v6253, 0.0
        %v6500 = vmax.f32 %v6431, 0.0
        %v6501 = vmax.f32 %v6255, 0.0
        %v6502 = vmax.f32 %v6433, 0.0
        %v6503 = vmax.f32 %v6258, 0.0
        %v6504 = vmax.f32 %v6436, 0.0
        %v6505 = vmax.f32 %v6260, 0.0
        %v6506 = vmax.f32 %v6438, 0.0
        %v6507 = vmax.f32 %v6263, 0.0
        %v6508 = vmax.f32 %v6441, 0.0
        %v6509 = vmax.f32 %v6265, 0.0
        %v6510 = vmax.f32 %v6443, 0.0
        %v6511 = vmax.f32 %v6268, 0.0
        %v6512 = vmax.f32 %v6446, 0.0
        %v6513 = vmax.f32 %v6270, 0.0
        %v6514 = vmax.f32 %v6448, 0.0
        %v6515 = vmax.f32 %v6273, 0.0
        %v6516 = vmax.f32 %v6451, 0.0
        %v6517 = vmax.f32 %v6275, 0.0
        %v6518 = vmax.f32 %v6453, 0.0
        %v6519 = vpack.c.bf16 %v6457, %v6455
        %v6520 = vpack.c.bf16 %v6458, %v6456
        %v6521 = vpack.c.bf16 %v6461, %v6459
        %v6522 = vpack.c.bf16 %v6462, %v6460
        %v6523 = vpack.c.bf16 %v6465, %v6463
        %v6524 = vpack.c.bf16 %v6466, %v6464
        %v6525 = vpack.c.bf16 %v6469, %v6467
        %v6526 = vpack.c.bf16 %v6470, %v6468
        %v6527 = vpack.c.bf16 %v6473, %v6471
        %v6528 = vpack.c.bf16 %v6474, %v6472
        %v6529 = vpack.c.bf16 %v6477, %v6475
        %v6530 = vpack.c.bf16 %v6478, %v6476
        %v6531 = vpack.c.bf16 %v6481, %v6479
        %v6532 = vpack.c.bf16 %v6482, %v6480
        %v6533 = vpack.c.bf16 %v6485, %v6483
        %v6534 = vpack.c.bf16 %v6486, %v6484
        %v6535 = vpack.c.bf16 %v6489, %v6487
        %v6536 = vpack.c.bf16 %v6490, %v6488
        %v6537 = vpack.c.bf16 %v6493, %v6491
        %v6538 = vpack.c.bf16 %v6494, %v6492
        %v6539 = vpack.c.bf16 %v6497, %v6495
        %v6540 = vpack.c.bf16 %v6498, %v6496
        %v6541 = vpack.c.bf16 %v6501, %v6499
        %v6542 = vpack.c.bf16 %v6502, %v6500
        %v6543 = vpack.c.bf16 %v6505, %v6503
        %v6544 = vpack.c.bf16 %v6506, %v6504
        %v6545 = vpack.c.bf16 %v6509, %v6507
        %v6546 = vpack.c.bf16 %v6510, %v6508
        %v6547 = vpack.c.bf16 %v6513, %v6511
        %v6548 = vpack.c.bf16 %v6514, %v6512
        %v6549 = vpack.c.bf16 %v6517, %v6515
        %v6550 = vpack.c.bf16 %v6518, %v6516
        %s6551 = scalar_lea.vmem [#allocation6], 2048
        %v6552 = vld [vmem:[%s6551] sm:$0xff]
        %v6553 = vld [vmem:[%s6551 + $0x8] sm:$0xff]
        %v6554 = vld [vmem:[%s6551 + $0x10] sm:$0xff]
        %v6555 = vld [vmem:[%s6551 + $0x18] sm:$0xff]
        %v6556 = vld [vmem:[%s6551 + $0x20] sm:$0xff]
        %v6557 = vld [vmem:[%s6551 + $0x28] sm:$0xff]
        %v6558 = vld [vmem:[%s6551 + $0x30] sm:$0xff]
        %v6559 = vld [vmem:[%s6551 + $0x38] sm:$0xff]
        %v6560 = vld [vmem:[%s6551 + $0x40] sm:$0xff]
        %v6561 = vld [vmem:[%s6551 + $0x48] sm:$0xff]
        %v6562 = vld [vmem:[%s6551 + $0x50] sm:$0xff]
        %v6563 = vld [vmem:[%s6551 + $0x58] sm:$0xff]
        %v6564 = vld [vmem:[%s6551 + $0x60] sm:$0xff]
        %v6565 = vld [vmem:[%s6551 + $0x68] sm:$0xff]
        %v6566 = vld [vmem:[%s6551 + $0x70] sm:$0xff]
        %v6567 = vld [vmem:[%s6551 + $0x78] sm:$0xff]
        %v6568 = vld [vmem:[%s6551 + $0x80] sm:$0xff]
        %v6569 = vld [vmem:[%s6551 + $0x88] sm:$0xff]
        %v6570 = vld [vmem:[%s6551 + $0x90] sm:$0xff]
        %v6571 = vld [vmem:[%s6551 + $0x98] sm:$0xff]
        %v6572 = vld [vmem:[%s6551 + $0xa0] sm:$0xff]
        %v6573 = vld [vmem:[%s6551 + $0xa8] sm:$0xff]
        %v6574 = vld [vmem:[%s6551 + $0xb0] sm:$0xff]
        %v6575 = vld [vmem:[%s6551 + $0xb8] sm:$0xff]
        %v6576 = vld [vmem:[%s6551 + $0xc0] sm:$0xff]
        %v6577 = vld [vmem:[%s6551 + $0xc8] sm:$0xff]
        %v6578 = vld [vmem:[%s6551 + $0xd0] sm:$0xff]
        %v6579 = vld [vmem:[%s6551 + $0xd8] sm:$0xff]
        %v6580 = vld [vmem:[%s6551 + $0xe0] sm:$0xff]
        %v6581 = vld [vmem:[%s6551 + $0xe8] sm:$0xff]
        %v6582 = vld [vmem:[%s6551 + $0xf0] sm:$0xff]
        %v6583 = vld [vmem:[%s6551 + $0xf8] sm:$0xff]
        %s6584 = scalar_lea.vmem [#allocation4], 17
        %v6585 = vld [vmem:[%s6584] ss:$8 sm:$0x3]
        %v6587 = vperm.slane %v6585, 0
        %v6588 = vperm.slane %v6585, 1
        %v6623 = vunpack.c.l.b16 %v6552
        %v6624 = vunpack.c.h.b16 %v6552
        %v6625 = vunpack.c.l.b16 %v6553
        %v6626 = vunpack.c.h.b16 %v6553
        %v6627 = vunpack.c.l.b16 %v6554
        %v6628 = vunpack.c.h.b16 %v6554
        %v6629 = vunpack.c.l.b16 %v6555
        %v6630 = vunpack.c.h.b16 %v6555
        %v6631 = vunpack.c.l.b16 %v6556
        %v6632 = vunpack.c.h.b16 %v6556
        %v6633 = vunpack.c.l.b16 %v6557
        %v6634 = vunpack.c.h.b16 %v6557
        %v6635 = vunpack.c.l.b16 %v6558
        %v6636 = vunpack.c.h.b16 %v6558
        %v6637 = vunpack.c.l.b16 %v6559
        %v6638 = vunpack.c.h.b16 %v6559
        %v6639 = vunpack.c.l.b16 %v6560
        %v6640 = vunpack.c.h.b16 %v6560
        %v6641 = vunpack.c.l.b16 %v6561
        %v6642 = vunpack.c.h.b16 %v6561
        %v6643 = vunpack.c.l.b16 %v6562
        %v6644 = vunpack.c.h.b16 %v6562
        %v6645 = vunpack.c.l.b16 %v6563
        %v6646 = vunpack.c.h.b16 %v6563
        %v6647 = vunpack.c.l.b16 %v6564
        %v6648 = vunpack.c.h.b16 %v6564
        %v6649 = vunpack.c.l.b16 %v6565
        %v6650 = vunpack.c.h.b16 %v6565
        %v6651 = vunpack.c.l.b16 %v6566
        %v6652 = vunpack.c.h.b16 %v6566
        %v6653 = vunpack.c.l.b16 %v6567
        %v6654 = vunpack.c.h.b16 %v6567
        %v6655 = vunpack.c.l.b16 %v6568
        %v6656 = vunpack.c.h.b16 %v6568
        %v6657 = vunpack.c.l.b16 %v6569
        %v6658 = vunpack.c.h.b16 %v6569
        %v6659 = vunpack.c.l.b16 %v6570
        %v6660 = vunpack.c.h.b16 %v6570
        %v6661 = vunpack.c.l.b16 %v6571
        %v6662 = vunpack.c.h.b16 %v6571
        %v6663 = vunpack.c.l.b16 %v6572
        %v6664 = vunpack.c.h.b16 %v6572
        %v6665 = vunpack.c.l.b16 %v6573
        %v6666 = vunpack.c.h.b16 %v6573
        %v6667 = vunpack.c.l.b16 %v6574
        %v6668 = vunpack.c.h.b16 %v6574
        %v6669 = vunpack.c.l.b16 %v6575
        %v6670 = vunpack.c.h.b16 %v6575
        %v6671 = vunpack.c.l.b16 %v6576
        %v6672 = vunpack.c.h.b16 %v6576
        %v6673 = vunpack.c.l.b16 %v6577
        %v6674 = vunpack.c.h.b16 %v6577
        %v6675 = vunpack.c.l.b16 %v6578
        %v6676 = vunpack.c.h.b16 %v6578
        %v6677 = vunpack.c.l.b16 %v6579
        %v6678 = vunpack.c.h.b16 %v6579
        %v6679 = vunpack.c.l.b16 %v6580
        %v6680 = vunpack.c.h.b16 %v6580
        %v6681 = vunpack.c.l.b16 %v6581
        %v6682 = vunpack.c.h.b16 %v6581
        %v6683 = vunpack.c.l.b16 %v6582
        %v6684 = vunpack.c.h.b16 %v6582
        %v6685 = vunpack.c.l.b16 %v6583
        %v6686 = vunpack.c.h.b16 %v6583
        %v6687 = vpack.c.b16 %v6625, %v6623
        %v6688 = vpack.c.b16 %v6626, %v6624
        %v6689 = vpack.c.b16 %v6629, %v6627
        %v6690 = vpack.c.b16 %v6630, %v6628
        %v6691 = vpack.c.b16 %v6633, %v6631
        %v6692 = vpack.c.b16 %v6634, %v6632
        %v6693 = vpack.c.b16 %v6637, %v6635
        %v6694 = vpack.c.b16 %v6638, %v6636
        %v6695 = vpack.c.b16 %v6641, %v6639
        %v6696 = vpack.c.b16 %v6642, %v6640
        %v6697 = vpack.c.b16 %v6645, %v6643
        %v6698 = vpack.c.b16 %v6646, %v6644
        %v6699 = vpack.c.b16 %v6649, %v6647
        %v6700 = vpack.c.b16 %v6650, %v6648
        %v6701 = vpack.c.b16 %v6653, %v6651
        %v6702 = vpack.c.b16 %v6654, %v6652
        %v6703 = vpack.c.b16 %v6657, %v6655
        %v6704 = vpack.c.b16 %v6658, %v6656
        %v6705 = vpack.c.b16 %v6661, %v6659
        %v6706 = vpack.c.b16 %v6662, %v6660
        %v6707 = vpack.c.b16 %v6665, %v6663
        %v6708 = vpack.c.b16 %v6666, %v6664
        %v6709 = vpack.c.b16 %v6669, %v6667
        %v6710 = vpack.c.b16 %v6670, %v6668
        %v6711 = vpack.c.b16 %v6673, %v6671
        %v6712 = vpack.c.b16 %v6674, %v6672
        %v6713 = vpack.c.b16 %v6677, %v6675
        %v6714 = vpack.c.b16 %v6678, %v6676
        %v6715 = vpack.c.b16 %v6681, %v6679
        %v6716 = vpack.c.b16 %v6682, %v6680
        %v6717 = vpack.c.b16 %v6685, %v6683
        %v6718 = vpack.c.b16 %v6686, %v6684
        %6751 = vmatpush.bf16.msra.mxu0 %v6701
        %6752 = vmatpush.bf16.msra.mxu0 %v6699
        %6753 = vmatpush.bf16.msra.mxu0 %v6697
        %6754 = vmatpush.bf16.msra.mxu0 %v6695
        %6755 = vmatpush.bf16.msra.mxu0 %v6693
        %6756 = vmatpush.bf16.msra.mxu0 %v6691
        %6757 = vmatpush.bf16.msra.mxu0 %v6689
        %6758 = vmatpush.bf16.msra.mxu0 %v6687
        %6759 = vmatmul.bf16.gmra.mxu0 %v6519
        %v6760 = vpop.f32.mrf.mxu0
        %v6761 = vadd.f32 %v6587, %v6760
        %v6762 = vpop.f32.mrf.mxu0
        %v6763 = vadd.f32 %v6587, %v6762
        %6764 = vmatmul.bf16.gmra.mxu0 %v6521
        %v6765 = vpop.f32.mrf.mxu0
        %v6766 = vadd.f32 %v6587, %v6765
        %v6767 = vpop.f32.mrf.mxu0
        %v6768 = vadd.f32 %v6587, %v6767
        %6769 = vmatmul.bf16.gmra.mxu0 %v6523
        %v6770 = vpop.f32.mrf.mxu0
        %v6771 = vadd.f32 %v6587, %v6770
        %v6772 = vpop.f32.mrf.mxu0
        %v6773 = vadd.f32 %v6587, %v6772
        %6774 = vmatmul.bf16.gmra.mxu0 %v6525
        %v6775 = vpop.f32.mrf.mxu0
        %v6776 = vadd.f32 %v6587, %v6775
        %v6777 = vpop.f32.mrf.mxu0
        %v6778 = vadd.f32 %v6587, %v6777
        %6779 = vmatmul.bf16.gmra.mxu0 %v6527
        %v6780 = vpop.f32.mrf.mxu0
        %v6781 = vadd.f32 %v6587, %v6780
        %v6782 = vpop.f32.mrf.mxu0
        %v6783 = vadd.f32 %v6587, %v6782
        %6784 = vmatmul.bf16.gmra.mxu0 %v6529
        %v6785 = vpop.f32.mrf.mxu0
        %v6786 = vadd.f32 %v6587, %v6785
        %v6787 = vpop.f32.mrf.mxu0
        %v6788 = vadd.f32 %v6587, %v6787
        %6789 = vmatmul.bf16.gmra.mxu0 %v6531
        %v6790 = vpop.f32.mrf.mxu0
        %v6791 = vadd.f32 %v6587, %v6790
        %v6792 = vpop.f32.mrf.mxu0
        %v6793 = vadd.f32 %v6587, %v6792
        %6794 = vmatmul.bf16.gmra.mxu0 %v6533
        %v6795 = vpop.f32.mrf.mxu0
        %v6796 = vadd.f32 %v6587, %v6795
        %v6797 = vpop.f32.mrf.mxu0
        %v6798 = vadd.f32 %v6587, %v6797
        %6799 = vmatmul.bf16.gmra.mxu0 %v6535
        %v6800 = vpop.f32.mrf.mxu0
        %v6801 = vadd.f32 %v6587, %v6800
        %v6802 = vpop.f32.mrf.mxu0
        %v6803 = vadd.f32 %v6587, %v6802
        %6804 = vmatmul.bf16.gmra.mxu0 %v6537
        %v6805 = vpop.f32.mrf.mxu0
        %v6806 = vadd.f32 %v6587, %v6805
        %v6807 = vpop.f32.mrf.mxu0
        %v6808 = vadd.f32 %v6587, %v6807
        %6809 = vmatmul.bf16.gmra.mxu0 %v6539
        %v6810 = vpop.f32.mrf.mxu0
        %v6811 = vadd.f32 %v6587, %v6810
        %v6812 = vpop.f32.mrf.mxu0
        %v6813 = vadd.f32 %v6587, %v6812
        %6814 = vmatmul.bf16.gmra.mxu0 %v6541
        %v6815 = vpop.f32.mrf.mxu0
        %v6816 = vadd.f32 %v6587, %v6815
        %v6817 = vpop.f32.mrf.mxu0
        %v6818 = vadd.f32 %v6587, %v6817
        %6819 = vmatmul.bf16.gmra.mxu0 %v6543
        %v6820 = vpop.f32.mrf.mxu0
        %v6821 = vadd.f32 %v6587, %v6820
        %v6822 = vpop.f32.mrf.mxu0
        %v6823 = vadd.f32 %v6587, %v6822
        %6824 = vmatmul.bf16.gmra.mxu0 %v6545
        %v6825 = vpop.f32.mrf.mxu0
        %v6826 = vadd.f32 %v6587, %v6825
        %v6827 = vpop.f32.mrf.mxu0
        %v6828 = vadd.f32 %v6587, %v6827
        %6829 = vmatmul.bf16.gmra.mxu0 %v6547
        %v6830 = vpop.f32.mrf.mxu0
        %v6831 = vadd.f32 %v6587, %v6830
        %v6832 = vpop.f32.mrf.mxu0
        %v6833 = vadd.f32 %v6587, %v6832
        %6834 = vmatmul.bf16.gmra.mxu0 %v6549
        %v6835 = vpop.f32.mrf.mxu0
        %v6836 = vadd.f32 %v6587, %v6835
        %v6837 = vpop.f32.mrf.mxu0
        %v6838 = vadd.f32 %v6587, %v6837
        %6839 = vdwg.mxu0
        %6840 = vmatpush.bf16.msra.mxu0 %v6717
        %6841 = vmatpush.bf16.msra.mxu0 %v6715
        %6842 = vmatpush.bf16.msra.mxu0 %v6713
        %6843 = vmatpush.bf16.msra.mxu0 %v6711
        %6844 = vmatpush.bf16.msra.mxu0 %v6709
        %6845 = vmatpush.bf16.msra.mxu0 %v6707
        %6846 = vmatpush.bf16.msra.mxu0 %v6705
        %6847 = vmatpush.bf16.msra.mxu0 %v6703
        %6848 = vmatmul.bf16.gmra.mxu0 %v6520
        %v6849 = vpop.f32.mrf.mxu0
        %v6850 = vadd.f32 %v6761, %v6849
        %v6851 = vpop.f32.mrf.mxu0
        %v6852 = vadd.f32 %v6763, %v6851
        %6853 = vmatmul.bf16.gmra.mxu0 %v6522
        %v6854 = vpop.f32.mrf.mxu0
        %v6855 = vadd.f32 %v6766, %v6854
        %v6856 = vpop.f32.mrf.mxu0
        %v6857 = vadd.f32 %v6768, %v6856
        %6858 = vmatmul.bf16.gmra.mxu0 %v6524
        %v6859 = vpop.f32.mrf.mxu0
        %v6860 = vadd.f32 %v6771, %v6859
        %v6861 = vpop.f32.mrf.mxu0
        %v6862 = vadd.f32 %v6773, %v6861
        %6863 = vmatmul.bf16.gmra.mxu0 %v6526
        %v6864 = vpop.f32.mrf.mxu0
        %v6865 = vadd.f32 %v6776, %v6864
        %v6866 = vpop.f32.mrf.mxu0
        %v6867 = vadd.f32 %v6778, %v6866
        %6868 = vmatmul.bf16.gmra.mxu0 %v6528
        %v6869 = vpop.f32.mrf.mxu0
        %v6870 = vadd.f32 %v6781, %v6869
        %v6871 = vpop.f32.mrf.mxu0
        %v6872 = vadd.f32 %v6783, %v6871
        %6873 = vmatmul.bf16.gmra.mxu0 %v6530
        %v6874 = vpop.f32.mrf.mxu0
        %v6875 = vadd.f32 %v6786, %v6874
        %v6876 = vpop.f32.mrf.mxu0
        %v6877 = vadd.f32 %v6788, %v6876
        %6878 = vmatmul.bf16.gmra.mxu0 %v6532
        %v6879 = vpop.f32.mrf.mxu0
        %v6880 = vadd.f32 %v6791, %v6879
        %v6881 = vpop.f32.mrf.mxu0
        %v6882 = vadd.f32 %v6793, %v6881
        %6883 = vmatmul.bf16.gmra.mxu0 %v6534
        %v6884 = vpop.f32.mrf.mxu0
        %v6885 = vadd.f32 %v6796, %v6884
        %v6886 = vpop.f32.mrf.mxu0
        %v6887 = vadd.f32 %v6798, %v6886
        %6888 = vmatmul.bf16.gmra.mxu0 %v6536
        %v6889 = vpop.f32.mrf.mxu0
        %v6890 = vadd.f32 %v6801, %v6889
        %v6891 = vpop.f32.mrf.mxu0
        %v6892 = vadd.f32 %v6803, %v6891
        %6893 = vmatmul.bf16.gmra.mxu0 %v6538
        %v6894 = vpop.f32.mrf.mxu0
        %v6895 = vadd.f32 %v6806, %v6894
        %v6896 = vpop.f32.mrf.mxu0
        %v6897 = vadd.f32 %v6808, %v6896
        %6898 = vmatmul.bf16.gmra.mxu0 %v6540
        %v6899 = vpop.f32.mrf.mxu0
        %v6900 = vadd.f32 %v6811, %v6899
        %v6901 = vpop.f32.mrf.mxu0
        %v6902 = vadd.f32 %v6813, %v6901
        %6903 = vmatmul.bf16.gmra.mxu0 %v6542
        %v6904 = vpop.f32.mrf.mxu0
        %v6905 = vadd.f32 %v6816, %v6904
        %v6906 = vpop.f32.mrf.mxu0
        %v6907 = vadd.f32 %v6818, %v6906
        %6908 = vmatmul.bf16.gmra.mxu0 %v6544
        %v6909 = vpop.f32.mrf.mxu0
        %v6910 = vadd.f32 %v6821, %v6909
        %v6911 = vpop.f32.mrf.mxu0
        %v6912 = vadd.f32 %v6823, %v6911
        %6913 = vmatmul.bf16.gmra.mxu0 %v6546
        %v6914 = vpop.f32.mrf.mxu0
        %v6915 = vadd.f32 %v6826, %v6914
        %v6916 = vpop.f32.mrf.mxu0
        %v6917 = vadd.f32 %v6828, %v6916
        %6918 = vmatmul.bf16.gmra.mxu0 %v6548
        %v6919 = vpop.f32.mrf.mxu0
        %v6920 = vadd.f32 %v6831, %v6919
        %v6921 = vpop.f32.mrf.mxu0
        %v6922 = vadd.f32 %v6833, %v6921
        %6923 = vmatmul.bf16.gmra.mxu0 %v6550
        %v6924 = vpop.f32.mrf.mxu0
        %v6925 = vadd.f32 %v6836, %v6924
        %v6926 = vpop.f32.mrf.mxu0
        %v6927 = vadd.f32 %v6838, %v6926
        %6928 = vdwg.mxu0
        %6929 = vmatpush.bf16.msra.mxu0 %v6702
        %6930 = vmatpush.bf16.msra.mxu0 %v6700
        %6931 = vmatpush.bf16.msra.mxu0 %v6698
        %6932 = vmatpush.bf16.msra.mxu0 %v6696
        %6933 = vmatpush.bf16.msra.mxu0 %v6694
        %6934 = vmatpush.bf16.msra.mxu0 %v6692
        %6935 = vmatpush.bf16.msra.mxu0 %v6690
        %6936 = vmatpush.bf16.msra.mxu0 %v6688
        %6937 = vmatmul.bf16.gmra.mxu0 %v6519
        %v6938 = vpop.f32.mrf.mxu0
        %v6939 = vadd.f32 %v6588, %v6938
        %v6940 = vpop.f32.mrf.mxu0
        %v6941 = vadd.f32 %v6588, %v6940
        %6942 = vmatmul.bf16.gmra.mxu0 %v6521
        %v6943 = vpop.f32.mrf.mxu0
        %v6944 = vadd.f32 %v6588, %v6943
        %v6945 = vpop.f32.mrf.mxu0
        %v6946 = vadd.f32 %v6588, %v6945
        %6947 = vmatmul.bf16.gmra.mxu0 %v6523
        %v6948 = vpop.f32.mrf.mxu0
        %v6949 = vadd.f32 %v6588, %v6948
        %v6950 = vpop.f32.mrf.mxu0
        %v6951 = vadd.f32 %v6588, %v6950
        %6952 = vmatmul.bf16.gmra.mxu0 %v6525
        %v6953 = vpop.f32.mrf.mxu0
        %v6954 = vadd.f32 %v6588, %v6953
        %v6955 = vpop.f32.mrf.mxu0
        %v6956 = vadd.f32 %v6588, %v6955
        %6957 = vmatmul.bf16.gmra.mxu0 %v6527
        %v6958 = vpop.f32.mrf.mxu0
        %v6959 = vadd.f32 %v6588, %v6958
        %v6960 = vpop.f32.mrf.mxu0
        %v6961 = vadd.f32 %v6588, %v6960
        %6962 = vmatmul.bf16.gmra.mxu0 %v6529
        %v6963 = vpop.f32.mrf.mxu0
        %v6964 = vadd.f32 %v6588, %v6963
        %v6965 = vpop.f32.mrf.mxu0
        %v6966 = vadd.f32 %v6588, %v6965
        %6967 = vmatmul.bf16.gmra.mxu0 %v6531
        %v6968 = vpop.f32.mrf.mxu0
        %v6969 = vadd.f32 %v6588, %v6968
        %v6970 = vpop.f32.mrf.mxu0
        %v6971 = vadd.f32 %v6588, %v6970
        %6972 = vmatmul.bf16.gmra.mxu0 %v6533
        %v6973 = vpop.f32.mrf.mxu0
        %v6974 = vadd.f32 %v6588, %v6973
        %v6975 = vpop.f32.mrf.mxu0
        %v6976 = vadd.f32 %v6588, %v6975
        %6977 = vmatmul.bf16.gmra.mxu0 %v6535
        %v6978 = vpop.f32.mrf.mxu0
        %v6979 = vadd.f32 %v6588, %v6978
        %v6980 = vpop.f32.mrf.mxu0
        %v6981 = vadd.f32 %v6588, %v6980
        %6982 = vmatmul.bf16.gmra.mxu0 %v6537
        %v6983 = vpop.f32.mrf.mxu0
        %v6984 = vadd.f32 %v6588, %v6983
        %v6985 = vpop.f32.mrf.mxu0
        %v6986 = vadd.f32 %v6588, %v6985
        %6987 = vmatmul.bf16.gmra.mxu0 %v6539
        %v6988 = vpop.f32.mrf.mxu0
        %v6989 = vadd.f32 %v6588, %v6988
        %v6990 = vpop.f32.mrf.mxu0
        %v6991 = vadd.f32 %v6588, %v6990
        %6992 = vmatmul.bf16.gmra.mxu0 %v6541
        %v6993 = vpop.f32.mrf.mxu0
        %v6994 = vadd.f32 %v6588, %v6993
        %v6995 = vpop.f32.mrf.mxu0
        %v6996 = vadd.f32 %v6588, %v6995
        %6997 = vmatmul.bf16.gmra.mxu0 %v6543
        %v6998 = vpop.f32.mrf.mxu0
        %v6999 = vadd.f32 %v6588, %v6998
        %v7000 = vpop.f32.mrf.mxu0
        %v7001 = vadd.f32 %v6588, %v7000
        %7002 = vmatmul.bf16.gmra.mxu0 %v6545
        %v7003 = vpop.f32.mrf.mxu0
        %v7004 = vadd.f32 %v6588, %v7003
        %v7005 = vpop.f32.mrf.mxu0
        %v7006 = vadd.f32 %v6588, %v7005
        %7007 = vmatmul.bf16.gmra.mxu0 %v6547
        %v7008 = vpop.f32.mrf.mxu0
        %v7009 = vadd.f32 %v6588, %v7008
        %v7010 = vpop.f32.mrf.mxu0
        %v7011 = vadd.f32 %v6588, %v7010
        %7012 = vmatmul.bf16.gmra.mxu0 %v6549
        %v7013 = vpop.f32.mrf.mxu0
        %v7014 = vadd.f32 %v6588, %v7013
        %v7015 = vpop.f32.mrf.mxu0
        %v7016 = vadd.f32 %v6588, %v7015
        %7017 = vdwg.mxu0
        %7018 = vmatpush.bf16.msra.mxu0 %v6718
        %7019 = vmatpush.bf16.msra.mxu0 %v6716
        %7020 = vmatpush.bf16.msra.mxu0 %v6714
        %7021 = vmatpush.bf16.msra.mxu0 %v6712
        %7022 = vmatpush.bf16.msra.mxu0 %v6710
        %7023 = vmatpush.bf16.msra.mxu0 %v6708
        %7024 = vmatpush.bf16.msra.mxu0 %v6706
        %7025 = vmatpush.bf16.msra.mxu0 %v6704
        %7026 = vmatmul.bf16.gmra.mxu0 %v6520
        %v7027 = vpop.f32.mrf.mxu0
        %v7028 = vadd.f32 %v6939, %v7027
        %v7029 = vpop.f32.mrf.mxu0
        %v7030 = vadd.f32 %v6941, %v7029
        %7031 = vmatmul.bf16.gmra.mxu0 %v6522
        %v7032 = vpop.f32.mrf.mxu0
        %v7033 = vadd.f32 %v6944, %v7032
        %v7034 = vpop.f32.mrf.mxu0
        %v7035 = vadd.f32 %v6946, %v7034
        %7036 = vmatmul.bf16.gmra.mxu0 %v6524
        %v7037 = vpop.f32.mrf.mxu0
        %v7038 = vadd.f32 %v6949, %v7037
        %v7039 = vpop.f32.mrf.mxu0
        %v7040 = vadd.f32 %v6951, %v7039
        %7041 = vmatmul.bf16.gmra.mxu0 %v6526
        %v7042 = vpop.f32.mrf.mxu0
        %v7043 = vadd.f32 %v6954, %v7042
        %v7044 = vpop.f32.mrf.mxu0
        %v7045 = vadd.f32 %v6956, %v7044
        %7046 = vmatmul.bf16.gmra.mxu0 %v6528
        %v7047 = vpop.f32.mrf.mxu0
        %v7048 = vadd.f32 %v6959, %v7047
        %v7049 = vpop.f32.mrf.mxu0
        %v7050 = vadd.f32 %v6961, %v7049
        %7051 = vmatmul.bf16.gmra.mxu0 %v6530
        %v7052 = vpop.f32.mrf.mxu0
        %v7053 = vadd.f32 %v6964, %v7052
        %v7054 = vpop.f32.mrf.mxu0
        %v7055 = vadd.f32 %v6966, %v7054
        %7056 = vmatmul.bf16.gmra.mxu0 %v6532
        %v7057 = vpop.f32.mrf.mxu0
        %v7058 = vadd.f32 %v6969, %v7057
        %v7059 = vpop.f32.mrf.mxu0
        %v7060 = vadd.f32 %v6971, %v7059
        %7061 = vmatmul.bf16.gmra.mxu0 %v6534
        %v7062 = vpop.f32.mrf.mxu0
        %v7063 = vadd.f32 %v6974, %v7062
        %v7064 = vpop.f32.mrf.mxu0
        %v7065 = vadd.f32 %v6976, %v7064
        %7066 = vmatmul.bf16.gmra.mxu0 %v6536
        %v7067 = vpop.f32.mrf.mxu0
        %v7068 = vadd.f32 %v6979, %v7067
        %v7069 = vpop.f32.mrf.mxu0
        %v7070 = vadd.f32 %v6981, %v7069
        %7071 = vmatmul.bf16.gmra.mxu0 %v6538
        %v7072 = vpop.f32.mrf.mxu0
        %v7073 = vadd.f32 %v6984, %v7072
        %v7074 = vpop.f32.mrf.mxu0
        %v7075 = vadd.f32 %v6986, %v7074
        %7076 = vmatmul.bf16.gmra.mxu0 %v6540
        %v7077 = vpop.f32.mrf.mxu0
        %v7078 = vadd.f32 %v6989, %v7077
        %v7079 = vpop.f32.mrf.mxu0
        %v7080 = vadd.f32 %v6991, %v7079
        %7081 = vmatmul.bf16.gmra.mxu0 %v6542
        %v7082 = vpop.f32.mrf.mxu0
        %v7083 = vadd.f32 %v6994, %v7082
        %v7084 = vpop.f32.mrf.mxu0
        %v7085 = vadd.f32 %v6996, %v7084
        %7086 = vmatmul.bf16.gmra.mxu0 %v6544
        %v7087 = vpop.f32.mrf.mxu0
        %v7088 = vadd.f32 %v6999, %v7087
        %v7089 = vpop.f32.mrf.mxu0
        %v7090 = vadd.f32 %v7001, %v7089
        %7091 = vmatmul.bf16.gmra.mxu0 %v6546
        %v7092 = vpop.f32.mrf.mxu0
        %v7093 = vadd.f32 %v7004, %v7092
        %v7094 = vpop.f32.mrf.mxu0
        %v7095 = vadd.f32 %v7006, %v7094
        %7096 = vmatmul.bf16.gmra.mxu0 %v6548
        %v7097 = vpop.f32.mrf.mxu0
        %v7098 = vadd.f32 %v7009, %v7097
        %v7099 = vpop.f32.mrf.mxu0
        %v7100 = vadd.f32 %v7011, %v7099
        %7101 = vmatmul.bf16.gmra.mxu0 %v6550
        %v7102 = vpop.f32.mrf.mxu0
        %v7103 = vadd.f32 %v7014, %v7102
        %v7104 = vpop.f32.mrf.mxu0
        %v7105 = vadd.f32 %v7016, %v7104
        %7106 = vdwg.mxu0
        %v7107 = vmax.f32 %v6850, 0.0
        %v7108 = vmax.f32 %v7028, 0.0
        %v7109 = vmax.f32 %v6852, 0.0
        %v7110 = vmax.f32 %v7030, 0.0
        %v7111 = vmax.f32 %v6855, 0.0
        %v7112 = vmax.f32 %v7033, 0.0
        %v7113 = vmax.f32 %v6857, 0.0
        %v7114 = vmax.f32 %v7035, 0.0
        %v7115 = vmax.f32 %v6860, 0.0
        %v7116 = vmax.f32 %v7038, 0.0
        %v7117 = vmax.f32 %v6862, 0.0
        %v7118 = vmax.f32 %v7040, 0.0
        %v7119 = vmax.f32 %v6865, 0.0
        %v7120 = vmax.f32 %v7043, 0.0
        %v7121 = vmax.f32 %v6867, 0.0
        %v7122 = vmax.f32 %v7045, 0.0
        %v7123 = vmax.f32 %v6870, 0.0
        %v7124 = vmax.f32 %v7048, 0.0
        %v7125 = vmax.f32 %v6872, 0.0
        %v7126 = vmax.f32 %v7050, 0.0
        %v7127 = vmax.f32 %v6875, 0.0
        %v7128 = vmax.f32 %v7053, 0.0
        %v7129 = vmax.f32 %v6877, 0.0
        %v7130 = vmax.f32 %v7055, 0.0
        %v7131 = vmax.f32 %v6880, 0.0
        %v7132 = vmax.f32 %v7058, 0.0
        %v7133 = vmax.f32 %v6882, 0.0
        %v7134 = vmax.f32 %v7060, 0.0
        %v7135 = vmax.f32 %v6885, 0.0
        %v7136 = vmax.f32 %v7063, 0.0
        %v7137 = vmax.f32 %v6887, 0.0
        %v7138 = vmax.f32 %v7065, 0.0
        %v7139 = vmax.f32 %v6890, 0.0
        %v7140 = vmax.f32 %v7068, 0.0
        %v7141 = vmax.f32 %v6892, 0.0
        %v7142 = vmax.f32 %v7070, 0.0
        %v7143 = vmax.f32 %v6895, 0.0
        %v7144 = vmax.f32 %v7073, 0.0
        %v7145 = vmax.f32 %v6897, 0.0
        %v7146 = vmax.f32 %v7075, 0.0
        %v7147 = vmax.f32 %v6900, 0.0
        %v7148 = vmax.f32 %v7078, 0.0
        %v7149 = vmax.f32 %v6902, 0.0
        %v7150 = vmax.f32 %v7080, 0.0
        %v7151 = vmax.f32 %v6905, 0.0
        %v7152 = vmax.f32 %v7083, 0.0
        %v7153 = vmax.f32 %v6907, 0.0
        %v7154 = vmax.f32 %v7085, 0.0
        %v7155 = vmax.f32 %v6910, 0.0
        %v7156 = vmax.f32 %v7088, 0.0
        %v7157 = vmax.f32 %v6912, 0.0
        %v7158 = vmax.f32 %v7090, 0.0
        %v7159 = vmax.f32 %v6915, 0.0
        %v7160 = vmax.f32 %v7093, 0.0
        %v7161 = vmax.f32 %v6917, 0.0
        %v7162 = vmax.f32 %v7095, 0.0
        %v7163 = vmax.f32 %v6920, 0.0
        %v7164 = vmax.f32 %v7098, 0.0
        %v7165 = vmax.f32 %v6922, 0.0
        %v7166 = vmax.f32 %v7100, 0.0
        %v7167 = vmax.f32 %v6925, 0.0
        %v7168 = vmax.f32 %v7103, 0.0
        %v7169 = vmax.f32 %v6927, 0.0
        %v7170 = vmax.f32 %v7105, 0.0
        %v7171 = vpack.c.bf16 %v7109, %v7107
        %v7172 = vpack.c.bf16 %v7110, %v7108
        %v7173 = vpack.c.bf16 %v7113, %v7111
        %v7174 = vpack.c.bf16 %v7114, %v7112
        %v7175 = vpack.c.bf16 %v7117, %v7115
        %v7176 = vpack.c.bf16 %v7118, %v7116
        %v7177 = vpack.c.bf16 %v7121, %v7119
        %v7178 = vpack.c.bf16 %v7122, %v7120
        %v7179 = vpack.c.bf16 %v7125, %v7123
        %v7180 = vpack.c.bf16 %v7126, %v7124
        %v7181 = vpack.c.bf16 %v7129, %v7127
        %v7182 = vpack.c.bf16 %v7130, %v7128
        %v7183 = vpack.c.bf16 %v7133, %v7131
        %v7184 = vpack.c.bf16 %v7134, %v7132
        %v7185 = vpack.c.bf16 %v7137, %v7135
        %v7186 = vpack.c.bf16 %v7138, %v7136
        %v7187 = vpack.c.bf16 %v7141, %v7139
        %v7188 = vpack.c.bf16 %v7142, %v7140
        %v7189 = vpack.c.bf16 %v7145, %v7143
        %v7190 = vpack.c.bf16 %v7146, %v7144
        %v7191 = vpack.c.bf16 %v7149, %v7147
        %v7192 = vpack.c.bf16 %v7150, %v7148
        %v7193 = vpack.c.bf16 %v7153, %v7151
        %v7194 = vpack.c.bf16 %v7154, %v7152
        %v7195 = vpack.c.bf16 %v7157, %v7155
        %v7196 = vpack.c.bf16 %v7158, %v7156
        %v7197 = vpack.c.bf16 %v7161, %v7159
        %v7198 = vpack.c.bf16 %v7162, %v7160
        %v7199 = vpack.c.bf16 %v7165, %v7163
        %v7200 = vpack.c.bf16 %v7166, %v7164
        %v7201 = vpack.c.bf16 %v7169, %v7167
        %v7202 = vpack.c.bf16 %v7170, %v7168
        %v7203 = vld [vmem:[%s4] sm:$0xf]
        %v7204 = vld [vmem:[%s4 + $0x4] sm:$0xf]
        %v7205 = vld [vmem:[%s4 + $0x8] sm:$0xf]
        %v7206 = vld [vmem:[%s4 + $0xc] sm:$0xf]
        %v7207 = vld [vmem:[%s4 + $0x10] sm:$0xf]
        %v7208 = vld [vmem:[%s4 + $0x14] sm:$0xf]
        %v7209 = vld [vmem:[%s4 + $0x18] sm:$0xf]
        %v7210 = vld [vmem:[%s4 + $0x1c] sm:$0xf]
        %v7211 = vld [vmem:[%s4 + $0x20] sm:$0xf]
        %v7212 = vld [vmem:[%s4 + $0x24] sm:$0xf]
        %v7213 = vld [vmem:[%s4 + $0x28] sm:$0xf]
        %v7214 = vld [vmem:[%s4 + $0x2c] sm:$0xf]
        %v7215 = vld [vmem:[%s4 + $0x30] sm:$0xf]
        %v7216 = vld [vmem:[%s4 + $0x34] sm:$0xf]
        %v7217 = vld [vmem:[%s4 + $0x38] sm:$0xf]
        %v7218 = vld [vmem:[%s4 + $0x3c] sm:$0xf]
        %v7219 = vld [vmem:[%s4 + $0x40] sm:$0xf]
        %v7220 = vld [vmem:[%s4 + $0x44] sm:$0xf]
        %v7221 = vld [vmem:[%s4 + $0x48] sm:$0xf]
        %v7222 = vld [vmem:[%s4 + $0x4c] sm:$0xf]
        %v7223 = vld [vmem:[%s4 + $0x50] sm:$0xf]
        %v7224 = vld [vmem:[%s4 + $0x54] sm:$0xf]
        %v7225 = vld [vmem:[%s4 + $0x58] sm:$0xf]
        %v7226 = vld [vmem:[%s4 + $0x5c] sm:$0xf]
        %v7227 = vld [vmem:[%s4 + $0x60] sm:$0xf]
        %v7228 = vld [vmem:[%s4 + $0x64] sm:$0xf]
        %v7229 = vld [vmem:[%s4 + $0x68] sm:$0xf]
        %v7230 = vld [vmem:[%s4 + $0x6c] sm:$0xf]
        %v7231 = vld [vmem:[%s4 + $0x70] sm:$0xf]
        %v7232 = vld [vmem:[%s4 + $0x74] sm:$0xf]
        %v7233 = vld [vmem:[%s4 + $0x78] sm:$0xf]
        %v7234 = vld [vmem:[%s4 + $0x7c] sm:$0xf]
        %v7235 = vld [vmem:[#allocation7] sm:$0x1]
        %v7237 = vperm.slane %v7235, 0
        %v7271 = vunpack.c.l.b16 %v7203
        %v7272 = vunpack.c.l.b16 %v7204
        %v7273 = vunpack.c.l.b16 %v7205
        %v7274 = vunpack.c.l.b16 %v7206
        %v7275 = vunpack.c.l.b16 %v7207
        %v7276 = vunpack.c.l.b16 %v7208
        %v7277 = vunpack.c.l.b16 %v7209
        %v7278 = vunpack.c.l.b16 %v7210
        %v7279 = vunpack.c.l.b16 %v7211
        %v7280 = vunpack.c.l.b16 %v7212
        %v7281 = vunpack.c.l.b16 %v7213
        %v7282 = vunpack.c.l.b16 %v7214
        %v7283 = vunpack.c.l.b16 %v7215
        %v7284 = vunpack.c.l.b16 %v7216
        %v7285 = vunpack.c.l.b16 %v7217
        %v7286 = vunpack.c.l.b16 %v7218
        %v7287 = vunpack.c.l.b16 %v7219
        %v7288 = vunpack.c.l.b16 %v7220
        %v7289 = vunpack.c.l.b16 %v7221
        %v7290 = vunpack.c.l.b16 %v7222
        %v7291 = vunpack.c.l.b16 %v7223
        %v7292 = vunpack.c.l.b16 %v7224
        %v7293 = vunpack.c.l.b16 %v7225
        %v7294 = vunpack.c.l.b16 %v7226
        %v7295 = vunpack.c.l.b16 %v7227
        %v7296 = vunpack.c.l.b16 %v7228
        %v7297 = vunpack.c.l.b16 %v7229
        %v7298 = vunpack.c.l.b16 %v7230
        %v7299 = vunpack.c.l.b16 %v7231
        %v7300 = vunpack.c.l.b16 %v7232
        %v7301 = vunpack.c.l.b16 %v7233
        %v7302 = vunpack.c.l.b16 %v7234
        %v7303 = vpack.c.b16 %v7272, %v7271
        %v7304 = vpack.c.b16 %v7274, %v7273
        %v7305 = vpack.c.b16 %v7276, %v7275
        %v7306 = vpack.c.b16 %v7278, %v7277
        %v7307 = vpack.c.b16 %v7280, %v7279
        %v7308 = vpack.c.b16 %v7282, %v7281
        %v7309 = vpack.c.b16 %v7284, %v7283
        %v7310 = vpack.c.b16 %v7286, %v7285
        %v7311 = vpack.c.b16 %v7288, %v7287
        %v7312 = vpack.c.b16 %v7290, %v7289
        %v7313 = vpack.c.b16 %v7292, %v7291
        %v7314 = vpack.c.b16 %v7294, %v7293
        %v7315 = vpack.c.b16 %v7296, %v7295
        %v7316 = vpack.c.b16 %v7298, %v7297
        %v7317 = vpack.c.b16 %v7300, %v7299
        %v7318 = vpack.c.b16 %v7302, %v7301
        %7335 = vmatpush.bf16.msra.mxu0 %v7310
        %7336 = vmatpush.bf16.msra.mxu0 %v7309
        %7337 = vmatpush.bf16.msra.mxu0 %v7308
        %7338 = vmatpush.bf16.msra.mxu0 %v7307
        %7339 = vmatpush.bf16.msra.mxu0 %v7306
        %7340 = vmatpush.bf16.msra.mxu0 %v7305
        %7341 = vmatpush.bf16.msra.mxu0 %v7304
        %7342 = vmatpush.bf16.msra.mxu0 %v7303
        %7343 = vmatmul.bf16.gmra.mxu0 %v7171
        %v7344 = vpop.f32.mrf.mxu0
        %v7345 = vadd.f32 %v7237, %v7344
        %v7346 = vpop.f32.mrf.mxu0
        %v7347 = vadd.f32 %v7237, %v7346
        %7348 = vmatmul.bf16.gmra.mxu0 %v7173
        %v7349 = vpop.f32.mrf.mxu0
        %v7350 = vadd.f32 %v7237, %v7349
        %v7351 = vpop.f32.mrf.mxu0
        %v7352 = vadd.f32 %v7237, %v7351
        %7353 = vmatmul.bf16.gmra.mxu0 %v7175
        %v7354 = vpop.f32.mrf.mxu0
        %v7355 = vadd.f32 %v7237, %v7354
        %v7356 = vpop.f32.mrf.mxu0
        %v7357 = vadd.f32 %v7237, %v7356
        %7358 = vmatmul.bf16.gmra.mxu0 %v7177
        %v7359 = vpop.f32.mrf.mxu0
        %v7360 = vadd.f32 %v7237, %v7359
        %v7361 = vpop.f32.mrf.mxu0
        %v7362 = vadd.f32 %v7237, %v7361
        %7363 = vmatmul.bf16.gmra.mxu0 %v7179
        %v7364 = vpop.f32.mrf.mxu0
        %v7365 = vadd.f32 %v7237, %v7364
        %v7366 = vpop.f32.mrf.mxu0
        %v7367 = vadd.f32 %v7237, %v7366
        %7368 = vmatmul.bf16.gmra.mxu0 %v7181
        %v7369 = vpop.f32.mrf.mxu0
        %v7370 = vadd.f32 %v7237, %v7369
        %v7371 = vpop.f32.mrf.mxu0
        %v7372 = vadd.f32 %v7237, %v7371
        %7373 = vmatmul.bf16.gmra.mxu0 %v7183
        %v7374 = vpop.f32.mrf.mxu0
        %v7375 = vadd.f32 %v7237, %v7374
        %v7376 = vpop.f32.mrf.mxu0
        %v7377 = vadd.f32 %v7237, %v7376
        %7378 = vmatmul.bf16.gmra.mxu0 %v7185
        %v7379 = vpop.f32.mrf.mxu0
        %v7380 = vadd.f32 %v7237, %v7379
        %v7381 = vpop.f32.mrf.mxu0
        %v7382 = vadd.f32 %v7237, %v7381
        %7383 = vmatmul.bf16.gmra.mxu0 %v7187
        %v7384 = vpop.f32.mrf.mxu0
        %v7385 = vadd.f32 %v7237, %v7384
        %v7386 = vpop.f32.mrf.mxu0
        %v7387 = vadd.f32 %v7237, %v7386
        %7388 = vmatmul.bf16.gmra.mxu0 %v7189
        %v7389 = vpop.f32.mrf.mxu0
        %v7390 = vadd.f32 %v7237, %v7389
        %v7391 = vpop.f32.mrf.mxu0
        %v7392 = vadd.f32 %v7237, %v7391
        %7393 = vmatmul.bf16.gmra.mxu0 %v7191
        %v7394 = vpop.f32.mrf.mxu0
        %v7395 = vadd.f32 %v7237, %v7394
        %v7396 = vpop.f32.mrf.mxu0
        %v7397 = vadd.f32 %v7237, %v7396
        %7398 = vmatmul.bf16.gmra.mxu0 %v7193
        %v7399 = vpop.f32.mrf.mxu0
        %v7400 = vadd.f32 %v7237, %v7399
        %v7401 = vpop.f32.mrf.mxu0
        %v7402 = vadd.f32 %v7237, %v7401
        %7403 = vmatmul.bf16.gmra.mxu0 %v7195
        %v7404 = vpop.f32.mrf.mxu0
        %v7405 = vadd.f32 %v7237, %v7404
        %v7406 = vpop.f32.mrf.mxu0
        %v7407 = vadd.f32 %v7237, %v7406
        %7408 = vmatmul.bf16.gmra.mxu0 %v7197
        %v7409 = vpop.f32.mrf.mxu0
        %v7410 = vadd.f32 %v7237, %v7409
        %v7411 = vpop.f32.mrf.mxu0
        %v7412 = vadd.f32 %v7237, %v7411
        %7413 = vmatmul.bf16.gmra.mxu0 %v7199
        %v7414 = vpop.f32.mrf.mxu0
        %v7415 = vadd.f32 %v7237, %v7414
        %v7416 = vpop.f32.mrf.mxu0
        %v7417 = vadd.f32 %v7237, %v7416
        %7418 = vmatmul.bf16.gmra.mxu0 %v7201
        %v7419 = vpop.f32.mrf.mxu0
        %v7420 = vadd.f32 %v7237, %v7419
        %v7421 = vpop.f32.mrf.mxu0
        %v7422 = vadd.f32 %v7237, %v7421
        %7423 = vdwg.mxu0
        %7424 = vmatpush.bf16.msra.mxu0 %v7318
        %7425 = vmatpush.bf16.msra.mxu0 %v7317
        %7426 = vmatpush.bf16.msra.mxu0 %v7316
        %7427 = vmatpush.bf16.msra.mxu0 %v7315
        %7428 = vmatpush.bf16.msra.mxu0 %v7314
        %7429 = vmatpush.bf16.msra.mxu0 %v7313
        %7430 = vmatpush.bf16.msra.mxu0 %v7312
        %7431 = vmatpush.bf16.msra.mxu0 %v7311
        %7432 = vmatmul.bf16.gmra.mxu0 %v7172
        %v7433 = vpop.f32.mrf.mxu0
        %v7434 = vadd.f32 %v7345, %v7433
        %v7435 = vpop.f32.mrf.mxu0
        %v7436 = vadd.f32 %v7347, %v7435
        %7437 = vmatmul.bf16.gmra.mxu0 %v7174
        %v7438 = vpop.f32.mrf.mxu0
        %v7439 = vadd.f32 %v7350, %v7438
        %v7440 = vpop.f32.mrf.mxu0
        %v7441 = vadd.f32 %v7352, %v7440
        %7442 = vmatmul.bf16.gmra.mxu0 %v7176
        %v7443 = vpop.f32.mrf.mxu0
        %v7444 = vadd.f32 %v7355, %v7443
        %v7445 = vpop.f32.mrf.mxu0
        %v7446 = vadd.f32 %v7357, %v7445
        %7447 = vmatmul.bf16.gmra.mxu0 %v7178
        %v7448 = vpop.f32.mrf.mxu0
        %v7449 = vadd.f32 %v7360, %v7448
        %v7450 = vpop.f32.mrf.mxu0
        %v7451 = vadd.f32 %v7362, %v7450
        %7452 = vmatmul.bf16.gmra.mxu0 %v7180
        %v7453 = vpop.f32.mrf.mxu0
        %v7454 = vadd.f32 %v7365, %v7453
        %v7455 = vpop.f32.mrf.mxu0
        %v7456 = vadd.f32 %v7367, %v7455
        %7457 = vmatmul.bf16.gmra.mxu0 %v7182
        %v7458 = vpop.f32.mrf.mxu0
        %v7459 = vadd.f32 %v7370, %v7458
        %v7460 = vpop.f32.mrf.mxu0
        %v7461 = vadd.f32 %v7372, %v7460
        %7462 = vmatmul.bf16.gmra.mxu0 %v7184
        %v7463 = vpop.f32.mrf.mxu0
        %v7464 = vadd.f32 %v7375, %v7463
        %v7465 = vpop.f32.mrf.mxu0
        %v7466 = vadd.f32 %v7377, %v7465
        %7467 = vmatmul.bf16.gmra.mxu0 %v7186
        %v7468 = vpop.f32.mrf.mxu0
        %v7469 = vadd.f32 %v7380, %v7468
        %v7470 = vpop.f32.mrf.mxu0
        %v7471 = vadd.f32 %v7382, %v7470
        %7472 = vmatmul.bf16.gmra.mxu0 %v7188
        %v7473 = vpop.f32.mrf.mxu0
        %v7474 = vadd.f32 %v7385, %v7473
        %v7475 = vpop.f32.mrf.mxu0
        %v7476 = vadd.f32 %v7387, %v7475
        %7477 = vmatmul.bf16.gmra.mxu0 %v7190
        %v7478 = vpop.f32.mrf.mxu0
        %v7479 = vadd.f32 %v7390, %v7478
        %v7480 = vpop.f32.mrf.mxu0
        %v7481 = vadd.f32 %v7392, %v7480
        %7482 = vmatmul.bf16.gmra.mxu0 %v7192
        %v7483 = vpop.f32.mrf.mxu0
        %v7484 = vadd.f32 %v7395, %v7483
        %v7485 = vpop.f32.mrf.mxu0
        %v7486 = vadd.f32 %v7397, %v7485
        %7487 = vmatmul.bf16.gmra.mxu0 %v7194
        %v7488 = vpop.f32.mrf.mxu0
        %v7489 = vadd.f32 %v7400, %v7488
        %v7490 = vpop.f32.mrf.mxu0
        %v7491 = vadd.f32 %v7402, %v7490
        %7492 = vmatmul.bf16.gmra.mxu0 %v7196
        %v7493 = vpop.f32.mrf.mxu0
        %v7494 = vadd.f32 %v7405, %v7493
        %v7495 = vpop.f32.mrf.mxu0
        %v7496 = vadd.f32 %v7407, %v7495
        %7497 = vmatmul.bf16.gmra.mxu0 %v7198
        %v7498 = vpop.f32.mrf.mxu0
        %v7499 = vadd.f32 %v7410, %v7498
        %v7500 = vpop.f32.mrf.mxu0
        %v7501 = vadd.f32 %v7412, %v7500
        %7502 = vmatmul.bf16.gmra.mxu0 %v7200
        %v7503 = vpop.f32.mrf.mxu0
        %v7504 = vadd.f32 %v7415, %v7503
        %v7505 = vpop.f32.mrf.mxu0
        %v7506 = vadd.f32 %v7417, %v7505
        %7507 = vmatmul.bf16.gmra.mxu0 %v7202
        %v7508 = vpop.f32.mrf.mxu0
        %v7509 = vadd.f32 %v7420, %v7508
        %v7510 = vpop.f32.mrf.mxu0
        %v7511 = vadd.f32 %v7422, %v7510
        %7512 = vdwg.mxu0
        %vm7513 = vcmask 15360
        %7514 = vst.msk [vmem:[%s316] sm:$0xff] %vm7513, %v7434
        %7515 = vst.msk [vmem:[%s316 + $0x8] sm:$0xff] %vm7513, %v7436
        %7516 = vst.msk [vmem:[%s316 + $0x10] sm:$0xff] %vm7513, %v7439
        %7517 = vst.msk [vmem:[%s316 + $0x18] sm:$0xff] %vm7513, %v7441
        %7518 = vst.msk [vmem:[%s316 + $0x20] sm:$0xff] %vm7513, %v7444
        %7519 = vst.msk [vmem:[%s316 + $0x28] sm:$0xff] %vm7513, %v7446
        %7520 = vst.msk [vmem:[%s316 + $0x30] sm:$0xff] %vm7513, %v7449
        %7521 = vst.msk [vmem:[%s316 + $0x38] sm:$0xff] %vm7513, %v7451
        %7522 = vst.msk [vmem:[%s316 + $0x40] sm:$0xff] %vm7513, %v7454
        %7523 = vst.msk [vmem:[%s316 + $0x48] sm:$0xff] %vm7513, %v7456
        %7524 = vst.msk [vmem:[%s316 + $0x50] sm:$0xff] %vm7513, %v7459
        %7525 = vst.msk [vmem:[%s316 + $0x58] sm:$0xff] %vm7513, %v7461
        %7526 = vst.msk [vmem:[%s316 + $0x60] sm:$0xff] %vm7513, %v7464
        %7527 = vst.msk [vmem:[%s316 + $0x68] sm:$0xff] %vm7513, %v7466
        %7528 = vst.msk [vmem:[%s316 + $0x70] sm:$0xff] %vm7513, %v7469
        %7529 = vst.msk [vmem:[%s316 + $0x78] sm:$0xff] %vm7513, %v7471
        %7530 = vst.msk [vmem:[%s316 + $0x80] sm:$0xff] %vm7513, %v7474
        %7531 = vst.msk [vmem:[%s316 + $0x88] sm:$0xff] %vm7513, %v7476
        %7532 = vst.msk [vmem:[%s316 + $0x90] sm:$0xff] %vm7513, %v7479
        %7533 = vst.msk [vmem:[%s316 + $0x98] sm:$0xff] %vm7513, %v7481
        %7534 = vst.msk [vmem:[%s316 + $0xa0] sm:$0xff] %vm7513, %v7484
        %7535 = vst.msk [vmem:[%s316 + $0xa8] sm:$0xff] %vm7513, %v7486
        %7536 = vst.msk [vmem:[%s316 + $0xb0] sm:$0xff] %vm7513, %v7489
        %7537 = vst.msk [vmem:[%s316 + $0xb8] sm:$0xff] %vm7513, %v7491
        %7538 = vst.msk [vmem:[%s316 + $0xc0] sm:$0xff] %vm7513, %v7494
        %7539 = vst.msk [vmem:[%s316 + $0xc8] sm:$0xff] %vm7513, %v7496
        %7540 = vst.msk [vmem:[%s316 + $0xd0] sm:$0xff] %vm7513, %v7499
        %7541 = vst.msk [vmem:[%s316 + $0xd8] sm:$0xff] %vm7513, %v7501
        %7542 = vst.msk [vmem:[%s316 + $0xe0] sm:$0xff] %vm7513, %v7504
        %7543 = vst.msk [vmem:[%s316 + $0xe8] sm:$0xff] %vm7513, %v7506
        %7544 = vst.msk [vmem:[%s316 + $0xf0] sm:$0xff] %vm7513, %v7509
        %7545 = vst.msk [vmem:[%s316 + $0xf8] sm:$0xff] %vm7513, %v7511
        %s7546 = smul.u32 32, %s20
        %p7547 = scmp.lt.s32.totalorder %s7546, 127
        %s7548 = scalar_select %p7547, %s7546, 127
        %s7549 = smul.addr %s7548, 8
        %s7550 = scalar_lea.vmem %s6, %s7549
        // Predicated region
        $region61: #{tpu_custom_call.1} parent=43 // pred_check
          %p7551 = pneg %p169
        $region62: #{tpu_custom_call.1} parent=43 // pred_check_branch
          %7553 = sbr.rel (%p7551) target = $region64
        $region63: #{tpu_custom_call.1} parent=43 // pred_region
          %s7554 = smul.u32 32, %s20
        $region64: #{tpu_custom_call.1} parent=43 // pred_fallthru
          _
      $region44: #{tpu_custom_call.1} parent=5 // pred_fallthru
        _
      %p7555 = scmp.le.s32.totalorder 2, %s15
      // Predicated region
      $region65: #{tpu_custom_call.1} parent=5 // pred_check
        %p7556 = pneg %p7555
      $region66: #{tpu_custom_call.1} parent=5 // pred_check_branch
        %7558 = sbr.rel (%p7556) target = $region68
      $region67: #{tpu_custom_call.1} parent=5 // pred_region
        %s7559 = ssub.s32 %s15, 2
        // Predicated region
        $region69: #{tpu_custom_call.1} parent=67 // pred_check
          %p7560 = pneg %p175
        $region70: #{tpu_custom_call.1} parent=67 // pred_check_branch
          %7562 = sbr.rel (%p7560) target = $region72
        $region71: #{tpu_custom_call.1} parent=67 // pred_region
          %s7563 = smul.u32 32, %s21
          %p7564 = scmp.lt.s32.totalorder %s7563, 127
          %s7565 = scalar_select %p7564, %s7563, 127
          %s7566 = smul.addr %s7565, 8
          %s7567 = scalar_lea.vmem %s6, %s7566
        $region72: #{tpu_custom_call.1} parent=67 // pred_fallthru
          _
      $region68: #{tpu_custom_call.1} parent=5 // pred_fallthru
        _
    $region6: #{tpu_custom_call.1} parent=1 // loop_footer
      %s19 = sadd.s32 1, %s15
    $region7: #{tpu_custom_call.1} parent=1 // loop_footer_branch
      %14 = sbr.rel target = $region3
    $region8: #{tpu_custom_call.1} parent=1 // loop_exit
      _
    %7568 = vsyncpa [#allocation3], 1
    %s7569 = scalar_lea.sflag [#allocation3], 1
    %7570 = vsyncpa %s7569, 1
    %7571 = vsyncpa [#allocation5], 1
    %7572 = vsyncpa [#allocation8], 1

</llo_original>
